<compile_context>
chip_gen: v7x
topology: tpu7x:2x2x1
jax: 0.10.0
libtpu: 0.0.40
codegen_flags: <defaults>
</compile_context>

<pallas_src>
import numpy as np
import jax
import jax.numpy as jnp
from jax.experimental import pallas as pl
from jax.experimental.pallas import tpu as pltpu

# ---------------- sizes (small, consistent with the module) ----------------
B, M, T = 2, 4, 8          # batch, memory_length, sequence length
E, H, L = 16, 32, 2        # embedding_size, hidden_size, rnn_layers
V = 50                     # vocab size


# ---------------- Pallas kernel: stacked LSTM over all rows, unrolled in T ----------------
def make_history_lstm_kernel(num_layers, seq_len, hidden):
    """Refs:
         x_ref:    (T, Nb, E)  f32  time-major embedded sequences (all memory*batch rows)
         last_ref: (Nb, 1)     i32  lens - 1 (last valid step per row; -1 => row unused)
         then per layer l: Wx_i..Wx_o (in_l, H), Wh_i..Wh_o (H, H), B_i..B_o (1, H)
         out_ref:  (Nb, H)     f32
    """
    def kernel(x_ref, last_ref, *rest):
        out_ref = rest[-1]
        w_refs = rest[:-1]
        nb = out_ref.shape[0]

        def wref(l, kind, g):            # kind: 0 = Wx, 1 = Wh, 2 = bias
            return w_refs[l * 12 + kind * 4 + g][...]

        # ---- hoisted, loop-invariant work (traced exactly once) ----
        last_t = last_ref[...]                                              # (Nb, 1) i32
        Wx = [[wref(l, 0, g) for g in range(4)] for l in range(num_layers)]
        Wh = [[wref(l, 1, g) for g in range(4)] for l in range(num_layers)]
        Bc = [[jnp.broadcast_to(wref(l, 2, g), (nb, hidden))                # pre-broadcast bias
               for g in range(4)] for l in range(num_layers)]

        hs = [jnp.zeros((nb, hidden), jnp.float32) for _ in range(num_layers)]
        cs = [jnp.zeros((nb, hidden), jnp.float32) for _ in range(num_layers)]
        out = jnp.zeros((nb, hidden), jnp.float32)

        # ---- fully unrolled recurrence (seq_len is static & small) ----
        # Per (layer, step): 4 lane-aligned per-gate dots for the x/input side (independent
        # of the recurrence -> scheduler can issue them early) + 4 per-gate dots on the
        # recurrent h.  No gate slicing, no cross-lane shuffles on the critical path.
        for t in range(seq_len):
            inp = x_ref[t]                                                  # (Nb, in_0)
            for l in range(num_layers):
                pre = [jnp.dot(inp, Wx[l][g], preferred_element_type=jnp.float32)
                       + jnp.dot(hs[l], Wh[l][g], preferred_element_type=jnp.float32)
                       + Bc[l][g]
                       for g in range(4)]                                   # each (Nb, H), lane ofs 0
                i_g = jax.nn.sigmoid(pre[0])
                f_g = jax.nn.sigmoid(pre[1])
                g_g = jnp.tanh(pre[2])
                o_g = jax.nn.sigmoid(pre[3])
                cs[l] = f_g * cs[l] + i_g * g_g
                hs[l] = o_g * jnp.tanh(cs[l])
                inp = hs[l]
            # top-layer hidden at the row's last valid step (== packed-seq last output)
            out = jnp.where(last_t == t, inp, out)

        out_ref[...] = out.astype(out_ref.dtype)

    return kernel


def run_history_lstm(x_tne, last_n1, flat_weights):
    t_run, n_rows, e_n = x_tne.shape
    kernel = make_history_lstm_kernel(L, t_run, H)
    in_specs = [
        pl.BlockSpec((t_run, n_rows, e_n), lambda i: (0, i, 0)),
        pl.BlockSpec((n_rows, 1), lambda i: (i, 0)),
    ]
    for w in flat_weights:                                   # small 2-D weights, full blocks
        in_specs.append(pl.BlockSpec(w.shape, lambda i: (0, 0)))
    out_spec = pl.BlockSpec((n_rows, H), lambda i: (i, 0))
    return pl.pallas_call(
        kernel,
        out_shape=jax.ShapeDtypeStruct((n_rows, H), jnp.float32),
        grid_spec=pltpu.PrefetchScalarGridSpec(
            num_scalar_prefetch=0,
            grid=(1,),                    # single row-block; axis stays parallel for scaling
            in_specs=in_specs,
            out_specs=out_spec,
        ),
        compiler_params=pltpu.CompilerParams(
            dimension_semantics=("parallel",)),
    )(x_tne, last_n1, *flat_weights)


# ---------------- parameters (deterministic, PyTorch-shaped) ----------------
def init_params(key):
    k = 1.0 / np.sqrt(H)
    keys = jax.random.split(key, 1 + 4 * L)
    params = {"embedding": jax.random.normal(keys[0], (V, E), jnp.float32) * 0.1}
    layers = []
    idx = 1
    for l in range(L):
        in_l = E if l == 0 else H
        w_ih = jax.random.uniform(keys[idx + 0], (4 * H, in_l), jnp.float32, -k, k)
        w_hh = jax.random.uniform(keys[idx + 1], (4 * H, H), jnp.float32, -k, k)
        b_ih = jax.random.uniform(keys[idx + 2], (4 * H,), jnp.float32, -k, k)
        b_hh = jax.random.uniform(keys[idx + 3], (4 * H,), jnp.float32, -k, k)
        idx += 4
        layers.append((w_ih, w_hh, b_ih, b_hh))
    params["lstm"] = layers
    return params


# ---------------- full forward (glue + kernel) ----------------
def history_encoder_forward(input_ids, lengths, params):
    lengths = np.asarray(lengths)
    s_idx = int(np.flatnonzero(lengths[0])[0])               # lengths[0].nonzero()[0][0]
    lengths = lengths[:, s_idx:]
    b_n, m_n, t_n = input_ids.shape
    lengths = lengths[:, :m_n]                                # (B, M)

    # Embedding lookup (gather) stays as XLA glue.
    emb = params["embedding"][input_ids]                      # (B, M, T, E)
    n = b_n * m_n                                             # fold M into batch
    x = jnp.transpose(emb.reshape(n, t_n, E), (1, 0, 2)).astype(jnp.float32)   # (T, N, E)

    # Bound the unrolled recurrence by the maximum real length (host-known, like
    # pack_padded_sequence); rows shorter than t_run are handled by the in-kernel select.
    t_run = int(min(t_n, max(1, int(lengths.max()))))
    x = x[:t_run]

    last = lengths.reshape(n).astype(np.int32) - 1            # (N,) hoisted lens-1
    n_pad = -(-n // 8) * 8                                    # fill the f32 8-sublane tile
    if n_pad != n:
        x = jnp.pad(x, ((0, 0), (0, n_pad - n), (0, 0)))
        last = np.pad(last, (0, n_pad - n), constant_values=-1)   # never selected -> zeros
    last_n1 = jnp.asarray(last).reshape(n_pad, 1)

    # Per layer, per gate: lane-aligned W_ih^T (in_l,H), W_hh^T (H,H), summed bias (1,H).
    flat_weights = []
    for (w_ih, w_hh, b_ih, b_hh) in params["lstm"]:
        b = b_ih + b_hh
        flat_weights += [jnp.transpose(w_ih[g * H:(g + 1) * H, :]) for g in range(4)]
        flat_weights += [jnp.transpose(w_hh[g * H:(g + 1) * H, :]) for g in range(4)]
        flat_weights += [b[g * H:(g + 1) * H].reshape(1, H) for g in range(4)]

    hist = run_history_lstm(x, last_n1, flat_weights)[:n]     # (N, H), original row order
    hist_bmh = hist.reshape(b_n, m_n, H)                      # (B, M, H)

    # The PyTorch code leaves each step's rows in descending-length (sorted) order.
    perm = jnp.argsort(-jnp.asarray(lengths), axis=0, stable=True)   # (B, M)
    history = jnp.take_along_axis(hist_bmh, perm[..., None], axis=0)
    return history                                            # (B, M, H)


# ---------------- pure NumPy reference for verification ----------------
def reference_forward(input_ids, lengths, params):
    lengths = np.asarray(lengths)
    s_idx = int(np.flatnonzero(lengths[0])[0])
    b_n, m_n, t_n = input_ids.shape
    lengths = lengths[:, s_idx:][:, :m_n]
    emb = np.asarray(params["embedding"])[np.asarray(input_ids)]      # (B, M, T, E)
    x = emb.reshape(b_n * m_n, t_n, E).transpose(1, 0, 2)             # (T, N, E)
    lens = lengths.reshape(b_n * m_n)
    n = b_n * m_n
    hs = [np.zeros((n, H), np.float32) for _ in range(L)]
    cs = [np.zeros((n, H), np.float32) for _ in range(L)]
    out = np.zeros((n, H), np.float32)
    sig = lambda z: 1.0 / (1.0 + np.exp(-z))
    for t in range(t_n):
        inp = x[t]
        for l in range(L):
            w_ih, w_hh, b_ih, b_hh = [np.asarray(a) for a in params["lstm"][l]]
            g = inp @ w_ih.T + hs[l] @ w_hh.T + b_ih + b_hh
            i_g, f_g = sig(g[:, :H]), sig(g[:, H:2 * H])
            g_g, o_g = np.tanh(g[:, 2 * H:3 * H]), sig(g[:, 3 * H:4 * H])
            cs[l] = f_g * cs[l] + i_g * g_g
            hs[l] = o_g * np.tanh(cs[l])
            inp = hs[l]
        sel = (lens - 1) == t
        out[sel] = inp[sel]
    out = out.reshape(b_n, m_n, H)
    perm = np.argsort(-lengths, axis=0, kind="stable")
    return np.take_along_axis(out, perm[..., None], axis=0)


if __name__ == "__main__":
    key = jax.random.PRNGKey(0)
    params = init_params(key)

    ids_key = jax.random.fold_in(key, 123)
    input_ids = jax.random.randint(ids_key, (B, M, T), 0, V, dtype=jnp.int32)
    # lengths: row 0 starts with zeros so s_idx > 0 (exercises the nonzero()/slice logic)
    lengths = np.array([[0, 0, 3, 5, 8, 2],
                        [5, 2, 7, 1, 4, 6]], dtype=np.int32)

    history = history_encoder_forward(input_ids, lengths, params)
    history = jax.block_until_ready(history)

    ref = reference_forward(input_ids, lengths, params)
    np.testing.assert_allclose(np.asarray(history), ref, atol=5e-3, rtol=5e-3)
    assert history.shape == (B, M, H)
    print("KERNEL_OK")
</pallas_src>

<mosaic_0001>
module attributes {stable_mosaic.version = 11 : i64} {
  func.func @kernel(%arg0: i32, %arg1: memref<8x8x16xf32, #tpu.memory_space<vmem>>, %arg2: memref<8x1xi32, #tpu.memory_space<vmem>>, %arg3: memref<16x32xf32, #tpu.memory_space<vmem>>, %arg4: memref<16x32xf32, #tpu.memory_space<vmem>>, %arg5: memref<16x32xf32, #tpu.memory_space<vmem>>, %arg6: memref<16x32xf32, #tpu.memory_space<vmem>>, %arg7: memref<32x32xf32, #tpu.memory_space<vmem>>, %arg8: memref<32x32xf32, #tpu.memory_space<vmem>>, %arg9: memref<32x32xf32, #tpu.memory_space<vmem>>, %arg10: memref<32x32xf32, #tpu.memory_space<vmem>>, %arg11: memref<1x32xf32, #tpu.memory_space<vmem>>, %arg12: memref<1x32xf32, #tpu.memory_space<vmem>>, %arg13: memref<1x32xf32, #tpu.memory_space<vmem>>, %arg14: memref<1x32xf32, #tpu.memory_space<vmem>>, %arg15: memref<32x32xf32, #tpu.memory_space<vmem>>, %arg16: memref<32x32xf32, #tpu.memory_space<vmem>>, %arg17: memref<32x32xf32, #tpu.memory_space<vmem>>, %arg18: memref<32x32xf32, #tpu.memory_space<vmem>>, %arg19: memref<32x32xf32, #tpu.memory_space<vmem>>, %arg20: memref<32x32xf32, #tpu.memory_space<vmem>>, %arg21: memref<32x32xf32, #tpu.memory_space<vmem>>, %arg22: memref<32x32xf32, #tpu.memory_space<vmem>>, %arg23: memref<1x32xf32, #tpu.memory_space<vmem>>, %arg24: memref<1x32xf32, #tpu.memory_space<vmem>>, %arg25: memref<1x32xf32, #tpu.memory_space<vmem>>, %arg26: memref<1x32xf32, #tpu.memory_space<vmem>>, %arg27: memref<8x32xf32, #tpu.memory_space<vmem>>) attributes {dimension_semantics = [#tpu.dimension_semantics<parallel>], iteration_bounds = array<i64: 1>, scalar_prefetch = 0 : i64, scratch_operands = 0 : i64, tpu.core_type = #tpu.core_type<tc>, window_params = [{transform_indices = @transform_0, window_bounds = array<i64: 8, 8, 16>}, {transform_indices = @transform_1, window_bounds = array<i64: 8, 1>}, {pipeline_mode = #tpu.pipeline_mode<synchronous>, transform_indices = @transform_2, window_bounds = array<i64: 16, 32>}, {pipeline_mode = #tpu.pipeline_mode<synchronous>, transform_indices = @transform_3, window_bounds = array<i64: 16, 32>}, {pipeline_mode = #tpu.pipeline_mode<synchronous>, transform_indices = @transform_4, window_bounds = array<i64: 16, 32>}, {pipeline_mode = #tpu.pipeline_mode<synchronous>, transform_indices = @transform_5, window_bounds = array<i64: 16, 32>}, {pipeline_mode = #tpu.pipeline_mode<synchronous>, transform_indices = @transform_6, window_bounds = array<i64: 32, 32>}, {pipeline_mode = #tpu.pipeline_mode<synchronous>, transform_indices = @transform_7, window_bounds = array<i64: 32, 32>}, {pipeline_mode = #tpu.pipeline_mode<synchronous>, transform_indices = @transform_8, window_bounds = array<i64: 32, 32>}, {pipeline_mode = #tpu.pipeline_mode<synchronous>, transform_indices = @transform_9, window_bounds = array<i64: 32, 32>}, {pipeline_mode = #tpu.pipeline_mode<synchronous>, transform_indices = @transform_10, window_bounds = array<i64: 1, 32>}, {pipeline_mode = #tpu.pipeline_mode<synchronous>, transform_indices = @transform_11, window_bounds = array<i64: 1, 32>}, {pipeline_mode = #tpu.pipeline_mode<synchronous>, transform_indices = @transform_12, window_bounds = array<i64: 1, 32>}, {pipeline_mode = #tpu.pipeline_mode<synchronous>, transform_indices = @transform_13, window_bounds = array<i64: 1, 32>}, {pipeline_mode = #tpu.pipeline_mode<synchronous>, transform_indices = @transform_14, window_bounds = array<i64: 32, 32>}, {pipeline_mode = #tpu.pipeline_mode<synchronous>, transform_indices = @transform_15, window_bounds = array<i64: 32, 32>}, {pipeline_mode = #tpu.pipeline_mode<synchronous>, transform_indices = @transform_16, window_bounds = array<i64: 32, 32>}, {pipeline_mode = #tpu.pipeline_mode<synchronous>, transform_indices = @transform_17, window_bounds = array<i64: 32, 32>}, {pipeline_mode = #tpu.pipeline_mode<synchronous>, transform_indices = @transform_18, window_bounds = array<i64: 32, 32>}, {pipeline_mode = #tpu.pipeline_mode<synchronous>, transform_indices = @transform_19, window_bounds = array<i64: 32, 32>}, {pipeline_mode = #tpu.pipeline_mode<synchronous>, transform_indices = @transform_20, window_bounds = array<i64: 32, 32>}, {pipeline_mode = #tpu.pipeline_mode<synchronous>, transform_indices = @transform_21, window_bounds = array<i64: 32, 32>}, {pipeline_mode = #tpu.pipeline_mode<synchronous>, transform_indices = @transform_22, window_bounds = array<i64: 1, 32>}, {pipeline_mode = #tpu.pipeline_mode<synchronous>, transform_indices = @transform_23, window_bounds = array<i64: 1, 32>}, {pipeline_mode = #tpu.pipeline_mode<synchronous>, transform_indices = @transform_24, window_bounds = array<i64: 1, 32>}, {pipeline_mode = #tpu.pipeline_mode<synchronous>, transform_indices = @transform_25, window_bounds = array<i64: 1, 32>}, {transform_indices = @transform_26, window_bounds = array<i64: 8, 32>}]} {
    %c0 = arith.constant 0 : index
    %c0_0 = arith.constant 0 : index
    %0 = vector.load %arg2[%c0, %c0_0] : memref<8x1xi32, #tpu.memory_space<vmem>>, vector<8x1xi32>
    %c0_1 = arith.constant 0 : index
    %c0_2 = arith.constant 0 : index
    %1 = vector.load %arg3[%c0_1, %c0_2] : memref<16x32xf32, #tpu.memory_space<vmem>>, vector<16x32xf32>
    %c0_3 = arith.constant 0 : index
    %c0_4 = arith.constant 0 : index
    %2 = vector.load %arg4[%c0_3, %c0_4] : memref<16x32xf32, #tpu.memory_space<vmem>>, vector<16x32xf32>
    %c0_5 = arith.constant 0 : index
    %c0_6 = arith.constant 0 : index
    %3 = vector.load %arg5[%c0_5, %c0_6] : memref<16x32xf32, #tpu.memory_space<vmem>>, vector<16x32xf32>
    %c0_7 = arith.constant 0 : index
    %c0_8 = arith.constant 0 : index
    %4 = vector.load %arg6[%c0_7, %c0_8] : memref<16x32xf32, #tpu.memory_space<vmem>>, vector<16x32xf32>
    %c0_9 = arith.constant 0 : index
    %c0_10 = arith.constant 0 : index
    %5 = vector.load %arg15[%c0_9, %c0_10] : memref<32x32xf32, #tpu.memory_space<vmem>>, vector<32x32xf32>
    %c0_11 = arith.constant 0 : index
    %c0_12 = arith.constant 0 : index
    %6 = vector.load %arg16[%c0_11, %c0_12] : memref<32x32xf32, #tpu.memory_space<vmem>>, vector<32x32xf32>
    %c0_13 = arith.constant 0 : index
    %c0_14 = arith.constant 0 : index
    %7 = vector.load %arg17[%c0_13, %c0_14] : memref<32x32xf32, #tpu.memory_space<vmem>>, vector<32x32xf32>
    %c0_15 = arith.constant 0 : index
    %c0_16 = arith.constant 0 : index
    %8 = vector.load %arg18[%c0_15, %c0_16] : memref<32x32xf32, #tpu.memory_space<vmem>>, vector<32x32xf32>
    %c0_17 = arith.constant 0 : index
    %c0_18 = arith.constant 0 : index
    %9 = vector.load %arg7[%c0_17, %c0_18] : memref<32x32xf32, #tpu.memory_space<vmem>>, vector<32x32xf32>
    %c0_19 = arith.constant 0 : index
    %c0_20 = arith.constant 0 : index
    %10 = vector.load %arg8[%c0_19, %c0_20] : memref<32x32xf32, #tpu.memory_space<vmem>>, vector<32x32xf32>
    %c0_21 = arith.constant 0 : index
    %c0_22 = arith.constant 0 : index
    %11 = vector.load %arg9[%c0_21, %c0_22] : memref<32x32xf32, #tpu.memory_space<vmem>>, vector<32x32xf32>
    %c0_23 = arith.constant 0 : index
    %c0_24 = arith.constant 0 : index
    %12 = vector.load %arg10[%c0_23, %c0_24] : memref<32x32xf32, #tpu.memory_space<vmem>>, vector<32x32xf32>
    %c0_25 = arith.constant 0 : index
    %c0_26 = arith.constant 0 : index
    %13 = vector.load %arg19[%c0_25, %c0_26] : memref<32x32xf32, #tpu.memory_space<vmem>>, vector<32x32xf32>
    %c0_27 = arith.constant 0 : index
    %c0_28 = arith.constant 0 : index
    %14 = vector.load %arg20[%c0_27, %c0_28] : memref<32x32xf32, #tpu.memory_space<vmem>>, vector<32x32xf32>
    %c0_29 = arith.constant 0 : index
    %c0_30 = arith.constant 0 : index
    %15 = vector.load %arg21[%c0_29, %c0_30] : memref<32x32xf32, #tpu.memory_space<vmem>>, vector<32x32xf32>
    %c0_31 = arith.constant 0 : index
    %c0_32 = arith.constant 0 : index
    %16 = vector.load %arg22[%c0_31, %c0_32] : memref<32x32xf32, #tpu.memory_space<vmem>>, vector<32x32xf32>
    %c0_33 = arith.constant 0 : index
    %c0_34 = arith.constant 0 : index
    %17 = vector.load %arg11[%c0_33, %c0_34] : memref<1x32xf32, #tpu.memory_space<vmem>>, vector<1x32xf32>
    %18 = vector.shape_cast %17 : vector<1x32xf32> to vector<1x32xf32>
    %19 = vector.broadcast %18 : vector<1x32xf32> to vector<8x32xf32>
    %c0_35 = arith.constant 0 : index
    %c0_36 = arith.constant 0 : index
    %20 = vector.load %arg12[%c0_35, %c0_36] : memref<1x32xf32, #tpu.memory_space<vmem>>, vector<1x32xf32>
    %21 = vector.shape_cast %20 : vector<1x32xf32> to vector<1x32xf32>
    %22 = vector.broadcast %21 : vector<1x32xf32> to vector<8x32xf32>
    %c0_37 = arith.constant 0 : index
    %c0_38 = arith.constant 0 : index
    %23 = vector.load %arg13[%c0_37, %c0_38] : memref<1x32xf32, #tpu.memory_space<vmem>>, vector<1x32xf32>
    %24 = vector.shape_cast %23 : vector<1x32xf32> to vector<1x32xf32>
    %25 = vector.broadcast %24 : vector<1x32xf32> to vector<8x32xf32>
    %c0_39 = arith.constant 0 : index
    %c0_40 = arith.constant 0 : index
    %26 = vector.load %arg14[%c0_39, %c0_40] : memref<1x32xf32, #tpu.memory_space<vmem>>, vector<1x32xf32>
    %27 = vector.shape_cast %26 : vector<1x32xf32> to vector<1x32xf32>
    %28 = vector.broadcast %27 : vector<1x32xf32> to vector<8x32xf32>
    %c0_41 = arith.constant 0 : index
    %c0_42 = arith.constant 0 : index
    %29 = vector.load %arg23[%c0_41, %c0_42] : memref<1x32xf32, #tpu.memory_space<vmem>>, vector<1x32xf32>
    %30 = vector.shape_cast %29 : vector<1x32xf32> to vector<1x32xf32>
    %31 = vector.broadcast %30 : vector<1x32xf32> to vector<8x32xf32>
    %c0_43 = arith.constant 0 : index
    %c0_44 = arith.constant 0 : index
    %32 = vector.load %arg24[%c0_43, %c0_44] : memref<1x32xf32, #tpu.memory_space<vmem>>, vector<1x32xf32>
    %33 = vector.shape_cast %32 : vector<1x32xf32> to vector<1x32xf32>
    %34 = vector.broadcast %33 : vector<1x32xf32> to vector<8x32xf32>
    %c0_45 = arith.constant 0 : index
    %c0_46 = arith.constant 0 : index
    %35 = vector.load %arg25[%c0_45, %c0_46] : memref<1x32xf32, #tpu.memory_space<vmem>>, vector<1x32xf32>
    %36 = vector.shape_cast %35 : vector<1x32xf32> to vector<1x32xf32>
    %37 = vector.broadcast %36 : vector<1x32xf32> to vector<8x32xf32>
    %c0_47 = arith.constant 0 : index
    %c0_48 = arith.constant 0 : index
    %38 = vector.load %arg26[%c0_47, %c0_48] : memref<1x32xf32, #tpu.memory_space<vmem>>, vector<1x32xf32>
    %39 = vector.shape_cast %38 : vector<1x32xf32> to vector<1x32xf32>
    %40 = vector.broadcast %39 : vector<1x32xf32> to vector<8x32xf32>
    %cst = arith.constant 0.000000e+00 : f32
    %41 = vector.broadcast %cst : f32 to vector<8x32xf32>
    %cst_49 = arith.constant 0.000000e+00 : f32
    %42 = vector.broadcast %cst_49 : f32 to vector<8x32xf32>
    %cst_50 = arith.constant 0.000000e+00 : f32
    %43 = vector.broadcast %cst_50 : f32 to vector<8x32xf32>
    %cst_51 = arith.constant 0.000000e+00 : f32
    %44 = vector.broadcast %cst_51 : f32 to vector<8x32xf32>
    %cst_52 = arith.constant 0.000000e+00 : f32
    %45 = vector.broadcast %cst_52 : f32 to vector<8x32xf32>
    %c0_53 = arith.constant 0 : index
    %c0_54 = arith.constant 0 : index
    %c0_55 = arith.constant 0 : index
    %46 = vector.load %arg1[%c0_53, %c0_54, %c0_55] : memref<8x8x16xf32, #tpu.memory_space<vmem>>, vector<1x8x16xf32>
    %47 = vector.shape_cast %46 : vector<1x8x16xf32> to vector<8x16xf32>
    %cst_56 = arith.constant dense<0.000000e+00> : vector<8x32xf32>
    %48 = tpu.matmul %47, %1, %cst_56 {dimension_numbers = #tpu.dot_dimension_numbers<[1], [0], [0], [1], [0, 0, 1, 1], [], []>} : vector<8x16xf32>, vector<16x32xf32>, vector<8x32xf32> -> vector<8x32xf32>
    %cst_57 = arith.constant dense<0.000000e+00> : vector<8x32xf32>
    %49 = tpu.matmul %41, %9, %cst_57 {dimension_numbers = #tpu.dot_dimension_numbers<[1], [0], [0], [1], [0, 0, 1, 1], [], []>} : vector<8x32xf32>, vector<32x32xf32>, vector<8x32xf32> -> vector<8x32xf32>
    %50 = arith.addf %48, %49 : vector<8x32xf32>
    %51 = arith.addf %50, %19 : vector<8x32xf32>
    %cst_58 = arith.constant dense<0.000000e+00> : vector<8x32xf32>
    %52 = tpu.matmul %47, %2, %cst_58 {dimension_numbers = #tpu.dot_dimension_numbers<[1], [0], [0], [1], [0, 0, 1, 1], [], []>} : vector<8x16xf32>, vector<16x32xf32>, vector<8x32xf32> -> vector<8x32xf32>
    %cst_59 = arith.constant dense<0.000000e+00> : vector<8x32xf32>
    %53 = tpu.matmul %41, %10, %cst_59 {dimension_numbers = #tpu.dot_dimension_numbers<[1], [0], [0], [1], [0, 0, 1, 1], [], []>} : vector<8x32xf32>, vector<32x32xf32>, vector<8x32xf32> -> vector<8x32xf32>
    %54 = arith.addf %52, %53 : vector<8x32xf32>
    %55 = arith.addf %54, %22 : vector<8x32xf32>
    %cst_60 = arith.constant dense<0.000000e+00> : vector<8x32xf32>
    %56 = tpu.matmul %47, %3, %cst_60 {dimension_numbers = #tpu.dot_dimension_numbers<[1], [0], [0], [1], [0, 0, 1, 1], [], []>} : vector<8x16xf32>, vector<16x32xf32>, vector<8x32xf32> -> vector<8x32xf32>
    %cst_61 = arith.constant dense<0.000000e+00> : vector<8x32xf32>
    %57 = tpu.matmul %41, %11, %cst_61 {dimension_numbers = #tpu.dot_dimension_numbers<[1], [0], [0], [1], [0, 0, 1, 1], [], []>} : vector<8x32xf32>, vector<32x32xf32>, vector<8x32xf32> -> vector<8x32xf32>
    %58 = arith.addf %56, %57 : vector<8x32xf32>
    %59 = arith.addf %58, %25 : vector<8x32xf32>
    %cst_62 = arith.constant dense<0.000000e+00> : vector<8x32xf32>
    %60 = tpu.matmul %47, %4, %cst_62 {dimension_numbers = #tpu.dot_dimension_numbers<[1], [0], [0], [1], [0, 0, 1, 1], [], []>} : vector<8x16xf32>, vector<16x32xf32>, vector<8x32xf32> -> vector<8x32xf32>
    %cst_63 = arith.constant dense<0.000000e+00> : vector<8x32xf32>
    %61 = tpu.matmul %41, %12, %cst_63 {dimension_numbers = #tpu.dot_dimension_numbers<[1], [0], [0], [1], [0, 0, 1, 1], [], []>} : vector<8x32xf32>, vector<32x32xf32>, vector<8x32xf32> -> vector<8x32xf32>
    %62 = arith.addf %60, %61 : vector<8x32xf32>
    %63 = arith.addf %62, %28 : vector<8x32xf32>
    %64 = arith.negf %51 : vector<8x32xf32>
    %65 = math.exp %64 : vector<8x32xf32>
    %cst_64 = arith.constant 1.000000e+00 : f32
    %66 = vector.broadcast %cst_64 : f32 to vector<8x32xf32>
    %67 = arith.addf %66, %65 : vector<8x32xf32>
    %68 = arith.divf %66, %67 : vector<8x32xf32>
    %69 = arith.negf %55 : vector<8x32xf32>
    %70 = math.exp %69 : vector<8x32xf32>
    %cst_65 = arith.constant 1.000000e+00 : f32
    %71 = vector.broadcast %cst_65 : f32 to vector<8x32xf32>
    %72 = arith.addf %71, %70 : vector<8x32xf32>
    %73 = arith.divf %71, %72 : vector<8x32xf32>
    %74 = math.tanh %59 : vector<8x32xf32>
    %75 = arith.negf %63 : vector<8x32xf32>
    %76 = math.exp %75 : vector<8x32xf32>
    %cst_66 = arith.constant 1.000000e+00 : f32
    %77 = vector.broadcast %cst_66 : f32 to vector<8x32xf32>
    %78 = arith.addf %77, %76 : vector<8x32xf32>
    %79 = arith.divf %77, %78 : vector<8x32xf32>
    %80 = arith.mulf %73, %43 : vector<8x32xf32>
    %81 = arith.mulf %68, %74 : vector<8x32xf32>
    %82 = arith.addf %80, %81 : vector<8x32xf32>
    %83 = math.tanh %82 : vector<8x32xf32>
    %84 = arith.mulf %79, %83 : vector<8x32xf32>
    %cst_67 = arith.constant dense<0.000000e+00> : vector<8x32xf32>
    %85 = tpu.matmul %84, %5, %cst_67 {dimension_numbers = #tpu.dot_dimension_numbers<[1], [0], [0], [1], [0, 0, 1, 1], [], []>} : vector<8x32xf32>, vector<32x32xf32>, vector<8x32xf32> -> vector<8x32xf32>
    %cst_68 = arith.constant dense<0.000000e+00> : vector<8x32xf32>
    %86 = tpu.matmul %42, %13, %cst_68 {dimension_numbers = #tpu.dot_dimension_numbers<[1], [0], [0], [1], [0, 0, 1, 1], [], []>} : vector<8x32xf32>, vector<32x32xf32>, vector<8x32xf32> -> vector<8x32xf32>
    %87 = arith.addf %85, %86 : vector<8x32xf32>
    %88 = arith.addf %87, %31 : vector<8x32xf32>
    %cst_69 = arith.constant dense<0.000000e+00> : vector<8x32xf32>
    %89 = tpu.matmul %84, %6, %cst_69 {dimension_numbers = #tpu.dot_dimension_numbers<[1], [0], [0], [1], [0, 0, 1, 1], [], []>} : vector<8x32xf32>, vector<32x32xf32>, vector<8x32xf32> -> vector<8x32xf32>
    %cst_70 = arith.constant dense<0.000000e+00> : vector<8x32xf32>
    %90 = tpu.matmul %42, %14, %cst_70 {dimension_numbers = #tpu.dot_dimension_numbers<[1], [0], [0], [1], [0, 0, 1, 1], [], []>} : vector<8x32xf32>, vector<32x32xf32>, vector<8x32xf32> -> vector<8x32xf32>
    %91 = arith.addf %89, %90 : vector<8x32xf32>
    %92 = arith.addf %91, %34 : vector<8x32xf32>
    %cst_71 = arith.constant dense<0.000000e+00> : vector<8x32xf32>
    %93 = tpu.matmul %84, %7, %cst_71 {dimension_numbers = #tpu.dot_dimension_numbers<[1], [0], [0], [1], [0, 0, 1, 1], [], []>} : vector<8x32xf32>, vector<32x32xf32>, vector<8x32xf32> -> vector<8x32xf32>
    %cst_72 = arith.constant dense<0.000000e+00> : vector<8x32xf32>
    %94 = tpu.matmul %42, %15, %cst_72 {dimension_numbers = #tpu.dot_dimension_numbers<[1], [0], [0], [1], [0, 0, 1, 1], [], []>} : vector<8x32xf32>, vector<32x32xf32>, vector<8x32xf32> -> vector<8x32xf32>
    %95 = arith.addf %93, %94 : vector<8x32xf32>
    %96 = arith.addf %95, %37 : vector<8x32xf32>
    %cst_73 = arith.constant dense<0.000000e+00> : vector<8x32xf32>
    %97 = tpu.matmul %84, %8, %cst_73 {dimension_numbers = #tpu.dot_dimension_numbers<[1], [0], [0], [1], [0, 0, 1, 1], [], []>} : vector<8x32xf32>, vector<32x32xf32>, vector<8x32xf32> -> vector<8x32xf32>
    %cst_74 = arith.constant dense<0.000000e+00> : vector<8x32xf32>
    %98 = tpu.matmul %42, %16, %cst_74 {dimension_numbers = #tpu.dot_dimension_numbers<[1], [0], [0], [1], [0, 0, 1, 1], [], []>} : vector<8x32xf32>, vector<32x32xf32>, vector<8x32xf32> -> vector<8x32xf32>
    %99 = arith.addf %97, %98 : vector<8x32xf32>
    %100 = arith.addf %99, %40 : vector<8x32xf32>
    %101 = arith.negf %88 : vector<8x32xf32>
    %102 = math.exp %101 : vector<8x32xf32>
    %cst_75 = arith.constant 1.000000e+00 : f32
    %103 = vector.broadcast %cst_75 : f32 to vector<8x32xf32>
    %104 = arith.addf %103, %102 : vector<8x32xf32>
    %105 = arith.divf %103, %104 : vector<8x32xf32>
    %106 = arith.negf %92 : vector<8x32xf32>
    %107 = math.exp %106 : vector<8x32xf32>
    %cst_76 = arith.constant 1.000000e+00 : f32
    %108 = vector.broadcast %cst_76 : f32 to vector<8x32xf32>
    %109 = arith.addf %108, %107 : vector<8x32xf32>
    %110 = arith.divf %108, %109 : vector<8x32xf32>
    %111 = math.tanh %96 : vector<8x32xf32>
    %112 = arith.negf %100 : vector<8x32xf32>
    %113 = math.exp %112 : vector<8x32xf32>
    %cst_77 = arith.constant 1.000000e+00 : f32
    %114 = vector.broadcast %cst_77 : f32 to vector<8x32xf32>
    %115 = arith.addf %114, %113 : vector<8x32xf32>
    %116 = arith.divf %114, %115 : vector<8x32xf32>
    %117 = arith.mulf %110, %44 : vector<8x32xf32>
    %118 = arith.mulf %105, %111 : vector<8x32xf32>
    %119 = arith.addf %117, %118 : vector<8x32xf32>
    %120 = math.tanh %119 : vector<8x32xf32>
    %121 = arith.mulf %116, %120 : vector<8x32xf32>
    %c0_i32 = arith.constant 0 : i32
    %122 = vector.broadcast %c0_i32 : i32 to vector<8x1xi32>
    %123 = arith.cmpi eq, %0, %122 : vector<8x1xi32>
    %124 = vector.shape_cast %123 : vector<8x1xi1> to vector<8x1xi1>
    %125 = vector.broadcast %124 : vector<8x1xi1> to vector<8x32xi1>
    %126 = arith.select %125, %121, %45 : vector<8x32xi1>, vector<8x32xf32>
    %c1 = arith.constant 1 : index
    %c0_78 = arith.constant 0 : index
    %c0_79 = arith.constant 0 : index
    %127 = vector.load %arg1[%c1, %c0_78, %c0_79] : memref<8x8x16xf32, #tpu.memory_space<vmem>>, vector<1x8x16xf32>
    %128 = vector.shape_cast %127 : vector<1x8x16xf32> to vector<8x16xf32>
    %cst_80 = arith.constant dense<0.000000e+00> : vector<8x32xf32>
    %129 = tpu.matmul %128, %1, %cst_80 {dimension_numbers = #tpu.dot_dimension_numbers<[1], [0], [0], [1], [0, 0, 1, 1], [], []>} : vector<8x16xf32>, vector<16x32xf32>, vector<8x32xf32> -> vector<8x32xf32>
    %cst_81 = arith.constant dense<0.000000e+00> : vector<8x32xf32>
    %130 = tpu.matmul %84, %9, %cst_81 {dimension_numbers = #tpu.dot_dimension_numbers<[1], [0], [0], [1], [0, 0, 1, 1], [], []>} : vector<8x32xf32>, vector<32x32xf32>, vector<8x32xf32> -> vector<8x32xf32>
    %131 = arith.addf %129, %130 : vector<8x32xf32>
    %132 = arith.addf %131, %19 : vector<8x32xf32>
    %cst_82 = arith.constant dense<0.000000e+00> : vector<8x32xf32>
    %133 = tpu.matmul %128, %2, %cst_82 {dimension_numbers = #tpu.dot_dimension_numbers<[1], [0], [0], [1], [0, 0, 1, 1], [], []>} : vector<8x16xf32>, vector<16x32xf32>, vector<8x32xf32> -> vector<8x32xf32>
    %cst_83 = arith.constant dense<0.000000e+00> : vector<8x32xf32>
    %134 = tpu.matmul %84, %10, %cst_83 {dimension_numbers = #tpu.dot_dimension_numbers<[1], [0], [0], [1], [0, 0, 1, 1], [], []>} : vector<8x32xf32>, vector<32x32xf32>, vector<8x32xf32> -> vector<8x32xf32>
    %135 = arith.addf %133, %134 : vector<8x32xf32>
    %136 = arith.addf %135, %22 : vector<8x32xf32>
    %cst_84 = arith.constant dense<0.000000e+00> : vector<8x32xf32>
    %137 = tpu.matmul %128, %3, %cst_84 {dimension_numbers = #tpu.dot_dimension_numbers<[1], [0], [0], [1], [0, 0, 1, 1], [], []>} : vector<8x16xf32>, vector<16x32xf32>, vector<8x32xf32> -> vector<8x32xf32>
    %cst_85 = arith.constant dense<0.000000e+00> : vector<8x32xf32>
    %138 = tpu.matmul %84, %11, %cst_85 {dimension_numbers = #tpu.dot_dimension_numbers<[1], [0], [0], [1], [0, 0, 1, 1], [], []>} : vector<8x32xf32>, vector<32x32xf32>, vector<8x32xf32> -> vector<8x32xf32>
    %139 = arith.addf %137, %138 : vector<8x32xf32>
    %140 = arith.addf %139, %25 : vector<8x32xf32>
    %cst_86 = arith.constant dense<0.000000e+00> : vector<8x32xf32>
    %141 = tpu.matmul %128, %4, %cst_86 {dimension_numbers = #tpu.dot_dimension_numbers<[1], [0], [0], [1], [0, 0, 1, 1], [], []>} : vector<8x16xf32>, vector<16x32xf32>, vector<8x32xf32> -> vector<8x32xf32>
    %cst_87 = arith.constant dense<0.000000e+00> : vector<8x32xf32>
    %142 = tpu.matmul %84, %12, %cst_87 {dimension_numbers = #tpu.dot_dimension_numbers<[1], [0], [0], [1], [0, 0, 1, 1], [], []>} : vector<8x32xf32>, vector<32x32xf32>, vector<8x32xf32> -> vector<8x32xf32>
    %143 = arith.addf %141, %142 : vector<8x32xf32>
    %144 = arith.addf %143, %28 : vector<8x32xf32>
    %145 = arith.negf %132 : vector<8x32xf32>
    %146 = math.exp %145 : vector<8x32xf32>
    %cst_88 = arith.constant 1.000000e+00 : f32
    %147 = vector.broadcast %cst_88 : f32 to vector<8x32xf32>
    %148 = arith.addf %147, %146 : vector<8x32xf32>
    %149 = arith.divf %147, %148 : vector<8x32xf32>
    %150 = arith.negf %136 : vector<8x32xf32>
    %151 = math.exp %150 : vector<8x32xf32>
    %cst_89 = arith.constant 1.000000e+00 : f32
    %152 = vector.broadcast %cst_89 : f32 to vector<8x32xf32>
    %153 = arith.addf %152, %151 : vector<8x32xf32>
    %154 = arith.divf %152, %153 : vector<8x32xf32>
    %155 = math.tanh %140 : vector<8x32xf32>
    %156 = arith.negf %144 : vector<8x32xf32>
    %157 = math.exp %156 : vector<8x32xf32>
    %cst_90 = arith.constant 1.000000e+00 : f32
    %158 = vector.broadcast %cst_90 : f32 to vector<8x32xf32>
    %159 = arith.addf %158, %157 : vector<8x32xf32>
    %160 = arith.divf %158, %159 : vector<8x32xf32>
    %161 = arith.mulf %154, %82 : vector<8x32xf32>
    %162 = arith.mulf %149, %155 : vector<8x32xf32>
    %163 = arith.addf %161, %162 : vector<8x32xf32>
    %164 = math.tanh %163 : vector<8x32xf32>
    %165 = arith.mulf %160, %164 : vector<8x32xf32>
    %cst_91 = arith.constant dense<0.000000e+00> : vector<8x32xf32>
    %166 = tpu.matmul %165, %5, %cst_91 {dimension_numbers = #tpu.dot_dimension_numbers<[1], [0], [0], [1], [0, 0, 1, 1], [], []>} : vector<8x32xf32>, vector<32x32xf32>, vector<8x32xf32> -> vector<8x32xf32>
    %cst_92 = arith.constant dense<0.000000e+00> : vector<8x32xf32>
    %167 = tpu.matmul %121, %13, %cst_92 {dimension_numbers = #tpu.dot_dimension_numbers<[1], [0], [0], [1], [0, 0, 1, 1], [], []>} : vector<8x32xf32>, vector<32x32xf32>, vector<8x32xf32> -> vector<8x32xf32>
    %168 = arith.addf %166, %167 : vector<8x32xf32>
    %169 = arith.addf %168, %31 : vector<8x32xf32>
    %cst_93 = arith.constant dense<0.000000e+00> : vector<8x32xf32>
    %170 = tpu.matmul %165, %6, %cst_93 {dimension_numbers = #tpu.dot_dimension_numbers<[1], [0], [0], [1], [0, 0, 1, 1], [], []>} : vector<8x32xf32>, vector<32x32xf32>, vector<8x32xf32> -> vector<8x32xf32>
    %cst_94 = arith.constant dense<0.000000e+00> : vector<8x32xf32>
    %171 = tpu.matmul %121, %14, %cst_94 {dimension_numbers = #tpu.dot_dimension_numbers<[1], [0], [0], [1], [0, 0, 1, 1], [], []>} : vector<8x32xf32>, vector<32x32xf32>, vector<8x32xf32> -> vector<8x32xf32>
    %172 = arith.addf %170, %171 : vector<8x32xf32>
    %173 = arith.addf %172, %34 : vector<8x32xf32>
    %cst_95 = arith.constant dense<0.000000e+00> : vector<8x32xf32>
    %174 = tpu.matmul %165, %7, %cst_95 {dimension_numbers = #tpu.dot_dimension_numbers<[1], [0], [0], [1], [0, 0, 1, 1], [], []>} : vector<8x32xf32>, vector<32x32xf32>, vector<8x32xf32> -> vector<8x32xf32>
    %cst_96 = arith.constant dense<0.000000e+00> : vector<8x32xf32>
    %175 = tpu.matmul %121, %15, %cst_96 {dimension_numbers = #tpu.dot_dimension_numbers<[1], [0], [0], [1], [0, 0, 1, 1], [], []>} : vector<8x32xf32>, vector<32x32xf32>, vector<8x32xf32> -> vector<8x32xf32>
    %176 = arith.addf %174, %175 : vector<8x32xf32>
    %177 = arith.addf %176, %37 : vector<8x32xf32>
    %cst_97 = arith.constant dense<0.000000e+00> : vector<8x32xf32>
    %178 = tpu.matmul %165, %8, %cst_97 {dimension_numbers = #tpu.dot_dimension_numbers<[1], [0], [0], [1], [0, 0, 1, 1], [], []>} : vector<8x32xf32>, vector<32x32xf32>, vector<8x32xf32> -> vector<8x32xf32>
    %cst_98 = arith.constant dense<0.000000e+00> : vector<8x32xf32>
    %179 = tpu.matmul %121, %16, %cst_98 {dimension_numbers = #tpu.dot_dimension_numbers<[1], [0], [0], [1], [0, 0, 1, 1], [], []>} : vector<8x32xf32>, vector<32x32xf32>, vector<8x32xf32> -> vector<8x32xf32>
    %180 = arith.addf %178, %179 : vector<8x32xf32>
    %181 = arith.addf %180, %40 : vector<8x32xf32>
    %182 = arith.negf %169 : vector<8x32xf32>
    %183 = math.exp %182 : vector<8x32xf32>
    %cst_99 = arith.constant 1.000000e+00 : f32
    %184 = vector.broadcast %cst_99 : f32 to vector<8x32xf32>
    %185 = arith.addf %184, %183 : vector<8x32xf32>
    %186 = arith.divf %184, %185 : vector<8x32xf32>
    %187 = arith.negf %173 : vector<8x32xf32>
    %188 = math.exp %187 : vector<8x32xf32>
    %cst_100 = arith.constant 1.000000e+00 : f32
    %189 = vector.broadcast %cst_100 : f32 to vector<8x32xf32>
    %190 = arith.addf %189, %188 : vector<8x32xf32>
    %191 = arith.divf %189, %190 : vector<8x32xf32>
    %192 = math.tanh %177 : vector<8x32xf32>
    %193 = arith.negf %181 : vector<8x32xf32>
    %194 = math.exp %193 : vector<8x32xf32>
    %cst_101 = arith.constant 1.000000e+00 : f32
    %195 = vector.broadcast %cst_101 : f32 to vector<8x32xf32>
    %196 = arith.addf %195, %194 : vector<8x32xf32>
    %197 = arith.divf %195, %196 : vector<8x32xf32>
    %198 = arith.mulf %191, %119 : vector<8x32xf32>
    %199 = arith.mulf %186, %192 : vector<8x32xf32>
    %200 = arith.addf %198, %199 : vector<8x32xf32>
    %201 = math.tanh %200 : vector<8x32xf32>
    %202 = arith.mulf %197, %201 : vector<8x32xf32>
    %c1_i32 = arith.constant 1 : i32
    %203 = vector.broadcast %c1_i32 : i32 to vector<8x1xi32>
    %204 = arith.cmpi eq, %0, %203 : vector<8x1xi32>
    %205 = vector.shape_cast %204 : vector<8x1xi1> to vector<8x1xi1>
    %206 = vector.broadcast %205 : vector<8x1xi1> to vector<8x32xi1>
    %207 = arith.select %206, %202, %126 : vector<8x32xi1>, vector<8x32xf32>
    %c2 = arith.constant 2 : index
    %c0_102 = arith.constant 0 : index
    %c0_103 = arith.constant 0 : index
    %208 = vector.load %arg1[%c2, %c0_102, %c0_103] : memref<8x8x16xf32, #tpu.memory_space<vmem>>, vector<1x8x16xf32>
    %209 = vector.shape_cast %208 : vector<1x8x16xf32> to vector<8x16xf32>
    %cst_104 = arith.constant dense<0.000000e+00> : vector<8x32xf32>
    %210 = tpu.matmul %209, %1, %cst_104 {dimension_numbers = #tpu.dot_dimension_numbers<[1], [0], [0], [1], [0, 0, 1, 1], [], []>} : vector<8x16xf32>, vector<16x32xf32>, vector<8x32xf32> -> vector<8x32xf32>
    %cst_105 = arith.constant dense<0.000000e+00> : vector<8x32xf32>
    %211 = tpu.matmul %165, %9, %cst_105 {dimension_numbers = #tpu.dot_dimension_numbers<[1], [0], [0], [1], [0, 0, 1, 1], [], []>} : vector<8x32xf32>, vector<32x32xf32>, vector<8x32xf32> -> vector<8x32xf32>
    %212 = arith.addf %210, %211 : vector<8x32xf32>
    %213 = arith.addf %212, %19 : vector<8x32xf32>
    %cst_106 = arith.constant dense<0.000000e+00> : vector<8x32xf32>
    %214 = tpu.matmul %209, %2, %cst_106 {dimension_numbers = #tpu.dot_dimension_numbers<[1], [0], [0], [1], [0, 0, 1, 1], [], []>} : vector<8x16xf32>, vector<16x32xf32>, vector<8x32xf32> -> vector<8x32xf32>
    %cst_107 = arith.constant dense<0.000000e+00> : vector<8x32xf32>
    %215 = tpu.matmul %165, %10, %cst_107 {dimension_numbers = #tpu.dot_dimension_numbers<[1], [0], [0], [1], [0, 0, 1, 1], [], []>} : vector<8x32xf32>, vector<32x32xf32>, vector<8x32xf32> -> vector<8x32xf32>
    %216 = arith.addf %214, %215 : vector<8x32xf32>
    %217 = arith.addf %216, %22 : vector<8x32xf32>
    %cst_108 = arith.constant dense<0.000000e+00> : vector<8x32xf32>
    %218 = tpu.matmul %209, %3, %cst_108 {dimension_numbers = #tpu.dot_dimension_numbers<[1], [0], [0], [1], [0, 0, 1, 1], [], []>} : vector<8x16xf32>, vector<16x32xf32>, vector<8x32xf32> -> vector<8x32xf32>
    %cst_109 = arith.constant dense<0.000000e+00> : vector<8x32xf32>
    %219 = tpu.matmul %165, %11, %cst_109 {dimension_numbers = #tpu.dot_dimension_numbers<[1], [0], [0], [1], [0, 0, 1, 1], [], []>} : vector<8x32xf32>, vector<32x32xf32>, vector<8x32xf32> -> vector<8x32xf32>
    %220 = arith.addf %218, %219 : vector<8x32xf32>
    %221 = arith.addf %220, %25 : vector<8x32xf32>
    %cst_110 = arith.constant dense<0.000000e+00> : vector<8x32xf32>
    %222 = tpu.matmul %209, %4, %cst_110 {dimension_numbers = #tpu.dot_dimension_numbers<[1], [0], [0], [1], [0, 0, 1, 1], [], []>} : vector<8x16xf32>, vector<16x32xf32>, vector<8x32xf32> -> vector<8x32xf32>
    %cst_111 = arith.constant dense<0.000000e+00> : vector<8x32xf32>
    %223 = tpu.matmul %165, %12, %cst_111 {dimension_numbers = #tpu.dot_dimension_numbers<[1], [0], [0], [1], [0, 0, 1, 1], [], []>} : vector<8x32xf32>, vector<32x32xf32>, vector<8x32xf32> -> vector<8x32xf32>
    %224 = arith.addf %222, %223 : vector<8x32xf32>
    %225 = arith.addf %224, %28 : vector<8x32xf32>
    %226 = arith.negf %213 : vector<8x32xf32>
    %227 = math.exp %226 : vector<8x32xf32>
    %cst_112 = arith.constant 1.000000e+00 : f32
    %228 = vector.broadcast %cst_112 : f32 to vector<8x32xf32>
    %229 = arith.addf %228, %227 : vector<8x32xf32>
    %230 = arith.divf %228, %229 : vector<8x32xf32>
    %231 = arith.negf %217 : vector<8x32xf32>
    %232 = math.exp %231 : vector<8x32xf32>
    %cst_113 = arith.constant 1.000000e+00 : f32
    %233 = vector.broadcast %cst_113 : f32 to vector<8x32xf32>
    %234 = arith.addf %233, %232 : vector<8x32xf32>
    %235 = arith.divf %233, %234 : vector<8x32xf32>
    %236 = math.tanh %221 : vector<8x32xf32>
    %237 = arith.negf %225 : vector<8x32xf32>
    %238 = math.exp %237 : vector<8x32xf32>
    %cst_114 = arith.constant 1.000000e+00 : f32
    %239 = vector.broadcast %cst_114 : f32 to vector<8x32xf32>
    %240 = arith.addf %239, %238 : vector<8x32xf32>
    %241 = arith.divf %239, %240 : vector<8x32xf32>
    %242 = arith.mulf %235, %163 : vector<8x32xf32>
    %243 = arith.mulf %230, %236 : vector<8x32xf32>
    %244 = arith.addf %242, %243 : vector<8x32xf32>
    %245 = math.tanh %244 : vector<8x32xf32>
    %246 = arith.mulf %241, %245 : vector<8x32xf32>
    %cst_115 = arith.constant dense<0.000000e+00> : vector<8x32xf32>
    %247 = tpu.matmul %246, %5, %cst_115 {dimension_numbers = #tpu.dot_dimension_numbers<[1], [0], [0], [1], [0, 0, 1, 1], [], []>} : vector<8x32xf32>, vector<32x32xf32>, vector<8x32xf32> -> vector<8x32xf32>
    %cst_116 = arith.constant dense<0.000000e+00> : vector<8x32xf32>
    %248 = tpu.matmul %202, %13, %cst_116 {dimension_numbers = #tpu.dot_dimension_numbers<[1], [0], [0], [1], [0, 0, 1, 1], [], []>} : vector<8x32xf32>, vector<32x32xf32>, vector<8x32xf32> -> vector<8x32xf32>
    %249 = arith.addf %247, %248 : vector<8x32xf32>
    %250 = arith.addf %249, %31 : vector<8x32xf32>
    %cst_117 = arith.constant dense<0.000000e+00> : vector<8x32xf32>
    %251 = tpu.matmul %246, %6, %cst_117 {dimension_numbers = #tpu.dot_dimension_numbers<[1], [0], [0], [1], [0, 0, 1, 1], [], []>} : vector<8x32xf32>, vector<32x32xf32>, vector<8x32xf32> -> vector<8x32xf32>
    %cst_118 = arith.constant dense<0.000000e+00> : vector<8x32xf32>
    %252 = tpu.matmul %202, %14, %cst_118 {dimension_numbers = #tpu.dot_dimension_numbers<[1], [0], [0], [1], [0, 0, 1, 1], [], []>} : vector<8x32xf32>, vector<32x32xf32>, vector<8x32xf32> -> vector<8x32xf32>
    %253 = arith.addf %251, %252 : vector<8x32xf32>
    %254 = arith.addf %253, %34 : vector<8x32xf32>
    %cst_119 = arith.constant dense<0.000000e+00> : vector<8x32xf32>
    %255 = tpu.matmul %246, %7, %cst_119 {dimension_numbers = #tpu.dot_dimension_numbers<[1], [0], [0], [1], [0, 0, 1, 1], [], []>} : vector<8x32xf32>, vector<32x32xf32>, vector<8x32xf32> -> vector<8x32xf32>
    %cst_120 = arith.constant dense<0.000000e+00> : vector<8x32xf32>
    %256 = tpu.matmul %202, %15, %cst_120 {dimension_numbers = #tpu.dot_dimension_numbers<[1], [0], [0], [1], [0, 0, 1, 1], [], []>} : vector<8x32xf32>, vector<32x32xf32>, vector<8x32xf32> -> vector<8x32xf32>
    %257 = arith.addf %255, %256 : vector<8x32xf32>
    %258 = arith.addf %257, %37 : vector<8x32xf32>
    %cst_121 = arith.constant dense<0.000000e+00> : vector<8x32xf32>
    %259 = tpu.matmul %246, %8, %cst_121 {dimension_numbers = #tpu.dot_dimension_numbers<[1], [0], [0], [1], [0, 0, 1, 1], [], []>} : vector<8x32xf32>, vector<32x32xf32>, vector<8x32xf32> -> vector<8x32xf32>
    %cst_122 = arith.constant dense<0.000000e+00> : vector<8x32xf32>
    %260 = tpu.matmul %202, %16, %cst_122 {dimension_numbers = #tpu.dot_dimension_numbers<[1], [0], [0], [1], [0, 0, 1, 1], [], []>} : vector<8x32xf32>, vector<32x32xf32>, vector<8x32xf32> -> vector<8x32xf32>
    %261 = arith.addf %259, %260 : vector<8x32xf32>
    %262 = arith.addf %261, %40 : vector<8x32xf32>
    %263 = arith.negf %250 : vector<8x32xf32>
    %264 = math.exp %263 : vector<8x32xf32>
    %cst_123 = arith.constant 1.000000e+00 : f32
    %265 = vector.broadcast %cst_123 : f32 to vector<8x32xf32>
    %266 = arith.addf %265, %264 : vector<8x32xf32>
    %267 = arith.divf %265, %266 : vector<8x32xf32>
    %268 = arith.negf %254 : vector<8x32xf32>
    %269 = math.exp %268 : vector<8x32xf32>
    %cst_124 = arith.constant 1.000000e+00 : f32
    %270 = vector.broadcast %cst_124 : f32 to vector<8x32xf32>
    %271 = arith.addf %270, %269 : vector<8x32xf32>
    %272 = arith.divf %270, %271 : vector<8x32xf32>
    %273 = math.tanh %258 : vector<8x32xf32>
    %274 = arith.negf %262 : vector<8x32xf32>
    %275 = math.exp %274 : vector<8x32xf32>
    %cst_125 = arith.constant 1.000000e+00 : f32
    %276 = vector.broadcast %cst_125 : f32 to vector<8x32xf32>
    %277 = arith.addf %276, %275 : vector<8x32xf32>
    %278 = arith.divf %276, %277 : vector<8x32xf32>
    %279 = arith.mulf %272, %200 : vector<8x32xf32>
    %280 = arith.mulf %267, %273 : vector<8x32xf32>
    %281 = arith.addf %279, %280 : vector<8x32xf32>
    %282 = math.tanh %281 : vector<8x32xf32>
    %283 = arith.mulf %278, %282 : vector<8x32xf32>
    %c2_i32 = arith.constant 2 : i32
    %284 = vector.broadcast %c2_i32 : i32 to vector<8x1xi32>
    %285 = arith.cmpi eq, %0, %284 : vector<8x1xi32>
    %286 = vector.shape_cast %285 : vector<8x1xi1> to vector<8x1xi1>
    %287 = vector.broadcast %286 : vector<8x1xi1> to vector<8x32xi1>
    %288 = arith.select %287, %283, %207 : vector<8x32xi1>, vector<8x32xf32>
    %c3 = arith.constant 3 : index
    %c0_126 = arith.constant 0 : index
    %c0_127 = arith.constant 0 : index
    %289 = vector.load %arg1[%c3, %c0_126, %c0_127] : memref<8x8x16xf32, #tpu.memory_space<vmem>>, vector<1x8x16xf32>
    %290 = vector.shape_cast %289 : vector<1x8x16xf32> to vector<8x16xf32>
    %cst_128 = arith.constant dense<0.000000e+00> : vector<8x32xf32>
    %291 = tpu.matmul %290, %1, %cst_128 {dimension_numbers = #tpu.dot_dimension_numbers<[1], [0], [0], [1], [0, 0, 1, 1], [], []>} : vector<8x16xf32>, vector<16x32xf32>, vector<8x32xf32> -> vector<8x32xf32>
    %cst_129 = arith.constant dense<0.000000e+00> : vector<8x32xf32>
    %292 = tpu.matmul %246, %9, %cst_129 {dimension_numbers = #tpu.dot_dimension_numbers<[1], [0], [0], [1], [0, 0, 1, 1], [], []>} : vector<8x32xf32>, vector<32x32xf32>, vector<8x32xf32> -> vector<8x32xf32>
    %293 = arith.addf %291, %292 : vector<8x32xf32>
    %294 = arith.addf %293, %19 : vector<8x32xf32>
    %cst_130 = arith.constant dense<0.000000e+00> : vector<8x32xf32>
    %295 = tpu.matmul %290, %2, %cst_130 {dimension_numbers = #tpu.dot_dimension_numbers<[1], [0], [0], [1], [0, 0, 1, 1], [], []>} : vector<8x16xf32>, vector<16x32xf32>, vector<8x32xf32> -> vector<8x32xf32>
    %cst_131 = arith.constant dense<0.000000e+00> : vector<8x32xf32>
    %296 = tpu.matmul %246, %10, %cst_131 {dimension_numbers = #tpu.dot_dimension_numbers<[1], [0], [0], [1], [0, 0, 1, 1], [], []>} : vector<8x32xf32>, vector<32x32xf32>, vector<8x32xf32> -> vector<8x32xf32>
    %297 = arith.addf %295, %296 : vector<8x32xf32>
    %298 = arith.addf %297, %22 : vector<8x32xf32>
    %cst_132 = arith.constant dense<0.000000e+00> : vector<8x32xf32>
    %299 = tpu.matmul %290, %3, %cst_132 {dimension_numbers = #tpu.dot_dimension_numbers<[1], [0], [0], [1], [0, 0, 1, 1], [], []>} : vector<8x16xf32>, vector<16x32xf32>, vector<8x32xf32> -> vector<8x32xf32>
    %cst_133 = arith.constant dense<0.000000e+00> : vector<8x32xf32>
    %300 = tpu.matmul %246, %11, %cst_133 {dimension_numbers = #tpu.dot_dimension_numbers<[1], [0], [0], [1], [0, 0, 1, 1], [], []>} : vector<8x32xf32>, vector<32x32xf32>, vector<8x32xf32> -> vector<8x32xf32>
    %301 = arith.addf %299, %300 : vector<8x32xf32>
    %302 = arith.addf %301, %25 : vector<8x32xf32>
    %cst_134 = arith.constant dense<0.000000e+00> : vector<8x32xf32>
    %303 = tpu.matmul %290, %4, %cst_134 {dimension_numbers = #tpu.dot_dimension_numbers<[1], [0], [0], [1], [0, 0, 1, 1], [], []>} : vector<8x16xf32>, vector<16x32xf32>, vector<8x32xf32> -> vector<8x32xf32>
    %cst_135 = arith.constant dense<0.000000e+00> : vector<8x32xf32>
    %304 = tpu.matmul %246, %12, %cst_135 {dimension_numbers = #tpu.dot_dimension_numbers<[1], [0], [0], [1], [0, 0, 1, 1], [], []>} : vector<8x32xf32>, vector<32x32xf32>, vector<8x32xf32> -> vector<8x32xf32>
    %305 = arith.addf %303, %304 : vector<8x32xf32>
    %306 = arith.addf %305, %28 : vector<8x32xf32>
    %307 = arith.negf %294 : vector<8x32xf32>
    %308 = math.exp %307 : vector<8x32xf32>
    %cst_136 = arith.constant 1.000000e+00 : f32
    %309 = vector.broadcast %cst_136 : f32 to vector<8x32xf32>
    %310 = arith.addf %309, %308 : vector<8x32xf32>
    %311 = arith.divf %309, %310 : vector<8x32xf32>
    %312 = arith.negf %298 : vector<8x32xf32>
    %313 = math.exp %312 : vector<8x32xf32>
    %cst_137 = arith.constant 1.000000e+00 : f32
    %314 = vector.broadcast %cst_137 : f32 to vector<8x32xf32>
    %315 = arith.addf %314, %313 : vector<8x32xf32>
    %316 = arith.divf %314, %315 : vector<8x32xf32>
    %317 = math.tanh %302 : vector<8x32xf32>
    %318 = arith.negf %306 : vector<8x32xf32>
    %319 = math.exp %318 : vector<8x32xf32>
    %cst_138 = arith.constant 1.000000e+00 : f32
    %320 = vector.broadcast %cst_138 : f32 to vector<8x32xf32>
    %321 = arith.addf %320, %319 : vector<8x32xf32>
    %322 = arith.divf %320, %321 : vector<8x32xf32>
    %323 = arith.mulf %316, %244 : vector<8x32xf32>
    %324 = arith.mulf %311, %317 : vector<8x32xf32>
    %325 = arith.addf %323, %324 : vector<8x32xf32>
    %326 = math.tanh %325 : vector<8x32xf32>
    %327 = arith.mulf %322, %326 : vector<8x32xf32>
    %cst_139 = arith.constant dense<0.000000e+00> : vector<8x32xf32>
    %328 = tpu.matmul %327, %5, %cst_139 {dimension_numbers = #tpu.dot_dimension_numbers<[1], [0], [0], [1], [0, 0, 1, 1], [], []>} : vector<8x32xf32>, vector<32x32xf32>, vector<8x32xf32> -> vector<8x32xf32>
    %cst_140 = arith.constant dense<0.000000e+00> : vector<8x32xf32>
    %329 = tpu.matmul %283, %13, %cst_140 {dimension_numbers = #tpu.dot_dimension_numbers<[1], [0], [0], [1], [0, 0, 1, 1], [], []>} : vector<8x32xf32>, vector<32x32xf32>, vector<8x32xf32> -> vector<8x32xf32>
    %330 = arith.addf %328, %329 : vector<8x32xf32>
    %331 = arith.addf %330, %31 : vector<8x32xf32>
    %cst_141 = arith.constant dense<0.000000e+00> : vector<8x32xf32>
    %332 = tpu.matmul %327, %6, %cst_141 {dimension_numbers = #tpu.dot_dimension_numbers<[1], [0], [0], [1], [0, 0, 1, 1], [], []>} : vector<8x32xf32>, vector<32x32xf32>, vector<8x32xf32> -> vector<8x32xf32>
    %cst_142 = arith.constant dense<0.000000e+00> : vector<8x32xf32>
    %333 = tpu.matmul %283, %14, %cst_142 {dimension_numbers = #tpu.dot_dimension_numbers<[1], [0], [0], [1], [0, 0, 1, 1], [], []>} : vector<8x32xf32>, vector<32x32xf32>, vector<8x32xf32> -> vector<8x32xf32>
    %334 = arith.addf %332, %333 : vector<8x32xf32>
    %335 = arith.addf %334, %34 : vector<8x32xf32>
    %cst_143 = arith.constant dense<0.000000e+00> : vector<8x32xf32>
    %336 = tpu.matmul %327, %7, %cst_143 {dimension_numbers = #tpu.dot_dimension_numbers<[1], [0], [0], [1], [0, 0, 1, 1], [], []>} : vector<8x32xf32>, vector<32x32xf32>, vector<8x32xf32> -> vector<8x32xf32>
    %cst_144 = arith.constant dense<0.000000e+00> : vector<8x32xf32>
    %337 = tpu.matmul %283, %15, %cst_144 {dimension_numbers = #tpu.dot_dimension_numbers<[1], [0], [0], [1], [0, 0, 1, 1], [], []>} : vector<8x32xf32>, vector<32x32xf32>, vector<8x32xf32> -> vector<8x32xf32>
    %338 = arith.addf %336, %337 : vector<8x32xf32>
    %339 = arith.addf %338, %37 : vector<8x32xf32>
    %cst_145 = arith.constant dense<0.000000e+00> : vector<8x32xf32>
    %340 = tpu.matmul %327, %8, %cst_145 {dimension_numbers = #tpu.dot_dimension_numbers<[1], [0], [0], [1], [0, 0, 1, 1], [], []>} : vector<8x32xf32>, vector<32x32xf32>, vector<8x32xf32> -> vector<8x32xf32>
    %cst_146 = arith.constant dense<0.000000e+00> : vector<8x32xf32>
    %341 = tpu.matmul %283, %16, %cst_146 {dimension_numbers = #tpu.dot_dimension_numbers<[1], [0], [0], [1], [0, 0, 1, 1], [], []>} : vector<8x32xf32>, vector<32x32xf32>, vector<8x32xf32> -> vector<8x32xf32>
    %342 = arith.addf %340, %341 : vector<8x32xf32>
    %343 = arith.addf %342, %40 : vector<8x32xf32>
    %344 = arith.negf %331 : vector<8x32xf32>
    %345 = math.exp %344 : vector<8x32xf32>
    %cst_147 = arith.constant 1.000000e+00 : f32
    %346 = vector.broadcast %cst_147 : f32 to vector<8x32xf32>
    %347 = arith.addf %346, %345 : vector<8x32xf32>
    %348 = arith.divf %346, %347 : vector<8x32xf32>
    %349 = arith.negf %335 : vector<8x32xf32>
    %350 = math.exp %349 : vector<8x32xf32>
    %cst_148 = arith.constant 1.000000e+00 : f32
    %351 = vector.broadcast %cst_148 : f32 to vector<8x32xf32>
    %352 = arith.addf %351, %350 : vector<8x32xf32>
    %353 = arith.divf %351, %352 : vector<8x32xf32>
    %354 = math.tanh %339 : vector<8x32xf32>
    %355 = arith.negf %343 : vector<8x32xf32>
    %356 = math.exp %355 : vector<8x32xf32>
    %cst_149 = arith.constant 1.000000e+00 : f32
    %357 = vector.broadcast %cst_149 : f32 to vector<8x32xf32>
    %358 = arith.addf %357, %356 : vector<8x32xf32>
    %359 = arith.divf %357, %358 : vector<8x32xf32>
    %360 = arith.mulf %353, %281 : vector<8x32xf32>
    %361 = arith.mulf %348, %354 : vector<8x32xf32>
    %362 = arith.addf %360, %361 : vector<8x32xf32>
    %363 = math.tanh %362 : vector<8x32xf32>
    %364 = arith.mulf %359, %363 : vector<8x32xf32>
    %c3_i32 = arith.constant 3 : i32
    %365 = vector.broadcast %c3_i32 : i32 to vector<8x1xi32>
    %366 = arith.cmpi eq, %0, %365 : vector<8x1xi32>
    %367 = vector.shape_cast %366 : vector<8x1xi1> to vector<8x1xi1>
    %368 = vector.broadcast %367 : vector<8x1xi1> to vector<8x32xi1>
    %369 = arith.select %368, %364, %288 : vector<8x32xi1>, vector<8x32xf32>
    %c4 = arith.constant 4 : index
    %c0_150 = arith.constant 0 : index
    %c0_151 = arith.constant 0 : index
    %370 = vector.load %arg1[%c4, %c0_150, %c0_151] : memref<8x8x16xf32, #tpu.memory_space<vmem>>, vector<1x8x16xf32>
    %371 = vector.shape_cast %370 : vector<1x8x16xf32> to vector<8x16xf32>
    %cst_152 = arith.constant dense<0.000000e+00> : vector<8x32xf32>
    %372 = tpu.matmul %371, %1, %cst_152 {dimension_numbers = #tpu.dot_dimension_numbers<[1], [0], [0], [1], [0, 0, 1, 1], [], []>} : vector<8x16xf32>, vector<16x32xf32>, vector<8x32xf32> -> vector<8x32xf32>
    %cst_153 = arith.constant dense<0.000000e+00> : vector<8x32xf32>
    %373 = tpu.matmul %327, %9, %cst_153 {dimension_numbers = #tpu.dot_dimension_numbers<[1], [0], [0], [1], [0, 0, 1, 1], [], []>} : vector<8x32xf32>, vector<32x32xf32>, vector<8x32xf32> -> vector<8x32xf32>
    %374 = arith.addf %372, %373 : vector<8x32xf32>
    %375 = arith.addf %374, %19 : vector<8x32xf32>
    %cst_154 = arith.constant dense<0.000000e+00> : vector<8x32xf32>
    %376 = tpu.matmul %371, %2, %cst_154 {dimension_numbers = #tpu.dot_dimension_numbers<[1], [0], [0], [1], [0, 0, 1, 1], [], []>} : vector<8x16xf32>, vector<16x32xf32>, vector<8x32xf32> -> vector<8x32xf32>
    %cst_155 = arith.constant dense<0.000000e+00> : vector<8x32xf32>
    %377 = tpu.matmul %327, %10, %cst_155 {dimension_numbers = #tpu.dot_dimension_numbers<[1], [0], [0], [1], [0, 0, 1, 1], [], []>} : vector<8x32xf32>, vector<32x32xf32>, vector<8x32xf32> -> vector<8x32xf32>
    %378 = arith.addf %376, %377 : vector<8x32xf32>
    %379 = arith.addf %378, %22 : vector<8x32xf32>
    %cst_156 = arith.constant dense<0.000000e+00> : vector<8x32xf32>
    %380 = tpu.matmul %371, %3, %cst_156 {dimension_numbers = #tpu.dot_dimension_numbers<[1], [0], [0], [1], [0, 0, 1, 1], [], []>} : vector<8x16xf32>, vector<16x32xf32>, vector<8x32xf32> -> vector<8x32xf32>
    %cst_157 = arith.constant dense<0.000000e+00> : vector<8x32xf32>
    %381 = tpu.matmul %327, %11, %cst_157 {dimension_numbers = #tpu.dot_dimension_numbers<[1], [0], [0], [1], [0, 0, 1, 1], [], []>} : vector<8x32xf32>, vector<32x32xf32>, vector<8x32xf32> -> vector<8x32xf32>
    %382 = arith.addf %380, %381 : vector<8x32xf32>
    %383 = arith.addf %382, %25 : vector<8x32xf32>
    %cst_158 = arith.constant dense<0.000000e+00> : vector<8x32xf32>
    %384 = tpu.matmul %371, %4, %cst_158 {dimension_numbers = #tpu.dot_dimension_numbers<[1], [0], [0], [1], [0, 0, 1, 1], [], []>} : vector<8x16xf32>, vector<16x32xf32>, vector<8x32xf32> -> vector<8x32xf32>
    %cst_159 = arith.constant dense<0.000000e+00> : vector<8x32xf32>
    %385 = tpu.matmul %327, %12, %cst_159 {dimension_numbers = #tpu.dot_dimension_numbers<[1], [0], [0], [1], [0, 0, 1, 1], [], []>} : vector<8x32xf32>, vector<32x32xf32>, vector<8x32xf32> -> vector<8x32xf32>
    %386 = arith.addf %384, %385 : vector<8x32xf32>
    %387 = arith.addf %386, %28 : vector<8x32xf32>
    %388 = arith.negf %375 : vector<8x32xf32>
    %389 = math.exp %388 : vector<8x32xf32>
    %cst_160 = arith.constant 1.000000e+00 : f32
    %390 = vector.broadcast %cst_160 : f32 to vector<8x32xf32>
    %391 = arith.addf %390, %389 : vector<8x32xf32>
    %392 = arith.divf %390, %391 : vector<8x32xf32>
    %393 = arith.negf %379 : vector<8x32xf32>
    %394 = math.exp %393 : vector<8x32xf32>
    %cst_161 = arith.constant 1.000000e+00 : f32
    %395 = vector.broadcast %cst_161 : f32 to vector<8x32xf32>
    %396 = arith.addf %395, %394 : vector<8x32xf32>
    %397 = arith.divf %395, %396 : vector<8x32xf32>
    %398 = math.tanh %383 : vector<8x32xf32>
    %399 = arith.negf %387 : vector<8x32xf32>
    %400 = math.exp %399 : vector<8x32xf32>
    %cst_162 = arith.constant 1.000000e+00 : f32
    %401 = vector.broadcast %cst_162 : f32 to vector<8x32xf32>
    %402 = arith.addf %401, %400 : vector<8x32xf32>
    %403 = arith.divf %401, %402 : vector<8x32xf32>
    %404 = arith.mulf %397, %325 : vector<8x32xf32>
    %405 = arith.mulf %392, %398 : vector<8x32xf32>
    %406 = arith.addf %404, %405 : vector<8x32xf32>
    %407 = math.tanh %406 : vector<8x32xf32>
    %408 = arith.mulf %403, %407 : vector<8x32xf32>
    %cst_163 = arith.constant dense<0.000000e+00> : vector<8x32xf32>
    %409 = tpu.matmul %408, %5, %cst_163 {dimension_numbers = #tpu.dot_dimension_numbers<[1], [0], [0], [1], [0, 0, 1, 1], [], []>} : vector<8x32xf32>, vector<32x32xf32>, vector<8x32xf32> -> vector<8x32xf32>
    %cst_164 = arith.constant dense<0.000000e+00> : vector<8x32xf32>
    %410 = tpu.matmul %364, %13, %cst_164 {dimension_numbers = #tpu.dot_dimension_numbers<[1], [0], [0], [1], [0, 0, 1, 1], [], []>} : vector<8x32xf32>, vector<32x32xf32>, vector<8x32xf32> -> vector<8x32xf32>
    %411 = arith.addf %409, %410 : vector<8x32xf32>
    %412 = arith.addf %411, %31 : vector<8x32xf32>
    %cst_165 = arith.constant dense<0.000000e+00> : vector<8x32xf32>
    %413 = tpu.matmul %408, %6, %cst_165 {dimension_numbers = #tpu.dot_dimension_numbers<[1], [0], [0], [1], [0, 0, 1, 1], [], []>} : vector<8x32xf32>, vector<32x32xf32>, vector<8x32xf32> -> vector<8x32xf32>
    %cst_166 = arith.constant dense<0.000000e+00> : vector<8x32xf32>
    %414 = tpu.matmul %364, %14, %cst_166 {dimension_numbers = #tpu.dot_dimension_numbers<[1], [0], [0], [1], [0, 0, 1, 1], [], []>} : vector<8x32xf32>, vector<32x32xf32>, vector<8x32xf32> -> vector<8x32xf32>
    %415 = arith.addf %413, %414 : vector<8x32xf32>
    %416 = arith.addf %415, %34 : vector<8x32xf32>
    %cst_167 = arith.constant dense<0.000000e+00> : vector<8x32xf32>
    %417 = tpu.matmul %408, %7, %cst_167 {dimension_numbers = #tpu.dot_dimension_numbers<[1], [0], [0], [1], [0, 0, 1, 1], [], []>} : vector<8x32xf32>, vector<32x32xf32>, vector<8x32xf32> -> vector<8x32xf32>
    %cst_168 = arith.constant dense<0.000000e+00> : vector<8x32xf32>
    %418 = tpu.matmul %364, %15, %cst_168 {dimension_numbers = #tpu.dot_dimension_numbers<[1], [0], [0], [1], [0, 0, 1, 1], [], []>} : vector<8x32xf32>, vector<32x32xf32>, vector<8x32xf32> -> vector<8x32xf32>
    %419 = arith.addf %417, %418 : vector<8x32xf32>
    %420 = arith.addf %419, %37 : vector<8x32xf32>
    %cst_169 = arith.constant dense<0.000000e+00> : vector<8x32xf32>
    %421 = tpu.matmul %408, %8, %cst_169 {dimension_numbers = #tpu.dot_dimension_numbers<[1], [0], [0], [1], [0, 0, 1, 1], [], []>} : vector<8x32xf32>, vector<32x32xf32>, vector<8x32xf32> -> vector<8x32xf32>
    %cst_170 = arith.constant dense<0.000000e+00> : vector<8x32xf32>
    %422 = tpu.matmul %364, %16, %cst_170 {dimension_numbers = #tpu.dot_dimension_numbers<[1], [0], [0], [1], [0, 0, 1, 1], [], []>} : vector<8x32xf32>, vector<32x32xf32>, vector<8x32xf32> -> vector<8x32xf32>
    %423 = arith.addf %421, %422 : vector<8x32xf32>
    %424 = arith.addf %423, %40 : vector<8x32xf32>
    %425 = arith.negf %412 : vector<8x32xf32>
    %426 = math.exp %425 : vector<8x32xf32>
    %cst_171 = arith.constant 1.000000e+00 : f32
    %427 = vector.broadcast %cst_171 : f32 to vector<8x32xf32>
    %428 = arith.addf %427, %426 : vector<8x32xf32>
    %429 = arith.divf %427, %428 : vector<8x32xf32>
    %430 = arith.negf %416 : vector<8x32xf32>
    %431 = math.exp %430 : vector<8x32xf32>
    %cst_172 = arith.constant 1.000000e+00 : f32
    %432 = vector.broadcast %cst_172 : f32 to vector<8x32xf32>
    %433 = arith.addf %432, %431 : vector<8x32xf32>
    %434 = arith.divf %432, %433 : vector<8x32xf32>
    %435 = math.tanh %420 : vector<8x32xf32>
    %436 = arith.negf %424 : vector<8x32xf32>
    %437 = math.exp %436 : vector<8x32xf32>
    %cst_173 = arith.constant 1.000000e+00 : f32
    %438 = vector.broadcast %cst_173 : f32 to vector<8x32xf32>
    %439 = arith.addf %438, %437 : vector<8x32xf32>
    %440 = arith.divf %438, %439 : vector<8x32xf32>
    %441 = arith.mulf %434, %362 : vector<8x32xf32>
    %442 = arith.mulf %429, %435 : vector<8x32xf32>
    %443 = arith.addf %441, %442 : vector<8x32xf32>
    %444 = math.tanh %443 : vector<8x32xf32>
    %445 = arith.mulf %440, %444 : vector<8x32xf32>
    %c4_i32 = arith.constant 4 : i32
    %446 = vector.broadcast %c4_i32 : i32 to vector<8x1xi32>
    %447 = arith.cmpi eq, %0, %446 : vector<8x1xi32>
    %448 = vector.shape_cast %447 : vector<8x1xi1> to vector<8x1xi1>
    %449 = vector.broadcast %448 : vector<8x1xi1> to vector<8x32xi1>
    %450 = arith.select %449, %445, %369 : vector<8x32xi1>, vector<8x32xf32>
    %c5 = arith.constant 5 : index
    %c0_174 = arith.constant 0 : index
    %c0_175 = arith.constant 0 : index
    %451 = vector.load %arg1[%c5, %c0_174, %c0_175] : memref<8x8x16xf32, #tpu.memory_space<vmem>>, vector<1x8x16xf32>
    %452 = vector.shape_cast %451 : vector<1x8x16xf32> to vector<8x16xf32>
    %cst_176 = arith.constant dense<0.000000e+00> : vector<8x32xf32>
    %453 = tpu.matmul %452, %1, %cst_176 {dimension_numbers = #tpu.dot_dimension_numbers<[1], [0], [0], [1], [0, 0, 1, 1], [], []>} : vector<8x16xf32>, vector<16x32xf32>, vector<8x32xf32> -> vector<8x32xf32>
    %cst_177 = arith.constant dense<0.000000e+00> : vector<8x32xf32>
    %454 = tpu.matmul %408, %9, %cst_177 {dimension_numbers = #tpu.dot_dimension_numbers<[1], [0], [0], [1], [0, 0, 1, 1], [], []>} : vector<8x32xf32>, vector<32x32xf32>, vector<8x32xf32> -> vector<8x32xf32>
    %455 = arith.addf %453, %454 : vector<8x32xf32>
    %456 = arith.addf %455, %19 : vector<8x32xf32>
    %cst_178 = arith.constant dense<0.000000e+00> : vector<8x32xf32>
    %457 = tpu.matmul %452, %2, %cst_178 {dimension_numbers = #tpu.dot_dimension_numbers<[1], [0], [0], [1], [0, 0, 1, 1], [], []>} : vector<8x16xf32>, vector<16x32xf32>, vector<8x32xf32> -> vector<8x32xf32>
    %cst_179 = arith.constant dense<0.000000e+00> : vector<8x32xf32>
    %458 = tpu.matmul %408, %10, %cst_179 {dimension_numbers = #tpu.dot_dimension_numbers<[1], [0], [0], [1], [0, 0, 1, 1], [], []>} : vector<8x32xf32>, vector<32x32xf32>, vector<8x32xf32> -> vector<8x32xf32>
    %459 = arith.addf %457, %458 : vector<8x32xf32>
    %460 = arith.addf %459, %22 : vector<8x32xf32>
    %cst_180 = arith.constant dense<0.000000e+00> : vector<8x32xf32>
    %461 = tpu.matmul %452, %3, %cst_180 {dimension_numbers = #tpu.dot_dimension_numbers<[1], [0], [0], [1], [0, 0, 1, 1], [], []>} : vector<8x16xf32>, vector<16x32xf32>, vector<8x32xf32> -> vector<8x32xf32>
    %cst_181 = arith.constant dense<0.000000e+00> : vector<8x32xf32>
    %462 = tpu.matmul %408, %11, %cst_181 {dimension_numbers = #tpu.dot_dimension_numbers<[1], [0], [0], [1], [0, 0, 1, 1], [], []>} : vector<8x32xf32>, vector<32x32xf32>, vector<8x32xf32> -> vector<8x32xf32>
    %463 = arith.addf %461, %462 : vector<8x32xf32>
    %464 = arith.addf %463, %25 : vector<8x32xf32>
    %cst_182 = arith.constant dense<0.000000e+00> : vector<8x32xf32>
    %465 = tpu.matmul %452, %4, %cst_182 {dimension_numbers = #tpu.dot_dimension_numbers<[1], [0], [0], [1], [0, 0, 1, 1], [], []>} : vector<8x16xf32>, vector<16x32xf32>, vector<8x32xf32> -> vector<8x32xf32>
    %cst_183 = arith.constant dense<0.000000e+00> : vector<8x32xf32>
    %466 = tpu.matmul %408, %12, %cst_183 {dimension_numbers = #tpu.dot_dimension_numbers<[1], [0], [0], [1], [0, 0, 1, 1], [], []>} : vector<8x32xf32>, vector<32x32xf32>, vector<8x32xf32> -> vector<8x32xf32>
    %467 = arith.addf %465, %466 : vector<8x32xf32>
    %468 = arith.addf %467, %28 : vector<8x32xf32>
    %469 = arith.negf %456 : vector<8x32xf32>
    %470 = math.exp %469 : vector<8x32xf32>
    %cst_184 = arith.constant 1.000000e+00 : f32
    %471 = vector.broadcast %cst_184 : f32 to vector<8x32xf32>
    %472 = arith.addf %471, %470 : vector<8x32xf32>
    %473 = arith.divf %471, %472 : vector<8x32xf32>
    %474 = arith.negf %460 : vector<8x32xf32>
    %475 = math.exp %474 : vector<8x32xf32>
    %cst_185 = arith.constant 1.000000e+00 : f32
    %476 = vector.broadcast %cst_185 : f32 to vector<8x32xf32>
    %477 = arith.addf %476, %475 : vector<8x32xf32>
    %478 = arith.divf %476, %477 : vector<8x32xf32>
    %479 = math.tanh %464 : vector<8x32xf32>
    %480 = arith.negf %468 : vector<8x32xf32>
    %481 = math.exp %480 : vector<8x32xf32>
    %cst_186 = arith.constant 1.000000e+00 : f32
    %482 = vector.broadcast %cst_186 : f32 to vector<8x32xf32>
    %483 = arith.addf %482, %481 : vector<8x32xf32>
    %484 = arith.divf %482, %483 : vector<8x32xf32>
    %485 = arith.mulf %478, %406 : vector<8x32xf32>
    %486 = arith.mulf %473, %479 : vector<8x32xf32>
    %487 = arith.addf %485, %486 : vector<8x32xf32>
    %488 = math.tanh %487 : vector<8x32xf32>
    %489 = arith.mulf %484, %488 : vector<8x32xf32>
    %cst_187 = arith.constant dense<0.000000e+00> : vector<8x32xf32>
    %490 = tpu.matmul %489, %5, %cst_187 {dimension_numbers = #tpu.dot_dimension_numbers<[1], [0], [0], [1], [0, 0, 1, 1], [], []>} : vector<8x32xf32>, vector<32x32xf32>, vector<8x32xf32> -> vector<8x32xf32>
    %cst_188 = arith.constant dense<0.000000e+00> : vector<8x32xf32>
    %491 = tpu.matmul %445, %13, %cst_188 {dimension_numbers = #tpu.dot_dimension_numbers<[1], [0], [0], [1], [0, 0, 1, 1], [], []>} : vector<8x32xf32>, vector<32x32xf32>, vector<8x32xf32> -> vector<8x32xf32>
    %492 = arith.addf %490, %491 : vector<8x32xf32>
    %493 = arith.addf %492, %31 : vector<8x32xf32>
    %cst_189 = arith.constant dense<0.000000e+00> : vector<8x32xf32>
    %494 = tpu.matmul %489, %6, %cst_189 {dimension_numbers = #tpu.dot_dimension_numbers<[1], [0], [0], [1], [0, 0, 1, 1], [], []>} : vector<8x32xf32>, vector<32x32xf32>, vector<8x32xf32> -> vector<8x32xf32>
    %cst_190 = arith.constant dense<0.000000e+00> : vector<8x32xf32>
    %495 = tpu.matmul %445, %14, %cst_190 {dimension_numbers = #tpu.dot_dimension_numbers<[1], [0], [0], [1], [0, 0, 1, 1], [], []>} : vector<8x32xf32>, vector<32x32xf32>, vector<8x32xf32> -> vector<8x32xf32>
    %496 = arith.addf %494, %495 : vector<8x32xf32>
    %497 = arith.addf %496, %34 : vector<8x32xf32>
    %cst_191 = arith.constant dense<0.000000e+00> : vector<8x32xf32>
    %498 = tpu.matmul %489, %7, %cst_191 {dimension_numbers = #tpu.dot_dimension_numbers<[1], [0], [0], [1], [0, 0, 1, 1], [], []>} : vector<8x32xf32>, vector<32x32xf32>, vector<8x32xf32> -> vector<8x32xf32>
    %cst_192 = arith.constant dense<0.000000e+00> : vector<8x32xf32>
    %499 = tpu.matmul %445, %15, %cst_192 {dimension_numbers = #tpu.dot_dimension_numbers<[1], [0], [0], [1], [0, 0, 1, 1], [], []>} : vector<8x32xf32>, vector<32x32xf32>, vector<8x32xf32> -> vector<8x32xf32>
    %500 = arith.addf %498, %499 : vector<8x32xf32>
    %501 = arith.addf %500, %37 : vector<8x32xf32>
    %cst_193 = arith.constant dense<0.000000e+00> : vector<8x32xf32>
    %502 = tpu.matmul %489, %8, %cst_193 {dimension_numbers = #tpu.dot_dimension_numbers<[1], [0], [0], [1], [0, 0, 1, 1], [], []>} : vector<8x32xf32>, vector<32x32xf32>, vector<8x32xf32> -> vector<8x32xf32>
    %cst_194 = arith.constant dense<0.000000e+00> : vector<8x32xf32>
    %503 = tpu.matmul %445, %16, %cst_194 {dimension_numbers = #tpu.dot_dimension_numbers<[1], [0], [0], [1], [0, 0, 1, 1], [], []>} : vector<8x32xf32>, vector<32x32xf32>, vector<8x32xf32> -> vector<8x32xf32>
    %504 = arith.addf %502, %503 : vector<8x32xf32>
    %505 = arith.addf %504, %40 : vector<8x32xf32>
    %506 = arith.negf %493 : vector<8x32xf32>
    %507 = math.exp %506 : vector<8x32xf32>
    %cst_195 = arith.constant 1.000000e+00 : f32
    %508 = vector.broadcast %cst_195 : f32 to vector<8x32xf32>
    %509 = arith.addf %508, %507 : vector<8x32xf32>
    %510 = arith.divf %508, %509 : vector<8x32xf32>
    %511 = arith.negf %497 : vector<8x32xf32>
    %512 = math.exp %511 : vector<8x32xf32>
    %cst_196 = arith.constant 1.000000e+00 : f32
    %513 = vector.broadcast %cst_196 : f32 to vector<8x32xf32>
    %514 = arith.addf %513, %512 : vector<8x32xf32>
    %515 = arith.divf %513, %514 : vector<8x32xf32>
    %516 = math.tanh %501 : vector<8x32xf32>
    %517 = arith.negf %505 : vector<8x32xf32>
    %518 = math.exp %517 : vector<8x32xf32>
    %cst_197 = arith.constant 1.000000e+00 : f32
    %519 = vector.broadcast %cst_197 : f32 to vector<8x32xf32>
    %520 = arith.addf %519, %518 : vector<8x32xf32>
    %521 = arith.divf %519, %520 : vector<8x32xf32>
    %522 = arith.mulf %515, %443 : vector<8x32xf32>
    %523 = arith.mulf %510, %516 : vector<8x32xf32>
    %524 = arith.addf %522, %523 : vector<8x32xf32>
    %525 = math.tanh %524 : vector<8x32xf32>
    %526 = arith.mulf %521, %525 : vector<8x32xf32>
    %c5_i32 = arith.constant 5 : i32
    %527 = vector.broadcast %c5_i32 : i32 to vector<8x1xi32>
    %528 = arith.cmpi eq, %0, %527 : vector<8x1xi32>
    %529 = vector.shape_cast %528 : vector<8x1xi1> to vector<8x1xi1>
    %530 = vector.broadcast %529 : vector<8x1xi1> to vector<8x32xi1>
    %531 = arith.select %530, %526, %450 : vector<8x32xi1>, vector<8x32xf32>
    %c6 = arith.constant 6 : index
    %c0_198 = arith.constant 0 : index
    %c0_199 = arith.constant 0 : index
    %532 = vector.load %arg1[%c6, %c0_198, %c0_199] : memref<8x8x16xf32, #tpu.memory_space<vmem>>, vector<1x8x16xf32>
    %533 = vector.shape_cast %532 : vector<1x8x16xf32> to vector<8x16xf32>
    %cst_200 = arith.constant dense<0.000000e+00> : vector<8x32xf32>
    %534 = tpu.matmul %533, %1, %cst_200 {dimension_numbers = #tpu.dot_dimension_numbers<[1], [0], [0], [1], [0, 0, 1, 1], [], []>} : vector<8x16xf32>, vector<16x32xf32>, vector<8x32xf32> -> vector<8x32xf32>
    %cst_201 = arith.constant dense<0.000000e+00> : vector<8x32xf32>
    %535 = tpu.matmul %489, %9, %cst_201 {dimension_numbers = #tpu.dot_dimension_numbers<[1], [0], [0], [1], [0, 0, 1, 1], [], []>} : vector<8x32xf32>, vector<32x32xf32>, vector<8x32xf32> -> vector<8x32xf32>
    %536 = arith.addf %534, %535 : vector<8x32xf32>
    %537 = arith.addf %536, %19 : vector<8x32xf32>
    %cst_202 = arith.constant dense<0.000000e+00> : vector<8x32xf32>
    %538 = tpu.matmul %533, %2, %cst_202 {dimension_numbers = #tpu.dot_dimension_numbers<[1], [0], [0], [1], [0, 0, 1, 1], [], []>} : vector<8x16xf32>, vector<16x32xf32>, vector<8x32xf32> -> vector<8x32xf32>
    %cst_203 = arith.constant dense<0.000000e+00> : vector<8x32xf32>
    %539 = tpu.matmul %489, %10, %cst_203 {dimension_numbers = #tpu.dot_dimension_numbers<[1], [0], [0], [1], [0, 0, 1, 1], [], []>} : vector<8x32xf32>, vector<32x32xf32>, vector<8x32xf32> -> vector<8x32xf32>
    %540 = arith.addf %538, %539 : vector<8x32xf32>
    %541 = arith.addf %540, %22 : vector<8x32xf32>
    %cst_204 = arith.constant dense<0.000000e+00> : vector<8x32xf32>
    %542 = tpu.matmul %533, %3, %cst_204 {dimension_numbers = #tpu.dot_dimension_numbers<[1], [0], [0], [1], [0, 0, 1, 1], [], []>} : vector<8x16xf32>, vector<16x32xf32>, vector<8x32xf32> -> vector<8x32xf32>
    %cst_205 = arith.constant dense<0.000000e+00> : vector<8x32xf32>
    %543 = tpu.matmul %489, %11, %cst_205 {dimension_numbers = #tpu.dot_dimension_numbers<[1], [0], [0], [1], [0, 0, 1, 1], [], []>} : vector<8x32xf32>, vector<32x32xf32>, vector<8x32xf32> -> vector<8x32xf32>
    %544 = arith.addf %542, %543 : vector<8x32xf32>
    %545 = arith.addf %544, %25 : vector<8x32xf32>
    %cst_206 = arith.constant dense<0.000000e+00> : vector<8x32xf32>
    %546 = tpu.matmul %533, %4, %cst_206 {dimension_numbers = #tpu.dot_dimension_numbers<[1], [0], [0], [1], [0, 0, 1, 1], [], []>} : vector<8x16xf32>, vector<16x32xf32>, vector<8x32xf32> -> vector<8x32xf32>
    %cst_207 = arith.constant dense<0.000000e+00> : vector<8x32xf32>
    %547 = tpu.matmul %489, %12, %cst_207 {dimension_numbers = #tpu.dot_dimension_numbers<[1], [0], [0], [1], [0, 0, 1, 1], [], []>} : vector<8x32xf32>, vector<32x32xf32>, vector<8x32xf32> -> vector<8x32xf32>
    %548 = arith.addf %546, %547 : vector<8x32xf32>
    %549 = arith.addf %548, %28 : vector<8x32xf32>
    %550 = arith.negf %537 : vector<8x32xf32>
    %551 = math.exp %550 : vector<8x32xf32>
    %cst_208 = arith.constant 1.000000e+00 : f32
    %552 = vector.broadcast %cst_208 : f32 to vector<8x32xf32>
    %553 = arith.addf %552, %551 : vector<8x32xf32>
    %554 = arith.divf %552, %553 : vector<8x32xf32>
    %555 = arith.negf %541 : vector<8x32xf32>
    %556 = math.exp %555 : vector<8x32xf32>
    %cst_209 = arith.constant 1.000000e+00 : f32
    %557 = vector.broadcast %cst_209 : f32 to vector<8x32xf32>
    %558 = arith.addf %557, %556 : vector<8x32xf32>
    %559 = arith.divf %557, %558 : vector<8x32xf32>
    %560 = math.tanh %545 : vector<8x32xf32>
    %561 = arith.negf %549 : vector<8x32xf32>
    %562 = math.exp %561 : vector<8x32xf32>
    %cst_210 = arith.constant 1.000000e+00 : f32
    %563 = vector.broadcast %cst_210 : f32 to vector<8x32xf32>
    %564 = arith.addf %563, %562 : vector<8x32xf32>
    %565 = arith.divf %563, %564 : vector<8x32xf32>
    %566 = arith.mulf %559, %487 : vector<8x32xf32>
    %567 = arith.mulf %554, %560 : vector<8x32xf32>
    %568 = arith.addf %566, %567 : vector<8x32xf32>
    %569 = math.tanh %568 : vector<8x32xf32>
    %570 = arith.mulf %565, %569 : vector<8x32xf32>
    %cst_211 = arith.constant dense<0.000000e+00> : vector<8x32xf32>
    %571 = tpu.matmul %570, %5, %cst_211 {dimension_numbers = #tpu.dot_dimension_numbers<[1], [0], [0], [1], [0, 0, 1, 1], [], []>} : vector<8x32xf32>, vector<32x32xf32>, vector<8x32xf32> -> vector<8x32xf32>
    %cst_212 = arith.constant dense<0.000000e+00> : vector<8x32xf32>
    %572 = tpu.matmul %526, %13, %cst_212 {dimension_numbers = #tpu.dot_dimension_numbers<[1], [0], [0], [1], [0, 0, 1, 1], [], []>} : vector<8x32xf32>, vector<32x32xf32>, vector<8x32xf32> -> vector<8x32xf32>
    %573 = arith.addf %571, %572 : vector<8x32xf32>
    %574 = arith.addf %573, %31 : vector<8x32xf32>
    %cst_213 = arith.constant dense<0.000000e+00> : vector<8x32xf32>
    %575 = tpu.matmul %570, %6, %cst_213 {dimension_numbers = #tpu.dot_dimension_numbers<[1], [0], [0], [1], [0, 0, 1, 1], [], []>} : vector<8x32xf32>, vector<32x32xf32>, vector<8x32xf32> -> vector<8x32xf32>
    %cst_214 = arith.constant dense<0.000000e+00> : vector<8x32xf32>
    %576 = tpu.matmul %526, %14, %cst_214 {dimension_numbers = #tpu.dot_dimension_numbers<[1], [0], [0], [1], [0, 0, 1, 1], [], []>} : vector<8x32xf32>, vector<32x32xf32>, vector<8x32xf32> -> vector<8x32xf32>
    %577 = arith.addf %575, %576 : vector<8x32xf32>
    %578 = arith.addf %577, %34 : vector<8x32xf32>
    %cst_215 = arith.constant dense<0.000000e+00> : vector<8x32xf32>
    %579 = tpu.matmul %570, %7, %cst_215 {dimension_numbers = #tpu.dot_dimension_numbers<[1], [0], [0], [1], [0, 0, 1, 1], [], []>} : vector<8x32xf32>, vector<32x32xf32>, vector<8x32xf32> -> vector<8x32xf32>
    %cst_216 = arith.constant dense<0.000000e+00> : vector<8x32xf32>
    %580 = tpu.matmul %526, %15, %cst_216 {dimension_numbers = #tpu.dot_dimension_numbers<[1], [0], [0], [1], [0, 0, 1, 1], [], []>} : vector<8x32xf32>, vector<32x32xf32>, vector<8x32xf32> -> vector<8x32xf32>
    %581 = arith.addf %579, %580 : vector<8x32xf32>
    %582 = arith.addf %581, %37 : vector<8x32xf32>
    %cst_217 = arith.constant dense<0.000000e+00> : vector<8x32xf32>
    %583 = tpu.matmul %570, %8, %cst_217 {dimension_numbers = #tpu.dot_dimension_numbers<[1], [0], [0], [1], [0, 0, 1, 1], [], []>} : vector<8x32xf32>, vector<32x32xf32>, vector<8x32xf32> -> vector<8x32xf32>
    %cst_218 = arith.constant dense<0.000000e+00> : vector<8x32xf32>
    %584 = tpu.matmul %526, %16, %cst_218 {dimension_numbers = #tpu.dot_dimension_numbers<[1], [0], [0], [1], [0, 0, 1, 1], [], []>} : vector<8x32xf32>, vector<32x32xf32>, vector<8x32xf32> -> vector<8x32xf32>
    %585 = arith.addf %583, %584 : vector<8x32xf32>
    %586 = arith.addf %585, %40 : vector<8x32xf32>
    %587 = arith.negf %574 : vector<8x32xf32>
    %588 = math.exp %587 : vector<8x32xf32>
    %cst_219 = arith.constant 1.000000e+00 : f32
    %589 = vector.broadcast %cst_219 : f32 to vector<8x32xf32>
    %590 = arith.addf %589, %588 : vector<8x32xf32>
    %591 = arith.divf %589, %590 : vector<8x32xf32>
    %592 = arith.negf %578 : vector<8x32xf32>
    %593 = math.exp %592 : vector<8x32xf32>
    %cst_220 = arith.constant 1.000000e+00 : f32
    %594 = vector.broadcast %cst_220 : f32 to vector<8x32xf32>
    %595 = arith.addf %594, %593 : vector<8x32xf32>
    %596 = arith.divf %594, %595 : vector<8x32xf32>
    %597 = math.tanh %582 : vector<8x32xf32>
    %598 = arith.negf %586 : vector<8x32xf32>
    %599 = math.exp %598 : vector<8x32xf32>
    %cst_221 = arith.constant 1.000000e+00 : f32
    %600 = vector.broadcast %cst_221 : f32 to vector<8x32xf32>
    %601 = arith.addf %600, %599 : vector<8x32xf32>
    %602 = arith.divf %600, %601 : vector<8x32xf32>
    %603 = arith.mulf %596, %524 : vector<8x32xf32>
    %604 = arith.mulf %591, %597 : vector<8x32xf32>
    %605 = arith.addf %603, %604 : vector<8x32xf32>
    %606 = math.tanh %605 : vector<8x32xf32>
    %607 = arith.mulf %602, %606 : vector<8x32xf32>
    %c6_i32 = arith.constant 6 : i32
    %608 = vector.broadcast %c6_i32 : i32 to vector<8x1xi32>
    %609 = arith.cmpi eq, %0, %608 : vector<8x1xi32>
    %610 = vector.shape_cast %609 : vector<8x1xi1> to vector<8x1xi1>
    %611 = vector.broadcast %610 : vector<8x1xi1> to vector<8x32xi1>
    %612 = arith.select %611, %607, %531 : vector<8x32xi1>, vector<8x32xf32>
    %c7 = arith.constant 7 : index
    %c0_222 = arith.constant 0 : index
    %c0_223 = arith.constant 0 : index
    %613 = vector.load %arg1[%c7, %c0_222, %c0_223] : memref<8x8x16xf32, #tpu.memory_space<vmem>>, vector<1x8x16xf32>
    %614 = vector.shape_cast %613 : vector<1x8x16xf32> to vector<8x16xf32>
    %cst_224 = arith.constant dense<0.000000e+00> : vector<8x32xf32>
    %615 = tpu.matmul %614, %1, %cst_224 {dimension_numbers = #tpu.dot_dimension_numbers<[1], [0], [0], [1], [0, 0, 1, 1], [], []>} : vector<8x16xf32>, vector<16x32xf32>, vector<8x32xf32> -> vector<8x32xf32>
    %cst_225 = arith.constant dense<0.000000e+00> : vector<8x32xf32>
    %616 = tpu.matmul %570, %9, %cst_225 {dimension_numbers = #tpu.dot_dimension_numbers<[1], [0], [0], [1], [0, 0, 1, 1], [], []>} : vector<8x32xf32>, vector<32x32xf32>, vector<8x32xf32> -> vector<8x32xf32>
    %617 = arith.addf %615, %616 : vector<8x32xf32>
    %618 = arith.addf %617, %19 : vector<8x32xf32>
    %cst_226 = arith.constant dense<0.000000e+00> : vector<8x32xf32>
    %619 = tpu.matmul %614, %2, %cst_226 {dimension_numbers = #tpu.dot_dimension_numbers<[1], [0], [0], [1], [0, 0, 1, 1], [], []>} : vector<8x16xf32>, vector<16x32xf32>, vector<8x32xf32> -> vector<8x32xf32>
    %cst_227 = arith.constant dense<0.000000e+00> : vector<8x32xf32>
    %620 = tpu.matmul %570, %10, %cst_227 {dimension_numbers = #tpu.dot_dimension_numbers<[1], [0], [0], [1], [0, 0, 1, 1], [], []>} : vector<8x32xf32>, vector<32x32xf32>, vector<8x32xf32> -> vector<8x32xf32>
    %621 = arith.addf %619, %620 : vector<8x32xf32>
    %622 = arith.addf %621, %22 : vector<8x32xf32>
    %cst_228 = arith.constant dense<0.000000e+00> : vector<8x32xf32>
    %623 = tpu.matmul %614, %3, %cst_228 {dimension_numbers = #tpu.dot_dimension_numbers<[1], [0], [0], [1], [0, 0, 1, 1], [], []>} : vector<8x16xf32>, vector<16x32xf32>, vector<8x32xf32> -> vector<8x32xf32>
    %cst_229 = arith.constant dense<0.000000e+00> : vector<8x32xf32>
    %624 = tpu.matmul %570, %11, %cst_229 {dimension_numbers = #tpu.dot_dimension_numbers<[1], [0], [0], [1], [0, 0, 1, 1], [], []>} : vector<8x32xf32>, vector<32x32xf32>, vector<8x32xf32> -> vector<8x32xf32>
    %625 = arith.addf %623, %624 : vector<8x32xf32>
    %626 = arith.addf %625, %25 : vector<8x32xf32>
    %cst_230 = arith.constant dense<0.000000e+00> : vector<8x32xf32>
    %627 = tpu.matmul %614, %4, %cst_230 {dimension_numbers = #tpu.dot_dimension_numbers<[1], [0], [0], [1], [0, 0, 1, 1], [], []>} : vector<8x16xf32>, vector<16x32xf32>, vector<8x32xf32> -> vector<8x32xf32>
    %cst_231 = arith.constant dense<0.000000e+00> : vector<8x32xf32>
    %628 = tpu.matmul %570, %12, %cst_231 {dimension_numbers = #tpu.dot_dimension_numbers<[1], [0], [0], [1], [0, 0, 1, 1], [], []>} : vector<8x32xf32>, vector<32x32xf32>, vector<8x32xf32> -> vector<8x32xf32>
    %629 = arith.addf %627, %628 : vector<8x32xf32>
    %630 = arith.addf %629, %28 : vector<8x32xf32>
    %631 = arith.negf %618 : vector<8x32xf32>
    %632 = math.exp %631 : vector<8x32xf32>
    %cst_232 = arith.constant 1.000000e+00 : f32
    %633 = vector.broadcast %cst_232 : f32 to vector<8x32xf32>
    %634 = arith.addf %633, %632 : vector<8x32xf32>
    %635 = arith.divf %633, %634 : vector<8x32xf32>
    %636 = arith.negf %622 : vector<8x32xf32>
    %637 = math.exp %636 : vector<8x32xf32>
    %cst_233 = arith.constant 1.000000e+00 : f32
    %638 = vector.broadcast %cst_233 : f32 to vector<8x32xf32>
    %639 = arith.addf %638, %637 : vector<8x32xf32>
    %640 = arith.divf %638, %639 : vector<8x32xf32>
    %641 = math.tanh %626 : vector<8x32xf32>
    %642 = arith.negf %630 : vector<8x32xf32>
    %643 = math.exp %642 : vector<8x32xf32>
    %cst_234 = arith.constant 1.000000e+00 : f32
    %644 = vector.broadcast %cst_234 : f32 to vector<8x32xf32>
    %645 = arith.addf %644, %643 : vector<8x32xf32>
    %646 = arith.divf %644, %645 : vector<8x32xf32>
    %647 = arith.mulf %640, %568 : vector<8x32xf32>
    %648 = arith.mulf %635, %641 : vector<8x32xf32>
    %649 = arith.addf %647, %648 : vector<8x32xf32>
    %650 = math.tanh %649 : vector<8x32xf32>
    %651 = arith.mulf %646, %650 : vector<8x32xf32>
    %cst_235 = arith.constant dense<0.000000e+00> : vector<8x32xf32>
    %652 = tpu.matmul %651, %5, %cst_235 {dimension_numbers = #tpu.dot_dimension_numbers<[1], [0], [0], [1], [0, 0, 1, 1], [], []>} : vector<8x32xf32>, vector<32x32xf32>, vector<8x32xf32> -> vector<8x32xf32>
    %cst_236 = arith.constant dense<0.000000e+00> : vector<8x32xf32>
    %653 = tpu.matmul %607, %13, %cst_236 {dimension_numbers = #tpu.dot_dimension_numbers<[1], [0], [0], [1], [0, 0, 1, 1], [], []>} : vector<8x32xf32>, vector<32x32xf32>, vector<8x32xf32> -> vector<8x32xf32>
    %654 = arith.addf %652, %653 : vector<8x32xf32>
    %655 = arith.addf %654, %31 : vector<8x32xf32>
    %cst_237 = arith.constant dense<0.000000e+00> : vector<8x32xf32>
    %656 = tpu.matmul %651, %6, %cst_237 {dimension_numbers = #tpu.dot_dimension_numbers<[1], [0], [0], [1], [0, 0, 1, 1], [], []>} : vector<8x32xf32>, vector<32x32xf32>, vector<8x32xf32> -> vector<8x32xf32>
    %cst_238 = arith.constant dense<0.000000e+00> : vector<8x32xf32>
    %657 = tpu.matmul %607, %14, %cst_238 {dimension_numbers = #tpu.dot_dimension_numbers<[1], [0], [0], [1], [0, 0, 1, 1], [], []>} : vector<8x32xf32>, vector<32x32xf32>, vector<8x32xf32> -> vector<8x32xf32>
    %658 = arith.addf %656, %657 : vector<8x32xf32>
    %659 = arith.addf %658, %34 : vector<8x32xf32>
    %cst_239 = arith.constant dense<0.000000e+00> : vector<8x32xf32>
    %660 = tpu.matmul %651, %7, %cst_239 {dimension_numbers = #tpu.dot_dimension_numbers<[1], [0], [0], [1], [0, 0, 1, 1], [], []>} : vector<8x32xf32>, vector<32x32xf32>, vector<8x32xf32> -> vector<8x32xf32>
    %cst_240 = arith.constant dense<0.000000e+00> : vector<8x32xf32>
    %661 = tpu.matmul %607, %15, %cst_240 {dimension_numbers = #tpu.dot_dimension_numbers<[1], [0], [0], [1], [0, 0, 1, 1], [], []>} : vector<8x32xf32>, vector<32x32xf32>, vector<8x32xf32> -> vector<8x32xf32>
    %662 = arith.addf %660, %661 : vector<8x32xf32>
    %663 = arith.addf %662, %37 : vector<8x32xf32>
    %cst_241 = arith.constant dense<0.000000e+00> : vector<8x32xf32>
    %664 = tpu.matmul %651, %8, %cst_241 {dimension_numbers = #tpu.dot_dimension_numbers<[1], [0], [0], [1], [0, 0, 1, 1], [], []>} : vector<8x32xf32>, vector<32x32xf32>, vector<8x32xf32> -> vector<8x32xf32>
    %cst_242 = arith.constant dense<0.000000e+00> : vector<8x32xf32>
    %665 = tpu.matmul %607, %16, %cst_242 {dimension_numbers = #tpu.dot_dimension_numbers<[1], [0], [0], [1], [0, 0, 1, 1], [], []>} : vector<8x32xf32>, vector<32x32xf32>, vector<8x32xf32> -> vector<8x32xf32>
    %666 = arith.addf %664, %665 : vector<8x32xf32>
    %667 = arith.addf %666, %40 : vector<8x32xf32>
    %668 = arith.negf %655 : vector<8x32xf32>
    %669 = math.exp %668 : vector<8x32xf32>
    %cst_243 = arith.constant 1.000000e+00 : f32
    %670 = vector.broadcast %cst_243 : f32 to vector<8x32xf32>
    %671 = arith.addf %670, %669 : vector<8x32xf32>
    %672 = arith.divf %670, %671 : vector<8x32xf32>
    %673 = arith.negf %659 : vector<8x32xf32>
    %674 = math.exp %673 : vector<8x32xf32>
    %cst_244 = arith.constant 1.000000e+00 : f32
    %675 = vector.broadcast %cst_244 : f32 to vector<8x32xf32>
    %676 = arith.addf %675, %674 : vector<8x32xf32>
    %677 = arith.divf %675, %676 : vector<8x32xf32>
    %678 = math.tanh %663 : vector<8x32xf32>
    %679 = arith.negf %667 : vector<8x32xf32>
    %680 = math.exp %679 : vector<8x32xf32>
    %cst_245 = arith.constant 1.000000e+00 : f32
    %681 = vector.broadcast %cst_245 : f32 to vector<8x32xf32>
    %682 = arith.addf %681, %680 : vector<8x32xf32>
    %683 = arith.divf %681, %682 : vector<8x32xf32>
    %684 = arith.mulf %677, %605 : vector<8x32xf32>
    %685 = arith.mulf %672, %678 : vector<8x32xf32>
    %686 = arith.addf %684, %685 : vector<8x32xf32>
    %687 = math.tanh %686 : vector<8x32xf32>
    %688 = arith.mulf %683, %687 : vector<8x32xf32>
    %c7_i32 = arith.constant 7 : i32
    %689 = vector.broadcast %c7_i32 : i32 to vector<8x1xi32>
    %690 = arith.cmpi eq, %0, %689 : vector<8x1xi32>
    %691 = vector.shape_cast %690 : vector<8x1xi1> to vector<8x1xi1>
    %692 = vector.broadcast %691 : vector<8x1xi1> to vector<8x32xi1>
    %693 = arith.select %692, %688, %612 : vector<8x32xi1>, vector<8x32xf32>
    %c0_246 = arith.constant 0 : index
    %c0_247 = arith.constant 0 : index
    %694 = vector.load %arg27[%c0_246, %c0_247] : memref<8x32xf32, #tpu.memory_space<vmem>>, vector<8x32xf32>
    tpu.vector_store %arg27[%c0_246, %c0_247], %693 {strides = array<i32>} : memref<8x32xf32, #tpu.memory_space<vmem>>, vector<8x32xf32>,
    return
  }
  func.func @transform_0(%arg0: i32) -> (i32, i32, i32) {
    %c0_i32 = arith.constant 0 : i32
    %c0_i32_0 = arith.constant 0 : i32
    %c0_i32_1 = arith.constant 0 : i32
    return %c0_i32, %arg0, %c0_i32_0 : i32, i32, i32
  }
  func.func @transform_1(%arg0: i32) -> (i32, i32) {
    %c0_i32 = arith.constant 0 : i32
    %c0_i32_0 = arith.constant 0 : i32
    return %arg0, %c0_i32 : i32, i32
  }
  func.func @transform_2(%arg0: i32) -> (i32, i32) {
    %c0_i32 = arith.constant 0 : i32
    %c0_i32_0 = arith.constant 0 : i32
    %c0_i32_1 = arith.constant 0 : i32
    return %c0_i32, %c0_i32_0 : i32, i32
  }
  func.func @transform_3(%arg0: i32) -> (i32, i32) {
    %c0_i32 = arith.constant 0 : i32
    %c0_i32_0 = arith.constant 0 : i32
    %c0_i32_1 = arith.constant 0 : i32
    return %c0_i32, %c0_i32_0 : i32, i32
  }
  func.func @transform_4(%arg0: i32) -> (i32, i32) {
    %c0_i32 = arith.constant 0 : i32
    %c0_i32_0 = arith.constant 0 : i32
    %c0_i32_1 = arith.constant 0 : i32
    return %c0_i32, %c0_i32_0 : i32, i32
  }
  func.func @transform_5(%arg0: i32) -> (i32, i32) {
    %c0_i32 = arith.constant 0 : i32
    %c0_i32_0 = arith.constant 0 : i32
    %c0_i32_1 = arith.constant 0 : i32
    return %c0_i32, %c0_i32_0 : i32, i32
  }
  func.func @transform_6(%arg0: i32) -> (i32, i32) {
    %c0_i32 = arith.constant 0 : i32
    %c0_i32_0 = arith.constant 0 : i32
    %c0_i32_1 = arith.constant 0 : i32
    return %c0_i32, %c0_i32_0 : i32, i32
  }
  func.func @transform_7(%arg0: i32) -> (i32, i32) {
    %c0_i32 = arith.constant 0 : i32
    %c0_i32_0 = arith.constant 0 : i32
    %c0_i32_1 = arith.constant 0 : i32
    return %c0_i32, %c0_i32_0 : i32, i32
  }
  func.func @transform_8(%arg0: i32) -> (i32, i32) {
    %c0_i32 = arith.constant 0 : i32
    %c0_i32_0 = arith.constant 0 : i32
    %c0_i32_1 = arith.constant 0 : i32
    return %c0_i32, %c0_i32_0 : i32, i32
  }
  func.func @transform_9(%arg0: i32) -> (i32, i32) {
    %c0_i32 = arith.constant 0 : i32
    %c0_i32_0 = arith.constant 0 : i32
    %c0_i32_1 = arith.constant 0 : i32
    return %c0_i32, %c0_i32_0 : i32, i32
  }
  func.func @transform_10(%arg0: i32) -> (i32, i32) {
    %c0_i32 = arith.constant 0 : i32
    %c0_i32_0 = arith.constant 0 : i32
    %c0_i32_1 = arith.constant 0 : i32
    return %c0_i32, %c0_i32_0 : i32, i32
  }
  func.func @transform_11(%arg0: i32) -> (i32, i32) {
    %c0_i32 = arith.constant 0 : i32
    %c0_i32_0 = arith.constant 0 : i32
    %c0_i32_1 = arith.constant 0 : i32
    return %c0_i32, %c0_i32_0 : i32, i32
  }
  func.func @transform_12(%arg0: i32) -> (i32, i32) {
    %c0_i32 = arith.constant 0 : i32
    %c0_i32_0 = arith.constant 0 : i32
    %c0_i32_1 = arith.constant 0 : i32
    return %c0_i32, %c0_i32_0 : i32, i32
  }
  func.func @transform_13(%arg0: i32) -> (i32, i32) {
    %c0_i32 = arith.constant 0 : i32
    %c0_i32_0 = arith.constant 0 : i32
    %c0_i32_1 = arith.constant 0 : i32
    return %c0_i32, %c0_i32_0 : i32, i32
  }
  func.func @transform_14(%arg0: i32) -> (i32, i32) {
    %c0_i32 = arith.constant 0 : i32
    %c0_i32_0 = arith.constant 0 : i32
    %c0_i32_1 = arith.constant 0 : i32
    return %c0_i32, %c0_i32_0 : i32, i32
  }
  func.func @transform_15(%arg0: i32) -> (i32, i32) {
    %c0_i32 = arith.constant 0 : i32
    %c0_i32_0 = arith.constant 0 : i32
    %c0_i32_1 = arith.constant 0 : i32
    return %c0_i32, %c0_i32_0 : i32, i32
  }
  func.func @transform_16(%arg0: i32) -> (i32, i32) {
    %c0_i32 = arith.constant 0 : i32
    %c0_i32_0 = arith.constant 0 : i32
    %c0_i32_1 = arith.constant 0 : i32
    return %c0_i32, %c0_i32_0 : i32, i32
  }
  func.func @transform_17(%arg0: i32) -> (i32, i32) {
    %c0_i32 = arith.constant 0 : i32
    %c0_i32_0 = arith.constant 0 : i32
    %c0_i32_1 = arith.constant 0 : i32
    return %c0_i32, %c0_i32_0 : i32, i32
  }
  func.func @transform_18(%arg0: i32) -> (i32, i32) {
    %c0_i32 = arith.constant 0 : i32
    %c0_i32_0 = arith.constant 0 : i32
    %c0_i32_1 = arith.constant 0 : i32
    return %c0_i32, %c0_i32_0 : i32, i32
  }
  func.func @transform_19(%arg0: i32) -> (i32, i32) {
    %c0_i32 = arith.constant 0 : i32
    %c0_i32_0 = arith.constant 0 : i32
    %c0_i32_1 = arith.constant 0 : i32
    return %c0_i32, %c0_i32_0 : i32, i32
  }
  func.func @transform_20(%arg0: i32) -> (i32, i32) {
    %c0_i32 = arith.constant 0 : i32
    %c0_i32_0 = arith.constant 0 : i32
    %c0_i32_1 = arith.constant 0 : i32
    return %c0_i32, %c0_i32_0 : i32, i32
  }
  func.func @transform_21(%arg0: i32) -> (i32, i32) {
    %c0_i32 = arith.constant 0 : i32
    %c0_i32_0 = arith.constant 0 : i32
    %c0_i32_1 = arith.constant 0 : i32
    return %c0_i32, %c0_i32_0 : i32, i32
  }
  func.func @transform_22(%arg0: i32) -> (i32, i32) {
    %c0_i32 = arith.constant 0 : i32
    %c0_i32_0 = arith.constant 0 : i32
    %c0_i32_1 = arith.constant 0 : i32
    return %c0_i32, %c0_i32_0 : i32, i32
  }
  func.func @transform_23(%arg0: i32) -> (i32, i32) {
    %c0_i32 = arith.constant 0 : i32
    %c0_i32_0 = arith.constant 0 : i32
    %c0_i32_1 = arith.constant 0 : i32
    return %c0_i32, %c0_i32_0 : i32, i32
  }
  func.func @transform_24(%arg0: i32) -> (i32, i32) {
    %c0_i32 = arith.constant 0 : i32
    %c0_i32_0 = arith.constant 0 : i32
    %c0_i32_1 = arith.constant 0 : i32
    return %c0_i32, %c0_i32_0 : i32, i32
  }
  func.func @transform_25(%arg0: i32) -> (i32, i32) {
    %c0_i32 = arith.constant 0 : i32
    %c0_i32_0 = arith.constant 0 : i32
    %c0_i32_1 = arith.constant 0 : i32
    return %c0_i32, %c0_i32_0 : i32, i32
  }
  func.func @transform_26(%arg0: i32) -> (i32, i32) {
    %c0_i32 = arith.constant 0 : i32
    %c0_i32_0 = arith.constant 0 : i32
    return %arg0, %c0_i32 : i32, i32
  }
}

</mosaic_0001>

<llo_original>
// kernel: tpu_custom_call.1
$region0: #{tpu_custom_call.1}
  #allocation0 [shape = 'u32[]', space=smem, size = 0x4, offset = 0x4, fixed_abs, tag = 'smem constant byte address 0x4 - core index']
  #allocation1 [shape = 'u32[144,128]{1,0:T(1,128)}', space=vmem, size = 0x12000, scoped, tag = 'internal scratch']
  %s0 = inlined_call_operand.hbm [shape: f32[8,8,16], index: 0, kind: input, shape index: {}]
  %s1 = inlined_call_operand.vmem [shape: s32[8,1], index: 1, kind: input, shape index: {}]
  %s2 = inlined_call_operand.hbm [shape: f32[16,32], index: 2, kind: input, shape index: {}]
  %s3 = inlined_call_operand.hbm [shape: f32[16,32], index: 3, kind: input, shape index: {}]
  %s4 = inlined_call_operand.hbm [shape: f32[16,32], index: 4, kind: input, shape index: {}]
  %s5 = inlined_call_operand.hbm [shape: f32[16,32], index: 5, kind: input, shape index: {}]
  %s6 = inlined_call_operand.hbm [shape: f32[32,32], index: 6, kind: input, shape index: {}]
  %s7 = inlined_call_operand.vmem [shape: f32[32,32], index: 7, kind: input, shape index: {}]
  %s8 = inlined_call_operand.hbm [shape: f32[32,32], index: 8, kind: input, shape index: {}]
  %s9 = inlined_call_operand.hbm [shape: f32[32,32], index: 9, kind: input, shape index: {}]
  %s10 = inlined_call_operand.vmem [shape: f32[1,32], index: 10, kind: input, shape index: {}]
  %s11 = inlined_call_operand.hbm [shape: f32[1,32], index: 11, kind: input, shape index: {}]
  %s12 = inlined_call_operand.hbm [shape: f32[1,32], index: 12, kind: input, shape index: {}]
  %s13 = inlined_call_operand.hbm [shape: f32[1,32], index: 13, kind: input, shape index: {}]
  %s14 = inlined_call_operand.hbm [shape: f32[32,32], index: 14, kind: input, shape index: {}]
  %s15 = inlined_call_operand.vmem [shape: f32[32,32], index: 15, kind: input, shape index: {}]
  %s16 = inlined_call_operand.hbm [shape: f32[32,32], index: 16, kind: input, shape index: {}]
  %s17 = inlined_call_operand.hbm [shape: f32[32,32], index: 17, kind: input, shape index: {}]
  %s18 = inlined_call_operand.hbm [shape: f32[32,32], index: 18, kind: input, shape index: {}]
  %s19 = inlined_call_operand.hbm [shape: f32[32,32], index: 19, kind: input, shape index: {}]
  %s20 = inlined_call_operand.hbm [shape: f32[32,32], index: 20, kind: input, shape index: {}]
  %s21 = inlined_call_operand.hbm [shape: f32[32,32], index: 21, kind: input, shape index: {}]
  %s22 = inlined_call_operand.vmem [shape: f32[1,32], index: 22, kind: input, shape index: {}]
  %s23 = inlined_call_operand.vmem [shape: f32[1,32], index: 23, kind: input, shape index: {}]
  %s24 = inlined_call_operand.vmem [shape: f32[1,32], index: 24, kind: input, shape index: {}]
  %s25 = inlined_call_operand.vmem [shape: f32[1,32], index: 25, kind: input, shape index: {}]
  %s26 = inlined_call_operand.hbm [shape: f32[8,32], index: 26, kind: output, shape index: {}]
  %s27 = sld [smem:[#allocation0]]
  $region186: #{tpu_custom_call.1} parent=0
    _
  %s29 = ssub.s32 1, %s27
  %s30 = scalar_select 0, %s29, %s27
  $region1: #{tpu_custom_call.1} parent=0
    #allocation2 [shape = 'u8[32768]{0}', space=vmem, size = 0x8000, scoped, tag = 'input window, operand 0, single buffered']
    #allocation3 [shape = 's32[1]{0}', space=sflag, size = 0x4, scoped, tag = 'scoped memory for tpu_custom_call.1']
    #allocation4 [shape = 's32[1]{0}', space=sflag, size = 0x4, scoped, tag = 'scoped memory for tpu_custom_call.1']
    #allocation5 [shape = 'u8[8192]{0}', space=vmem, size = 0x2000, scoped, tag = 'input window, operand 2, single buffered']
    #allocation6 [shape = 's32[1]{0}', space=sflag, size = 0x4, scoped, tag = 'scoped memory for tpu_custom_call.1']
    #allocation7 [shape = 'u8[8192]{0}', space=vmem, size = 0x2000, scoped, tag = 'input window, operand 3, single buffered']
    #allocation8 [shape = 'u8[8192]{0}', space=vmem, size = 0x2000, scoped, tag = 'input window, operand 4, single buffered']
    #allocation9 [shape = 's32[1]{0}', space=sflag, size = 0x4, scoped, tag = 'scoped memory for tpu_custom_call.1']
    #allocation10 [shape = 'u8[8192]{0}', space=vmem, size = 0x2000, scoped, tag = 'input window, operand 5, single buffered']
    #allocation11 [shape = 'u8[16384]{0}', space=vmem, size = 0x4000, scoped, tag = 'input window, operand 6, single buffered']
    #allocation12 [shape = 's32[1]{0}', space=sflag, size = 0x4, scoped, tag = 'scoped memory for tpu_custom_call.1']
    #allocation13 [shape = 'u8[16384]{0}', space=vmem, size = 0x4000, scoped, tag = 'input window, operand 8, single buffered']
    #allocation14 [shape = 'u8[16384]{0}', space=vmem, size = 0x4000, scoped, tag = 'input window, operand 9, single buffered']
    #allocation15 [shape = 's32[1]{0}', space=sflag, size = 0x4, scoped, tag = 'scoped memory for tpu_custom_call.1']
    #allocation16 [shape = 'u8[512]{0}', space=vmem, size = 0x400, scoped, tag = 'input window, operand 11, single buffered']
    #allocation17 [shape = 'u8[512]{0}', space=vmem, size = 0x400, scoped, tag = 'input window, operand 12, single buffered']
    #allocation18 [shape = 's32[1]{0}', space=sflag, size = 0x4, scoped, tag = 'scoped memory for tpu_custom_call.1']
    #allocation19 [shape = 'u8[512]{0}', space=vmem, size = 0x400, scoped, tag = 'input window, operand 13, single buffered']
    #allocation20 [shape = 'u8[16384]{0}', space=vmem, size = 0x4000, scoped, tag = 'input window, operand 14, single buffered']
    #allocation21 [shape = 's32[1]{0}', space=sflag, size = 0x4, scoped, tag = 'scoped memory for tpu_custom_call.1']
    #allocation22 [shape = 'u8[16384]{0}', space=vmem, size = 0x4000, scoped, tag = 'input window, operand 16, single buffered']
    #allocation23 [shape = 'u8[16384]{0}', space=vmem, size = 0x4000, scoped, tag = 'input window, operand 17, single buffered']
    #allocation24 [shape = 's32[1]{0}', space=sflag, size = 0x4, scoped, tag = 'scoped memory for tpu_custom_call.1']
    #allocation25 [shape = 'u8[16384]{0}', space=vmem, size = 0x4000, scoped, tag = 'input window, operand 18, single buffered']
    #allocation26 [shape = 'u8[16384]{0}', space=vmem, size = 0x4000, scoped, tag = 'input window, operand 19, single buffered']
    #allocation27 [shape = 's32[1]{0}', space=sflag, size = 0x4, scoped, tag = 'scoped memory for tpu_custom_call.1']
    #allocation28 [shape = 'u8[16384]{0}', space=vmem, size = 0x4000, scoped, tag = 'input window, operand 20, single buffered']
    #allocation29 [shape = 'u8[16384]{0}', space=vmem, size = 0x4000, scoped, tag = 'input window, operand 21, single buffered']
    #allocation30 [shape = 's32[1]{0}', space=sflag, size = 0x4, scoped, tag = 'scoped memory for tpu_custom_call.1']
    #allocation31 [shape = 'u8[4096]{0}', space=vmem, size = 0x1000, scoped, tag = 'output window, operand 0, single buffered']
    %31 = vsyncpa [#allocation3], 0
    %32 = vsyncpa [#allocation6], 0
    %33 = vsyncpa [#allocation9], 0
    %34 = vsyncpa [#allocation12], 0
    %35 = vsyncpa [#allocation15], 0
    %36 = vsyncpa [#allocation18], 0
    %37 = vsyncpa [#allocation21], 0
    %38 = vsyncpa [#allocation24], 0
    %39 = vsyncpa [#allocation27], 0
    %40 = vsyncpa [#allocation30], 0
    %41 = vsyncpa [#allocation4], 0
    // Predicated region
    $region2: #{tpu_custom_call.1} parent=1 // pred_check
      _
    $region3: #{tpu_custom_call.1} parent=1 // pred_check_branch
      %43 = sbr.rel (0) target = $region5
    $region4: #{tpu_custom_call.1} parent=1 // pred_region
      %s45 = ssub.s32 1024, 1024
      %46 = vsyncadd [#allocation3], %s45
      %s47 = sshll.u32 [#allocation2], 4
      %s48 = int_to_ptr.vmem [resolvable:$true] %s47
      %53 = dma.hbm_to_vmem [thread:$0]  %s0, 1024, %s48, [#allocation3], 128, 128, 8
    $region5: #{tpu_custom_call.1} parent=1 // pred_fallthru
      _
    // Predicated region
    $region6: #{tpu_custom_call.1} parent=1 // pred_check
      _
    $region7: #{tpu_custom_call.1} parent=1 // pred_check_branch
      %55 = sbr.rel (0) target = $region9
    $region8: #{tpu_custom_call.1} parent=1 // pred_region
      _
    $region9: #{tpu_custom_call.1} parent=1 // pred_fallthru
      _
    // Predicated region
    $region10: #{tpu_custom_call.1} parent=1 // pred_check
      _
    $region11: #{tpu_custom_call.1} parent=1 // pred_check_branch
      %57 = sbr.rel (0) target = $region13
    $region12: #{tpu_custom_call.1} parent=1 // pred_region
      %s59 = ssub.s32 256, 256
      %60 = vsyncadd [#allocation6], %s59
      %s61 = sshll.u32 [#allocation5], 4
      %s62 = int_to_ptr.vmem [resolvable:$true] %s61
      %67 = dma.hbm_to_vmem [thread:$0]  %s2, 256, %s62, [#allocation6], 128, 128, 8
    $region13: #{tpu_custom_call.1} parent=1 // pred_fallthru
      _
    // Predicated region
    $region14: #{tpu_custom_call.1} parent=1 // pred_check
      _
    $region15: #{tpu_custom_call.1} parent=1 // pred_check_branch
      %69 = sbr.rel (0) target = $region17
    $region16: #{tpu_custom_call.1} parent=1 // pred_region
      %s71 = ssub.s32 256, 256
      %72 = vsyncadd [#allocation6], %s71
      %s73 = sshll.u32 [#allocation7], 4
      %s74 = int_to_ptr.vmem [resolvable:$true] %s73
      %79 = dma.hbm_to_vmem [thread:$0]  %s3, 256, %s74, [#allocation6], 128, 128, 8
    $region17: #{tpu_custom_call.1} parent=1 // pred_fallthru
      _
    // Predicated region
    $region18: #{tpu_custom_call.1} parent=1 // pred_check
      _
    $region19: #{tpu_custom_call.1} parent=1 // pred_check_branch
      %81 = sbr.rel (0) target = $region21
    $region20: #{tpu_custom_call.1} parent=1 // pred_region
      %s83 = ssub.s32 256, 256
      %84 = vsyncadd [#allocation9], %s83
      %s85 = sshll.u32 [#allocation8], 4
      %s86 = int_to_ptr.vmem [resolvable:$true] %s85
      %91 = dma.hbm_to_vmem [thread:$0]  %s4, 256, %s86, [#allocation9], 128, 128, 8
    $region21: #{tpu_custom_call.1} parent=1 // pred_fallthru
      _
    // Predicated region
    $region22: #{tpu_custom_call.1} parent=1 // pred_check
      _
    $region23: #{tpu_custom_call.1} parent=1 // pred_check_branch
      %93 = sbr.rel (0) target = $region25
    $region24: #{tpu_custom_call.1} parent=1 // pred_region
      %s95 = ssub.s32 256, 256
      %96 = vsyncadd [#allocation9], %s95
      %s97 = sshll.u32 [#allocation10], 4
      %s98 = int_to_ptr.vmem [resolvable:$true] %s97
      %103 = dma.hbm_to_vmem [thread:$0]  %s5, 256, %s98, [#allocation9], 128, 128, 8
    $region25: #{tpu_custom_call.1} parent=1 // pred_fallthru
      _
    // Predicated region
    $region26: #{tpu_custom_call.1} parent=1 // pred_check
      _
    $region27: #{tpu_custom_call.1} parent=1 // pred_check_branch
      %105 = sbr.rel (0) target = $region29
    $region28: #{tpu_custom_call.1} parent=1 // pred_region
      %s107 = ssub.s32 512, 512
      %108 = vsyncadd [#allocation12], %s107
      %s109 = sshll.u32 [#allocation11], 4
      %s110 = int_to_ptr.vmem [resolvable:$true] %s109
      %115 = dma.hbm_to_vmem [thread:$0]  %s6, 512, %s110, [#allocation12], 128, 128, 8
    $region29: #{tpu_custom_call.1} parent=1 // pred_fallthru
      _
    // Predicated region
    $region30: #{tpu_custom_call.1} parent=1 // pred_check
      _
    $region31: #{tpu_custom_call.1} parent=1 // pred_check_branch
      %117 = sbr.rel (0) target = $region33
    $region32: #{tpu_custom_call.1} parent=1 // pred_region
      _
    $region33: #{tpu_custom_call.1} parent=1 // pred_fallthru
      _
    // Predicated region
    $region34: #{tpu_custom_call.1} parent=1 // pred_check
      _
    $region35: #{tpu_custom_call.1} parent=1 // pred_check_branch
      %119 = sbr.rel (0) target = $region37
    $region36: #{tpu_custom_call.1} parent=1 // pred_region
      %s121 = ssub.s32 512, 512
      %122 = vsyncadd [#allocation12], %s121
      %s123 = sshll.u32 [#allocation13], 4
      %s124 = int_to_ptr.vmem [resolvable:$true] %s123
      %129 = dma.hbm_to_vmem [thread:$0]  %s8, 512, %s124, [#allocation12], 128, 128, 8
    $region37: #{tpu_custom_call.1} parent=1 // pred_fallthru
      _
    // Predicated region
    $region38: #{tpu_custom_call.1} parent=1 // pred_check
      _
    $region39: #{tpu_custom_call.1} parent=1 // pred_check_branch
      %131 = sbr.rel (0) target = $region41
    $region40: #{tpu_custom_call.1} parent=1 // pred_region
      %s133 = ssub.s32 512, 512
      %134 = vsyncadd [#allocation15], %s133
      %s135 = sshll.u32 [#allocation14], 4
      %s136 = int_to_ptr.vmem [resolvable:$true] %s135
      %141 = dma.hbm_to_vmem [thread:$0]  %s9, 512, %s136, [#allocation15], 128, 128, 8
    $region41: #{tpu_custom_call.1} parent=1 // pred_fallthru
      _
    // Predicated region
    $region42: #{tpu_custom_call.1} parent=1 // pred_check
      _
    $region43: #{tpu_custom_call.1} parent=1 // pred_check_branch
      %143 = sbr.rel (0) target = $region45
    $region44: #{tpu_custom_call.1} parent=1 // pred_region
      _
    $region45: #{tpu_custom_call.1} parent=1 // pred_fallthru
      _
    // Predicated region
    $region46: #{tpu_custom_call.1} parent=1 // pred_check
      _
    $region47: #{tpu_custom_call.1} parent=1 // pred_check_branch
      %145 = sbr.rel (0) target = $region49
    $region48: #{tpu_custom_call.1} parent=1 // pred_region
      %s147 = ssub.s32 16, 16
      %148 = vsyncadd [#allocation15], %s147
      %s150 = sshll.u32 [#allocation16], 4
      %s151 = int_to_ptr.vmem [resolvable:$true] %s150
      %153 = dma.hbm_to_vmem [thread:$0]  %s11, 16, %s151, [#allocation15]
    $region49: #{tpu_custom_call.1} parent=1 // pred_fallthru
      _
    // Predicated region
    $region50: #{tpu_custom_call.1} parent=1 // pred_check
      _
    $region51: #{tpu_custom_call.1} parent=1 // pred_check_branch
      %155 = sbr.rel (0) target = $region53
    $region52: #{tpu_custom_call.1} parent=1 // pred_region
      %s157 = ssub.s32 16, 16
      %158 = vsyncadd [#allocation18], %s157
      %s160 = sshll.u32 [#allocation17], 4
      %s161 = int_to_ptr.vmem [resolvable:$true] %s160
      %163 = dma.hbm_to_vmem [thread:$0]  %s12, 16, %s161, [#allocation18]
    $region53: #{tpu_custom_call.1} parent=1 // pred_fallthru
      _
    // Predicated region
    $region54: #{tpu_custom_call.1} parent=1 // pred_check
      _
    $region55: #{tpu_custom_call.1} parent=1 // pred_check_branch
      %165 = sbr.rel (0) target = $region57
    $region56: #{tpu_custom_call.1} parent=1 // pred_region
      %s167 = ssub.s32 16, 16
      %168 = vsyncadd [#allocation18], %s167
      %s170 = sshll.u32 [#allocation19], 4
      %s171 = int_to_ptr.vmem [resolvable:$true] %s170
      %173 = dma.hbm_to_vmem [thread:$0]  %s13, 16, %s171, [#allocation18]
    $region57: #{tpu_custom_call.1} parent=1 // pred_fallthru
      _
    // Predicated region
    $region58: #{tpu_custom_call.1} parent=1 // pred_check
      _
    $region59: #{tpu_custom_call.1} parent=1 // pred_check_branch
      %175 = sbr.rel (0) target = $region61
    $region60: #{tpu_custom_call.1} parent=1 // pred_region
      %s177 = ssub.s32 512, 512
      %178 = vsyncadd [#allocation21], %s177
      %s179 = sshll.u32 [#allocation20], 4
      %s180 = int_to_ptr.vmem [resolvable:$true] %s179
      %185 = dma.hbm_to_vmem [thread:$0]  %s14, 512, %s180, [#allocation21], 128, 128, 8
    $region61: #{tpu_custom_call.1} parent=1 // pred_fallthru
      _
    // Predicated region
    $region62: #{tpu_custom_call.1} parent=1 // pred_check
      _
    $region63: #{tpu_custom_call.1} parent=1 // pred_check_branch
      %187 = sbr.rel (0) target = $region65
    $region64: #{tpu_custom_call.1} parent=1 // pred_region
      _
    $region65: #{tpu_custom_call.1} parent=1 // pred_fallthru
      _
    // Predicated region
    $region66: #{tpu_custom_call.1} parent=1 // pred_check
      _
    $region67: #{tpu_custom_call.1} parent=1 // pred_check_branch
      %189 = sbr.rel (0) target = $region69
    $region68: #{tpu_custom_call.1} parent=1 // pred_region
      %s191 = ssub.s32 512, 512
      %192 = vsyncadd [#allocation21], %s191
      %s193 = sshll.u32 [#allocation22], 4
      %s194 = int_to_ptr.vmem [resolvable:$true] %s193
      %199 = dma.hbm_to_vmem [thread:$0]  %s16, 512, %s194, [#allocation21], 128, 128, 8
    $region69: #{tpu_custom_call.1} parent=1 // pred_fallthru
      _
    // Predicated region
    $region70: #{tpu_custom_call.1} parent=1 // pred_check
      _
    $region71: #{tpu_custom_call.1} parent=1 // pred_check_branch
      %201 = sbr.rel (0) target = $region73
    $region72: #{tpu_custom_call.1} parent=1 // pred_region
      %s203 = ssub.s32 512, 512
      %204 = vsyncadd [#allocation24], %s203
      %s205 = sshll.u32 [#allocation23], 4
      %s206 = int_to_ptr.vmem [resolvable:$true] %s205
      %211 = dma.hbm_to_vmem [thread:$0]  %s17, 512, %s206, [#allocation24], 128, 128, 8
    $region73: #{tpu_custom_call.1} parent=1 // pred_fallthru
      _
    // Predicated region
    $region74: #{tpu_custom_call.1} parent=1 // pred_check
      _
    $region75: #{tpu_custom_call.1} parent=1 // pred_check_branch
      %213 = sbr.rel (0) target = $region77
    $region76: #{tpu_custom_call.1} parent=1 // pred_region
      %s215 = ssub.s32 512, 512
      %216 = vsyncadd [#allocation24], %s215
      %s217 = sshll.u32 [#allocation25], 4
      %s218 = int_to_ptr.vmem [resolvable:$true] %s217
      %223 = dma.hbm_to_vmem [thread:$0]  %s18, 512, %s218, [#allocation24], 128, 128, 8
    $region77: #{tpu_custom_call.1} parent=1 // pred_fallthru
      _
    // Predicated region
    $region78: #{tpu_custom_call.1} parent=1 // pred_check
      _
    $region79: #{tpu_custom_call.1} parent=1 // pred_check_branch
      %225 = sbr.rel (0) target = $region81
    $region80: #{tpu_custom_call.1} parent=1 // pred_region
      %s227 = ssub.s32 512, 512
      %228 = vsyncadd [#allocation27], %s227
      %s229 = sshll.u32 [#allocation26], 4
      %s230 = int_to_ptr.vmem [resolvable:$true] %s229
      %235 = dma.hbm_to_vmem [thread:$0]  %s19, 512, %s230, [#allocation27], 128, 128, 8
    $region81: #{tpu_custom_call.1} parent=1 // pred_fallthru
      _
    // Predicated region
    $region82: #{tpu_custom_call.1} parent=1 // pred_check
      _
    $region83: #{tpu_custom_call.1} parent=1 // pred_check_branch
      %237 = sbr.rel (0) target = $region85
    $region84: #{tpu_custom_call.1} parent=1 // pred_region
      %s239 = ssub.s32 512, 512
      %240 = vsyncadd [#allocation27], %s239
      %s241 = sshll.u32 [#allocation28], 4
      %s242 = int_to_ptr.vmem [resolvable:$true] %s241
      %247 = dma.hbm_to_vmem [thread:$0]  %s20, 512, %s242, [#allocation27], 128, 128, 8
    $region85: #{tpu_custom_call.1} parent=1 // pred_fallthru
      _
    // Predicated region
    $region86: #{tpu_custom_call.1} parent=1 // pred_check
      _
    $region87: #{tpu_custom_call.1} parent=1 // pred_check_branch
      %249 = sbr.rel (0) target = $region89
    $region88: #{tpu_custom_call.1} parent=1 // pred_region
      %s251 = ssub.s32 512, 512
      %252 = vsyncadd [#allocation30], %s251
      %s253 = sshll.u32 [#allocation29], 4
      %s254 = int_to_ptr.vmem [resolvable:$true] %s253
      %259 = dma.hbm_to_vmem [thread:$0]  %s21, 512, %s254, [#allocation30], 128, 128, 8
    $region89: #{tpu_custom_call.1} parent=1 // pred_fallthru
      _
    // Predicated region
    $region90: #{tpu_custom_call.1} parent=1 // pred_check
      _
    $region91: #{tpu_custom_call.1} parent=1 // pred_check_branch
      %261 = sbr.rel (0) target = $region93
    $region92: #{tpu_custom_call.1} parent=1 // pred_region
      _
    $region93: #{tpu_custom_call.1} parent=1 // pred_fallthru
      _
    // Predicated region
    $region94: #{tpu_custom_call.1} parent=1 // pred_check
      _
    $region95: #{tpu_custom_call.1} parent=1 // pred_check_branch
      %263 = sbr.rel (0) target = $region97
    $region96: #{tpu_custom_call.1} parent=1 // pred_region
      _
    $region97: #{tpu_custom_call.1} parent=1 // pred_fallthru
      _
    // Predicated region
    $region98: #{tpu_custom_call.1} parent=1 // pred_check
      _
    $region99: #{tpu_custom_call.1} parent=1 // pred_check_branch
      %265 = sbr.rel (0) target = $region101
    $region100: #{tpu_custom_call.1} parent=1 // pred_region
      _
    $region101: #{tpu_custom_call.1} parent=1 // pred_fallthru
      _
    // Predicated region
    $region102: #{tpu_custom_call.1} parent=1 // pred_check
      _
    $region103: #{tpu_custom_call.1} parent=1 // pred_check_branch
      %267 = sbr.rel (0) target = $region105
    $region104: #{tpu_custom_call.1} parent=1 // pred_region
      _
    $region105: #{tpu_custom_call.1} parent=1 // pred_fallthru
      _
    // Predicated region
    $region106: #{tpu_custom_call.1} parent=1 // pred_check
      _
    $region107: #{tpu_custom_call.1} parent=1 // pred_check_branch
      %269 = sbr.rel (0) target = $region109
    $region108: #{tpu_custom_call.1} parent=1 // pred_region
      %270 = dma.done [#allocation3], 1024
    $region109: #{tpu_custom_call.1} parent=1 // pred_fallthru
      _
    // Predicated region
    $region110: #{tpu_custom_call.1} parent=1 // pred_check
      _
    $region111: #{tpu_custom_call.1} parent=1 // pred_check_branch
      %272 = sbr.rel (0) target = $region113
    $region112: #{tpu_custom_call.1} parent=1 // pred_region
      %273 = dma.done [#allocation6], 256
    $region113: #{tpu_custom_call.1} parent=1 // pred_fallthru
      _
    // Predicated region
    $region114: #{tpu_custom_call.1} parent=1 // pred_check
      _
    $region115: #{tpu_custom_call.1} parent=1 // pred_check_branch
      %275 = sbr.rel (0) target = $region117
    $region116: #{tpu_custom_call.1} parent=1 // pred_region
      %276 = dma.done [#allocation6], 256
    $region117: #{tpu_custom_call.1} parent=1 // pred_fallthru
      _
    // Predicated region
    $region118: #{tpu_custom_call.1} parent=1 // pred_check
      _
    $region119: #{tpu_custom_call.1} parent=1 // pred_check_branch
      %278 = sbr.rel (0) target = $region121
    $region120: #{tpu_custom_call.1} parent=1 // pred_region
      %279 = dma.done [#allocation9], 256
    $region121: #{tpu_custom_call.1} parent=1 // pred_fallthru
      _
    // Predicated region
    $region122: #{tpu_custom_call.1} parent=1 // pred_check
      _
    $region123: #{tpu_custom_call.1} parent=1 // pred_check_branch
      %281 = sbr.rel (0) target = $region125
    $region124: #{tpu_custom_call.1} parent=1 // pred_region
      %282 = dma.done [#allocation9], 256
    $region125: #{tpu_custom_call.1} parent=1 // pred_fallthru
      _
    // Predicated region
    $region126: #{tpu_custom_call.1} parent=1 // pred_check
      _
    $region127: #{tpu_custom_call.1} parent=1 // pred_check_branch
      %284 = sbr.rel (0) target = $region129
    $region128: #{tpu_custom_call.1} parent=1 // pred_region
      %285 = dma.done [#allocation12], 512
    $region129: #{tpu_custom_call.1} parent=1 // pred_fallthru
      _
    // Predicated region
    $region130: #{tpu_custom_call.1} parent=1 // pred_check
      _
    $region131: #{tpu_custom_call.1} parent=1 // pred_check_branch
      %287 = sbr.rel (0) target = $region133
    $region132: #{tpu_custom_call.1} parent=1 // pred_region
      %288 = dma.done [#allocation12], 512
    $region133: #{tpu_custom_call.1} parent=1 // pred_fallthru
      _
    // Predicated region
    $region134: #{tpu_custom_call.1} parent=1 // pred_check
      _
    $region135: #{tpu_custom_call.1} parent=1 // pred_check_branch
      %290 = sbr.rel (0) target = $region137
    $region136: #{tpu_custom_call.1} parent=1 // pred_region
      %291 = dma.done [#allocation15], 512
    $region137: #{tpu_custom_call.1} parent=1 // pred_fallthru
      _
    // Predicated region
    $region138: #{tpu_custom_call.1} parent=1 // pred_check
      _
    $region139: #{tpu_custom_call.1} parent=1 // pred_check_branch
      %293 = sbr.rel (0) target = $region141
    $region140: #{tpu_custom_call.1} parent=1 // pred_region
      %294 = dma.done [#allocation15], 16
    $region141: #{tpu_custom_call.1} parent=1 // pred_fallthru
      _
    // Predicated region
    $region142: #{tpu_custom_call.1} parent=1 // pred_check
      _
    $region143: #{tpu_custom_call.1} parent=1 // pred_check_branch
      %296 = sbr.rel (0) target = $region145
    $region144: #{tpu_custom_call.1} parent=1 // pred_region
      %297 = dma.done [#allocation18], 16
    $region145: #{tpu_custom_call.1} parent=1 // pred_fallthru
      _
    // Predicated region
    $region146: #{tpu_custom_call.1} parent=1 // pred_check
      _
    $region147: #{tpu_custom_call.1} parent=1 // pred_check_branch
      %299 = sbr.rel (0) target = $region149
    $region148: #{tpu_custom_call.1} parent=1 // pred_region
      %300 = dma.done [#allocation18], 16
    $region149: #{tpu_custom_call.1} parent=1 // pred_fallthru
      _
    // Predicated region
    $region150: #{tpu_custom_call.1} parent=1 // pred_check
      _
    $region151: #{tpu_custom_call.1} parent=1 // pred_check_branch
      %302 = sbr.rel (0) target = $region153
    $region152: #{tpu_custom_call.1} parent=1 // pred_region
      %303 = dma.done [#allocation21], 512
    $region153: #{tpu_custom_call.1} parent=1 // pred_fallthru
      _
    // Predicated region
    $region154: #{tpu_custom_call.1} parent=1 // pred_check
      _
    $region155: #{tpu_custom_call.1} parent=1 // pred_check_branch
      %305 = sbr.rel (0) target = $region157
    $region156: #{tpu_custom_call.1} parent=1 // pred_region
      %306 = dma.done [#allocation21], 512
    $region157: #{tpu_custom_call.1} parent=1 // pred_fallthru
      _
    // Predicated region
    $region158: #{tpu_custom_call.1} parent=1 // pred_check
      _
    $region159: #{tpu_custom_call.1} parent=1 // pred_check_branch
      %308 = sbr.rel (0) target = $region161
    $region160: #{tpu_custom_call.1} parent=1 // pred_region
      %309 = dma.done [#allocation24], 512
    $region161: #{tpu_custom_call.1} parent=1 // pred_fallthru
      _
    // Predicated region
    $region162: #{tpu_custom_call.1} parent=1 // pred_check
      _
    $region163: #{tpu_custom_call.1} parent=1 // pred_check_branch
      %311 = sbr.rel (0) target = $region165
    $region164: #{tpu_custom_call.1} parent=1 // pred_region
      %312 = dma.done [#allocation24], 512
    $region165: #{tpu_custom_call.1} parent=1 // pred_fallthru
      _
    // Predicated region
    $region166: #{tpu_custom_call.1} parent=1 // pred_check
      _
    $region167: #{tpu_custom_call.1} parent=1 // pred_check_branch
      %314 = sbr.rel (0) target = $region169
    $region168: #{tpu_custom_call.1} parent=1 // pred_region
      %315 = dma.done [#allocation27], 512
    $region169: #{tpu_custom_call.1} parent=1 // pred_fallthru
      _
    // Predicated region
    $region170: #{tpu_custom_call.1} parent=1 // pred_check
      _
    $region171: #{tpu_custom_call.1} parent=1 // pred_check_branch
      %317 = sbr.rel (0) target = $region173
    $region172: #{tpu_custom_call.1} parent=1 // pred_region
      %318 = dma.done [#allocation27], 512
    $region173: #{tpu_custom_call.1} parent=1 // pred_fallthru
      _
    // Predicated region
    $region174: #{tpu_custom_call.1} parent=1 // pred_check
      _
    $region175: #{tpu_custom_call.1} parent=1 // pred_check_branch
      %320 = sbr.rel (0) target = $region177
    $region176: #{tpu_custom_call.1} parent=1 // pred_region
      %321 = dma.done [#allocation30], 512
    $region177: #{tpu_custom_call.1} parent=1 // pred_fallthru
      _
    %v322 = vld [vmem:[%s1] sm:$0xff]
    %v323 = vld [vmem:[#allocation5] sm:$0xff]
    %v324 = vld [vmem:[#allocation5 + $0x8] sm:$0xff]
    %v325 = vld [vmem:[#allocation7] sm:$0xff]
    %v326 = vld [vmem:[#allocation7 + $0x8] sm:$0xff]
    %v327 = vld [vmem:[#allocation8] sm:$0xff]
    %v328 = vld [vmem:[#allocation8 + $0x8] sm:$0xff]
    %v329 = vld [vmem:[#allocation10] sm:$0xff]
    %v330 = vld [vmem:[#allocation10 + $0x8] sm:$0xff]
    %v331 = vld [vmem:[#allocation20] sm:$0xff]
    %v332 = vld [vmem:[#allocation20 + $0x8] sm:$0xff]
    %v333 = vld [vmem:[#allocation20 + $0x10] sm:$0xff]
    %v334 = vld [vmem:[#allocation20 + $0x18] sm:$0xff]
    %v335 = vld [vmem:[%s15] sm:$0xff]
    %v336 = vld [vmem:[%s15 + $0x8] sm:$0xff]
    %v337 = vld [vmem:[%s15 + $0x10] sm:$0xff]
    %v338 = vld [vmem:[%s15 + $0x18] sm:$0xff]
    %v339 = vld [vmem:[#allocation22] sm:$0xff]
    %v340 = vld [vmem:[#allocation22 + $0x8] sm:$0xff]
    %v341 = vld [vmem:[#allocation22 + $0x10] sm:$0xff]
    %v342 = vld [vmem:[#allocation22 + $0x18] sm:$0xff]
    %v343 = vld [vmem:[#allocation23] sm:$0xff]
    %v344 = vld [vmem:[#allocation23 + $0x8] sm:$0xff]
    %v345 = vld [vmem:[#allocation23 + $0x10] sm:$0xff]
    %v346 = vld [vmem:[#allocation23 + $0x18] sm:$0xff]
    %v347 = vld [vmem:[#allocation11] sm:$0xff]
    %v348 = vld [vmem:[#allocation11 + $0x8] sm:$0xff]
    %v349 = vld [vmem:[#allocation11 + $0x10] sm:$0xff]
    %v350 = vld [vmem:[#allocation11 + $0x18] sm:$0xff]
    %v351 = vld [vmem:[%s7] sm:$0xff]
    %v352 = vld [vmem:[%s7 + $0x8] sm:$0xff]
    %v353 = vld [vmem:[%s7 + $0x10] sm:$0xff]
    %v354 = vld [vmem:[%s7 + $0x18] sm:$0xff]
    %v355 = vld [vmem:[#allocation13] sm:$0xff]
    %v356 = vld [vmem:[#allocation13 + $0x8] sm:$0xff]
    %v357 = vld [vmem:[#allocation13 + $0x10] sm:$0xff]
    %v358 = vld [vmem:[#allocation13 + $0x18] sm:$0xff]
    %v359 = vld [vmem:[#allocation14] sm:$0xff]
    %v360 = vld [vmem:[#allocation14 + $0x8] sm:$0xff]
    %v361 = vld [vmem:[#allocation14 + $0x10] sm:$0xff]
    %v362 = vld [vmem:[#allocation14 + $0x18] sm:$0xff]
    %v363 = vld [vmem:[#allocation25] sm:$0xff]
    %v364 = vld [vmem:[#allocation25 + $0x8] sm:$0xff]
    %v365 = vld [vmem:[#allocation25 + $0x10] sm:$0xff]
    %v366 = vld [vmem:[#allocation25 + $0x18] sm:$0xff]
    %v367 = vld [vmem:[#allocation26] sm:$0xff]
    %v368 = vld [vmem:[#allocation26 + $0x8] sm:$0xff]
    %v369 = vld [vmem:[#allocation26 + $0x10] sm:$0xff]
    %v370 = vld [vmem:[#allocation26 + $0x18] sm:$0xff]
    %v371 = vld [vmem:[#allocation28] sm:$0xff]
    %v372 = vld [vmem:[#allocation28 + $0x8] sm:$0xff]
    %v373 = vld [vmem:[#allocation28 + $0x10] sm:$0xff]
    %v374 = vld [vmem:[#allocation28 + $0x18] sm:$0xff]
    %v375 = vld [vmem:[#allocation29] sm:$0xff]
    %v376 = vld [vmem:[#allocation29 + $0x8] sm:$0xff]
    %v377 = vld [vmem:[#allocation29 + $0x10] sm:$0xff]
    %v378 = vld [vmem:[#allocation29 + $0x18] sm:$0xff]
    %v379 = vld [vmem:[%s10] sm:$0x1]
    %v381 = vlaneseq
    %v382 = vshrl.u32 %v381, 7
    %v383 = vsub.s32 0, %v382
    %v384 = vrot.slane %v379, %v383
    %v386 = vld [vmem:[#allocation16] sm:$0x1]
    %v388 = vlaneseq
    %v389 = vshrl.u32 %v388, 7
    %v390 = vsub.s32 0, %v389
    %v391 = vrot.slane %v386, %v390
    %v393 = vld [vmem:[#allocation17] sm:$0x1]
    %v395 = vlaneseq
    %v396 = vshrl.u32 %v395, 7
    %v397 = vsub.s32 0, %v396
    %v398 = vrot.slane %v393, %v397
    %v400 = vld [vmem:[#allocation19] sm:$0x1]
    %v402 = vlaneseq
    %v403 = vshrl.u32 %v402, 7
    %v404 = vsub.s32 0, %v403
    %v405 = vrot.slane %v400, %v404
    %v407 = vld [vmem:[%s22] sm:$0x1]
    %v409 = vlaneseq
    %v410 = vshrl.u32 %v409, 7
    %v411 = vsub.s32 0, %v410
    %v412 = vrot.slane %v407, %v411
    %v414 = vld [vmem:[%s23] sm:$0x1]
    %v416 = vlaneseq
    %v417 = vshrl.u32 %v416, 7
    %v418 = vsub.s32 0, %v417
    %v419 = vrot.slane %v414, %v418
    %v421 = vld [vmem:[%s24] sm:$0x1]
    %v423 = vlaneseq
    %v424 = vshrl.u32 %v423, 7
    %v425 = vsub.s32 0, %v424
    %v426 = vrot.slane %v421, %v425
    %v428 = vld [vmem:[%s25] sm:$0x1]
    %v430 = vlaneseq
    %v431 = vshrl.u32 %v430, 7
    %v432 = vsub.s32 0, %v431
    %v433 = vrot.slane %v428, %v432
    %v435 = vld [vmem:[#allocation2] sm:$0xff]
    %vm436 = vcmask 261120
    %v438 = vsel %vm436, 0.0, 0
    %440 = vmatprep.subr.mxu0 0.0
    %441 = vmatpush1.msra.mxu0 %v347
    %442 = vmatprep.subr.mxu0 0.0
    %443 = vmatpush1.msra.mxu0 %v348
    %444 = vmatprep.subr.mxu0 0.0
    %445 = vmatpush1.msra.mxu0 %v349
    %446 = vmatprep.subr.mxu0 0.0
    %447 = vmatpush1.msra.mxu0 %v350
    %448 = vmatprep.subr.mxu0 0.0
    %449 = vmatpush1.msra.mxu0 0.0
    %450 = vmatprep.subr.mxu0 0.0
    %451 = vmatpush1.msra.mxu0 0.0
    %452 = vmatprep.subr.mxu0 0.0
    %453 = vmatpush1.msra.mxu0 0.0
    %454 = vmatprep.subr.mxu0 0.0
    %455 = vmatpush1.msra.mxu0 0.0
    %456 = vmatprep.subr.mxu0 0.0
    %457 = vmatpush1.msra.mxu0 0.0
    %458 = vmatprep.subr.mxu0 0.0
    %459 = vmatpush1.msra.mxu0 0.0
    %460 = vmatprep.subr.mxu0 0.0
    %461 = vmatpush1.msra.mxu0 0.0
    %462 = vmatprep.subr.mxu0 0.0
    %463 = vmatpush1.msra.mxu0 0.0
    %464 = vmatprep.subr.mxu0 0.0
    %465 = vmatpush1.msra.mxu0 0.0
    %466 = vmatprep.subr.mxu0 0.0
    %467 = vmatpush1.msra.mxu0 0.0
    %468 = vmatprep.subr.mxu0 0.0
    %469 = vmatpush1.msra.mxu0 0.0
    %470 = vmatprep.subr.mxu0 0.0
    %471 = vmatpush1.msra.mxu0 0.0
    %472 = vmatprep.subr.mxu0 0.0
    %473 = vmatpush1.msra.mxu0 0.0
    %474 = vmatprep.subr.mxu0 0.0
    %475 = vmatpush1.msra.mxu0 0.0
    %476 = vmatprep.subr.mxu0 0.0
    %477 = vmatpush1.msra.mxu0 0.0
    %478 = vmatprep.subr.mxu0 0.0
    %479 = vmatpush1.msra.mxu0 0.0
    %480 = vmatprep.subr.mxu0 0.0
    %481 = vmatpush1.msra.mxu0 0.0
    %482 = vmatprep.subr.mxu0 0.0
    %483 = vmatpush1.msra.mxu0 0.0
    %484 = vmatprep.subr.mxu0 0.0
    %485 = vmatpush1.msra.mxu0 0.0
    %486 = vmatprep.subr.mxu0 0.0
    %487 = vmatpush1.msra.mxu0 0.0
    %488 = vmatprep.subr.mxu0 0.0
    %489 = vmatpush1.msra.mxu0 0.0
    %490 = vmatprep.subr.mxu0 0.0
    %491 = vmatpush1.msra.mxu0 0.0
    %492 = vmatprep.subr.mxu0 0.0
    %493 = vmatpush1.msra.mxu0 0.0
    %494 = vmatprep.subr.mxu0 0.0
    %495 = vmatpush1.msra.mxu0 0.0
    %496 = vmatprep.subr.mxu0 0.0
    %497 = vmatpush1.msra.mxu0 0.0
    %498 = vmatprep.subr.mxu0 0.0
    %499 = vmatpush1.msra.mxu0 0.0
    %500 = vmatprep.subr.mxu0 0.0
    %501 = vmatpush1.msra.mxu0 0.0
    %502 = vmatprep.subr.mxu0 0.0
    %503 = vmatpush1.msra.mxu0 0.0
    %504 = vmatprep.mubr.f32.mxu0 0.0
    %505 = vmatmul.mubr.f32.gmra.mrb[0].mxu0 %v438
    %v506 = vpop.f32.mrb[0].mxu0
    %v507 = vadd.f32 0.0, %v506
    %v508 = vpop.f32.mrb[0].mxu0
    %509 = vdwg.mxu0
    %vm510 = vcmask 130048
    %v512 = vsel %vm510, %v435, 0
    %514 = vmatprep.subr.mxu0 0.0
    %515 = vmatpush1.msra.mxu0 %v323
    %516 = vmatprep.subr.mxu0 0.0
    %517 = vmatpush1.msra.mxu0 %v324
    %518 = vmatprep.subr.mxu0 0.0
    %519 = vmatpush1.msra.mxu0 0.0
    %520 = vmatprep.subr.mxu0 0.0
    %521 = vmatpush1.msra.mxu0 0.0
    %522 = vmatprep.subr.mxu0 0.0
    %523 = vmatpush1.msra.mxu0 0.0
    %524 = vmatprep.subr.mxu0 0.0
    %525 = vmatpush1.msra.mxu0 0.0
    %526 = vmatprep.subr.mxu0 0.0
    %527 = vmatpush1.msra.mxu0 0.0
    %528 = vmatprep.subr.mxu0 0.0
    %529 = vmatpush1.msra.mxu0 0.0
    %530 = vmatprep.subr.mxu0 0.0
    %531 = vmatpush1.msra.mxu0 0.0
    %532 = vmatprep.subr.mxu0 0.0
    %533 = vmatpush1.msra.mxu0 0.0
    %534 = vmatprep.subr.mxu0 0.0
    %535 = vmatpush1.msra.mxu0 0.0
    %536 = vmatprep.subr.mxu0 0.0
    %537 = vmatpush1.msra.mxu0 0.0
    %538 = vmatprep.subr.mxu0 0.0
    %539 = vmatpush1.msra.mxu0 0.0
    %540 = vmatprep.subr.mxu0 0.0
    %541 = vmatpush1.msra.mxu0 0.0
    %542 = vmatprep.subr.mxu0 0.0
    %543 = vmatpush1.msra.mxu0 0.0
    %544 = vmatprep.subr.mxu0 0.0
    %545 = vmatpush1.msra.mxu0 0.0
    %546 = vmatprep.subr.mxu0 0.0
    %547 = vmatpush1.msra.mxu0 0.0
    %548 = vmatprep.subr.mxu0 0.0
    %549 = vmatpush1.msra.mxu0 0.0
    %550 = vmatprep.subr.mxu0 0.0
    %551 = vmatpush1.msra.mxu0 0.0
    %552 = vmatprep.subr.mxu0 0.0
    %553 = vmatpush1.msra.mxu0 0.0
    %554 = vmatprep.subr.mxu0 0.0
    %555 = vmatpush1.msra.mxu0 0.0
    %556 = vmatprep.subr.mxu0 0.0
    %557 = vmatpush1.msra.mxu0 0.0
    %558 = vmatprep.subr.mxu0 0.0
    %559 = vmatpush1.msra.mxu0 0.0
    %560 = vmatprep.subr.mxu0 0.0
    %561 = vmatpush1.msra.mxu0 0.0
    %562 = vmatprep.subr.mxu0 0.0
    %563 = vmatpush1.msra.mxu0 0.0
    %564 = vmatprep.subr.mxu0 0.0
    %565 = vmatpush1.msra.mxu0 0.0
    %566 = vmatprep.subr.mxu0 0.0
    %567 = vmatpush1.msra.mxu0 0.0
    %568 = vmatprep.subr.mxu0 0.0
    %569 = vmatpush1.msra.mxu0 0.0
    %570 = vmatprep.subr.mxu0 0.0
    %571 = vmatpush1.msra.mxu0 0.0
    %572 = vmatprep.subr.mxu0 0.0
    %573 = vmatpush1.msra.mxu0 0.0
    %574 = vmatprep.subr.mxu0 0.0
    %575 = vmatpush1.msra.mxu0 0.0
    %576 = vmatprep.subr.mxu0 0.0
    %577 = vmatpush1.msra.mxu0 0.0
    %578 = vmatprep.mubr.f32.mxu0 0.0
    %579 = vmatmul.mubr.f32.gmra.mrb[0].mxu0 %v512
    %v580 = vpop.f32.mrb[0].mxu0
    %v581 = vadd.f32 %v507, %v580
    %v582 = vpop.f32.mrb[0].mxu0
    %583 = vdwg.mxu0
    %v584 = vadd.f32 %v581, %v384
    %585 = vmatprep.subr.mxu0 0.0
    %586 = vmatpush1.msra.mxu0 %v351
    %587 = vmatprep.subr.mxu0 0.0
    %588 = vmatpush1.msra.mxu0 %v352
    %589 = vmatprep.subr.mxu0 0.0
    %590 = vmatpush1.msra.mxu0 %v353
    %591 = vmatprep.subr.mxu0 0.0
    %592 = vmatpush1.msra.mxu0 %v354
    %593 = vmatprep.subr.mxu0 0.0
    %594 = vmatpush1.msra.mxu0 0.0
    %595 = vmatprep.subr.mxu0 0.0
    %596 = vmatpush1.msra.mxu0 0.0
    %597 = vmatprep.subr.mxu0 0.0
    %598 = vmatpush1.msra.mxu0 0.0
    %599 = vmatprep.subr.mxu0 0.0
    %600 = vmatpush1.msra.mxu0 0.0
    %601 = vmatprep.subr.mxu0 0.0
    %602 = vmatpush1.msra.mxu0 0.0
    %603 = vmatprep.subr.mxu0 0.0
    %604 = vmatpush1.msra.mxu0 0.0
    %605 = vmatprep.subr.mxu0 0.0
    %606 = vmatpush1.msra.mxu0 0.0
    %607 = vmatprep.subr.mxu0 0.0
    %608 = vmatpush1.msra.mxu0 0.0
    %609 = vmatprep.subr.mxu0 0.0
    %610 = vmatpush1.msra.mxu0 0.0
    %611 = vmatprep.subr.mxu0 0.0
    %612 = vmatpush1.msra.mxu0 0.0
    %613 = vmatprep.subr.mxu0 0.0
    %614 = vmatpush1.msra.mxu0 0.0
    %615 = vmatprep.subr.mxu0 0.0
    %616 = vmatpush1.msra.mxu0 0.0
    %617 = vmatprep.subr.mxu0 0.0
    %618 = vmatpush1.msra.mxu0 0.0
    %619 = vmatprep.subr.mxu0 0.0
    %620 = vmatpush1.msra.mxu0 0.0
    %621 = vmatprep.subr.mxu0 0.0
    %622 = vmatpush1.msra.mxu0 0.0
    %623 = vmatprep.subr.mxu0 0.0
    %624 = vmatpush1.msra.mxu0 0.0
    %625 = vmatprep.subr.mxu0 0.0
    %626 = vmatpush1.msra.mxu0 0.0
    %627 = vmatprep.subr.mxu0 0.0
    %628 = vmatpush1.msra.mxu0 0.0
    %629 = vmatprep.subr.mxu0 0.0
    %630 = vmatpush1.msra.mxu0 0.0
    %631 = vmatprep.subr.mxu0 0.0
    %632 = vmatpush1.msra.mxu0 0.0
    %633 = vmatprep.subr.mxu0 0.0
    %634 = vmatpush1.msra.mxu0 0.0
    %635 = vmatprep.subr.mxu0 0.0
    %636 = vmatpush1.msra.mxu0 0.0
    %637 = vmatprep.subr.mxu0 0.0
    %638 = vmatpush1.msra.mxu0 0.0
    %639 = vmatprep.subr.mxu0 0.0
    %640 = vmatpush1.msra.mxu0 0.0
    %641 = vmatprep.subr.mxu0 0.0
    %642 = vmatpush1.msra.mxu0 0.0
    %643 = vmatprep.subr.mxu0 0.0
    %644 = vmatpush1.msra.mxu0 0.0
    %645 = vmatprep.subr.mxu0 0.0
    %646 = vmatpush1.msra.mxu0 0.0
    %647 = vmatprep.subr.mxu0 0.0
    %648 = vmatpush1.msra.mxu0 0.0
    %649 = vmatprep.mubr.f32.mxu0 0.0
    %650 = vmatmul.mubr.f32.gmra.mrb[0].mxu0 %v438
    %v651 = vpop.f32.mrb[0].mxu0
    %v652 = vadd.f32 0.0, %v651
    %v653 = vpop.f32.mrb[0].mxu0
    %654 = vdwg.mxu0
    %655 = vmatprep.subr.mxu0 0.0
    %656 = vmatpush1.msra.mxu0 %v325
    %657 = vmatprep.subr.mxu0 0.0
    %658 = vmatpush1.msra.mxu0 %v326
    %659 = vmatprep.subr.mxu0 0.0
    %660 = vmatpush1.msra.mxu0 0.0
    %661 = vmatprep.subr.mxu0 0.0
    %662 = vmatpush1.msra.mxu0 0.0
    %663 = vmatprep.subr.mxu0 0.0
    %664 = vmatpush1.msra.mxu0 0.0
    %665 = vmatprep.subr.mxu0 0.0
    %666 = vmatpush1.msra.mxu0 0.0
    %667 = vmatprep.subr.mxu0 0.0
    %668 = vmatpush1.msra.mxu0 0.0
    %669 = vmatprep.subr.mxu0 0.0
    %670 = vmatpush1.msra.mxu0 0.0
    %671 = vmatprep.subr.mxu0 0.0
    %672 = vmatpush1.msra.mxu0 0.0
    %673 = vmatprep.subr.mxu0 0.0
    %674 = vmatpush1.msra.mxu0 0.0
    %675 = vmatprep.subr.mxu0 0.0
    %676 = vmatpush1.msra.mxu0 0.0
    %677 = vmatprep.subr.mxu0 0.0
    %678 = vmatpush1.msra.mxu0 0.0
    %679 = vmatprep.subr.mxu0 0.0
    %680 = vmatpush1.msra.mxu0 0.0
    %681 = vmatprep.subr.mxu0 0.0
    %682 = vmatpush1.msra.mxu0 0.0
    %683 = vmatprep.subr.mxu0 0.0
    %684 = vmatpush1.msra.mxu0 0.0
    %685 = vmatprep.subr.mxu0 0.0
    %686 = vmatpush1.msra.mxu0 0.0
    %687 = vmatprep.subr.mxu0 0.0
    %688 = vmatpush1.msra.mxu0 0.0
    %689 = vmatprep.subr.mxu0 0.0
    %690 = vmatpush1.msra.mxu0 0.0
    %691 = vmatprep.subr.mxu0 0.0
    %692 = vmatpush1.msra.mxu0 0.0
    %693 = vmatprep.subr.mxu0 0.0
    %694 = vmatpush1.msra.mxu0 0.0
    %695 = vmatprep.subr.mxu0 0.0
    %696 = vmatpush1.msra.mxu0 0.0
    %697 = vmatprep.subr.mxu0 0.0
    %698 = vmatpush1.msra.mxu0 0.0
    %699 = vmatprep.subr.mxu0 0.0
    %700 = vmatpush1.msra.mxu0 0.0
    %701 = vmatprep.subr.mxu0 0.0
    %702 = vmatpush1.msra.mxu0 0.0
    %703 = vmatprep.subr.mxu0 0.0
    %704 = vmatpush1.msra.mxu0 0.0
    %705 = vmatprep.subr.mxu0 0.0
    %706 = vmatpush1.msra.mxu0 0.0
    %707 = vmatprep.subr.mxu0 0.0
    %708 = vmatpush1.msra.mxu0 0.0
    %709 = vmatprep.subr.mxu0 0.0
    %710 = vmatpush1.msra.mxu0 0.0
    %711 = vmatprep.subr.mxu0 0.0
    %712 = vmatpush1.msra.mxu0 0.0
    %713 = vmatprep.subr.mxu0 0.0
    %714 = vmatpush1.msra.mxu0 0.0
    %715 = vmatprep.subr.mxu0 0.0
    %716 = vmatpush1.msra.mxu0 0.0
    %717 = vmatprep.subr.mxu0 0.0
    %718 = vmatpush1.msra.mxu0 0.0
    %719 = vmatprep.mubr.f32.mxu0 0.0
    %720 = vmatmul.mubr.f32.gmra.mrb[0].mxu0 %v512
    %v721 = vpop.f32.mrb[0].mxu0
    %v722 = vadd.f32 %v652, %v721
    %v723 = vpop.f32.mrb[0].mxu0
    %724 = vdwg.mxu0
    %v725 = vadd.f32 %v722, %v391
    %726 = vmatprep.subr.mxu0 0.0
    %727 = vmatpush1.msra.mxu0 %v355
    %728 = vmatprep.subr.mxu0 0.0
    %729 = vmatpush1.msra.mxu0 %v356
    %730 = vmatprep.subr.mxu0 0.0
    %731 = vmatpush1.msra.mxu0 %v357
    %732 = vmatprep.subr.mxu0 0.0
    %733 = vmatpush1.msra.mxu0 %v358
    %734 = vmatprep.subr.mxu0 0.0
    %735 = vmatpush1.msra.mxu0 0.0
    %736 = vmatprep.subr.mxu0 0.0
    %737 = vmatpush1.msra.mxu0 0.0
    %738 = vmatprep.subr.mxu0 0.0
    %739 = vmatpush1.msra.mxu0 0.0
    %740 = vmatprep.subr.mxu0 0.0
    %741 = vmatpush1.msra.mxu0 0.0
    %742 = vmatprep.subr.mxu0 0.0
    %743 = vmatpush1.msra.mxu0 0.0
    %744 = vmatprep.subr.mxu0 0.0
    %745 = vmatpush1.msra.mxu0 0.0
    %746 = vmatprep.subr.mxu0 0.0
    %747 = vmatpush1.msra.mxu0 0.0
    %748 = vmatprep.subr.mxu0 0.0
    %749 = vmatpush1.msra.mxu0 0.0
    %750 = vmatprep.subr.mxu0 0.0
    %751 = vmatpush1.msra.mxu0 0.0
    %752 = vmatprep.subr.mxu0 0.0
    %753 = vmatpush1.msra.mxu0 0.0
    %754 = vmatprep.subr.mxu0 0.0
    %755 = vmatpush1.msra.mxu0 0.0
    %756 = vmatprep.subr.mxu0 0.0
    %757 = vmatpush1.msra.mxu0 0.0
    %758 = vmatprep.subr.mxu0 0.0
    %759 = vmatpush1.msra.mxu0 0.0
    %760 = vmatprep.subr.mxu0 0.0
    %761 = vmatpush1.msra.mxu0 0.0
    %762 = vmatprep.subr.mxu0 0.0
    %763 = vmatpush1.msra.mxu0 0.0
    %764 = vmatprep.subr.mxu0 0.0
    %765 = vmatpush1.msra.mxu0 0.0
    %766 = vmatprep.subr.mxu0 0.0
    %767 = vmatpush1.msra.mxu0 0.0
    %768 = vmatprep.subr.mxu0 0.0
    %769 = vmatpush1.msra.mxu0 0.0
    %770 = vmatprep.subr.mxu0 0.0
    %771 = vmatpush1.msra.mxu0 0.0
    %772 = vmatprep.subr.mxu0 0.0
    %773 = vmatpush1.msra.mxu0 0.0
    %774 = vmatprep.subr.mxu0 0.0
    %775 = vmatpush1.msra.mxu0 0.0
    %776 = vmatprep.subr.mxu0 0.0
    %777 = vmatpush1.msra.mxu0 0.0
    %778 = vmatprep.subr.mxu0 0.0
    %779 = vmatpush1.msra.mxu0 0.0
    %780 = vmatprep.subr.mxu0 0.0
    %781 = vmatpush1.msra.mxu0 0.0
    %782 = vmatprep.subr.mxu0 0.0
    %783 = vmatpush1.msra.mxu0 0.0
    %784 = vmatprep.subr.mxu0 0.0
    %785 = vmatpush1.msra.mxu0 0.0
    %786 = vmatprep.subr.mxu0 0.0
    %787 = vmatpush1.msra.mxu0 0.0
    %788 = vmatprep.subr.mxu0 0.0
    %789 = vmatpush1.msra.mxu0 0.0
    %790 = vmatprep.mubr.f32.mxu0 0.0
    %791 = vmatmul.mubr.f32.gmra.mrb[0].mxu0 %v438
    %v792 = vpop.f32.mrb[0].mxu0
    %v793 = vadd.f32 0.0, %v792
    %v794 = vpop.f32.mrb[0].mxu0
    %795 = vdwg.mxu0
    %796 = vmatprep.subr.mxu0 0.0
    %797 = vmatpush1.msra.mxu0 %v327
    %798 = vmatprep.subr.mxu0 0.0
    %799 = vmatpush1.msra.mxu0 %v328
    %800 = vmatprep.subr.mxu0 0.0
    %801 = vmatpush1.msra.mxu0 0.0
    %802 = vmatprep.subr.mxu0 0.0
    %803 = vmatpush1.msra.mxu0 0.0
    %804 = vmatprep.subr.mxu0 0.0
    %805 = vmatpush1.msra.mxu0 0.0
    %806 = vmatprep.subr.mxu0 0.0
    %807 = vmatpush1.msra.mxu0 0.0
    %808 = vmatprep.subr.mxu0 0.0
    %809 = vmatpush1.msra.mxu0 0.0
    %810 = vmatprep.subr.mxu0 0.0
    %811 = vmatpush1.msra.mxu0 0.0
    %812 = vmatprep.subr.mxu0 0.0
    %813 = vmatpush1.msra.mxu0 0.0
    %814 = vmatprep.subr.mxu0 0.0
    %815 = vmatpush1.msra.mxu0 0.0
    %816 = vmatprep.subr.mxu0 0.0
    %817 = vmatpush1.msra.mxu0 0.0
    %818 = vmatprep.subr.mxu0 0.0
    %819 = vmatpush1.msra.mxu0 0.0
    %820 = vmatprep.subr.mxu0 0.0
    %821 = vmatpush1.msra.mxu0 0.0
    %822 = vmatprep.subr.mxu0 0.0
    %823 = vmatpush1.msra.mxu0 0.0
    %824 = vmatprep.subr.mxu0 0.0
    %825 = vmatpush1.msra.mxu0 0.0
    %826 = vmatprep.subr.mxu0 0.0
    %827 = vmatpush1.msra.mxu0 0.0
    %828 = vmatprep.subr.mxu0 0.0
    %829 = vmatpush1.msra.mxu0 0.0
    %830 = vmatprep.subr.mxu0 0.0
    %831 = vmatpush1.msra.mxu0 0.0
    %832 = vmatprep.subr.mxu0 0.0
    %833 = vmatpush1.msra.mxu0 0.0
    %834 = vmatprep.subr.mxu0 0.0
    %835 = vmatpush1.msra.mxu0 0.0
    %836 = vmatprep.subr.mxu0 0.0
    %837 = vmatpush1.msra.mxu0 0.0
    %838 = vmatprep.subr.mxu0 0.0
    %839 = vmatpush1.msra.mxu0 0.0
    %840 = vmatprep.subr.mxu0 0.0
    %841 = vmatpush1.msra.mxu0 0.0
    %842 = vmatprep.subr.mxu0 0.0
    %843 = vmatpush1.msra.mxu0 0.0
    %844 = vmatprep.subr.mxu0 0.0
    %845 = vmatpush1.msra.mxu0 0.0
    %846 = vmatprep.subr.mxu0 0.0
    %847 = vmatpush1.msra.mxu0 0.0
    %848 = vmatprep.subr.mxu0 0.0
    %849 = vmatpush1.msra.mxu0 0.0
    %850 = vmatprep.subr.mxu0 0.0
    %851 = vmatpush1.msra.mxu0 0.0
    %852 = vmatprep.subr.mxu0 0.0
    %853 = vmatpush1.msra.mxu0 0.0
    %854 = vmatprep.subr.mxu0 0.0
    %855 = vmatpush1.msra.mxu0 0.0
    %856 = vmatprep.subr.mxu0 0.0
    %857 = vmatpush1.msra.mxu0 0.0
    %858 = vmatprep.subr.mxu0 0.0
    %859 = vmatpush1.msra.mxu0 0.0
    %860 = vmatprep.mubr.f32.mxu0 0.0
    %861 = vmatmul.mubr.f32.gmra.mrb[0].mxu0 %v512
    %v862 = vpop.f32.mrb[0].mxu0
    %v863 = vadd.f32 %v793, %v862
    %v864 = vpop.f32.mrb[0].mxu0
    %865 = vdwg.mxu0
    %v866 = vadd.f32 %v863, %v398
    %867 = vmatprep.subr.mxu0 0.0
    %868 = vmatpush1.msra.mxu0 %v359
    %869 = vmatprep.subr.mxu0 0.0
    %870 = vmatpush1.msra.mxu0 %v360
    %871 = vmatprep.subr.mxu0 0.0
    %872 = vmatpush1.msra.mxu0 %v361
    %873 = vmatprep.subr.mxu0 0.0
    %874 = vmatpush1.msra.mxu0 %v362
    %875 = vmatprep.subr.mxu0 0.0
    %876 = vmatpush1.msra.mxu0 0.0
    %877 = vmatprep.subr.mxu0 0.0
    %878 = vmatpush1.msra.mxu0 0.0
    %879 = vmatprep.subr.mxu0 0.0
    %880 = vmatpush1.msra.mxu0 0.0
    %881 = vmatprep.subr.mxu0 0.0
    %882 = vmatpush1.msra.mxu0 0.0
    %883 = vmatprep.subr.mxu0 0.0
    %884 = vmatpush1.msra.mxu0 0.0
    %885 = vmatprep.subr.mxu0 0.0
    %886 = vmatpush1.msra.mxu0 0.0
    %887 = vmatprep.subr.mxu0 0.0
    %888 = vmatpush1.msra.mxu0 0.0
    %889 = vmatprep.subr.mxu0 0.0
    %890 = vmatpush1.msra.mxu0 0.0
    %891 = vmatprep.subr.mxu0 0.0
    %892 = vmatpush1.msra.mxu0 0.0
    %893 = vmatprep.subr.mxu0 0.0
    %894 = vmatpush1.msra.mxu0 0.0
    %895 = vmatprep.subr.mxu0 0.0
    %896 = vmatpush1.msra.mxu0 0.0
    %897 = vmatprep.subr.mxu0 0.0
    %898 = vmatpush1.msra.mxu0 0.0
    %899 = vmatprep.subr.mxu0 0.0
    %900 = vmatpush1.msra.mxu0 0.0
    %901 = vmatprep.subr.mxu0 0.0
    %902 = vmatpush1.msra.mxu0 0.0
    %903 = vmatprep.subr.mxu0 0.0
    %904 = vmatpush1.msra.mxu0 0.0
    %905 = vmatprep.subr.mxu0 0.0
    %906 = vmatpush1.msra.mxu0 0.0
    %907 = vmatprep.subr.mxu0 0.0
    %908 = vmatpush1.msra.mxu0 0.0
    %909 = vmatprep.subr.mxu0 0.0
    %910 = vmatpush1.msra.mxu0 0.0
    %911 = vmatprep.subr.mxu0 0.0
    %912 = vmatpush1.msra.mxu0 0.0
    %913 = vmatprep.subr.mxu0 0.0
    %914 = vmatpush1.msra.mxu0 0.0
    %915 = vmatprep.subr.mxu0 0.0
    %916 = vmatpush1.msra.mxu0 0.0
    %917 = vmatprep.subr.mxu0 0.0
    %918 = vmatpush1.msra.mxu0 0.0
    %919 = vmatprep.subr.mxu0 0.0
    %920 = vmatpush1.msra.mxu0 0.0
    %921 = vmatprep.subr.mxu0 0.0
    %922 = vmatpush1.msra.mxu0 0.0
    %923 = vmatprep.subr.mxu0 0.0
    %924 = vmatpush1.msra.mxu0 0.0
    %925 = vmatprep.subr.mxu0 0.0
    %926 = vmatpush1.msra.mxu0 0.0
    %927 = vmatprep.subr.mxu0 0.0
    %928 = vmatpush1.msra.mxu0 0.0
    %929 = vmatprep.subr.mxu0 0.0
    %930 = vmatpush1.msra.mxu0 0.0
    %931 = vmatprep.mubr.f32.mxu0 0.0
    %932 = vmatmul.mubr.f32.gmra.mrb[0].mxu0 %v438
    %v933 = vpop.f32.mrb[0].mxu0
    %v934 = vadd.f32 0.0, %v933
    %v935 = vpop.f32.mrb[0].mxu0
    %936 = vdwg.mxu0
    %937 = vmatprep.subr.mxu0 0.0
    %938 = vmatpush1.msra.mxu0 %v329
    %939 = vmatprep.subr.mxu0 0.0
    %940 = vmatpush1.msra.mxu0 %v330
    %941 = vmatprep.subr.mxu0 0.0
    %942 = vmatpush1.msra.mxu0 0.0
    %943 = vmatprep.subr.mxu0 0.0
    %944 = vmatpush1.msra.mxu0 0.0
    %945 = vmatprep.subr.mxu0 0.0
    %946 = vmatpush1.msra.mxu0 0.0
    %947 = vmatprep.subr.mxu0 0.0
    %948 = vmatpush1.msra.mxu0 0.0
    %949 = vmatprep.subr.mxu0 0.0
    %950 = vmatpush1.msra.mxu0 0.0
    %951 = vmatprep.subr.mxu0 0.0
    %952 = vmatpush1.msra.mxu0 0.0
    %953 = vmatprep.subr.mxu0 0.0
    %954 = vmatpush1.msra.mxu0 0.0
    %955 = vmatprep.subr.mxu0 0.0
    %956 = vmatpush1.msra.mxu0 0.0
    %957 = vmatprep.subr.mxu0 0.0
    %958 = vmatpush1.msra.mxu0 0.0
    %959 = vmatprep.subr.mxu0 0.0
    %960 = vmatpush1.msra.mxu0 0.0
    %961 = vmatprep.subr.mxu0 0.0
    %962 = vmatpush1.msra.mxu0 0.0
    %963 = vmatprep.subr.mxu0 0.0
    %964 = vmatpush1.msra.mxu0 0.0
    %965 = vmatprep.subr.mxu0 0.0
    %966 = vmatpush1.msra.mxu0 0.0
    %967 = vmatprep.subr.mxu0 0.0
    %968 = vmatpush1.msra.mxu0 0.0
    %969 = vmatprep.subr.mxu0 0.0
    %970 = vmatpush1.msra.mxu0 0.0
    %971 = vmatprep.subr.mxu0 0.0
    %972 = vmatpush1.msra.mxu0 0.0
    %973 = vmatprep.subr.mxu0 0.0
    %974 = vmatpush1.msra.mxu0 0.0
    %975 = vmatprep.subr.mxu0 0.0
    %976 = vmatpush1.msra.mxu0 0.0
    %977 = vmatprep.subr.mxu0 0.0
    %978 = vmatpush1.msra.mxu0 0.0
    %979 = vmatprep.subr.mxu0 0.0
    %980 = vmatpush1.msra.mxu0 0.0
    %981 = vmatprep.subr.mxu0 0.0
    %982 = vmatpush1.msra.mxu0 0.0
    %983 = vmatprep.subr.mxu0 0.0
    %984 = vmatpush1.msra.mxu0 0.0
    %985 = vmatprep.subr.mxu0 0.0
    %986 = vmatpush1.msra.mxu0 0.0
    %987 = vmatprep.subr.mxu0 0.0
    %988 = vmatpush1.msra.mxu0 0.0
    %989 = vmatprep.subr.mxu0 0.0
    %990 = vmatpush1.msra.mxu0 0.0
    %991 = vmatprep.subr.mxu0 0.0
    %992 = vmatpush1.msra.mxu0 0.0
    %993 = vmatprep.subr.mxu0 0.0
    %994 = vmatpush1.msra.mxu0 0.0
    %995 = vmatprep.subr.mxu0 0.0
    %996 = vmatpush1.msra.mxu0 0.0
    %997 = vmatprep.subr.mxu0 0.0
    %998 = vmatpush1.msra.mxu0 0.0
    %999 = vmatprep.subr.mxu0 0.0
    %1000 = vmatpush1.msra.mxu0 0.0
    %1001 = vmatprep.mubr.f32.mxu0 0.0
    %1002 = vmatmul.mubr.f32.gmra.mrb[0].mxu0 %v512
    %v1003 = vpop.f32.mrb[0].mxu0
    %v1004 = vadd.f32 %v934, %v1003
    %v1005 = vpop.f32.mrb[0].mxu0
    %1006 = vdwg.mxu0
    %v1007 = vadd.f32 %v1004, %v405
    %v1008 = vxor.u32 %v584, 2147483648
    %v1009 = vmul.f32 %v1008, 1.442695
    %v1010 = vpow.pop %v1009
    %v1011 = vadd.f32 %v1010, 1.0
    %v1012 = vrcp.pop %v1011
    %v1013 = vmul.f32 1.0, %v1012
    %v1014 = vxor.u32 %v725, 2147483648
    %v1015 = vmul.f32 %v1014, 1.442695
    %v1016 = vpow.pop %v1015
    %v1017 = vadd.f32 %v1016, 1.0
    %v1018 = vrcp.pop %v1017
    %v1019 = vmul.f32 1.0, %v1018
    %v1020 = vtanh.pop %v866
    %v1021 = vxor.u32 %v1007, 2147483648
    %v1022 = vmul.f32 %v1021, 1.442695
    %v1023 = vpow.pop %v1022
    %v1024 = vadd.f32 %v1023, 1.0
    %v1025 = vrcp.pop %v1024
    %v1026 = vmul.f32 1.0, %v1025
    %v1027 = vmul.f32 %v1019, 0.0
    %v1028 = vmul.f32 %v1013, %v1020
    %v1029 = vadd.f32 %v1027, %v1028
    %v1030 = vtanh.pop %v1029
    %v1031 = vmul.f32 %v1026, %v1030
    %1032 = vmatprep.subr.mxu0 0.0
    %1033 = vmatpush1.msra.mxu0 %v363
    %1034 = vmatprep.subr.mxu0 0.0
    %1035 = vmatpush1.msra.mxu0 %v364
    %1036 = vmatprep.subr.mxu0 0.0
    %1037 = vmatpush1.msra.mxu0 %v365
    %1038 = vmatprep.subr.mxu0 0.0
    %1039 = vmatpush1.msra.mxu0 %v366
    %1040 = vmatprep.subr.mxu0 0.0
    %1041 = vmatpush1.msra.mxu0 0.0
    %1042 = vmatprep.subr.mxu0 0.0
    %1043 = vmatpush1.msra.mxu0 0.0
    %1044 = vmatprep.subr.mxu0 0.0
    %1045 = vmatpush1.msra.mxu0 0.0
    %1046 = vmatprep.subr.mxu0 0.0
    %1047 = vmatpush1.msra.mxu0 0.0
    %1048 = vmatprep.subr.mxu0 0.0
    %1049 = vmatpush1.msra.mxu0 0.0
    %1050 = vmatprep.subr.mxu0 0.0
    %1051 = vmatpush1.msra.mxu0 0.0
    %1052 = vmatprep.subr.mxu0 0.0
    %1053 = vmatpush1.msra.mxu0 0.0
    %1054 = vmatprep.subr.mxu0 0.0
    %1055 = vmatpush1.msra.mxu0 0.0
    %1056 = vmatprep.subr.mxu0 0.0
    %1057 = vmatpush1.msra.mxu0 0.0
    %1058 = vmatprep.subr.mxu0 0.0
    %1059 = vmatpush1.msra.mxu0 0.0
    %1060 = vmatprep.subr.mxu0 0.0
    %1061 = vmatpush1.msra.mxu0 0.0
    %1062 = vmatprep.subr.mxu0 0.0
    %1063 = vmatpush1.msra.mxu0 0.0
    %1064 = vmatprep.subr.mxu0 0.0
    %1065 = vmatpush1.msra.mxu0 0.0
    %1066 = vmatprep.subr.mxu0 0.0
    %1067 = vmatpush1.msra.mxu0 0.0
    %1068 = vmatprep.subr.mxu0 0.0
    %1069 = vmatpush1.msra.mxu0 0.0
    %1070 = vmatprep.subr.mxu0 0.0
    %1071 = vmatpush1.msra.mxu0 0.0
    %1072 = vmatprep.subr.mxu0 0.0
    %1073 = vmatpush1.msra.mxu0 0.0
    %1074 = vmatprep.subr.mxu0 0.0
    %1075 = vmatpush1.msra.mxu0 0.0
    %1076 = vmatprep.subr.mxu0 0.0
    %1077 = vmatpush1.msra.mxu0 0.0
    %1078 = vmatprep.subr.mxu0 0.0
    %1079 = vmatpush1.msra.mxu0 0.0
    %1080 = vmatprep.subr.mxu0 0.0
    %1081 = vmatpush1.msra.mxu0 0.0
    %1082 = vmatprep.subr.mxu0 0.0
    %1083 = vmatpush1.msra.mxu0 0.0
    %1084 = vmatprep.subr.mxu0 0.0
    %1085 = vmatpush1.msra.mxu0 0.0
    %1086 = vmatprep.subr.mxu0 0.0
    %1087 = vmatpush1.msra.mxu0 0.0
    %1088 = vmatprep.subr.mxu0 0.0
    %1089 = vmatpush1.msra.mxu0 0.0
    %1090 = vmatprep.subr.mxu0 0.0
    %1091 = vmatpush1.msra.mxu0 0.0
    %1092 = vmatprep.subr.mxu0 0.0
    %1093 = vmatpush1.msra.mxu0 0.0
    %1094 = vmatprep.subr.mxu0 0.0
    %1095 = vmatpush1.msra.mxu0 0.0
    %1096 = vmatprep.mubr.f32.mxu0 0.0
    %1097 = vmatmul.mubr.f32.gmra.mrb[0].mxu0 %v438
    %v1098 = vpop.f32.mrb[0].mxu0
    %v1099 = vadd.f32 0.0, %v1098
    %v1100 = vpop.f32.mrb[0].mxu0
    %1101 = vdwg.mxu0
    %v1103 = vsel %vm436, %v1031, 0
    %1105 = vmatprep.subr.mxu0 0.0
    %1106 = vmatpush1.msra.mxu0 %v331
    %1107 = vmatprep.subr.mxu0 0.0
    %1108 = vmatpush1.msra.mxu0 %v332
    %1109 = vmatprep.subr.mxu0 0.0
    %1110 = vmatpush1.msra.mxu0 %v333
    %1111 = vmatprep.subr.mxu0 0.0
    %1112 = vmatpush1.msra.mxu0 %v334
    %1113 = vmatprep.subr.mxu0 0.0
    %1114 = vmatpush1.msra.mxu0 0.0
    %1115 = vmatprep.subr.mxu0 0.0
    %1116 = vmatpush1.msra.mxu0 0.0
    %1117 = vmatprep.subr.mxu0 0.0
    %1118 = vmatpush1.msra.mxu0 0.0
    %1119 = vmatprep.subr.mxu0 0.0
    %1120 = vmatpush1.msra.mxu0 0.0
    %1121 = vmatprep.subr.mxu0 0.0
    %1122 = vmatpush1.msra.mxu0 0.0
    %1123 = vmatprep.subr.mxu0 0.0
    %1124 = vmatpush1.msra.mxu0 0.0
    %1125 = vmatprep.subr.mxu0 0.0
    %1126 = vmatpush1.msra.mxu0 0.0
    %1127 = vmatprep.subr.mxu0 0.0
    %1128 = vmatpush1.msra.mxu0 0.0
    %1129 = vmatprep.subr.mxu0 0.0
    %1130 = vmatpush1.msra.mxu0 0.0
    %1131 = vmatprep.subr.mxu0 0.0
    %1132 = vmatpush1.msra.mxu0 0.0
    %1133 = vmatprep.subr.mxu0 0.0
    %1134 = vmatpush1.msra.mxu0 0.0
    %1135 = vmatprep.subr.mxu0 0.0
    %1136 = vmatpush1.msra.mxu0 0.0
    %1137 = vmatprep.subr.mxu0 0.0
    %1138 = vmatpush1.msra.mxu0 0.0
    %1139 = vmatprep.subr.mxu0 0.0
    %1140 = vmatpush1.msra.mxu0 0.0
    %1141 = vmatprep.subr.mxu0 0.0
    %1142 = vmatpush1.msra.mxu0 0.0
    %1143 = vmatprep.subr.mxu0 0.0
    %1144 = vmatpush1.msra.mxu0 0.0
    %1145 = vmatprep.subr.mxu0 0.0
    %1146 = vmatpush1.msra.mxu0 0.0
    %1147 = vmatprep.subr.mxu0 0.0
    %1148 = vmatpush1.msra.mxu0 0.0
    %1149 = vmatprep.subr.mxu0 0.0
    %1150 = vmatpush1.msra.mxu0 0.0
    %1151 = vmatprep.subr.mxu0 0.0
    %1152 = vmatpush1.msra.mxu0 0.0
    %1153 = vmatprep.subr.mxu0 0.0
    %1154 = vmatpush1.msra.mxu0 0.0
    %1155 = vmatprep.subr.mxu0 0.0
    %1156 = vmatpush1.msra.mxu0 0.0
    %1157 = vmatprep.subr.mxu0 0.0
    %1158 = vmatpush1.msra.mxu0 0.0
    %1159 = vmatprep.subr.mxu0 0.0
    %1160 = vmatpush1.msra.mxu0 0.0
    %1161 = vmatprep.subr.mxu0 0.0
    %1162 = vmatpush1.msra.mxu0 0.0
    %1163 = vmatprep.subr.mxu0 0.0
    %1164 = vmatpush1.msra.mxu0 0.0
    %1165 = vmatprep.subr.mxu0 0.0
    %1166 = vmatpush1.msra.mxu0 0.0
    %1167 = vmatprep.subr.mxu0 0.0
    %1168 = vmatpush1.msra.mxu0 0.0
    %1169 = vmatprep.mubr.f32.mxu0 0.0
    %1170 = vmatmul.mubr.f32.gmra.mrb[0].mxu0 %v1103
    %v1171 = vpop.f32.mrb[0].mxu0
    %v1172 = vadd.f32 %v1099, %v1171
    %v1173 = vpop.f32.mrb[0].mxu0
    %1174 = vdwg.mxu0
    %v1175 = vadd.f32 %v1172, %v412
    %1176 = vmatprep.subr.mxu0 0.0
    %1177 = vmatpush1.msra.mxu0 %v367
    %1178 = vmatprep.subr.mxu0 0.0
    %1179 = vmatpush1.msra.mxu0 %v368
    %1180 = vmatprep.subr.mxu0 0.0
    %1181 = vmatpush1.msra.mxu0 %v369
    %1182 = vmatprep.subr.mxu0 0.0
    %1183 = vmatpush1.msra.mxu0 %v370
    %1184 = vmatprep.subr.mxu0 0.0
    %1185 = vmatpush1.msra.mxu0 0.0
    %1186 = vmatprep.subr.mxu0 0.0
    %1187 = vmatpush1.msra.mxu0 0.0
    %1188 = vmatprep.subr.mxu0 0.0
    %1189 = vmatpush1.msra.mxu0 0.0
    %1190 = vmatprep.subr.mxu0 0.0
    %1191 = vmatpush1.msra.mxu0 0.0
    %1192 = vmatprep.subr.mxu0 0.0
    %1193 = vmatpush1.msra.mxu0 0.0
    %1194 = vmatprep.subr.mxu0 0.0
    %1195 = vmatpush1.msra.mxu0 0.0
    %1196 = vmatprep.subr.mxu0 0.0
    %1197 = vmatpush1.msra.mxu0 0.0
    %1198 = vmatprep.subr.mxu0 0.0
    %1199 = vmatpush1.msra.mxu0 0.0
    %1200 = vmatprep.subr.mxu0 0.0
    %1201 = vmatpush1.msra.mxu0 0.0
    %1202 = vmatprep.subr.mxu0 0.0
    %1203 = vmatpush1.msra.mxu0 0.0
    %1204 = vmatprep.subr.mxu0 0.0
    %1205 = vmatpush1.msra.mxu0 0.0
    %1206 = vmatprep.subr.mxu0 0.0
    %1207 = vmatpush1.msra.mxu0 0.0
    %1208 = vmatprep.subr.mxu0 0.0
    %1209 = vmatpush1.msra.mxu0 0.0
    %1210 = vmatprep.subr.mxu0 0.0
    %1211 = vmatpush1.msra.mxu0 0.0
    %1212 = vmatprep.subr.mxu0 0.0
    %1213 = vmatpush1.msra.mxu0 0.0
    %1214 = vmatprep.subr.mxu0 0.0
    %1215 = vmatpush1.msra.mxu0 0.0
    %1216 = vmatprep.subr.mxu0 0.0
    %1217 = vmatpush1.msra.mxu0 0.0
    %1218 = vmatprep.subr.mxu0 0.0
    %1219 = vmatpush1.msra.mxu0 0.0
    %1220 = vmatprep.subr.mxu0 0.0
    %1221 = vmatpush1.msra.mxu0 0.0
    %1222 = vmatprep.subr.mxu0 0.0
    %1223 = vmatpush1.msra.mxu0 0.0
    %1224 = vmatprep.subr.mxu0 0.0
    %1225 = vmatpush1.msra.mxu0 0.0
    %1226 = vmatprep.subr.mxu0 0.0
    %1227 = vmatpush1.msra.mxu0 0.0
    %1228 = vmatprep.subr.mxu0 0.0
    %1229 = vmatpush1.msra.mxu0 0.0
    %1230 = vmatprep.subr.mxu0 0.0
    %1231 = vmatpush1.msra.mxu0 0.0
    %1232 = vmatprep.subr.mxu0 0.0
    %1233 = vmatpush1.msra.mxu0 0.0
    %1234 = vmatprep.subr.mxu0 0.0
    %1235 = vmatpush1.msra.mxu0 0.0
    %1236 = vmatprep.subr.mxu0 0.0
    %1237 = vmatpush1.msra.mxu0 0.0
    %1238 = vmatprep.subr.mxu0 0.0
    %1239 = vmatpush1.msra.mxu0 0.0
    %1240 = vmatprep.mubr.f32.mxu0 0.0
    %1241 = vmatmul.mubr.f32.gmra.mrb[0].mxu0 %v438
    %v1242 = vpop.f32.mrb[0].mxu0
    %v1243 = vadd.f32 0.0, %v1242
    %v1244 = vpop.f32.mrb[0].mxu0
    %1245 = vdwg.mxu0
    %1246 = vmatprep.subr.mxu0 0.0
    %1247 = vmatpush1.msra.mxu0 %v335
    %1248 = vmatprep.subr.mxu0 0.0
    %1249 = vmatpush1.msra.mxu0 %v336
    %1250 = vmatprep.subr.mxu0 0.0
    %1251 = vmatpush1.msra.mxu0 %v337
    %1252 = vmatprep.subr.mxu0 0.0
    %1253 = vmatpush1.msra.mxu0 %v338
    %1254 = vmatprep.subr.mxu0 0.0
    %1255 = vmatpush1.msra.mxu0 0.0
    %1256 = vmatprep.subr.mxu0 0.0
    %1257 = vmatpush1.msra.mxu0 0.0
    %1258 = vmatprep.subr.mxu0 0.0
    %1259 = vmatpush1.msra.mxu0 0.0
    %1260 = vmatprep.subr.mxu0 0.0
    %1261 = vmatpush1.msra.mxu0 0.0
    %1262 = vmatprep.subr.mxu0 0.0
    %1263 = vmatpush1.msra.mxu0 0.0
    %1264 = vmatprep.subr.mxu0 0.0
    %1265 = vmatpush1.msra.mxu0 0.0
    %1266 = vmatprep.subr.mxu0 0.0
    %1267 = vmatpush1.msra.mxu0 0.0
    %1268 = vmatprep.subr.mxu0 0.0
    %1269 = vmatpush1.msra.mxu0 0.0
    %1270 = vmatprep.subr.mxu0 0.0
    %1271 = vmatpush1.msra.mxu0 0.0
    %1272 = vmatprep.subr.mxu0 0.0
    %1273 = vmatpush1.msra.mxu0 0.0
    %1274 = vmatprep.subr.mxu0 0.0
    %1275 = vmatpush1.msra.mxu0 0.0
    %1276 = vmatprep.subr.mxu0 0.0
    %1277 = vmatpush1.msra.mxu0 0.0
    %1278 = vmatprep.subr.mxu0 0.0
    %1279 = vmatpush1.msra.mxu0 0.0
    %1280 = vmatprep.subr.mxu0 0.0
    %1281 = vmatpush1.msra.mxu0 0.0
    %1282 = vmatprep.subr.mxu0 0.0
    %1283 = vmatpush1.msra.mxu0 0.0
    %1284 = vmatprep.subr.mxu0 0.0
    %1285 = vmatpush1.msra.mxu0 0.0
    %1286 = vmatprep.subr.mxu0 0.0
    %1287 = vmatpush1.msra.mxu0 0.0
    %1288 = vmatprep.subr.mxu0 0.0
    %1289 = vmatpush1.msra.mxu0 0.0
    %1290 = vmatprep.subr.mxu0 0.0
    %1291 = vmatpush1.msra.mxu0 0.0
    %1292 = vmatprep.subr.mxu0 0.0
    %1293 = vmatpush1.msra.mxu0 0.0
    %1294 = vmatprep.subr.mxu0 0.0
    %1295 = vmatpush1.msra.mxu0 0.0
    %1296 = vmatprep.subr.mxu0 0.0
    %1297 = vmatpush1.msra.mxu0 0.0
    %1298 = vmatprep.subr.mxu0 0.0
    %1299 = vmatpush1.msra.mxu0 0.0
    %1300 = vmatprep.subr.mxu0 0.0
    %1301 = vmatpush1.msra.mxu0 0.0
    %1302 = vmatprep.subr.mxu0 0.0
    %1303 = vmatpush1.msra.mxu0 0.0
    %1304 = vmatprep.subr.mxu0 0.0
    %1305 = vmatpush1.msra.mxu0 0.0
    %1306 = vmatprep.subr.mxu0 0.0
    %1307 = vmatpush1.msra.mxu0 0.0
    %1308 = vmatprep.subr.mxu0 0.0
    %1309 = vmatpush1.msra.mxu0 0.0
    %1310 = vmatprep.mubr.f32.mxu0 0.0
    %1311 = vmatmul.mubr.f32.gmra.mrb[0].mxu0 %v1103
    %v1312 = vpop.f32.mrb[0].mxu0
    %v1313 = vadd.f32 %v1243, %v1312
    %v1314 = vpop.f32.mrb[0].mxu0
    %1315 = vdwg.mxu0
    %v1316 = vadd.f32 %v1313, %v419
    %1317 = vmatprep.subr.mxu0 0.0
    %1318 = vmatpush1.msra.mxu0 %v371
    %1319 = vmatprep.subr.mxu0 0.0
    %1320 = vmatpush1.msra.mxu0 %v372
    %1321 = vmatprep.subr.mxu0 0.0
    %1322 = vmatpush1.msra.mxu0 %v373
    %1323 = vmatprep.subr.mxu0 0.0
    %1324 = vmatpush1.msra.mxu0 %v374
    %1325 = vmatprep.subr.mxu0 0.0
    %1326 = vmatpush1.msra.mxu0 0.0
    %1327 = vmatprep.subr.mxu0 0.0
    %1328 = vmatpush1.msra.mxu0 0.0
    %1329 = vmatprep.subr.mxu0 0.0
    %1330 = vmatpush1.msra.mxu0 0.0
    %1331 = vmatprep.subr.mxu0 0.0
    %1332 = vmatpush1.msra.mxu0 0.0
    %1333 = vmatprep.subr.mxu0 0.0
    %1334 = vmatpush1.msra.mxu0 0.0
    %1335 = vmatprep.subr.mxu0 0.0
    %1336 = vmatpush1.msra.mxu0 0.0
    %1337 = vmatprep.subr.mxu0 0.0
    %1338 = vmatpush1.msra.mxu0 0.0
    %1339 = vmatprep.subr.mxu0 0.0
    %1340 = vmatpush1.msra.mxu0 0.0
    %1341 = vmatprep.subr.mxu0 0.0
    %1342 = vmatpush1.msra.mxu0 0.0
    %1343 = vmatprep.subr.mxu0 0.0
    %1344 = vmatpush1.msra.mxu0 0.0
    %1345 = vmatprep.subr.mxu0 0.0
    %1346 = vmatpush1.msra.mxu0 0.0
    %1347 = vmatprep.subr.mxu0 0.0
    %1348 = vmatpush1.msra.mxu0 0.0
    %1349 = vmatprep.subr.mxu0 0.0
    %1350 = vmatpush1.msra.mxu0 0.0
    %1351 = vmatprep.subr.mxu0 0.0
    %1352 = vmatpush1.msra.mxu0 0.0
    %1353 = vmatprep.subr.mxu0 0.0
    %1354 = vmatpush1.msra.mxu0 0.0
    %1355 = vmatprep.subr.mxu0 0.0
    %1356 = vmatpush1.msra.mxu0 0.0
    %1357 = vmatprep.subr.mxu0 0.0
    %1358 = vmatpush1.msra.mxu0 0.0
    %1359 = vmatprep.subr.mxu0 0.0
    %1360 = vmatpush1.msra.mxu0 0.0
    %1361 = vmatprep.subr.mxu0 0.0
    %1362 = vmatpush1.msra.mxu0 0.0
    %1363 = vmatprep.subr.mxu0 0.0
    %1364 = vmatpush1.msra.mxu0 0.0
    %1365 = vmatprep.subr.mxu0 0.0
    %1366 = vmatpush1.msra.mxu0 0.0
    %1367 = vmatprep.subr.mxu0 0.0
    %1368 = vmatpush1.msra.mxu0 0.0
    %1369 = vmatprep.subr.mxu0 0.0
    %1370 = vmatpush1.msra.mxu0 0.0
    %1371 = vmatprep.subr.mxu0 0.0
    %1372 = vmatpush1.msra.mxu0 0.0
    %1373 = vmatprep.subr.mxu0 0.0
    %1374 = vmatpush1.msra.mxu0 0.0
    %1375 = vmatprep.subr.mxu0 0.0
    %1376 = vmatpush1.msra.mxu0 0.0
    %1377 = vmatprep.subr.mxu0 0.0
    %1378 = vmatpush1.msra.mxu0 0.0
    %1379 = vmatprep.subr.mxu0 0.0
    %1380 = vmatpush1.msra.mxu0 0.0
    %1381 = vmatprep.mubr.f32.mxu0 0.0
    %1382 = vmatmul.mubr.f32.gmra.mrb[0].mxu0 %v438
    %v1383 = vpop.f32.mrb[0].mxu0
    %v1384 = vadd.f32 0.0, %v1383
    %v1385 = vpop.f32.mrb[0].mxu0
    %1386 = vdwg.mxu0
    %1387 = vmatprep.subr.mxu0 0.0
    %1388 = vmatpush1.msra.mxu0 %v339
    %1389 = vmatprep.subr.mxu0 0.0
    %1390 = vmatpush1.msra.mxu0 %v340
    %1391 = vmatprep.subr.mxu0 0.0
    %1392 = vmatpush1.msra.mxu0 %v341
    %1393 = vmatprep.subr.mxu0 0.0
    %1394 = vmatpush1.msra.mxu0 %v342
    %1395 = vmatprep.subr.mxu0 0.0
    %1396 = vmatpush1.msra.mxu0 0.0
    %1397 = vmatprep.subr.mxu0 0.0
    %1398 = vmatpush1.msra.mxu0 0.0
    %1399 = vmatprep.subr.mxu0 0.0
    %1400 = vmatpush1.msra.mxu0 0.0
    %1401 = vmatprep.subr.mxu0 0.0
    %1402 = vmatpush1.msra.mxu0 0.0
    %1403 = vmatprep.subr.mxu0 0.0
    %1404 = vmatpush1.msra.mxu0 0.0
    %1405 = vmatprep.subr.mxu0 0.0
    %1406 = vmatpush1.msra.mxu0 0.0
    %1407 = vmatprep.subr.mxu0 0.0
    %1408 = vmatpush1.msra.mxu0 0.0
    %1409 = vmatprep.subr.mxu0 0.0
    %1410 = vmatpush1.msra.mxu0 0.0
    %1411 = vmatprep.subr.mxu0 0.0
    %1412 = vmatpush1.msra.mxu0 0.0
    %1413 = vmatprep.subr.mxu0 0.0
    %1414 = vmatpush1.msra.mxu0 0.0
    %1415 = vmatprep.subr.mxu0 0.0
    %1416 = vmatpush1.msra.mxu0 0.0
    %1417 = vmatprep.subr.mxu0 0.0
    %1418 = vmatpush1.msra.mxu0 0.0
    %1419 = vmatprep.subr.mxu0 0.0
    %1420 = vmatpush1.msra.mxu0 0.0
    %1421 = vmatprep.subr.mxu0 0.0
    %1422 = vmatpush1.msra.mxu0 0.0
    %1423 = vmatprep.subr.mxu0 0.0
    %1424 = vmatpush1.msra.mxu0 0.0
    %1425 = vmatprep.subr.mxu0 0.0
    %1426 = vmatpush1.msra.mxu0 0.0
    %1427 = vmatprep.subr.mxu0 0.0
    %1428 = vmatpush1.msra.mxu0 0.0
    %1429 = vmatprep.subr.mxu0 0.0
    %1430 = vmatpush1.msra.mxu0 0.0
    %1431 = vmatprep.subr.mxu0 0.0
    %1432 = vmatpush1.msra.mxu0 0.0
    %1433 = vmatprep.subr.mxu0 0.0
    %1434 = vmatpush1.msra.mxu0 0.0
    %1435 = vmatprep.subr.mxu0 0.0
    %1436 = vmatpush1.msra.mxu0 0.0
    %1437 = vmatprep.subr.mxu0 0.0
    %1438 = vmatpush1.msra.mxu0 0.0
    %1439 = vmatprep.subr.mxu0 0.0
    %1440 = vmatpush1.msra.mxu0 0.0
    %1441 = vmatprep.subr.mxu0 0.0
    %1442 = vmatpush1.msra.mxu0 0.0
    %1443 = vmatprep.subr.mxu0 0.0
    %1444 = vmatpush1.msra.mxu0 0.0
    %1445 = vmatprep.subr.mxu0 0.0
    %1446 = vmatpush1.msra.mxu0 0.0
    %1447 = vmatprep.subr.mxu0 0.0
    %1448 = vmatpush1.msra.mxu0 0.0
    %1449 = vmatprep.subr.mxu0 0.0
    %1450 = vmatpush1.msra.mxu0 0.0
    %1451 = vmatprep.mubr.f32.mxu0 0.0
    %1452 = vmatmul.mubr.f32.gmra.mrb[0].mxu0 %v1103
    %v1453 = vpop.f32.mrb[0].mxu0
    %v1454 = vadd.f32 %v1384, %v1453
    %v1455 = vpop.f32.mrb[0].mxu0
    %1456 = vdwg.mxu0
    %v1457 = vadd.f32 %v1454, %v426
    %1458 = vmatprep.subr.mxu0 0.0
    %1459 = vmatpush1.msra.mxu0 %v375
    %1460 = vmatprep.subr.mxu0 0.0
    %1461 = vmatpush1.msra.mxu0 %v376
    %1462 = vmatprep.subr.mxu0 0.0
    %1463 = vmatpush1.msra.mxu0 %v377
    %1464 = vmatprep.subr.mxu0 0.0
    %1465 = vmatpush1.msra.mxu0 %v378
    %1466 = vmatprep.subr.mxu0 0.0
    %1467 = vmatpush1.msra.mxu0 0.0
    %1468 = vmatprep.subr.mxu0 0.0
    %1469 = vmatpush1.msra.mxu0 0.0
    %1470 = vmatprep.subr.mxu0 0.0
    %1471 = vmatpush1.msra.mxu0 0.0
    %1472 = vmatprep.subr.mxu0 0.0
    %1473 = vmatpush1.msra.mxu0 0.0
    %1474 = vmatprep.subr.mxu0 0.0
    %1475 = vmatpush1.msra.mxu0 0.0
    %1476 = vmatprep.subr.mxu0 0.0
    %1477 = vmatpush1.msra.mxu0 0.0
    %1478 = vmatprep.subr.mxu0 0.0
    %1479 = vmatpush1.msra.mxu0 0.0
    %1480 = vmatprep.subr.mxu0 0.0
    %1481 = vmatpush1.msra.mxu0 0.0
    %1482 = vmatprep.subr.mxu0 0.0
    %1483 = vmatpush1.msra.mxu0 0.0
    %1484 = vmatprep.subr.mxu0 0.0
    %1485 = vmatpush1.msra.mxu0 0.0
    %1486 = vmatprep.subr.mxu0 0.0
    %1487 = vmatpush1.msra.mxu0 0.0
    %1488 = vmatprep.subr.mxu0 0.0
    %1489 = vmatpush1.msra.mxu0 0.0
    %1490 = vmatprep.subr.mxu0 0.0
    %1491 = vmatpush1.msra.mxu0 0.0
    %1492 = vmatprep.subr.mxu0 0.0
    %1493 = vmatpush1.msra.mxu0 0.0
    %1494 = vmatprep.subr.mxu0 0.0
    %1495 = vmatpush1.msra.mxu0 0.0
    %1496 = vmatprep.subr.mxu0 0.0
    %1497 = vmatpush1.msra.mxu0 0.0
    %1498 = vmatprep.subr.mxu0 0.0
    %1499 = vmatpush1.msra.mxu0 0.0
    %1500 = vmatprep.subr.mxu0 0.0
    %1501 = vmatpush1.msra.mxu0 0.0
    %1502 = vmatprep.subr.mxu0 0.0
    %1503 = vmatpush1.msra.mxu0 0.0
    %1504 = vmatprep.subr.mxu0 0.0
    %1505 = vmatpush1.msra.mxu0 0.0
    %1506 = vmatprep.subr.mxu0 0.0
    %1507 = vmatpush1.msra.mxu0 0.0
    %1508 = vmatprep.subr.mxu0 0.0
    %1509 = vmatpush1.msra.mxu0 0.0
    %1510 = vmatprep.subr.mxu0 0.0
    %1511 = vmatpush1.msra.mxu0 0.0
    %1512 = vmatprep.subr.mxu0 0.0
    %1513 = vmatpush1.msra.mxu0 0.0
    %1514 = vmatprep.subr.mxu0 0.0
    %1515 = vmatpush1.msra.mxu0 0.0
    %1516 = vmatprep.subr.mxu0 0.0
    %1517 = vmatpush1.msra.mxu0 0.0
    %1518 = vmatprep.subr.mxu0 0.0
    %1519 = vmatpush1.msra.mxu0 0.0
    %1520 = vmatprep.subr.mxu0 0.0
    %1521 = vmatpush1.msra.mxu0 0.0
    %1522 = vmatprep.mubr.f32.mxu0 0.0
    %1523 = vmatmul.mubr.f32.gmra.mrb[0].mxu0 %v438
    %v1524 = vpop.f32.mrb[0].mxu0
    %v1525 = vadd.f32 0.0, %v1524
    %v1526 = vpop.f32.mrb[0].mxu0
    %1527 = vdwg.mxu0
    %1528 = vmatprep.subr.mxu0 0.0
    %1529 = vmatpush1.msra.mxu0 %v343
    %1530 = vmatprep.subr.mxu0 0.0
    %1531 = vmatpush1.msra.mxu0 %v344
    %1532 = vmatprep.subr.mxu0 0.0
    %1533 = vmatpush1.msra.mxu0 %v345
    %1534 = vmatprep.subr.mxu0 0.0
    %1535 = vmatpush1.msra.mxu0 %v346
    %1536 = vmatprep.subr.mxu0 0.0
    %1537 = vmatpush1.msra.mxu0 0.0
    %1538 = vmatprep.subr.mxu0 0.0
    %1539 = vmatpush1.msra.mxu0 0.0
    %1540 = vmatprep.subr.mxu0 0.0
    %1541 = vmatpush1.msra.mxu0 0.0
    %1542 = vmatprep.subr.mxu0 0.0
    %1543 = vmatpush1.msra.mxu0 0.0
    %1544 = vmatprep.subr.mxu0 0.0
    %1545 = vmatpush1.msra.mxu0 0.0
    %1546 = vmatprep.subr.mxu0 0.0
    %1547 = vmatpush1.msra.mxu0 0.0
    %1548 = vmatprep.subr.mxu0 0.0
    %1549 = vmatpush1.msra.mxu0 0.0
    %1550 = vmatprep.subr.mxu0 0.0
    %1551 = vmatpush1.msra.mxu0 0.0
    %1552 = vmatprep.subr.mxu0 0.0
    %1553 = vmatpush1.msra.mxu0 0.0
    %1554 = vmatprep.subr.mxu0 0.0
    %1555 = vmatpush1.msra.mxu0 0.0
    %1556 = vmatprep.subr.mxu0 0.0
    %1557 = vmatpush1.msra.mxu0 0.0
    %1558 = vmatprep.subr.mxu0 0.0
    %1559 = vmatpush1.msra.mxu0 0.0
    %1560 = vmatprep.subr.mxu0 0.0
    %1561 = vmatpush1.msra.mxu0 0.0
    %1562 = vmatprep.subr.mxu0 0.0
    %1563 = vmatpush1.msra.mxu0 0.0
    %1564 = vmatprep.subr.mxu0 0.0
    %1565 = vmatpush1.msra.mxu0 0.0
    %1566 = vmatprep.subr.mxu0 0.0
    %1567 = vmatpush1.msra.mxu0 0.0
    %1568 = vmatprep.subr.mxu0 0.0
    %1569 = vmatpush1.msra.mxu0 0.0
    %1570 = vmatprep.subr.mxu0 0.0
    %1571 = vmatpush1.msra.mxu0 0.0
    %1572 = vmatprep.subr.mxu0 0.0
    %1573 = vmatpush1.msra.mxu0 0.0
    %1574 = vmatprep.subr.mxu0 0.0
    %1575 = vmatpush1.msra.mxu0 0.0
    %1576 = vmatprep.subr.mxu0 0.0
    %1577 = vmatpush1.msra.mxu0 0.0
    %1578 = vmatprep.subr.mxu0 0.0
    %1579 = vmatpush1.msra.mxu0 0.0
    %1580 = vmatprep.subr.mxu0 0.0
    %1581 = vmatpush1.msra.mxu0 0.0
    %1582 = vmatprep.subr.mxu0 0.0
    %1583 = vmatpush1.msra.mxu0 0.0
    %1584 = vmatprep.subr.mxu0 0.0
    %1585 = vmatpush1.msra.mxu0 0.0
    %1586 = vmatprep.subr.mxu0 0.0
    %1587 = vmatpush1.msra.mxu0 0.0
    %1588 = vmatprep.subr.mxu0 0.0
    %1589 = vmatpush1.msra.mxu0 0.0
    %1590 = vmatprep.subr.mxu0 0.0
    %1591 = vmatpush1.msra.mxu0 0.0
    %1592 = vmatprep.mubr.f32.mxu0 0.0
    %1593 = vmatmul.mubr.f32.gmra.mrb[0].mxu0 %v1103
    %v1594 = vpop.f32.mrb[0].mxu0
    %v1595 = vadd.f32 %v1525, %v1594
    %v1596 = vpop.f32.mrb[0].mxu0
    %1597 = vdwg.mxu0
    %v1598 = vadd.f32 %v1595, %v433
    %v1599 = vxor.u32 %v1175, 2147483648
    %v1600 = vmul.f32 %v1599, 1.442695
    %v1601 = vpow.pop %v1600
    %v1602 = vadd.f32 %v1601, 1.0
    %v1603 = vrcp.pop %v1602
    %v1604 = vmul.f32 1.0, %v1603
    %v1605 = vxor.u32 %v1316, 2147483648
    %v1606 = vmul.f32 %v1605, 1.442695
    %v1607 = vpow.pop %v1606
    %v1608 = vadd.f32 %v1607, 1.0
    %v1609 = vrcp.pop %v1608
    %v1610 = vmul.f32 1.0, %v1609
    %v1611 = vtanh.pop %v1457
    %v1612 = vxor.u32 %v1598, 2147483648
    %v1613 = vmul.f32 %v1612, 1.442695
    %v1614 = vpow.pop %v1613
    %v1615 = vadd.f32 %v1614, 1.0
    %v1616 = vrcp.pop %v1615
    %v1617 = vmul.f32 1.0, %v1616
    %v1618 = vmul.f32 %v1610, 0.0
    %v1619 = vmul.f32 %v1604, %v1611
    %v1620 = vadd.f32 %v1618, %v1619
    %v1621 = vtanh.pop %v1620
    %v1622 = vmul.f32 %v1617, %v1621
    %vm1623 = vcmp.eq.s32.totalorder %v322, 0
    %v1624 = vsel %vm1623, 1, 0
    %1625 = vset.pattern.permute.xlu0 0
    %1626 = vperm.xlu0 %1625, %v1624
    %v1627 = vpop.permute.xlu0 %1626
    %vm1628 = vcmp.eq.s32.totalorder %v1627, 1
    %v1629 = vsel %vm1628, %v1622, 0.0
    %s1630 = scalar_lea.vmem [#allocation2], 8
    %v1631 = vld [vmem:[%s1630] sm:$0xff]
    %1632 = vmatprep.subr.mxu0 0.0
    %1633 = vmatpush1.msra.mxu0 %v347
    %1634 = vmatprep.subr.mxu0 0.0
    %1635 = vmatpush1.msra.mxu0 %v348
    %1636 = vmatprep.subr.mxu0 0.0
    %1637 = vmatpush1.msra.mxu0 %v349
    %1638 = vmatprep.subr.mxu0 0.0
    %1639 = vmatpush1.msra.mxu0 %v350
    %1640 = vmatprep.subr.mxu0 0.0
    %1641 = vmatpush1.msra.mxu0 0.0
    %1642 = vmatprep.subr.mxu0 0.0
    %1643 = vmatpush1.msra.mxu0 0.0
    %1644 = vmatprep.subr.mxu0 0.0
    %1645 = vmatpush1.msra.mxu0 0.0
    %1646 = vmatprep.subr.mxu0 0.0
    %1647 = vmatpush1.msra.mxu0 0.0
    %1648 = vmatprep.subr.mxu0 0.0
    %1649 = vmatpush1.msra.mxu0 0.0
    %1650 = vmatprep.subr.mxu0 0.0
    %1651 = vmatpush1.msra.mxu0 0.0
    %1652 = vmatprep.subr.mxu0 0.0
    %1653 = vmatpush1.msra.mxu0 0.0
    %1654 = vmatprep.subr.mxu0 0.0
    %1655 = vmatpush1.msra.mxu0 0.0
    %1656 = vmatprep.subr.mxu0 0.0
    %1657 = vmatpush1.msra.mxu0 0.0
    %1658 = vmatprep.subr.mxu0 0.0
    %1659 = vmatpush1.msra.mxu0 0.0
    %1660 = vmatprep.subr.mxu0 0.0
    %1661 = vmatpush1.msra.mxu0 0.0
    %1662 = vmatprep.subr.mxu0 0.0
    %1663 = vmatpush1.msra.mxu0 0.0
    %1664 = vmatprep.subr.mxu0 0.0
    %1665 = vmatpush1.msra.mxu0 0.0
    %1666 = vmatprep.subr.mxu0 0.0
    %1667 = vmatpush1.msra.mxu0 0.0
    %1668 = vmatprep.subr.mxu0 0.0
    %1669 = vmatpush1.msra.mxu0 0.0
    %1670 = vmatprep.subr.mxu0 0.0
    %1671 = vmatpush1.msra.mxu0 0.0
    %1672 = vmatprep.subr.mxu0 0.0
    %1673 = vmatpush1.msra.mxu0 0.0
    %1674 = vmatprep.subr.mxu0 0.0
    %1675 = vmatpush1.msra.mxu0 0.0
    %1676 = vmatprep.subr.mxu0 0.0
    %1677 = vmatpush1.msra.mxu0 0.0
    %1678 = vmatprep.subr.mxu0 0.0
    %1679 = vmatpush1.msra.mxu0 0.0
    %1680 = vmatprep.subr.mxu0 0.0
    %1681 = vmatpush1.msra.mxu0 0.0
    %1682 = vmatprep.subr.mxu0 0.0
    %1683 = vmatpush1.msra.mxu0 0.0
    %1684 = vmatprep.subr.mxu0 0.0
    %1685 = vmatpush1.msra.mxu0 0.0
    %1686 = vmatprep.subr.mxu0 0.0
    %1687 = vmatpush1.msra.mxu0 0.0
    %1688 = vmatprep.subr.mxu0 0.0
    %1689 = vmatpush1.msra.mxu0 0.0
    %1690 = vmatprep.subr.mxu0 0.0
    %1691 = vmatpush1.msra.mxu0 0.0
    %1692 = vmatprep.subr.mxu0 0.0
    %1693 = vmatpush1.msra.mxu0 0.0
    %1694 = vmatprep.subr.mxu0 0.0
    %1695 = vmatpush1.msra.mxu0 0.0
    %1696 = vmatprep.mubr.f32.mxu0 0.0
    %1697 = vmatmul.mubr.f32.gmra.mrb[0].mxu0 %v1103
    %v1698 = vpop.f32.mrb[0].mxu0
    %v1699 = vadd.f32 0.0, %v1698
    %v1700 = vpop.f32.mrb[0].mxu0
    %1701 = vdwg.mxu0
    %v1703 = vsel %vm510, %v1631, 0
    %1705 = vmatprep.subr.mxu0 0.0
    %1706 = vmatpush1.msra.mxu0 %v323
    %1707 = vmatprep.subr.mxu0 0.0
    %1708 = vmatpush1.msra.mxu0 %v324
    %1709 = vmatprep.subr.mxu0 0.0
    %1710 = vmatpush1.msra.mxu0 0.0
    %1711 = vmatprep.subr.mxu0 0.0
    %1712 = vmatpush1.msra.mxu0 0.0
    %1713 = vmatprep.subr.mxu0 0.0
    %1714 = vmatpush1.msra.mxu0 0.0
    %1715 = vmatprep.subr.mxu0 0.0
    %1716 = vmatpush1.msra.mxu0 0.0
    %1717 = vmatprep.subr.mxu0 0.0
    %1718 = vmatpush1.msra.mxu0 0.0
    %1719 = vmatprep.subr.mxu0 0.0
    %1720 = vmatpush1.msra.mxu0 0.0
    %1721 = vmatprep.subr.mxu0 0.0
    %1722 = vmatpush1.msra.mxu0 0.0
    %1723 = vmatprep.subr.mxu0 0.0
    %1724 = vmatpush1.msra.mxu0 0.0
    %1725 = vmatprep.subr.mxu0 0.0
    %1726 = vmatpush1.msra.mxu0 0.0
    %1727 = vmatprep.subr.mxu0 0.0
    %1728 = vmatpush1.msra.mxu0 0.0
    %1729 = vmatprep.subr.mxu0 0.0
    %1730 = vmatpush1.msra.mxu0 0.0
    %1731 = vmatprep.subr.mxu0 0.0
    %1732 = vmatpush1.msra.mxu0 0.0
    %1733 = vmatprep.subr.mxu0 0.0
    %1734 = vmatpush1.msra.mxu0 0.0
    %1735 = vmatprep.subr.mxu0 0.0
    %1736 = vmatpush1.msra.mxu0 0.0
    %1737 = vmatprep.subr.mxu0 0.0
    %1738 = vmatpush1.msra.mxu0 0.0
    %1739 = vmatprep.subr.mxu0 0.0
    %1740 = vmatpush1.msra.mxu0 0.0
    %1741 = vmatprep.subr.mxu0 0.0
    %1742 = vmatpush1.msra.mxu0 0.0
    %1743 = vmatprep.subr.mxu0 0.0
    %1744 = vmatpush1.msra.mxu0 0.0
    %1745 = vmatprep.subr.mxu0 0.0
    %1746 = vmatpush1.msra.mxu0 0.0
    %1747 = vmatprep.subr.mxu0 0.0
    %1748 = vmatpush1.msra.mxu0 0.0
    %1749 = vmatprep.subr.mxu0 0.0
    %1750 = vmatpush1.msra.mxu0 0.0
    %1751 = vmatprep.subr.mxu0 0.0
    %1752 = vmatpush1.msra.mxu0 0.0
    %1753 = vmatprep.subr.mxu0 0.0
    %1754 = vmatpush1.msra.mxu0 0.0
    %1755 = vmatprep.subr.mxu0 0.0
    %1756 = vmatpush1.msra.mxu0 0.0
    %1757 = vmatprep.subr.mxu0 0.0
    %1758 = vmatpush1.msra.mxu0 0.0
    %1759 = vmatprep.subr.mxu0 0.0
    %1760 = vmatpush1.msra.mxu0 0.0
    %1761 = vmatprep.subr.mxu0 0.0
    %1762 = vmatpush1.msra.mxu0 0.0
    %1763 = vmatprep.subr.mxu0 0.0
    %1764 = vmatpush1.msra.mxu0 0.0
    %1765 = vmatprep.subr.mxu0 0.0
    %1766 = vmatpush1.msra.mxu0 0.0
    %1767 = vmatprep.subr.mxu0 0.0
    %1768 = vmatpush1.msra.mxu0 0.0
    %1769 = vmatprep.mubr.f32.mxu0 0.0
    %1770 = vmatmul.mubr.f32.gmra.mrb[0].mxu0 %v1703
    %v1771 = vpop.f32.mrb[0].mxu0
    %v1772 = vadd.f32 %v1699, %v1771
    %v1773 = vpop.f32.mrb[0].mxu0
    %1774 = vdwg.mxu0
    %v1775 = vadd.f32 %v1772, %v384
    %1776 = vmatprep.subr.mxu0 0.0
    %1777 = vmatpush1.msra.mxu0 %v351
    %1778 = vmatprep.subr.mxu0 0.0
    %1779 = vmatpush1.msra.mxu0 %v352
    %1780 = vmatprep.subr.mxu0 0.0
    %1781 = vmatpush1.msra.mxu0 %v353
    %1782 = vmatprep.subr.mxu0 0.0
    %1783 = vmatpush1.msra.mxu0 %v354
    %1784 = vmatprep.subr.mxu0 0.0
    %1785 = vmatpush1.msra.mxu0 0.0
    %1786 = vmatprep.subr.mxu0 0.0
    %1787 = vmatpush1.msra.mxu0 0.0
    %1788 = vmatprep.subr.mxu0 0.0
    %1789 = vmatpush1.msra.mxu0 0.0
    %1790 = vmatprep.subr.mxu0 0.0
    %1791 = vmatpush1.msra.mxu0 0.0
    %1792 = vmatprep.subr.mxu0 0.0
    %1793 = vmatpush1.msra.mxu0 0.0
    %1794 = vmatprep.subr.mxu0 0.0
    %1795 = vmatpush1.msra.mxu0 0.0
    %1796 = vmatprep.subr.mxu0 0.0
    %1797 = vmatpush1.msra.mxu0 0.0
    %1798 = vmatprep.subr.mxu0 0.0
    %1799 = vmatpush1.msra.mxu0 0.0
    %1800 = vmatprep.subr.mxu0 0.0
    %1801 = vmatpush1.msra.mxu0 0.0
    %1802 = vmatprep.subr.mxu0 0.0
    %1803 = vmatpush1.msra.mxu0 0.0
    %1804 = vmatprep.subr.mxu0 0.0
    %1805 = vmatpush1.msra.mxu0 0.0
    %1806 = vmatprep.subr.mxu0 0.0
    %1807 = vmatpush1.msra.mxu0 0.0
    %1808 = vmatprep.subr.mxu0 0.0
    %1809 = vmatpush1.msra.mxu0 0.0
    %1810 = vmatprep.subr.mxu0 0.0
    %1811 = vmatpush1.msra.mxu0 0.0
    %1812 = vmatprep.subr.mxu0 0.0
    %1813 = vmatpush1.msra.mxu0 0.0
    %1814 = vmatprep.subr.mxu0 0.0
    %1815 = vmatpush1.msra.mxu0 0.0
    %1816 = vmatprep.subr.mxu0 0.0
    %1817 = vmatpush1.msra.mxu0 0.0
    %1818 = vmatprep.subr.mxu0 0.0
    %1819 = vmatpush1.msra.mxu0 0.0
    %1820 = vmatprep.subr.mxu0 0.0
    %1821 = vmatpush1.msra.mxu0 0.0
    %1822 = vmatprep.subr.mxu0 0.0
    %1823 = vmatpush1.msra.mxu0 0.0
    %1824 = vmatprep.subr.mxu0 0.0
    %1825 = vmatpush1.msra.mxu0 0.0
    %1826 = vmatprep.subr.mxu0 0.0
    %1827 = vmatpush1.msra.mxu0 0.0
    %1828 = vmatprep.subr.mxu0 0.0
    %1829 = vmatpush1.msra.mxu0 0.0
    %1830 = vmatprep.subr.mxu0 0.0
    %1831 = vmatpush1.msra.mxu0 0.0
    %1832 = vmatprep.subr.mxu0 0.0
    %1833 = vmatpush1.msra.mxu0 0.0
    %1834 = vmatprep.subr.mxu0 0.0
    %1835 = vmatpush1.msra.mxu0 0.0
    %1836 = vmatprep.subr.mxu0 0.0
    %1837 = vmatpush1.msra.mxu0 0.0
    %1838 = vmatprep.subr.mxu0 0.0
    %1839 = vmatpush1.msra.mxu0 0.0
    %1840 = vmatprep.mubr.f32.mxu0 0.0
    %1841 = vmatmul.mubr.f32.gmra.mrb[0].mxu0 %v1103
    %v1842 = vpop.f32.mrb[0].mxu0
    %v1843 = vadd.f32 0.0, %v1842
    %v1844 = vpop.f32.mrb[0].mxu0
    %1845 = vdwg.mxu0
    %1846 = vmatprep.subr.mxu0 0.0
    %1847 = vmatpush1.msra.mxu0 %v325
    %1848 = vmatprep.subr.mxu0 0.0
    %1849 = vmatpush1.msra.mxu0 %v326
    %1850 = vmatprep.subr.mxu0 0.0
    %1851 = vmatpush1.msra.mxu0 0.0
    %1852 = vmatprep.subr.mxu0 0.0
    %1853 = vmatpush1.msra.mxu0 0.0
    %1854 = vmatprep.subr.mxu0 0.0
    %1855 = vmatpush1.msra.mxu0 0.0
    %1856 = vmatprep.subr.mxu0 0.0
    %1857 = vmatpush1.msra.mxu0 0.0
    %1858 = vmatprep.subr.mxu0 0.0
    %1859 = vmatpush1.msra.mxu0 0.0
    %1860 = vmatprep.subr.mxu0 0.0
    %1861 = vmatpush1.msra.mxu0 0.0
    %1862 = vmatprep.subr.mxu0 0.0
    %1863 = vmatpush1.msra.mxu0 0.0
    %1864 = vmatprep.subr.mxu0 0.0
    %1865 = vmatpush1.msra.mxu0 0.0
    %1866 = vmatprep.subr.mxu0 0.0
    %1867 = vmatpush1.msra.mxu0 0.0
    %1868 = vmatprep.subr.mxu0 0.0
    %1869 = vmatpush1.msra.mxu0 0.0
    %1870 = vmatprep.subr.mxu0 0.0
    %1871 = vmatpush1.msra.mxu0 0.0
    %1872 = vmatprep.subr.mxu0 0.0
    %1873 = vmatpush1.msra.mxu0 0.0
    %1874 = vmatprep.subr.mxu0 0.0
    %1875 = vmatpush1.msra.mxu0 0.0
    %1876 = vmatprep.subr.mxu0 0.0
    %1877 = vmatpush1.msra.mxu0 0.0
    %1878 = vmatprep.subr.mxu0 0.0
    %1879 = vmatpush1.msra.mxu0 0.0
    %1880 = vmatprep.subr.mxu0 0.0
    %1881 = vmatpush1.msra.mxu0 0.0
    %1882 = vmatprep.subr.mxu0 0.0
    %1883 = vmatpush1.msra.mxu0 0.0
    %1884 = vmatprep.subr.mxu0 0.0
    %1885 = vmatpush1.msra.mxu0 0.0
    %1886 = vmatprep.subr.mxu0 0.0
    %1887 = vmatpush1.msra.mxu0 0.0
    %1888 = vmatprep.subr.mxu0 0.0
    %1889 = vmatpush1.msra.mxu0 0.0
    %1890 = vmatprep.subr.mxu0 0.0
    %1891 = vmatpush1.msra.mxu0 0.0
    %1892 = vmatprep.subr.mxu0 0.0
    %1893 = vmatpush1.msra.mxu0 0.0
    %1894 = vmatprep.subr.mxu0 0.0
    %1895 = vmatpush1.msra.mxu0 0.0
    %1896 = vmatprep.subr.mxu0 0.0
    %1897 = vmatpush1.msra.mxu0 0.0
    %1898 = vmatprep.subr.mxu0 0.0
    %1899 = vmatpush1.msra.mxu0 0.0
    %1900 = vmatprep.subr.mxu0 0.0
    %1901 = vmatpush1.msra.mxu0 0.0
    %1902 = vmatprep.subr.mxu0 0.0
    %1903 = vmatpush1.msra.mxu0 0.0
    %1904 = vmatprep.subr.mxu0 0.0
    %1905 = vmatpush1.msra.mxu0 0.0
    %1906 = vmatprep.subr.mxu0 0.0
    %1907 = vmatpush1.msra.mxu0 0.0
    %1908 = vmatprep.subr.mxu0 0.0
    %1909 = vmatpush1.msra.mxu0 0.0
    %1910 = vmatprep.mubr.f32.mxu0 0.0
    %1911 = vmatmul.mubr.f32.gmra.mrb[0].mxu0 %v1703
    %v1912 = vpop.f32.mrb[0].mxu0
    %v1913 = vadd.f32 %v1843, %v1912
    %v1914 = vpop.f32.mrb[0].mxu0
    %1915 = vdwg.mxu0
    %v1916 = vadd.f32 %v1913, %v391
    %1917 = vmatprep.subr.mxu0 0.0
    %1918 = vmatpush1.msra.mxu0 %v355
    %1919 = vmatprep.subr.mxu0 0.0
    %1920 = vmatpush1.msra.mxu0 %v356
    %1921 = vmatprep.subr.mxu0 0.0
    %1922 = vmatpush1.msra.mxu0 %v357
    %1923 = vmatprep.subr.mxu0 0.0
    %1924 = vmatpush1.msra.mxu0 %v358
    %1925 = vmatprep.subr.mxu0 0.0
    %1926 = vmatpush1.msra.mxu0 0.0
    %1927 = vmatprep.subr.mxu0 0.0
    %1928 = vmatpush1.msra.mxu0 0.0
    %1929 = vmatprep.subr.mxu0 0.0
    %1930 = vmatpush1.msra.mxu0 0.0
    %1931 = vmatprep.subr.mxu0 0.0
    %1932 = vmatpush1.msra.mxu0 0.0
    %1933 = vmatprep.subr.mxu0 0.0
    %1934 = vmatpush1.msra.mxu0 0.0
    %1935 = vmatprep.subr.mxu0 0.0
    %1936 = vmatpush1.msra.mxu0 0.0
    %1937 = vmatprep.subr.mxu0 0.0
    %1938 = vmatpush1.msra.mxu0 0.0
    %1939 = vmatprep.subr.mxu0 0.0
    %1940 = vmatpush1.msra.mxu0 0.0
    %1941 = vmatprep.subr.mxu0 0.0
    %1942 = vmatpush1.msra.mxu0 0.0
    %1943 = vmatprep.subr.mxu0 0.0
    %1944 = vmatpush1.msra.mxu0 0.0
    %1945 = vmatprep.subr.mxu0 0.0
    %1946 = vmatpush1.msra.mxu0 0.0
    %1947 = vmatprep.subr.mxu0 0.0
    %1948 = vmatpush1.msra.mxu0 0.0
    %1949 = vmatprep.subr.mxu0 0.0
    %1950 = vmatpush1.msra.mxu0 0.0
    %1951 = vmatprep.subr.mxu0 0.0
    %1952 = vmatpush1.msra.mxu0 0.0
    %1953 = vmatprep.subr.mxu0 0.0
    %1954 = vmatpush1.msra.mxu0 0.0
    %1955 = vmatprep.subr.mxu0 0.0
    %1956 = vmatpush1.msra.mxu0 0.0
    %1957 = vmatprep.subr.mxu0 0.0
    %1958 = vmatpush1.msra.mxu0 0.0
    %1959 = vmatprep.subr.mxu0 0.0
    %1960 = vmatpush1.msra.mxu0 0.0
    %1961 = vmatprep.subr.mxu0 0.0
    %1962 = vmatpush1.msra.mxu0 0.0
    %1963 = vmatprep.subr.mxu0 0.0
    %1964 = vmatpush1.msra.mxu0 0.0
    %1965 = vmatprep.subr.mxu0 0.0
    %1966 = vmatpush1.msra.mxu0 0.0
    %1967 = vmatprep.subr.mxu0 0.0
    %1968 = vmatpush1.msra.mxu0 0.0
    %1969 = vmatprep.subr.mxu0 0.0
    %1970 = vmatpush1.msra.mxu0 0.0
    %1971 = vmatprep.subr.mxu0 0.0
    %1972 = vmatpush1.msra.mxu0 0.0
    %1973 = vmatprep.subr.mxu0 0.0
    %1974 = vmatpush1.msra.mxu0 0.0
    %1975 = vmatprep.subr.mxu0 0.0
    %1976 = vmatpush1.msra.mxu0 0.0
    %1977 = vmatprep.subr.mxu0 0.0
    %1978 = vmatpush1.msra.mxu0 0.0
    %1979 = vmatprep.subr.mxu0 0.0
    %1980 = vmatpush1.msra.mxu0 0.0
    %1981 = vmatprep.mubr.f32.mxu0 0.0
    %1982 = vmatmul.mubr.f32.gmra.mrb[0].mxu0 %v1103
    %v1983 = vpop.f32.mrb[0].mxu0
    %v1984 = vadd.f32 0.0, %v1983
    %v1985 = vpop.f32.mrb[0].mxu0
    %1986 = vdwg.mxu0
    %1987 = vmatprep.subr.mxu0 0.0
    %1988 = vmatpush1.msra.mxu0 %v327
    %1989 = vmatprep.subr.mxu0 0.0
    %1990 = vmatpush1.msra.mxu0 %v328
    %1991 = vmatprep.subr.mxu0 0.0
    %1992 = vmatpush1.msra.mxu0 0.0
    %1993 = vmatprep.subr.mxu0 0.0
    %1994 = vmatpush1.msra.mxu0 0.0
    %1995 = vmatprep.subr.mxu0 0.0
    %1996 = vmatpush1.msra.mxu0 0.0
    %1997 = vmatprep.subr.mxu0 0.0
    %1998 = vmatpush1.msra.mxu0 0.0
    %1999 = vmatprep.subr.mxu0 0.0
    %2000 = vmatpush1.msra.mxu0 0.0
    %2001 = vmatprep.subr.mxu0 0.0
    %2002 = vmatpush1.msra.mxu0 0.0
    %2003 = vmatprep.subr.mxu0 0.0
    %2004 = vmatpush1.msra.mxu0 0.0
    %2005 = vmatprep.subr.mxu0 0.0
    %2006 = vmatpush1.msra.mxu0 0.0
    %2007 = vmatprep.subr.mxu0 0.0
    %2008 = vmatpush1.msra.mxu0 0.0
    %2009 = vmatprep.subr.mxu0 0.0
    %2010 = vmatpush1.msra.mxu0 0.0
    %2011 = vmatprep.subr.mxu0 0.0
    %2012 = vmatpush1.msra.mxu0 0.0
    %2013 = vmatprep.subr.mxu0 0.0
    %2014 = vmatpush1.msra.mxu0 0.0
    %2015 = vmatprep.subr.mxu0 0.0
    %2016 = vmatpush1.msra.mxu0 0.0
    %2017 = vmatprep.subr.mxu0 0.0
    %2018 = vmatpush1.msra.mxu0 0.0
    %2019 = vmatprep.subr.mxu0 0.0
    %2020 = vmatpush1.msra.mxu0 0.0
    %2021 = vmatprep.subr.mxu0 0.0
    %2022 = vmatpush1.msra.mxu0 0.0
    %2023 = vmatprep.subr.mxu0 0.0
    %2024 = vmatpush1.msra.mxu0 0.0
    %2025 = vmatprep.subr.mxu0 0.0
    %2026 = vmatpush1.msra.mxu0 0.0
    %2027 = vmatprep.subr.mxu0 0.0
    %2028 = vmatpush1.msra.mxu0 0.0
    %2029 = vmatprep.subr.mxu0 0.0
    %2030 = vmatpush1.msra.mxu0 0.0
    %2031 = vmatprep.subr.mxu0 0.0
    %2032 = vmatpush1.msra.mxu0 0.0
    %2033 = vmatprep.subr.mxu0 0.0
    %2034 = vmatpush1.msra.mxu0 0.0
    %2035 = vmatprep.subr.mxu0 0.0
    %2036 = vmatpush1.msra.mxu0 0.0
    %2037 = vmatprep.subr.mxu0 0.0
    %2038 = vmatpush1.msra.mxu0 0.0
    %2039 = vmatprep.subr.mxu0 0.0
    %2040 = vmatpush1.msra.mxu0 0.0
    %2041 = vmatprep.subr.mxu0 0.0
    %2042 = vmatpush1.msra.mxu0 0.0
    %2043 = vmatprep.subr.mxu0 0.0
    %2044 = vmatpush1.msra.mxu0 0.0
    %2045 = vmatprep.subr.mxu0 0.0
    %2046 = vmatpush1.msra.mxu0 0.0
    %2047 = vmatprep.subr.mxu0 0.0
    %2048 = vmatpush1.msra.mxu0 0.0
    %2049 = vmatprep.subr.mxu0 0.0
    %2050 = vmatpush1.msra.mxu0 0.0
    %2051 = vmatprep.mubr.f32.mxu0 0.0
    %2052 = vmatmul.mubr.f32.gmra.mrb[0].mxu0 %v1703
    %v2053 = vpop.f32.mrb[0].mxu0
    %v2054 = vadd.f32 %v1984, %v2053
    %v2055 = vpop.f32.mrb[0].mxu0
    %2056 = vdwg.mxu0
    %v2057 = vadd.f32 %v2054, %v398
    %2058 = vmatprep.subr.mxu0 0.0
    %2059 = vmatpush1.msra.mxu0 %v359
    %2060 = vmatprep.subr.mxu0 0.0
    %2061 = vmatpush1.msra.mxu0 %v360
    %2062 = vmatprep.subr.mxu0 0.0
    %2063 = vmatpush1.msra.mxu0 %v361
    %2064 = vmatprep.subr.mxu0 0.0
    %2065 = vmatpush1.msra.mxu0 %v362
    %2066 = vmatprep.subr.mxu0 0.0
    %2067 = vmatpush1.msra.mxu0 0.0
    %2068 = vmatprep.subr.mxu0 0.0
    %2069 = vmatpush1.msra.mxu0 0.0
    %2070 = vmatprep.subr.mxu0 0.0
    %2071 = vmatpush1.msra.mxu0 0.0
    %2072 = vmatprep.subr.mxu0 0.0
    %2073 = vmatpush1.msra.mxu0 0.0
    %2074 = vmatprep.subr.mxu0 0.0
    %2075 = vmatpush1.msra.mxu0 0.0
    %2076 = vmatprep.subr.mxu0 0.0
    %2077 = vmatpush1.msra.mxu0 0.0
    %2078 = vmatprep.subr.mxu0 0.0
    %2079 = vmatpush1.msra.mxu0 0.0
    %2080 = vmatprep.subr.mxu0 0.0
    %2081 = vmatpush1.msra.mxu0 0.0
    %2082 = vmatprep.subr.mxu0 0.0
    %2083 = vmatpush1.msra.mxu0 0.0
    %2084 = vmatprep.subr.mxu0 0.0
    %2085 = vmatpush1.msra.mxu0 0.0
    %2086 = vmatprep.subr.mxu0 0.0
    %2087 = vmatpush1.msra.mxu0 0.0
    %2088 = vmatprep.subr.mxu0 0.0
    %2089 = vmatpush1.msra.mxu0 0.0
    %2090 = vmatprep.subr.mxu0 0.0
    %2091 = vmatpush1.msra.mxu0 0.0
    %2092 = vmatprep.subr.mxu0 0.0
    %2093 = vmatpush1.msra.mxu0 0.0
    %2094 = vmatprep.subr.mxu0 0.0
    %2095 = vmatpush1.msra.mxu0 0.0
    %2096 = vmatprep.subr.mxu0 0.0
    %2097 = vmatpush1.msra.mxu0 0.0
    %2098 = vmatprep.subr.mxu0 0.0
    %2099 = vmatpush1.msra.mxu0 0.0
    %2100 = vmatprep.subr.mxu0 0.0
    %2101 = vmatpush1.msra.mxu0 0.0
    %2102 = vmatprep.subr.mxu0 0.0
    %2103 = vmatpush1.msra.mxu0 0.0
    %2104 = vmatprep.subr.mxu0 0.0
    %2105 = vmatpush1.msra.mxu0 0.0
    %2106 = vmatprep.subr.mxu0 0.0
    %2107 = vmatpush1.msra.mxu0 0.0
    %2108 = vmatprep.subr.mxu0 0.0
    %2109 = vmatpush1.msra.mxu0 0.0
    %2110 = vmatprep.subr.mxu0 0.0
    %2111 = vmatpush1.msra.mxu0 0.0
    %2112 = vmatprep.subr.mxu0 0.0
    %2113 = vmatpush1.msra.mxu0 0.0
    %2114 = vmatprep.subr.mxu0 0.0
    %2115 = vmatpush1.msra.mxu0 0.0
    %2116 = vmatprep.subr.mxu0 0.0
    %2117 = vmatpush1.msra.mxu0 0.0
    %2118 = vmatprep.subr.mxu0 0.0
    %2119 = vmatpush1.msra.mxu0 0.0
    %2120 = vmatprep.subr.mxu0 0.0
    %2121 = vmatpush1.msra.mxu0 0.0
    %2122 = vmatprep.mubr.f32.mxu0 0.0
    %2123 = vmatmul.mubr.f32.gmra.mrb[0].mxu0 %v1103
    %v2124 = vpop.f32.mrb[0].mxu0
    %v2125 = vadd.f32 0.0, %v2124
    %v2126 = vpop.f32.mrb[0].mxu0
    %2127 = vdwg.mxu0
    %2128 = vmatprep.subr.mxu0 0.0
    %2129 = vmatpush1.msra.mxu0 %v329
    %2130 = vmatprep.subr.mxu0 0.0
    %2131 = vmatpush1.msra.mxu0 %v330
    %2132 = vmatprep.subr.mxu0 0.0
    %2133 = vmatpush1.msra.mxu0 0.0
    %2134 = vmatprep.subr.mxu0 0.0
    %2135 = vmatpush1.msra.mxu0 0.0
    %2136 = vmatprep.subr.mxu0 0.0
    %2137 = vmatpush1.msra.mxu0 0.0
    %2138 = vmatprep.subr.mxu0 0.0
    %2139 = vmatpush1.msra.mxu0 0.0
    %2140 = vmatprep.subr.mxu0 0.0
    %2141 = vmatpush1.msra.mxu0 0.0
    %2142 = vmatprep.subr.mxu0 0.0
    %2143 = vmatpush1.msra.mxu0 0.0
    %2144 = vmatprep.subr.mxu0 0.0
    %2145 = vmatpush1.msra.mxu0 0.0
    %2146 = vmatprep.subr.mxu0 0.0
    %2147 = vmatpush1.msra.mxu0 0.0
    %2148 = vmatprep.subr.mxu0 0.0
    %2149 = vmatpush1.msra.mxu0 0.0
    %2150 = vmatprep.subr.mxu0 0.0
    %2151 = vmatpush1.msra.mxu0 0.0
    %2152 = vmatprep.subr.mxu0 0.0
    %2153 = vmatpush1.msra.mxu0 0.0
    %2154 = vmatprep.subr.mxu0 0.0
    %2155 = vmatpush1.msra.mxu0 0.0
    %2156 = vmatprep.subr.mxu0 0.0
    %2157 = vmatpush1.msra.mxu0 0.0
    %2158 = vmatprep.subr.mxu0 0.0
    %2159 = vmatpush1.msra.mxu0 0.0
    %2160 = vmatprep.subr.mxu0 0.0
    %2161 = vmatpush1.msra.mxu0 0.0
    %2162 = vmatprep.subr.mxu0 0.0
    %2163 = vmatpush1.msra.mxu0 0.0
    %2164 = vmatprep.subr.mxu0 0.0
    %2165 = vmatpush1.msra.mxu0 0.0
    %2166 = vmatprep.subr.mxu0 0.0
    %2167 = vmatpush1.msra.mxu0 0.0
    %2168 = vmatprep.subr.mxu0 0.0
    %2169 = vmatpush1.msra.mxu0 0.0
    %2170 = vmatprep.subr.mxu0 0.0
    %2171 = vmatpush1.msra.mxu0 0.0
    %2172 = vmatprep.subr.mxu0 0.0
    %2173 = vmatpush1.msra.mxu0 0.0
    %2174 = vmatprep.subr.mxu0 0.0
    %2175 = vmatpush1.msra.mxu0 0.0
    %2176 = vmatprep.subr.mxu0 0.0
    %2177 = vmatpush1.msra.mxu0 0.0
    %2178 = vmatprep.subr.mxu0 0.0
    %2179 = vmatpush1.msra.mxu0 0.0
    %2180 = vmatprep.subr.mxu0 0.0
    %2181 = vmatpush1.msra.mxu0 0.0
    %2182 = vmatprep.subr.mxu0 0.0
    %2183 = vmatpush1.msra.mxu0 0.0
    %2184 = vmatprep.subr.mxu0 0.0
    %2185 = vmatpush1.msra.mxu0 0.0
    %2186 = vmatprep.subr.mxu0 0.0
    %2187 = vmatpush1.msra.mxu0 0.0
    %2188 = vmatprep.subr.mxu0 0.0
    %2189 = vmatpush1.msra.mxu0 0.0
    %2190 = vmatprep.subr.mxu0 0.0
    %2191 = vmatpush1.msra.mxu0 0.0
    %2192 = vmatprep.mubr.f32.mxu0 0.0
    %2193 = vmatmul.mubr.f32.gmra.mrb[0].mxu0 %v1703
    %v2194 = vpop.f32.mrb[0].mxu0
    %v2195 = vadd.f32 %v2125, %v2194
    %v2196 = vpop.f32.mrb[0].mxu0
    %2197 = vdwg.mxu0
    %v2198 = vadd.f32 %v2195, %v405
    %v2199 = vxor.u32 %v1775, 2147483648
    %v2200 = vmul.f32 %v2199, 1.442695
    %v2201 = vpow.pop %v2200
    %v2202 = vadd.f32 %v2201, 1.0
    %v2203 = vrcp.pop %v2202
    %v2204 = vmul.f32 1.0, %v2203
    %v2205 = vxor.u32 %v1916, 2147483648
    %v2206 = vmul.f32 %v2205, 1.442695
    %v2207 = vpow.pop %v2206
    %v2208 = vadd.f32 %v2207, 1.0
    %v2209 = vrcp.pop %v2208
    %v2210 = vmul.f32 1.0, %v2209
    %v2211 = vtanh.pop %v2057
    %v2212 = vxor.u32 %v2198, 2147483648
    %v2213 = vmul.f32 %v2212, 1.442695
    %v2214 = vpow.pop %v2213
    %v2215 = vadd.f32 %v2214, 1.0
    %v2216 = vrcp.pop %v2215
    %v2217 = vmul.f32 1.0, %v2216
    %v2218 = vmul.f32 %v2210, %v1029
    %v2219 = vmul.f32 %v2204, %v2211
    %v2220 = vadd.f32 %v2218, %v2219
    %v2221 = vtanh.pop %v2220
    %v2222 = vmul.f32 %v2217, %v2221
    %v2224 = vsel %vm436, %v1622, 0
    %2226 = vmatprep.subr.mxu0 0.0
    %2227 = vmatpush1.msra.mxu0 %v363
    %2228 = vmatprep.subr.mxu0 0.0
    %2229 = vmatpush1.msra.mxu0 %v364
    %2230 = vmatprep.subr.mxu0 0.0
    %2231 = vmatpush1.msra.mxu0 %v365
    %2232 = vmatprep.subr.mxu0 0.0
    %2233 = vmatpush1.msra.mxu0 %v366
    %2234 = vmatprep.subr.mxu0 0.0
    %2235 = vmatpush1.msra.mxu0 0.0
    %2236 = vmatprep.subr.mxu0 0.0
    %2237 = vmatpush1.msra.mxu0 0.0
    %2238 = vmatprep.subr.mxu0 0.0
    %2239 = vmatpush1.msra.mxu0 0.0
    %2240 = vmatprep.subr.mxu0 0.0
    %2241 = vmatpush1.msra.mxu0 0.0
    %2242 = vmatprep.subr.mxu0 0.0
    %2243 = vmatpush1.msra.mxu0 0.0
    %2244 = vmatprep.subr.mxu0 0.0
    %2245 = vmatpush1.msra.mxu0 0.0
    %2246 = vmatprep.subr.mxu0 0.0
    %2247 = vmatpush1.msra.mxu0 0.0
    %2248 = vmatprep.subr.mxu0 0.0
    %2249 = vmatpush1.msra.mxu0 0.0
    %2250 = vmatprep.subr.mxu0 0.0
    %2251 = vmatpush1.msra.mxu0 0.0
    %2252 = vmatprep.subr.mxu0 0.0
    %2253 = vmatpush1.msra.mxu0 0.0
    %2254 = vmatprep.subr.mxu0 0.0
    %2255 = vmatpush1.msra.mxu0 0.0
    %2256 = vmatprep.subr.mxu0 0.0
    %2257 = vmatpush1.msra.mxu0 0.0
    %2258 = vmatprep.subr.mxu0 0.0
    %2259 = vmatpush1.msra.mxu0 0.0
    %2260 = vmatprep.subr.mxu0 0.0
    %2261 = vmatpush1.msra.mxu0 0.0
    %2262 = vmatprep.subr.mxu0 0.0
    %2263 = vmatpush1.msra.mxu0 0.0
    %2264 = vmatprep.subr.mxu0 0.0
    %2265 = vmatpush1.msra.mxu0 0.0
    %2266 = vmatprep.subr.mxu0 0.0
    %2267 = vmatpush1.msra.mxu0 0.0
    %2268 = vmatprep.subr.mxu0 0.0
    %2269 = vmatpush1.msra.mxu0 0.0
    %2270 = vmatprep.subr.mxu0 0.0
    %2271 = vmatpush1.msra.mxu0 0.0
    %2272 = vmatprep.subr.mxu0 0.0
    %2273 = vmatpush1.msra.mxu0 0.0
    %2274 = vmatprep.subr.mxu0 0.0
    %2275 = vmatpush1.msra.mxu0 0.0
    %2276 = vmatprep.subr.mxu0 0.0
    %2277 = vmatpush1.msra.mxu0 0.0
    %2278 = vmatprep.subr.mxu0 0.0
    %2279 = vmatpush1.msra.mxu0 0.0
    %2280 = vmatprep.subr.mxu0 0.0
    %2281 = vmatpush1.msra.mxu0 0.0
    %2282 = vmatprep.subr.mxu0 0.0
    %2283 = vmatpush1.msra.mxu0 0.0
    %2284 = vmatprep.subr.mxu0 0.0
    %2285 = vmatpush1.msra.mxu0 0.0
    %2286 = vmatprep.subr.mxu0 0.0
    %2287 = vmatpush1.msra.mxu0 0.0
    %2288 = vmatprep.subr.mxu0 0.0
    %2289 = vmatpush1.msra.mxu0 0.0
    %2290 = vmatprep.mubr.f32.mxu0 0.0
    %2291 = vmatmul.mubr.f32.gmra.mrb[0].mxu0 %v2224
    %v2292 = vpop.f32.mrb[0].mxu0
    %v2293 = vadd.f32 0.0, %v2292
    %v2294 = vpop.f32.mrb[0].mxu0
    %2295 = vdwg.mxu0
    %v2297 = vsel %vm436, %v2222, 0
    %2299 = vmatprep.subr.mxu0 0.0
    %2300 = vmatpush1.msra.mxu0 %v331
    %2301 = vmatprep.subr.mxu0 0.0
    %2302 = vmatpush1.msra.mxu0 %v332
    %2303 = vmatprep.subr.mxu0 0.0
    %2304 = vmatpush1.msra.mxu0 %v333
    %2305 = vmatprep.subr.mxu0 0.0
    %2306 = vmatpush1.msra.mxu0 %v334
    %2307 = vmatprep.subr.mxu0 0.0
    %2308 = vmatpush1.msra.mxu0 0.0
    %2309 = vmatprep.subr.mxu0 0.0
    %2310 = vmatpush1.msra.mxu0 0.0
    %2311 = vmatprep.subr.mxu0 0.0
    %2312 = vmatpush1.msra.mxu0 0.0
    %2313 = vmatprep.subr.mxu0 0.0
    %2314 = vmatpush1.msra.mxu0 0.0
    %2315 = vmatprep.subr.mxu0 0.0
    %2316 = vmatpush1.msra.mxu0 0.0
    %2317 = vmatprep.subr.mxu0 0.0
    %2318 = vmatpush1.msra.mxu0 0.0
    %2319 = vmatprep.subr.mxu0 0.0
    %2320 = vmatpush1.msra.mxu0 0.0
    %2321 = vmatprep.subr.mxu0 0.0
    %2322 = vmatpush1.msra.mxu0 0.0
    %2323 = vmatprep.subr.mxu0 0.0
    %2324 = vmatpush1.msra.mxu0 0.0
    %2325 = vmatprep.subr.mxu0 0.0
    %2326 = vmatpush1.msra.mxu0 0.0
    %2327 = vmatprep.subr.mxu0 0.0
    %2328 = vmatpush1.msra.mxu0 0.0
    %2329 = vmatprep.subr.mxu0 0.0
    %2330 = vmatpush1.msra.mxu0 0.0
    %2331 = vmatprep.subr.mxu0 0.0
    %2332 = vmatpush1.msra.mxu0 0.0
    %2333 = vmatprep.subr.mxu0 0.0
    %2334 = vmatpush1.msra.mxu0 0.0
    %2335 = vmatprep.subr.mxu0 0.0
    %2336 = vmatpush1.msra.mxu0 0.0
    %2337 = vmatprep.subr.mxu0 0.0
    %2338 = vmatpush1.msra.mxu0 0.0
    %2339 = vmatprep.subr.mxu0 0.0
    %2340 = vmatpush1.msra.mxu0 0.0
    %2341 = vmatprep.subr.mxu0 0.0
    %2342 = vmatpush1.msra.mxu0 0.0
    %2343 = vmatprep.subr.mxu0 0.0
    %2344 = vmatpush1.msra.mxu0 0.0
    %2345 = vmatprep.subr.mxu0 0.0
    %2346 = vmatpush1.msra.mxu0 0.0
    %2347 = vmatprep.subr.mxu0 0.0
    %2348 = vmatpush1.msra.mxu0 0.0
    %2349 = vmatprep.subr.mxu0 0.0
    %2350 = vmatpush1.msra.mxu0 0.0
    %2351 = vmatprep.subr.mxu0 0.0
    %2352 = vmatpush1.msra.mxu0 0.0
    %2353 = vmatprep.subr.mxu0 0.0
    %2354 = vmatpush1.msra.mxu0 0.0
    %2355 = vmatprep.subr.mxu0 0.0
    %2356 = vmatpush1.msra.mxu0 0.0
    %2357 = vmatprep.subr.mxu0 0.0
    %2358 = vmatpush1.msra.mxu0 0.0
    %2359 = vmatprep.subr.mxu0 0.0
    %2360 = vmatpush1.msra.mxu0 0.0
    %2361 = vmatprep.subr.mxu0 0.0
    %2362 = vmatpush1.msra.mxu0 0.0
    %2363 = vmatprep.mubr.f32.mxu0 0.0
    %2364 = vmatmul.mubr.f32.gmra.mrb[0].mxu0 %v2297
    %v2365 = vpop.f32.mrb[0].mxu0
    %v2366 = vadd.f32 %v2293, %v2365
    %v2367 = vpop.f32.mrb[0].mxu0
    %2368 = vdwg.mxu0
    %v2369 = vadd.f32 %v2366, %v412
    %2370 = vmatprep.subr.mxu0 0.0
    %2371 = vmatpush1.msra.mxu0 %v367
    %2372 = vmatprep.subr.mxu0 0.0
    %2373 = vmatpush1.msra.mxu0 %v368
    %2374 = vmatprep.subr.mxu0 0.0
    %2375 = vmatpush1.msra.mxu0 %v369
    %2376 = vmatprep.subr.mxu0 0.0
    %2377 = vmatpush1.msra.mxu0 %v370
    %2378 = vmatprep.subr.mxu0 0.0
    %2379 = vmatpush1.msra.mxu0 0.0
    %2380 = vmatprep.subr.mxu0 0.0
    %2381 = vmatpush1.msra.mxu0 0.0
    %2382 = vmatprep.subr.mxu0 0.0
    %2383 = vmatpush1.msra.mxu0 0.0
    %2384 = vmatprep.subr.mxu0 0.0
    %2385 = vmatpush1.msra.mxu0 0.0
    %2386 = vmatprep.subr.mxu0 0.0
    %2387 = vmatpush1.msra.mxu0 0.0
    %2388 = vmatprep.subr.mxu0 0.0
    %2389 = vmatpush1.msra.mxu0 0.0
    %2390 = vmatprep.subr.mxu0 0.0
    %2391 = vmatpush1.msra.mxu0 0.0
    %2392 = vmatprep.subr.mxu0 0.0
    %2393 = vmatpush1.msra.mxu0 0.0
    %2394 = vmatprep.subr.mxu0 0.0
    %2395 = vmatpush1.msra.mxu0 0.0
    %2396 = vmatprep.subr.mxu0 0.0
    %2397 = vmatpush1.msra.mxu0 0.0
    %2398 = vmatprep.subr.mxu0 0.0
    %2399 = vmatpush1.msra.mxu0 0.0
    %2400 = vmatprep.subr.mxu0 0.0
    %2401 = vmatpush1.msra.mxu0 0.0
    %2402 = vmatprep.subr.mxu0 0.0
    %2403 = vmatpush1.msra.mxu0 0.0
    %2404 = vmatprep.subr.mxu0 0.0
    %2405 = vmatpush1.msra.mxu0 0.0
    %2406 = vmatprep.subr.mxu0 0.0
    %2407 = vmatpush1.msra.mxu0 0.0
    %2408 = vmatprep.subr.mxu0 0.0
    %2409 = vmatpush1.msra.mxu0 0.0
    %2410 = vmatprep.subr.mxu0 0.0
    %2411 = vmatpush1.msra.mxu0 0.0
    %2412 = vmatprep.subr.mxu0 0.0
    %2413 = vmatpush1.msra.mxu0 0.0
    %2414 = vmatprep.subr.mxu0 0.0
    %2415 = vmatpush1.msra.mxu0 0.0
    %2416 = vmatprep.subr.mxu0 0.0
    %2417 = vmatpush1.msra.mxu0 0.0
    %2418 = vmatprep.subr.mxu0 0.0
    %2419 = vmatpush1.msra.mxu0 0.0
    %2420 = vmatprep.subr.mxu0 0.0
    %2421 = vmatpush1.msra.mxu0 0.0
    %2422 = vmatprep.subr.mxu0 0.0
    %2423 = vmatpush1.msra.mxu0 0.0
    %2424 = vmatprep.subr.mxu0 0.0
    %2425 = vmatpush1.msra.mxu0 0.0
    %2426 = vmatprep.subr.mxu0 0.0
    %2427 = vmatpush1.msra.mxu0 0.0
    %2428 = vmatprep.subr.mxu0 0.0
    %2429 = vmatpush1.msra.mxu0 0.0
    %2430 = vmatprep.subr.mxu0 0.0
    %2431 = vmatpush1.msra.mxu0 0.0
    %2432 = vmatprep.subr.mxu0 0.0
    %2433 = vmatpush1.msra.mxu0 0.0
    %2434 = vmatprep.mubr.f32.mxu0 0.0
    %2435 = vmatmul.mubr.f32.gmra.mrb[0].mxu0 %v2224
    %v2436 = vpop.f32.mrb[0].mxu0
    %v2437 = vadd.f32 0.0, %v2436
    %v2438 = vpop.f32.mrb[0].mxu0
    %2439 = vdwg.mxu0
    %2440 = vmatprep.subr.mxu0 0.0
    %2441 = vmatpush1.msra.mxu0 %v335
    %2442 = vmatprep.subr.mxu0 0.0
    %2443 = vmatpush1.msra.mxu0 %v336
    %2444 = vmatprep.subr.mxu0 0.0
    %2445 = vmatpush1.msra.mxu0 %v337
    %2446 = vmatprep.subr.mxu0 0.0
    %2447 = vmatpush1.msra.mxu0 %v338
    %2448 = vmatprep.subr.mxu0 0.0
    %2449 = vmatpush1.msra.mxu0 0.0
    %2450 = vmatprep.subr.mxu0 0.0
    %2451 = vmatpush1.msra.mxu0 0.0
    %2452 = vmatprep.subr.mxu0 0.0
    %2453 = vmatpush1.msra.mxu0 0.0
    %2454 = vmatprep.subr.mxu0 0.0
    %2455 = vmatpush1.msra.mxu0 0.0
    %2456 = vmatprep.subr.mxu0 0.0
    %2457 = vmatpush1.msra.mxu0 0.0
    %2458 = vmatprep.subr.mxu0 0.0
    %2459 = vmatpush1.msra.mxu0 0.0
    %2460 = vmatprep.subr.mxu0 0.0
    %2461 = vmatpush1.msra.mxu0 0.0
    %2462 = vmatprep.subr.mxu0 0.0
    %2463 = vmatpush1.msra.mxu0 0.0
    %2464 = vmatprep.subr.mxu0 0.0
    %2465 = vmatpush1.msra.mxu0 0.0
    %2466 = vmatprep.subr.mxu0 0.0
    %2467 = vmatpush1.msra.mxu0 0.0
    %2468 = vmatprep.subr.mxu0 0.0
    %2469 = vmatpush1.msra.mxu0 0.0
    %2470 = vmatprep.subr.mxu0 0.0
    %2471 = vmatpush1.msra.mxu0 0.0
    %2472 = vmatprep.subr.mxu0 0.0
    %2473 = vmatpush1.msra.mxu0 0.0
    %2474 = vmatprep.subr.mxu0 0.0
    %2475 = vmatpush1.msra.mxu0 0.0
    %2476 = vmatprep.subr.mxu0 0.0
    %2477 = vmatpush1.msra.mxu0 0.0
    %2478 = vmatprep.subr.mxu0 0.0
    %2479 = vmatpush1.msra.mxu0 0.0
    %2480 = vmatprep.subr.mxu0 0.0
    %2481 = vmatpush1.msra.mxu0 0.0
    %2482 = vmatprep.subr.mxu0 0.0
    %2483 = vmatpush1.msra.mxu0 0.0
    %2484 = vmatprep.subr.mxu0 0.0
    %2485 = vmatpush1.msra.mxu0 0.0
    %2486 = vmatprep.subr.mxu0 0.0
    %2487 = vmatpush1.msra.mxu0 0.0
    %2488 = vmatprep.subr.mxu0 0.0
    %2489 = vmatpush1.msra.mxu0 0.0
    %2490 = vmatprep.subr.mxu0 0.0
    %2491 = vmatpush1.msra.mxu0 0.0
    %2492 = vmatprep.subr.mxu0 0.0
    %2493 = vmatpush1.msra.mxu0 0.0
    %2494 = vmatprep.subr.mxu0 0.0
    %2495 = vmatpush1.msra.mxu0 0.0
    %2496 = vmatprep.subr.mxu0 0.0
    %2497 = vmatpush1.msra.mxu0 0.0
    %2498 = vmatprep.subr.mxu0 0.0
    %2499 = vmatpush1.msra.mxu0 0.0
    %2500 = vmatprep.subr.mxu0 0.0
    %2501 = vmatpush1.msra.mxu0 0.0
    %2502 = vmatprep.subr.mxu0 0.0
    %2503 = vmatpush1.msra.mxu0 0.0
    %2504 = vmatprep.mubr.f32.mxu0 0.0
    %2505 = vmatmul.mubr.f32.gmra.mrb[0].mxu0 %v2297
    %v2506 = vpop.f32.mrb[0].mxu0
    %v2507 = vadd.f32 %v2437, %v2506
    %v2508 = vpop.f32.mrb[0].mxu0
    %2509 = vdwg.mxu0
    %v2510 = vadd.f32 %v2507, %v419
    %2511 = vmatprep.subr.mxu0 0.0
    %2512 = vmatpush1.msra.mxu0 %v371
    %2513 = vmatprep.subr.mxu0 0.0
    %2514 = vmatpush1.msra.mxu0 %v372
    %2515 = vmatprep.subr.mxu0 0.0
    %2516 = vmatpush1.msra.mxu0 %v373
    %2517 = vmatprep.subr.mxu0 0.0
    %2518 = vmatpush1.msra.mxu0 %v374
    %2519 = vmatprep.subr.mxu0 0.0
    %2520 = vmatpush1.msra.mxu0 0.0
    %2521 = vmatprep.subr.mxu0 0.0
    %2522 = vmatpush1.msra.mxu0 0.0
    %2523 = vmatprep.subr.mxu0 0.0
    %2524 = vmatpush1.msra.mxu0 0.0
    %2525 = vmatprep.subr.mxu0 0.0
    %2526 = vmatpush1.msra.mxu0 0.0
    %2527 = vmatprep.subr.mxu0 0.0
    %2528 = vmatpush1.msra.mxu0 0.0
    %2529 = vmatprep.subr.mxu0 0.0
    %2530 = vmatpush1.msra.mxu0 0.0
    %2531 = vmatprep.subr.mxu0 0.0
    %2532 = vmatpush1.msra.mxu0 0.0
    %2533 = vmatprep.subr.mxu0 0.0
    %2534 = vmatpush1.msra.mxu0 0.0
    %2535 = vmatprep.subr.mxu0 0.0
    %2536 = vmatpush1.msra.mxu0 0.0
    %2537 = vmatprep.subr.mxu0 0.0
    %2538 = vmatpush1.msra.mxu0 0.0
    %2539 = vmatprep.subr.mxu0 0.0
    %2540 = vmatpush1.msra.mxu0 0.0
    %2541 = vmatprep.subr.mxu0 0.0
    %2542 = vmatpush1.msra.mxu0 0.0
    %2543 = vmatprep.subr.mxu0 0.0
    %2544 = vmatpush1.msra.mxu0 0.0
    %2545 = vmatprep.subr.mxu0 0.0
    %2546 = vmatpush1.msra.mxu0 0.0
    %2547 = vmatprep.subr.mxu0 0.0
    %2548 = vmatpush1.msra.mxu0 0.0
    %2549 = vmatprep.subr.mxu0 0.0
    %2550 = vmatpush1.msra.mxu0 0.0
    %2551 = vmatprep.subr.mxu0 0.0
    %2552 = vmatpush1.msra.mxu0 0.0
    %2553 = vmatprep.subr.mxu0 0.0
    %2554 = vmatpush1.msra.mxu0 0.0
    %2555 = vmatprep.subr.mxu0 0.0
    %2556 = vmatpush1.msra.mxu0 0.0
    %2557 = vmatprep.subr.mxu0 0.0
    %2558 = vmatpush1.msra.mxu0 0.0
    %2559 = vmatprep.subr.mxu0 0.0
    %2560 = vmatpush1.msra.mxu0 0.0
    %2561 = vmatprep.subr.mxu0 0.0
    %2562 = vmatpush1.msra.mxu0 0.0
    %2563 = vmatprep.subr.mxu0 0.0
    %2564 = vmatpush1.msra.mxu0 0.0
    %2565 = vmatprep.subr.mxu0 0.0
    %2566 = vmatpush1.msra.mxu0 0.0
    %2567 = vmatprep.subr.mxu0 0.0
    %2568 = vmatpush1.msra.mxu0 0.0
    %2569 = vmatprep.subr.mxu0 0.0
    %2570 = vmatpush1.msra.mxu0 0.0
    %2571 = vmatprep.subr.mxu0 0.0
    %2572 = vmatpush1.msra.mxu0 0.0
    %2573 = vmatprep.subr.mxu0 0.0
    %2574 = vmatpush1.msra.mxu0 0.0
    %2575 = vmatprep.mubr.f32.mxu0 0.0
    %2576 = vmatmul.mubr.f32.gmra.mrb[0].mxu0 %v2224
    %v2577 = vpop.f32.mrb[0].mxu0
    %v2578 = vadd.f32 0.0, %v2577
    %v2579 = vpop.f32.mrb[0].mxu0
    %2580 = vdwg.mxu0
    %2581 = vmatprep.subr.mxu0 0.0
    %2582 = vmatpush1.msra.mxu0 %v339
    %2583 = vmatprep.subr.mxu0 0.0
    %2584 = vmatpush1.msra.mxu0 %v340
    %2585 = vmatprep.subr.mxu0 0.0
    %2586 = vmatpush1.msra.mxu0 %v341
    %2587 = vmatprep.subr.mxu0 0.0
    %2588 = vmatpush1.msra.mxu0 %v342
    %2589 = vmatprep.subr.mxu0 0.0
    %2590 = vmatpush1.msra.mxu0 0.0
    %2591 = vmatprep.subr.mxu0 0.0
    %2592 = vmatpush1.msra.mxu0 0.0
    %2593 = vmatprep.subr.mxu0 0.0
    %2594 = vmatpush1.msra.mxu0 0.0
    %2595 = vmatprep.subr.mxu0 0.0
    %2596 = vmatpush1.msra.mxu0 0.0
    %2597 = vmatprep.subr.mxu0 0.0
    %2598 = vmatpush1.msra.mxu0 0.0
    %2599 = vmatprep.subr.mxu0 0.0
    %2600 = vmatpush1.msra.mxu0 0.0
    %2601 = vmatprep.subr.mxu0 0.0
    %2602 = vmatpush1.msra.mxu0 0.0
    %2603 = vmatprep.subr.mxu0 0.0
    %2604 = vmatpush1.msra.mxu0 0.0
    %2605 = vmatprep.subr.mxu0 0.0
    %2606 = vmatpush1.msra.mxu0 0.0
    %2607 = vmatprep.subr.mxu0 0.0
    %2608 = vmatpush1.msra.mxu0 0.0
    %2609 = vmatprep.subr.mxu0 0.0
    %2610 = vmatpush1.msra.mxu0 0.0
    %2611 = vmatprep.subr.mxu0 0.0
    %2612 = vmatpush1.msra.mxu0 0.0
    %2613 = vmatprep.subr.mxu0 0.0
    %2614 = vmatpush1.msra.mxu0 0.0
    %2615 = vmatprep.subr.mxu0 0.0
    %2616 = vmatpush1.msra.mxu0 0.0
    %2617 = vmatprep.subr.mxu0 0.0
    %2618 = vmatpush1.msra.mxu0 0.0
    %2619 = vmatprep.subr.mxu0 0.0
    %2620 = vmatpush1.msra.mxu0 0.0
    %2621 = vmatprep.subr.mxu0 0.0
    %2622 = vmatpush1.msra.mxu0 0.0
    %2623 = vmatprep.subr.mxu0 0.0
    %2624 = vmatpush1.msra.mxu0 0.0
    %2625 = vmatprep.subr.mxu0 0.0
    %2626 = vmatpush1.msra.mxu0 0.0
    %2627 = vmatprep.subr.mxu0 0.0
    %2628 = vmatpush1.msra.mxu0 0.0
    %2629 = vmatprep.subr.mxu0 0.0
    %2630 = vmatpush1.msra.mxu0 0.0
    %2631 = vmatprep.subr.mxu0 0.0
    %2632 = vmatpush1.msra.mxu0 0.0
    %2633 = vmatprep.subr.mxu0 0.0
    %2634 = vmatpush1.msra.mxu0 0.0
    %2635 = vmatprep.subr.mxu0 0.0
    %2636 = vmatpush1.msra.mxu0 0.0
    %2637 = vmatprep.subr.mxu0 0.0
    %2638 = vmatpush1.msra.mxu0 0.0
    %2639 = vmatprep.subr.mxu0 0.0
    %2640 = vmatpush1.msra.mxu0 0.0
    %2641 = vmatprep.subr.mxu0 0.0
    %2642 = vmatpush1.msra.mxu0 0.0
    %2643 = vmatprep.subr.mxu0 0.0
    %2644 = vmatpush1.msra.mxu0 0.0
    %2645 = vmatprep.mubr.f32.mxu0 0.0
    %2646 = vmatmul.mubr.f32.gmra.mrb[0].mxu0 %v2297
    %v2647 = vpop.f32.mrb[0].mxu0
    %v2648 = vadd.f32 %v2578, %v2647
    %v2649 = vpop.f32.mrb[0].mxu0
    %2650 = vdwg.mxu0
    %v2651 = vadd.f32 %v2648, %v426
    %2652 = vmatprep.subr.mxu0 0.0
    %2653 = vmatpush1.msra.mxu0 %v375
    %2654 = vmatprep.subr.mxu0 0.0
    %2655 = vmatpush1.msra.mxu0 %v376
    %2656 = vmatprep.subr.mxu0 0.0
    %2657 = vmatpush1.msra.mxu0 %v377
    %2658 = vmatprep.subr.mxu0 0.0
    %2659 = vmatpush1.msra.mxu0 %v378
    %2660 = vmatprep.subr.mxu0 0.0
    %2661 = vmatpush1.msra.mxu0 0.0
    %2662 = vmatprep.subr.mxu0 0.0
    %2663 = vmatpush1.msra.mxu0 0.0
    %2664 = vmatprep.subr.mxu0 0.0
    %2665 = vmatpush1.msra.mxu0 0.0
    %2666 = vmatprep.subr.mxu0 0.0
    %2667 = vmatpush1.msra.mxu0 0.0
    %2668 = vmatprep.subr.mxu0 0.0
    %2669 = vmatpush1.msra.mxu0 0.0
    %2670 = vmatprep.subr.mxu0 0.0
    %2671 = vmatpush1.msra.mxu0 0.0
    %2672 = vmatprep.subr.mxu0 0.0
    %2673 = vmatpush1.msra.mxu0 0.0
    %2674 = vmatprep.subr.mxu0 0.0
    %2675 = vmatpush1.msra.mxu0 0.0
    %2676 = vmatprep.subr.mxu0 0.0
    %2677 = vmatpush1.msra.mxu0 0.0
    %2678 = vmatprep.subr.mxu0 0.0
    %2679 = vmatpush1.msra.mxu0 0.0
    %2680 = vmatprep.subr.mxu0 0.0
    %2681 = vmatpush1.msra.mxu0 0.0
    %2682 = vmatprep.subr.mxu0 0.0
    %2683 = vmatpush1.msra.mxu0 0.0
    %2684 = vmatprep.subr.mxu0 0.0
    %2685 = vmatpush1.msra.mxu0 0.0
    %2686 = vmatprep.subr.mxu0 0.0
    %2687 = vmatpush1.msra.mxu0 0.0
    %2688 = vmatprep.subr.mxu0 0.0
    %2689 = vmatpush1.msra.mxu0 0.0
    %2690 = vmatprep.subr.mxu0 0.0
    %2691 = vmatpush1.msra.mxu0 0.0
    %2692 = vmatprep.subr.mxu0 0.0
    %2693 = vmatpush1.msra.mxu0 0.0
    %2694 = vmatprep.subr.mxu0 0.0
    %2695 = vmatpush1.msra.mxu0 0.0
    %2696 = vmatprep.subr.mxu0 0.0
    %2697 = vmatpush1.msra.mxu0 0.0
    %2698 = vmatprep.subr.mxu0 0.0
    %2699 = vmatpush1.msra.mxu0 0.0
    %2700 = vmatprep.subr.mxu0 0.0
    %2701 = vmatpush1.msra.mxu0 0.0
    %2702 = vmatprep.subr.mxu0 0.0
    %2703 = vmatpush1.msra.mxu0 0.0
    %2704 = vmatprep.subr.mxu0 0.0
    %2705 = vmatpush1.msra.mxu0 0.0
    %2706 = vmatprep.subr.mxu0 0.0
    %2707 = vmatpush1.msra.mxu0 0.0
    %2708 = vmatprep.subr.mxu0 0.0
    %2709 = vmatpush1.msra.mxu0 0.0
    %2710 = vmatprep.subr.mxu0 0.0
    %2711 = vmatpush1.msra.mxu0 0.0
    %2712 = vmatprep.subr.mxu0 0.0
    %2713 = vmatpush1.msra.mxu0 0.0
    %2714 = vmatprep.subr.mxu0 0.0
    %2715 = vmatpush1.msra.mxu0 0.0
    %2716 = vmatprep.mubr.f32.mxu0 0.0
    %2717 = vmatmul.mubr.f32.gmra.mrb[0].mxu0 %v2224
    %v2718 = vpop.f32.mrb[0].mxu0
    %v2719 = vadd.f32 0.0, %v2718
    %v2720 = vpop.f32.mrb[0].mxu0
    %2721 = vdwg.mxu0
    %2722 = vmatprep.subr.mxu0 0.0
    %2723 = vmatpush1.msra.mxu0 %v343
    %2724 = vmatprep.subr.mxu0 0.0
    %2725 = vmatpush1.msra.mxu0 %v344
    %2726 = vmatprep.subr.mxu0 0.0
    %2727 = vmatpush1.msra.mxu0 %v345
    %2728 = vmatprep.subr.mxu0 0.0
    %2729 = vmatpush1.msra.mxu0 %v346
    %2730 = vmatprep.subr.mxu0 0.0
    %2731 = vmatpush1.msra.mxu0 0.0
    %2732 = vmatprep.subr.mxu0 0.0
    %2733 = vmatpush1.msra.mxu0 0.0
    %2734 = vmatprep.subr.mxu0 0.0
    %2735 = vmatpush1.msra.mxu0 0.0
    %2736 = vmatprep.subr.mxu0 0.0
    %2737 = vmatpush1.msra.mxu0 0.0
    %2738 = vmatprep.subr.mxu0 0.0
    %2739 = vmatpush1.msra.mxu0 0.0
    %2740 = vmatprep.subr.mxu0 0.0
    %2741 = vmatpush1.msra.mxu0 0.0
    %2742 = vmatprep.subr.mxu0 0.0
    %2743 = vmatpush1.msra.mxu0 0.0
    %2744 = vmatprep.subr.mxu0 0.0
    %2745 = vmatpush1.msra.mxu0 0.0
    %2746 = vmatprep.subr.mxu0 0.0
    %2747 = vmatpush1.msra.mxu0 0.0
    %2748 = vmatprep.subr.mxu0 0.0
    %2749 = vmatpush1.msra.mxu0 0.0
    %2750 = vmatprep.subr.mxu0 0.0
    %2751 = vmatpush1.msra.mxu0 0.0
    %2752 = vmatprep.subr.mxu0 0.0
    %2753 = vmatpush1.msra.mxu0 0.0
    %2754 = vmatprep.subr.mxu0 0.0
    %2755 = vmatpush1.msra.mxu0 0.0
    %2756 = vmatprep.subr.mxu0 0.0
    %2757 = vmatpush1.msra.mxu0 0.0
    %2758 = vmatprep.subr.mxu0 0.0
    %2759 = vmatpush1.msra.mxu0 0.0
    %2760 = vmatprep.subr.mxu0 0.0
    %2761 = vmatpush1.msra.mxu0 0.0
    %2762 = vmatprep.subr.mxu0 0.0
    %2763 = vmatpush1.msra.mxu0 0.0
    %2764 = vmatprep.subr.mxu0 0.0
    %2765 = vmatpush1.msra.mxu0 0.0
    %2766 = vmatprep.subr.mxu0 0.0
    %2767 = vmatpush1.msra.mxu0 0.0
    %2768 = vmatprep.subr.mxu0 0.0
    %2769 = vmatpush1.msra.mxu0 0.0
    %2770 = vmatprep.subr.mxu0 0.0
    %2771 = vmatpush1.msra.mxu0 0.0
    %2772 = vmatprep.subr.mxu0 0.0
    %2773 = vmatpush1.msra.mxu0 0.0
    %2774 = vmatprep.subr.mxu0 0.0
    %2775 = vmatpush1.msra.mxu0 0.0
    %2776 = vmatprep.subr.mxu0 0.0
    %2777 = vmatpush1.msra.mxu0 0.0
    %2778 = vmatprep.subr.mxu0 0.0
    %2779 = vmatpush1.msra.mxu0 0.0
    %2780 = vmatprep.subr.mxu0 0.0
    %2781 = vmatpush1.msra.mxu0 0.0
    %2782 = vmatprep.subr.mxu0 0.0
    %2783 = vmatpush1.msra.mxu0 0.0
    %2784 = vmatprep.subr.mxu0 0.0
    %2785 = vmatpush1.msra.mxu0 0.0
    %2786 = vmatprep.mubr.f32.mxu0 0.0
    %2787 = vmatmul.mubr.f32.gmra.mrb[0].mxu0 %v2297
    %v2788 = vpop.f32.mrb[0].mxu0
    %v2789 = vadd.f32 %v2719, %v2788
    %v2790 = vpop.f32.mrb[0].mxu0
    %2791 = vdwg.mxu0
    %v2792 = vadd.f32 %v2789, %v433
    %v2793 = vxor.u32 %v2369, 2147483648
    %v2794 = vmul.f32 %v2793, 1.442695
    %v2795 = vpow.pop %v2794
    %v2796 = vadd.f32 %v2795, 1.0
    %v2797 = vrcp.pop %v2796
    %v2798 = vmul.f32 1.0, %v2797
    %v2799 = vxor.u32 %v2510, 2147483648
    %v2800 = vmul.f32 %v2799, 1.442695
    %v2801 = vpow.pop %v2800
    %v2802 = vadd.f32 %v2801, 1.0
    %v2803 = vrcp.pop %v2802
    %v2804 = vmul.f32 1.0, %v2803
    %v2805 = vtanh.pop %v2651
    %v2806 = vxor.u32 %v2792, 2147483648
    %v2807 = vmul.f32 %v2806, 1.442695
    %v2808 = vpow.pop %v2807
    %v2809 = vadd.f32 %v2808, 1.0
    %v2810 = vrcp.pop %v2809
    %v2811 = vmul.f32 1.0, %v2810
    %v2812 = vmul.f32 %v2804, %v1620
    %v2813 = vmul.f32 %v2798, %v2805
    %v2814 = vadd.f32 %v2812, %v2813
    %v2815 = vtanh.pop %v2814
    %v2816 = vmul.f32 %v2811, %v2815
    %vm2817 = vcmp.eq.s32.totalorder %v322, 1
    %v2818 = vsel %vm2817, 1, 0
    %2819 = vset.pattern.permute.xlu0 0
    %2820 = vperm.xlu0 %2819, %v2818
    %v2821 = vpop.permute.xlu0 %2820
    %vm2822 = vcmp.eq.s32.totalorder %v2821, 1
    %v2823 = vsel %vm2822, %v2816, %v1629
    %s2824 = scalar_lea.vmem [#allocation2], 16
    %v2825 = vld [vmem:[%s2824] sm:$0xff]
    %2826 = vmatprep.subr.mxu0 0.0
    %2827 = vmatpush1.msra.mxu0 %v347
    %2828 = vmatprep.subr.mxu0 0.0
    %2829 = vmatpush1.msra.mxu0 %v348
    %2830 = vmatprep.subr.mxu0 0.0
    %2831 = vmatpush1.msra.mxu0 %v349
    %2832 = vmatprep.subr.mxu0 0.0
    %2833 = vmatpush1.msra.mxu0 %v350
    %2834 = vmatprep.subr.mxu0 0.0
    %2835 = vmatpush1.msra.mxu0 0.0
    %2836 = vmatprep.subr.mxu0 0.0
    %2837 = vmatpush1.msra.mxu0 0.0
    %2838 = vmatprep.subr.mxu0 0.0
    %2839 = vmatpush1.msra.mxu0 0.0
    %2840 = vmatprep.subr.mxu0 0.0
    %2841 = vmatpush1.msra.mxu0 0.0
    %2842 = vmatprep.subr.mxu0 0.0
    %2843 = vmatpush1.msra.mxu0 0.0
    %2844 = vmatprep.subr.mxu0 0.0
    %2845 = vmatpush1.msra.mxu0 0.0
    %2846 = vmatprep.subr.mxu0 0.0
    %2847 = vmatpush1.msra.mxu0 0.0
    %2848 = vmatprep.subr.mxu0 0.0
    %2849 = vmatpush1.msra.mxu0 0.0
    %2850 = vmatprep.subr.mxu0 0.0
    %2851 = vmatpush1.msra.mxu0 0.0
    %2852 = vmatprep.subr.mxu0 0.0
    %2853 = vmatpush1.msra.mxu0 0.0
    %2854 = vmatprep.subr.mxu0 0.0
    %2855 = vmatpush1.msra.mxu0 0.0
    %2856 = vmatprep.subr.mxu0 0.0
    %2857 = vmatpush1.msra.mxu0 0.0
    %2858 = vmatprep.subr.mxu0 0.0
    %2859 = vmatpush1.msra.mxu0 0.0
    %2860 = vmatprep.subr.mxu0 0.0
    %2861 = vmatpush1.msra.mxu0 0.0
    %2862 = vmatprep.subr.mxu0 0.0
    %2863 = vmatpush1.msra.mxu0 0.0
    %2864 = vmatprep.subr.mxu0 0.0
    %2865 = vmatpush1.msra.mxu0 0.0
    %2866 = vmatprep.subr.mxu0 0.0
    %2867 = vmatpush1.msra.mxu0 0.0
    %2868 = vmatprep.subr.mxu0 0.0
    %2869 = vmatpush1.msra.mxu0 0.0
    %2870 = vmatprep.subr.mxu0 0.0
    %2871 = vmatpush1.msra.mxu0 0.0
    %2872 = vmatprep.subr.mxu0 0.0
    %2873 = vmatpush1.msra.mxu0 0.0
    %2874 = vmatprep.subr.mxu0 0.0
    %2875 = vmatpush1.msra.mxu0 0.0
    %2876 = vmatprep.subr.mxu0 0.0
    %2877 = vmatpush1.msra.mxu0 0.0
    %2878 = vmatprep.subr.mxu0 0.0
    %2879 = vmatpush1.msra.mxu0 0.0
    %2880 = vmatprep.subr.mxu0 0.0
    %2881 = vmatpush1.msra.mxu0 0.0
    %2882 = vmatprep.subr.mxu0 0.0
    %2883 = vmatpush1.msra.mxu0 0.0
    %2884 = vmatprep.subr.mxu0 0.0
    %2885 = vmatpush1.msra.mxu0 0.0
    %2886 = vmatprep.subr.mxu0 0.0
    %2887 = vmatpush1.msra.mxu0 0.0
    %2888 = vmatprep.subr.mxu0 0.0
    %2889 = vmatpush1.msra.mxu0 0.0
    %2890 = vmatprep.mubr.f32.mxu0 0.0
    %2891 = vmatmul.mubr.f32.gmra.mrb[0].mxu0 %v2297
    %v2892 = vpop.f32.mrb[0].mxu0
    %v2893 = vadd.f32 0.0, %v2892
    %v2894 = vpop.f32.mrb[0].mxu0
    %2895 = vdwg.mxu0
    %v2897 = vsel %vm510, %v2825, 0
    %2899 = vmatprep.subr.mxu0 0.0
    %2900 = vmatpush1.msra.mxu0 %v323
    %2901 = vmatprep.subr.mxu0 0.0
    %2902 = vmatpush1.msra.mxu0 %v324
    %2903 = vmatprep.subr.mxu0 0.0
    %2904 = vmatpush1.msra.mxu0 0.0
    %2905 = vmatprep.subr.mxu0 0.0
    %2906 = vmatpush1.msra.mxu0 0.0
    %2907 = vmatprep.subr.mxu0 0.0
    %2908 = vmatpush1.msra.mxu0 0.0
    %2909 = vmatprep.subr.mxu0 0.0
    %2910 = vmatpush1.msra.mxu0 0.0
    %2911 = vmatprep.subr.mxu0 0.0
    %2912 = vmatpush1.msra.mxu0 0.0
    %2913 = vmatprep.subr.mxu0 0.0
    %2914 = vmatpush1.msra.mxu0 0.0
    %2915 = vmatprep.subr.mxu0 0.0
    %2916 = vmatpush1.msra.mxu0 0.0
    %2917 = vmatprep.subr.mxu0 0.0
    %2918 = vmatpush1.msra.mxu0 0.0
    %2919 = vmatprep.subr.mxu0 0.0
    %2920 = vmatpush1.msra.mxu0 0.0
    %2921 = vmatprep.subr.mxu0 0.0
    %2922 = vmatpush1.msra.mxu0 0.0
    %2923 = vmatprep.subr.mxu0 0.0
    %2924 = vmatpush1.msra.mxu0 0.0
    %2925 = vmatprep.subr.mxu0 0.0
    %2926 = vmatpush1.msra.mxu0 0.0
    %2927 = vmatprep.subr.mxu0 0.0
    %2928 = vmatpush1.msra.mxu0 0.0
    %2929 = vmatprep.subr.mxu0 0.0
    %2930 = vmatpush1.msra.mxu0 0.0
    %2931 = vmatprep.subr.mxu0 0.0
    %2932 = vmatpush1.msra.mxu0 0.0
    %2933 = vmatprep.subr.mxu0 0.0
    %2934 = vmatpush1.msra.mxu0 0.0
    %2935 = vmatprep.subr.mxu0 0.0
    %2936 = vmatpush1.msra.mxu0 0.0
    %2937 = vmatprep.subr.mxu0 0.0
    %2938 = vmatpush1.msra.mxu0 0.0
    %2939 = vmatprep.subr.mxu0 0.0
    %2940 = vmatpush1.msra.mxu0 0.0
    %2941 = vmatprep.subr.mxu0 0.0
    %2942 = vmatpush1.msra.mxu0 0.0
    %2943 = vmatprep.subr.mxu0 0.0
    %2944 = vmatpush1.msra.mxu0 0.0
    %2945 = vmatprep.subr.mxu0 0.0
    %2946 = vmatpush1.msra.mxu0 0.0
    %2947 = vmatprep.subr.mxu0 0.0
    %2948 = vmatpush1.msra.mxu0 0.0
    %2949 = vmatprep.subr.mxu0 0.0
    %2950 = vmatpush1.msra.mxu0 0.0
    %2951 = vmatprep.subr.mxu0 0.0
    %2952 = vmatpush1.msra.mxu0 0.0
    %2953 = vmatprep.subr.mxu0 0.0
    %2954 = vmatpush1.msra.mxu0 0.0
    %2955 = vmatprep.subr.mxu0 0.0
    %2956 = vmatpush1.msra.mxu0 0.0
    %2957 = vmatprep.subr.mxu0 0.0
    %2958 = vmatpush1.msra.mxu0 0.0
    %2959 = vmatprep.subr.mxu0 0.0
    %2960 = vmatpush1.msra.mxu0 0.0
    %2961 = vmatprep.subr.mxu0 0.0
    %2962 = vmatpush1.msra.mxu0 0.0
    %2963 = vmatprep.mubr.f32.mxu0 0.0
    %2964 = vmatmul.mubr.f32.gmra.mrb[0].mxu0 %v2897
    %v2965 = vpop.f32.mrb[0].mxu0
    %v2966 = vadd.f32 %v2893, %v2965
    %v2967 = vpop.f32.mrb[0].mxu0
    %2968 = vdwg.mxu0
    %v2969 = vadd.f32 %v2966, %v384
    %2970 = vmatprep.subr.mxu0 0.0
    %2971 = vmatpush1.msra.mxu0 %v351
    %2972 = vmatprep.subr.mxu0 0.0
    %2973 = vmatpush1.msra.mxu0 %v352
    %2974 = vmatprep.subr.mxu0 0.0
    %2975 = vmatpush1.msra.mxu0 %v353
    %2976 = vmatprep.subr.mxu0 0.0
    %2977 = vmatpush1.msra.mxu0 %v354
    %2978 = vmatprep.subr.mxu0 0.0
    %2979 = vmatpush1.msra.mxu0 0.0
    %2980 = vmatprep.subr.mxu0 0.0
    %2981 = vmatpush1.msra.mxu0 0.0
    %2982 = vmatprep.subr.mxu0 0.0
    %2983 = vmatpush1.msra.mxu0 0.0
    %2984 = vmatprep.subr.mxu0 0.0
    %2985 = vmatpush1.msra.mxu0 0.0
    %2986 = vmatprep.subr.mxu0 0.0
    %2987 = vmatpush1.msra.mxu0 0.0
    %2988 = vmatprep.subr.mxu0 0.0
    %2989 = vmatpush1.msra.mxu0 0.0
    %2990 = vmatprep.subr.mxu0 0.0
    %2991 = vmatpush1.msra.mxu0 0.0
    %2992 = vmatprep.subr.mxu0 0.0
    %2993 = vmatpush1.msra.mxu0 0.0
    %2994 = vmatprep.subr.mxu0 0.0
    %2995 = vmatpush1.msra.mxu0 0.0
    %2996 = vmatprep.subr.mxu0 0.0
    %2997 = vmatpush1.msra.mxu0 0.0
    %2998 = vmatprep.subr.mxu0 0.0
    %2999 = vmatpush1.msra.mxu0 0.0
    %3000 = vmatprep.subr.mxu0 0.0
    %3001 = vmatpush1.msra.mxu0 0.0
    %3002 = vmatprep.subr.mxu0 0.0
    %3003 = vmatpush1.msra.mxu0 0.0
    %3004 = vmatprep.subr.mxu0 0.0
    %3005 = vmatpush1.msra.mxu0 0.0
    %3006 = vmatprep.subr.mxu0 0.0
    %3007 = vmatpush1.msra.mxu0 0.0
    %3008 = vmatprep.subr.mxu0 0.0
    %3009 = vmatpush1.msra.mxu0 0.0
    %3010 = vmatprep.subr.mxu0 0.0
    %3011 = vmatpush1.msra.mxu0 0.0
    %3012 = vmatprep.subr.mxu0 0.0
    %3013 = vmatpush1.msra.mxu0 0.0
    %3014 = vmatprep.subr.mxu0 0.0
    %3015 = vmatpush1.msra.mxu0 0.0
    %3016 = vmatprep.subr.mxu0 0.0
    %3017 = vmatpush1.msra.mxu0 0.0
    %3018 = vmatprep.subr.mxu0 0.0
    %3019 = vmatpush1.msra.mxu0 0.0
    %3020 = vmatprep.subr.mxu0 0.0
    %3021 = vmatpush1.msra.mxu0 0.0
    %3022 = vmatprep.subr.mxu0 0.0
    %3023 = vmatpush1.msra.mxu0 0.0
    %3024 = vmatprep.subr.mxu0 0.0
    %3025 = vmatpush1.msra.mxu0 0.0
    %3026 = vmatprep.subr.mxu0 0.0
    %3027 = vmatpush1.msra.mxu0 0.0
    %3028 = vmatprep.subr.mxu0 0.0
    %3029 = vmatpush1.msra.mxu0 0.0
    %3030 = vmatprep.subr.mxu0 0.0
    %3031 = vmatpush1.msra.mxu0 0.0
    %3032 = vmatprep.subr.mxu0 0.0
    %3033 = vmatpush1.msra.mxu0 0.0
    %3034 = vmatprep.mubr.f32.mxu0 0.0
    %3035 = vmatmul.mubr.f32.gmra.mrb[0].mxu0 %v2297
    %v3036 = vpop.f32.mrb[0].mxu0
    %v3037 = vadd.f32 0.0, %v3036
    %v3038 = vpop.f32.mrb[0].mxu0
    %3039 = vdwg.mxu0
    %3040 = vmatprep.subr.mxu0 0.0
    %3041 = vmatpush1.msra.mxu0 %v325
    %3042 = vmatprep.subr.mxu0 0.0
    %3043 = vmatpush1.msra.mxu0 %v326
    %3044 = vmatprep.subr.mxu0 0.0
    %3045 = vmatpush1.msra.mxu0 0.0
    %3046 = vmatprep.subr.mxu0 0.0
    %3047 = vmatpush1.msra.mxu0 0.0
    %3048 = vmatprep.subr.mxu0 0.0
    %3049 = vmatpush1.msra.mxu0 0.0
    %3050 = vmatprep.subr.mxu0 0.0
    %3051 = vmatpush1.msra.mxu0 0.0
    %3052 = vmatprep.subr.mxu0 0.0
    %3053 = vmatpush1.msra.mxu0 0.0
    %3054 = vmatprep.subr.mxu0 0.0
    %3055 = vmatpush1.msra.mxu0 0.0
    %3056 = vmatprep.subr.mxu0 0.0
    %3057 = vmatpush1.msra.mxu0 0.0
    %3058 = vmatprep.subr.mxu0 0.0
    %3059 = vmatpush1.msra.mxu0 0.0
    %3060 = vmatprep.subr.mxu0 0.0
    %3061 = vmatpush1.msra.mxu0 0.0
    %3062 = vmatprep.subr.mxu0 0.0
    %3063 = vmatpush1.msra.mxu0 0.0
    %3064 = vmatprep.subr.mxu0 0.0
    %3065 = vmatpush1.msra.mxu0 0.0
    %3066 = vmatprep.subr.mxu0 0.0
    %3067 = vmatpush1.msra.mxu0 0.0
    %3068 = vmatprep.subr.mxu0 0.0
    %3069 = vmatpush1.msra.mxu0 0.0
    %3070 = vmatprep.subr.mxu0 0.0
    %3071 = vmatpush1.msra.mxu0 0.0
    %3072 = vmatprep.subr.mxu0 0.0
    %3073 = vmatpush1.msra.mxu0 0.0
    %3074 = vmatprep.subr.mxu0 0.0
    %3075 = vmatpush1.msra.mxu0 0.0
    %3076 = vmatprep.subr.mxu0 0.0
    %3077 = vmatpush1.msra.mxu0 0.0
    %3078 = vmatprep.subr.mxu0 0.0
    %3079 = vmatpush1.msra.mxu0 0.0
    %3080 = vmatprep.subr.mxu0 0.0
    %3081 = vmatpush1.msra.mxu0 0.0
    %3082 = vmatprep.subr.mxu0 0.0
    %3083 = vmatpush1.msra.mxu0 0.0
    %3084 = vmatprep.subr.mxu0 0.0
    %3085 = vmatpush1.msra.mxu0 0.0
    %3086 = vmatprep.subr.mxu0 0.0
    %3087 = vmatpush1.msra.mxu0 0.0
    %3088 = vmatprep.subr.mxu0 0.0
    %3089 = vmatpush1.msra.mxu0 0.0
    %3090 = vmatprep.subr.mxu0 0.0
    %3091 = vmatpush1.msra.mxu0 0.0
    %3092 = vmatprep.subr.mxu0 0.0
    %3093 = vmatpush1.msra.mxu0 0.0
    %3094 = vmatprep.subr.mxu0 0.0
    %3095 = vmatpush1.msra.mxu0 0.0
    %3096 = vmatprep.subr.mxu0 0.0
    %3097 = vmatpush1.msra.mxu0 0.0
    %3098 = vmatprep.subr.mxu0 0.0
    %3099 = vmatpush1.msra.mxu0 0.0
    %3100 = vmatprep.subr.mxu0 0.0
    %3101 = vmatpush1.msra.mxu0 0.0
    %3102 = vmatprep.subr.mxu0 0.0
    %3103 = vmatpush1.msra.mxu0 0.0
    %3104 = vmatprep.mubr.f32.mxu0 0.0
    %3105 = vmatmul.mubr.f32.gmra.mrb[0].mxu0 %v2897
    %v3106 = vpop.f32.mrb[0].mxu0
    %v3107 = vadd.f32 %v3037, %v3106
    %v3108 = vpop.f32.mrb[0].mxu0
    %3109 = vdwg.mxu0
    %v3110 = vadd.f32 %v3107, %v391
    %3111 = vmatprep.subr.mxu0 0.0
    %3112 = vmatpush1.msra.mxu0 %v355
    %3113 = vmatprep.subr.mxu0 0.0
    %3114 = vmatpush1.msra.mxu0 %v356
    %3115 = vmatprep.subr.mxu0 0.0
    %3116 = vmatpush1.msra.mxu0 %v357
    %3117 = vmatprep.subr.mxu0 0.0
    %3118 = vmatpush1.msra.mxu0 %v358
    %3119 = vmatprep.subr.mxu0 0.0
    %3120 = vmatpush1.msra.mxu0 0.0
    %3121 = vmatprep.subr.mxu0 0.0
    %3122 = vmatpush1.msra.mxu0 0.0
    %3123 = vmatprep.subr.mxu0 0.0
    %3124 = vmatpush1.msra.mxu0 0.0
    %3125 = vmatprep.subr.mxu0 0.0
    %3126 = vmatpush1.msra.mxu0 0.0
    %3127 = vmatprep.subr.mxu0 0.0
    %3128 = vmatpush1.msra.mxu0 0.0
    %3129 = vmatprep.subr.mxu0 0.0
    %3130 = vmatpush1.msra.mxu0 0.0
    %3131 = vmatprep.subr.mxu0 0.0
    %3132 = vmatpush1.msra.mxu0 0.0
    %3133 = vmatprep.subr.mxu0 0.0
    %3134 = vmatpush1.msra.mxu0 0.0
    %3135 = vmatprep.subr.mxu0 0.0
    %3136 = vmatpush1.msra.mxu0 0.0
    %3137 = vmatprep.subr.mxu0 0.0
    %3138 = vmatpush1.msra.mxu0 0.0
    %3139 = vmatprep.subr.mxu0 0.0
    %3140 = vmatpush1.msra.mxu0 0.0
    %3141 = vmatprep.subr.mxu0 0.0
    %3142 = vmatpush1.msra.mxu0 0.0
    %3143 = vmatprep.subr.mxu0 0.0
    %3144 = vmatpush1.msra.mxu0 0.0
    %3145 = vmatprep.subr.mxu0 0.0
    %3146 = vmatpush1.msra.mxu0 0.0
    %3147 = vmatprep.subr.mxu0 0.0
    %3148 = vmatpush1.msra.mxu0 0.0
    %3149 = vmatprep.subr.mxu0 0.0
    %3150 = vmatpush1.msra.mxu0 0.0
    %3151 = vmatprep.subr.mxu0 0.0
    %3152 = vmatpush1.msra.mxu0 0.0
    %3153 = vmatprep.subr.mxu0 0.0
    %3154 = vmatpush1.msra.mxu0 0.0
    %3155 = vmatprep.subr.mxu0 0.0
    %3156 = vmatpush1.msra.mxu0 0.0
    %3157 = vmatprep.subr.mxu0 0.0
    %3158 = vmatpush1.msra.mxu0 0.0
    %3159 = vmatprep.subr.mxu0 0.0
    %3160 = vmatpush1.msra.mxu0 0.0
    %3161 = vmatprep.subr.mxu0 0.0
    %3162 = vmatpush1.msra.mxu0 0.0
    %3163 = vmatprep.subr.mxu0 0.0
    %3164 = vmatpush1.msra.mxu0 0.0
    %3165 = vmatprep.subr.mxu0 0.0
    %3166 = vmatpush1.msra.mxu0 0.0
    %3167 = vmatprep.subr.mxu0 0.0
    %3168 = vmatpush1.msra.mxu0 0.0
    %3169 = vmatprep.subr.mxu0 0.0
    %3170 = vmatpush1.msra.mxu0 0.0
    %3171 = vmatprep.subr.mxu0 0.0
    %3172 = vmatpush1.msra.mxu0 0.0
    %3173 = vmatprep.subr.mxu0 0.0
    %3174 = vmatpush1.msra.mxu0 0.0
    %3175 = vmatprep.mubr.f32.mxu0 0.0
    %3176 = vmatmul.mubr.f32.gmra.mrb[0].mxu0 %v2297
    %v3177 = vpop.f32.mrb[0].mxu0
    %v3178 = vadd.f32 0.0, %v3177
    %v3179 = vpop.f32.mrb[0].mxu0
    %3180 = vdwg.mxu0
    %3181 = vmatprep.subr.mxu0 0.0
    %3182 = vmatpush1.msra.mxu0 %v327
    %3183 = vmatprep.subr.mxu0 0.0
    %3184 = vmatpush1.msra.mxu0 %v328
    %3185 = vmatprep.subr.mxu0 0.0
    %3186 = vmatpush1.msra.mxu0 0.0
    %3187 = vmatprep.subr.mxu0 0.0
    %3188 = vmatpush1.msra.mxu0 0.0
    %3189 = vmatprep.subr.mxu0 0.0
    %3190 = vmatpush1.msra.mxu0 0.0
    %3191 = vmatprep.subr.mxu0 0.0
    %3192 = vmatpush1.msra.mxu0 0.0
    %3193 = vmatprep.subr.mxu0 0.0
    %3194 = vmatpush1.msra.mxu0 0.0
    %3195 = vmatprep.subr.mxu0 0.0
    %3196 = vmatpush1.msra.mxu0 0.0
    %3197 = vmatprep.subr.mxu0 0.0
    %3198 = vmatpush1.msra.mxu0 0.0
    %3199 = vmatprep.subr.mxu0 0.0
    %3200 = vmatpush1.msra.mxu0 0.0
    %3201 = vmatprep.subr.mxu0 0.0
    %3202 = vmatpush1.msra.mxu0 0.0
    %3203 = vmatprep.subr.mxu0 0.0
    %3204 = vmatpush1.msra.mxu0 0.0
    %3205 = vmatprep.subr.mxu0 0.0
    %3206 = vmatpush1.msra.mxu0 0.0
    %3207 = vmatprep.subr.mxu0 0.0
    %3208 = vmatpush1.msra.mxu0 0.0
    %3209 = vmatprep.subr.mxu0 0.0
    %3210 = vmatpush1.msra.mxu0 0.0
    %3211 = vmatprep.subr.mxu0 0.0
    %3212 = vmatpush1.msra.mxu0 0.0
    %3213 = vmatprep.subr.mxu0 0.0
    %3214 = vmatpush1.msra.mxu0 0.0
    %3215 = vmatprep.subr.mxu0 0.0
    %3216 = vmatpush1.msra.mxu0 0.0
    %3217 = vmatprep.subr.mxu0 0.0
    %3218 = vmatpush1.msra.mxu0 0.0
    %3219 = vmatprep.subr.mxu0 0.0
    %3220 = vmatpush1.msra.mxu0 0.0
    %3221 = vmatprep.subr.mxu0 0.0
    %3222 = vmatpush1.msra.mxu0 0.0
    %3223 = vmatprep.subr.mxu0 0.0
    %3224 = vmatpush1.msra.mxu0 0.0
    %3225 = vmatprep.subr.mxu0 0.0
    %3226 = vmatpush1.msra.mxu0 0.0
    %3227 = vmatprep.subr.mxu0 0.0
    %3228 = vmatpush1.msra.mxu0 0.0
    %3229 = vmatprep.subr.mxu0 0.0
    %3230 = vmatpush1.msra.mxu0 0.0
    %3231 = vmatprep.subr.mxu0 0.0
    %3232 = vmatpush1.msra.mxu0 0.0
    %3233 = vmatprep.subr.mxu0 0.0
    %3234 = vmatpush1.msra.mxu0 0.0
    %3235 = vmatprep.subr.mxu0 0.0
    %3236 = vmatpush1.msra.mxu0 0.0
    %3237 = vmatprep.subr.mxu0 0.0
    %3238 = vmatpush1.msra.mxu0 0.0
    %3239 = vmatprep.subr.mxu0 0.0
    %3240 = vmatpush1.msra.mxu0 0.0
    %3241 = vmatprep.subr.mxu0 0.0
    %3242 = vmatpush1.msra.mxu0 0.0
    %3243 = vmatprep.subr.mxu0 0.0
    %3244 = vmatpush1.msra.mxu0 0.0
    %3245 = vmatprep.mubr.f32.mxu0 0.0
    %3246 = vmatmul.mubr.f32.gmra.mrb[0].mxu0 %v2897
    %v3247 = vpop.f32.mrb[0].mxu0
    %v3248 = vadd.f32 %v3178, %v3247
    %v3249 = vpop.f32.mrb[0].mxu0
    %3250 = vdwg.mxu0
    %v3251 = vadd.f32 %v3248, %v398
    %3252 = vmatprep.subr.mxu0 0.0
    %3253 = vmatpush1.msra.mxu0 %v359
    %3254 = vmatprep.subr.mxu0 0.0
    %3255 = vmatpush1.msra.mxu0 %v360
    %3256 = vmatprep.subr.mxu0 0.0
    %3257 = vmatpush1.msra.mxu0 %v361
    %3258 = vmatprep.subr.mxu0 0.0
    %3259 = vmatpush1.msra.mxu0 %v362
    %3260 = vmatprep.subr.mxu0 0.0
    %3261 = vmatpush1.msra.mxu0 0.0
    %3262 = vmatprep.subr.mxu0 0.0
    %3263 = vmatpush1.msra.mxu0 0.0
    %3264 = vmatprep.subr.mxu0 0.0
    %3265 = vmatpush1.msra.mxu0 0.0
    %3266 = vmatprep.subr.mxu0 0.0
    %3267 = vmatpush1.msra.mxu0 0.0
    %3268 = vmatprep.subr.mxu0 0.0
    %3269 = vmatpush1.msra.mxu0 0.0
    %3270 = vmatprep.subr.mxu0 0.0
    %3271 = vmatpush1.msra.mxu0 0.0
    %3272 = vmatprep.subr.mxu0 0.0
    %3273 = vmatpush1.msra.mxu0 0.0
    %3274 = vmatprep.subr.mxu0 0.0
    %3275 = vmatpush1.msra.mxu0 0.0
    %3276 = vmatprep.subr.mxu0 0.0
    %3277 = vmatpush1.msra.mxu0 0.0
    %3278 = vmatprep.subr.mxu0 0.0
    %3279 = vmatpush1.msra.mxu0 0.0
    %3280 = vmatprep.subr.mxu0 0.0
    %3281 = vmatpush1.msra.mxu0 0.0
    %3282 = vmatprep.subr.mxu0 0.0
    %3283 = vmatpush1.msra.mxu0 0.0
    %3284 = vmatprep.subr.mxu0 0.0
    %3285 = vmatpush1.msra.mxu0 0.0
    %3286 = vmatprep.subr.mxu0 0.0
    %3287 = vmatpush1.msra.mxu0 0.0
    %3288 = vmatprep.subr.mxu0 0.0
    %3289 = vmatpush1.msra.mxu0 0.0
    %3290 = vmatprep.subr.mxu0 0.0
    %3291 = vmatpush1.msra.mxu0 0.0
    %3292 = vmatprep.subr.mxu0 0.0
    %3293 = vmatpush1.msra.mxu0 0.0
    %3294 = vmatprep.subr.mxu0 0.0
    %3295 = vmatpush1.msra.mxu0 0.0
    %3296 = vmatprep.subr.mxu0 0.0
    %3297 = vmatpush1.msra.mxu0 0.0
    %3298 = vmatprep.subr.mxu0 0.0
    %3299 = vmatpush1.msra.mxu0 0.0
    %3300 = vmatprep.subr.mxu0 0.0
    %3301 = vmatpush1.msra.mxu0 0.0
    %3302 = vmatprep.subr.mxu0 0.0
    %3303 = vmatpush1.msra.mxu0 0.0
    %3304 = vmatprep.subr.mxu0 0.0
    %3305 = vmatpush1.msra.mxu0 0.0
    %3306 = vmatprep.subr.mxu0 0.0
    %3307 = vmatpush1.msra.mxu0 0.0
    %3308 = vmatprep.subr.mxu0 0.0
    %3309 = vmatpush1.msra.mxu0 0.0
    %3310 = vmatprep.subr.mxu0 0.0
    %3311 = vmatpush1.msra.mxu0 0.0
    %3312 = vmatprep.subr.mxu0 0.0
    %3313 = vmatpush1.msra.mxu0 0.0
    %3314 = vmatprep.subr.mxu0 0.0
    %3315 = vmatpush1.msra.mxu0 0.0
    %3316 = vmatprep.mubr.f32.mxu0 0.0
    %3317 = vmatmul.mubr.f32.gmra.mrb[0].mxu0 %v2297
    %v3318 = vpop.f32.mrb[0].mxu0
    %v3319 = vadd.f32 0.0, %v3318
    %v3320 = vpop.f32.mrb[0].mxu0
    %3321 = vdwg.mxu0
    %3322 = vmatprep.subr.mxu0 0.0
    %3323 = vmatpush1.msra.mxu0 %v329
    %3324 = vmatprep.subr.mxu0 0.0
    %3325 = vmatpush1.msra.mxu0 %v330
    %3326 = vmatprep.subr.mxu0 0.0
    %3327 = vmatpush1.msra.mxu0 0.0
    %3328 = vmatprep.subr.mxu0 0.0
    %3329 = vmatpush1.msra.mxu0 0.0
    %3330 = vmatprep.subr.mxu0 0.0
    %3331 = vmatpush1.msra.mxu0 0.0
    %3332 = vmatprep.subr.mxu0 0.0
    %3333 = vmatpush1.msra.mxu0 0.0
    %3334 = vmatprep.subr.mxu0 0.0
    %3335 = vmatpush1.msra.mxu0 0.0
    %3336 = vmatprep.subr.mxu0 0.0
    %3337 = vmatpush1.msra.mxu0 0.0
    %3338 = vmatprep.subr.mxu0 0.0
    %3339 = vmatpush1.msra.mxu0 0.0
    %3340 = vmatprep.subr.mxu0 0.0
    %3341 = vmatpush1.msra.mxu0 0.0
    %3342 = vmatprep.subr.mxu0 0.0
    %3343 = vmatpush1.msra.mxu0 0.0
    %3344 = vmatprep.subr.mxu0 0.0
    %3345 = vmatpush1.msra.mxu0 0.0
    %3346 = vmatprep.subr.mxu0 0.0
    %3347 = vmatpush1.msra.mxu0 0.0
    %3348 = vmatprep.subr.mxu0 0.0
    %3349 = vmatpush1.msra.mxu0 0.0
    %3350 = vmatprep.subr.mxu0 0.0
    %3351 = vmatpush1.msra.mxu0 0.0
    %3352 = vmatprep.subr.mxu0 0.0
    %3353 = vmatpush1.msra.mxu0 0.0
    %3354 = vmatprep.subr.mxu0 0.0
    %3355 = vmatpush1.msra.mxu0 0.0
    %3356 = vmatprep.subr.mxu0 0.0
    %3357 = vmatpush1.msra.mxu0 0.0
    %3358 = vmatprep.subr.mxu0 0.0
    %3359 = vmatpush1.msra.mxu0 0.0
    %3360 = vmatprep.subr.mxu0 0.0
    %3361 = vmatpush1.msra.mxu0 0.0
    %3362 = vmatprep.subr.mxu0 0.0
    %3363 = vmatpush1.msra.mxu0 0.0
    %3364 = vmatprep.subr.mxu0 0.0
    %3365 = vmatpush1.msra.mxu0 0.0
    %3366 = vmatprep.subr.mxu0 0.0
    %3367 = vmatpush1.msra.mxu0 0.0
    %3368 = vmatprep.subr.mxu0 0.0
    %3369 = vmatpush1.msra.mxu0 0.0
    %3370 = vmatprep.subr.mxu0 0.0
    %3371 = vmatpush1.msra.mxu0 0.0
    %3372 = vmatprep.subr.mxu0 0.0
    %3373 = vmatpush1.msra.mxu0 0.0
    %3374 = vmatprep.subr.mxu0 0.0
    %3375 = vmatpush1.msra.mxu0 0.0
    %3376 = vmatprep.subr.mxu0 0.0
    %3377 = vmatpush1.msra.mxu0 0.0
    %3378 = vmatprep.subr.mxu0 0.0
    %3379 = vmatpush1.msra.mxu0 0.0
    %3380 = vmatprep.subr.mxu0 0.0
    %3381 = vmatpush1.msra.mxu0 0.0
    %3382 = vmatprep.subr.mxu0 0.0
    %3383 = vmatpush1.msra.mxu0 0.0
    %3384 = vmatprep.subr.mxu0 0.0
    %3385 = vmatpush1.msra.mxu0 0.0
    %3386 = vmatprep.mubr.f32.mxu0 0.0
    %3387 = vmatmul.mubr.f32.gmra.mrb[0].mxu0 %v2897
    %v3388 = vpop.f32.mrb[0].mxu0
    %v3389 = vadd.f32 %v3319, %v3388
    %v3390 = vpop.f32.mrb[0].mxu0
    %3391 = vdwg.mxu0
    %v3392 = vadd.f32 %v3389, %v405
    %v3393 = vxor.u32 %v2969, 2147483648
    %v3394 = vmul.f32 %v3393, 1.442695
    %v3395 = vpow.pop %v3394
    %v3396 = vadd.f32 %v3395, 1.0
    %v3397 = vrcp.pop %v3396
    %v3398 = vmul.f32 1.0, %v3397
    %v3399 = vxor.u32 %v3110, 2147483648
    %v3400 = vmul.f32 %v3399, 1.442695
    %v3401 = vpow.pop %v3400
    %v3402 = vadd.f32 %v3401, 1.0
    %v3403 = vrcp.pop %v3402
    %v3404 = vmul.f32 1.0, %v3403
    %v3405 = vtanh.pop %v3251
    %v3406 = vxor.u32 %v3392, 2147483648
    %v3407 = vmul.f32 %v3406, 1.442695
    %v3408 = vpow.pop %v3407
    %v3409 = vadd.f32 %v3408, 1.0
    %v3410 = vrcp.pop %v3409
    %v3411 = vmul.f32 1.0, %v3410
    %v3412 = vmul.f32 %v3404, %v2220
    %v3413 = vmul.f32 %v3398, %v3405
    %v3414 = vadd.f32 %v3412, %v3413
    %v3415 = vtanh.pop %v3414
    %v3416 = vmul.f32 %v3411, %v3415
    %v3418 = vsel %vm436, %v2816, 0
    %3420 = vmatprep.subr.mxu0 0.0
    %3421 = vmatpush1.msra.mxu0 %v363
    %3422 = vmatprep.subr.mxu0 0.0
    %3423 = vmatpush1.msra.mxu0 %v364
    %3424 = vmatprep.subr.mxu0 0.0
    %3425 = vmatpush1.msra.mxu0 %v365
    %3426 = vmatprep.subr.mxu0 0.0
    %3427 = vmatpush1.msra.mxu0 %v366
    %3428 = vmatprep.subr.mxu0 0.0
    %3429 = vmatpush1.msra.mxu0 0.0
    %3430 = vmatprep.subr.mxu0 0.0
    %3431 = vmatpush1.msra.mxu0 0.0
    %3432 = vmatprep.subr.mxu0 0.0
    %3433 = vmatpush1.msra.mxu0 0.0
    %3434 = vmatprep.subr.mxu0 0.0
    %3435 = vmatpush1.msra.mxu0 0.0
    %3436 = vmatprep.subr.mxu0 0.0
    %3437 = vmatpush1.msra.mxu0 0.0
    %3438 = vmatprep.subr.mxu0 0.0
    %3439 = vmatpush1.msra.mxu0 0.0
    %3440 = vmatprep.subr.mxu0 0.0
    %3441 = vmatpush1.msra.mxu0 0.0
    %3442 = vmatprep.subr.mxu0 0.0
    %3443 = vmatpush1.msra.mxu0 0.0
    %3444 = vmatprep.subr.mxu0 0.0
    %3445 = vmatpush1.msra.mxu0 0.0
    %3446 = vmatprep.subr.mxu0 0.0
    %3447 = vmatpush1.msra.mxu0 0.0
    %3448 = vmatprep.subr.mxu0 0.0
    %3449 = vmatpush1.msra.mxu0 0.0
    %3450 = vmatprep.subr.mxu0 0.0
    %3451 = vmatpush1.msra.mxu0 0.0
    %3452 = vmatprep.subr.mxu0 0.0
    %3453 = vmatpush1.msra.mxu0 0.0
    %3454 = vmatprep.subr.mxu0 0.0
    %3455 = vmatpush1.msra.mxu0 0.0
    %3456 = vmatprep.subr.mxu0 0.0
    %3457 = vmatpush1.msra.mxu0 0.0
    %3458 = vmatprep.subr.mxu0 0.0
    %3459 = vmatpush1.msra.mxu0 0.0
    %3460 = vmatprep.subr.mxu0 0.0
    %3461 = vmatpush1.msra.mxu0 0.0
    %3462 = vmatprep.subr.mxu0 0.0
    %3463 = vmatpush1.msra.mxu0 0.0
    %3464 = vmatprep.subr.mxu0 0.0
    %3465 = vmatpush1.msra.mxu0 0.0
    %3466 = vmatprep.subr.mxu0 0.0
    %3467 = vmatpush1.msra.mxu0 0.0
    %3468 = vmatprep.subr.mxu0 0.0
    %3469 = vmatpush1.msra.mxu0 0.0
    %3470 = vmatprep.subr.mxu0 0.0
    %3471 = vmatpush1.msra.mxu0 0.0
    %3472 = vmatprep.subr.mxu0 0.0
    %3473 = vmatpush1.msra.mxu0 0.0
    %3474 = vmatprep.subr.mxu0 0.0
    %3475 = vmatpush1.msra.mxu0 0.0
    %3476 = vmatprep.subr.mxu0 0.0
    %3477 = vmatpush1.msra.mxu0 0.0
    %3478 = vmatprep.subr.mxu0 0.0
    %3479 = vmatpush1.msra.mxu0 0.0
    %3480 = vmatprep.subr.mxu0 0.0
    %3481 = vmatpush1.msra.mxu0 0.0
    %3482 = vmatprep.subr.mxu0 0.0
    %3483 = vmatpush1.msra.mxu0 0.0
    %3484 = vmatprep.mubr.f32.mxu0 0.0
    %3485 = vmatmul.mubr.f32.gmra.mrb[0].mxu0 %v3418
    %v3486 = vpop.f32.mrb[0].mxu0
    %v3487 = vadd.f32 0.0, %v3486
    %v3488 = vpop.f32.mrb[0].mxu0
    %3489 = vdwg.mxu0
    %v3491 = vsel %vm436, %v3416, 0
    %3493 = vmatprep.subr.mxu0 0.0
    %3494 = vmatpush1.msra.mxu0 %v331
    %3495 = vmatprep.subr.mxu0 0.0
    %3496 = vmatpush1.msra.mxu0 %v332
    %3497 = vmatprep.subr.mxu0 0.0
    %3498 = vmatpush1.msra.mxu0 %v333
    %3499 = vmatprep.subr.mxu0 0.0
    %3500 = vmatpush1.msra.mxu0 %v334
    %3501 = vmatprep.subr.mxu0 0.0
    %3502 = vmatpush1.msra.mxu0 0.0
    %3503 = vmatprep.subr.mxu0 0.0
    %3504 = vmatpush1.msra.mxu0 0.0
    %3505 = vmatprep.subr.mxu0 0.0
    %3506 = vmatpush1.msra.mxu0 0.0
    %3507 = vmatprep.subr.mxu0 0.0
    %3508 = vmatpush1.msra.mxu0 0.0
    %3509 = vmatprep.subr.mxu0 0.0
    %3510 = vmatpush1.msra.mxu0 0.0
    %3511 = vmatprep.subr.mxu0 0.0
    %3512 = vmatpush1.msra.mxu0 0.0
    %3513 = vmatprep.subr.mxu0 0.0
    %3514 = vmatpush1.msra.mxu0 0.0
    %3515 = vmatprep.subr.mxu0 0.0
    %3516 = vmatpush1.msra.mxu0 0.0
    %3517 = vmatprep.subr.mxu0 0.0
    %3518 = vmatpush1.msra.mxu0 0.0
    %3519 = vmatprep.subr.mxu0 0.0
    %3520 = vmatpush1.msra.mxu0 0.0
    %3521 = vmatprep.subr.mxu0 0.0
    %3522 = vmatpush1.msra.mxu0 0.0
    %3523 = vmatprep.subr.mxu0 0.0
    %3524 = vmatpush1.msra.mxu0 0.0
    %3525 = vmatprep.subr.mxu0 0.0
    %3526 = vmatpush1.msra.mxu0 0.0
    %3527 = vmatprep.subr.mxu0 0.0
    %3528 = vmatpush1.msra.mxu0 0.0
    %3529 = vmatprep.subr.mxu0 0.0
    %3530 = vmatpush1.msra.mxu0 0.0
    %3531 = vmatprep.subr.mxu0 0.0
    %3532 = vmatpush1.msra.mxu0 0.0
    %3533 = vmatprep.subr.mxu0 0.0
    %3534 = vmatpush1.msra.mxu0 0.0
    %3535 = vmatprep.subr.mxu0 0.0
    %3536 = vmatpush1.msra.mxu0 0.0
    %3537 = vmatprep.subr.mxu0 0.0
    %3538 = vmatpush1.msra.mxu0 0.0
    %3539 = vmatprep.subr.mxu0 0.0
    %3540 = vmatpush1.msra.mxu0 0.0
    %3541 = vmatprep.subr.mxu0 0.0
    %3542 = vmatpush1.msra.mxu0 0.0
    %3543 = vmatprep.subr.mxu0 0.0
    %3544 = vmatpush1.msra.mxu0 0.0
    %3545 = vmatprep.subr.mxu0 0.0
    %3546 = vmatpush1.msra.mxu0 0.0
    %3547 = vmatprep.subr.mxu0 0.0
    %3548 = vmatpush1.msra.mxu0 0.0
    %3549 = vmatprep.subr.mxu0 0.0
    %3550 = vmatpush1.msra.mxu0 0.0
    %3551 = vmatprep.subr.mxu0 0.0
    %3552 = vmatpush1.msra.mxu0 0.0
    %3553 = vmatprep.subr.mxu0 0.0
    %3554 = vmatpush1.msra.mxu0 0.0
    %3555 = vmatprep.subr.mxu0 0.0
    %3556 = vmatpush1.msra.mxu0 0.0
    %3557 = vmatprep.mubr.f32.mxu0 0.0
    %3558 = vmatmul.mubr.f32.gmra.mrb[0].mxu0 %v3491
    %v3559 = vpop.f32.mrb[0].mxu0
    %v3560 = vadd.f32 %v3487, %v3559
    %v3561 = vpop.f32.mrb[0].mxu0
    %3562 = vdwg.mxu0
    %v3563 = vadd.f32 %v3560, %v412
    %3564 = vmatprep.subr.mxu0 0.0
    %3565 = vmatpush1.msra.mxu0 %v367
    %3566 = vmatprep.subr.mxu0 0.0
    %3567 = vmatpush1.msra.mxu0 %v368
    %3568 = vmatprep.subr.mxu0 0.0
    %3569 = vmatpush1.msra.mxu0 %v369
    %3570 = vmatprep.subr.mxu0 0.0
    %3571 = vmatpush1.msra.mxu0 %v370
    %3572 = vmatprep.subr.mxu0 0.0
    %3573 = vmatpush1.msra.mxu0 0.0
    %3574 = vmatprep.subr.mxu0 0.0
    %3575 = vmatpush1.msra.mxu0 0.0
    %3576 = vmatprep.subr.mxu0 0.0
    %3577 = vmatpush1.msra.mxu0 0.0
    %3578 = vmatprep.subr.mxu0 0.0
    %3579 = vmatpush1.msra.mxu0 0.0
    %3580 = vmatprep.subr.mxu0 0.0
    %3581 = vmatpush1.msra.mxu0 0.0
    %3582 = vmatprep.subr.mxu0 0.0
    %3583 = vmatpush1.msra.mxu0 0.0
    %3584 = vmatprep.subr.mxu0 0.0
    %3585 = vmatpush1.msra.mxu0 0.0
    %3586 = vmatprep.subr.mxu0 0.0
    %3587 = vmatpush1.msra.mxu0 0.0
    %3588 = vmatprep.subr.mxu0 0.0
    %3589 = vmatpush1.msra.mxu0 0.0
    %3590 = vmatprep.subr.mxu0 0.0
    %3591 = vmatpush1.msra.mxu0 0.0
    %3592 = vmatprep.subr.mxu0 0.0
    %3593 = vmatpush1.msra.mxu0 0.0
    %3594 = vmatprep.subr.mxu0 0.0
    %3595 = vmatpush1.msra.mxu0 0.0
    %3596 = vmatprep.subr.mxu0 0.0
    %3597 = vmatpush1.msra.mxu0 0.0
    %3598 = vmatprep.subr.mxu0 0.0
    %3599 = vmatpush1.msra.mxu0 0.0
    %3600 = vmatprep.subr.mxu0 0.0
    %3601 = vmatpush1.msra.mxu0 0.0
    %3602 = vmatprep.subr.mxu0 0.0
    %3603 = vmatpush1.msra.mxu0 0.0
    %3604 = vmatprep.subr.mxu0 0.0
    %3605 = vmatpush1.msra.mxu0 0.0
    %3606 = vmatprep.subr.mxu0 0.0
    %3607 = vmatpush1.msra.mxu0 0.0
    %3608 = vmatprep.subr.mxu0 0.0
    %3609 = vmatpush1.msra.mxu0 0.0
    %3610 = vmatprep.subr.mxu0 0.0
    %3611 = vmatpush1.msra.mxu0 0.0
    %3612 = vmatprep.subr.mxu0 0.0
    %3613 = vmatpush1.msra.mxu0 0.0
    %3614 = vmatprep.subr.mxu0 0.0
    %3615 = vmatpush1.msra.mxu0 0.0
    %3616 = vmatprep.subr.mxu0 0.0
    %3617 = vmatpush1.msra.mxu0 0.0
    %3618 = vmatprep.subr.mxu0 0.0
    %3619 = vmatpush1.msra.mxu0 0.0
    %3620 = vmatprep.subr.mxu0 0.0
    %3621 = vmatpush1.msra.mxu0 0.0
    %3622 = vmatprep.subr.mxu0 0.0
    %3623 = vmatpush1.msra.mxu0 0.0
    %3624 = vmatprep.subr.mxu0 0.0
    %3625 = vmatpush1.msra.mxu0 0.0
    %3626 = vmatprep.subr.mxu0 0.0
    %3627 = vmatpush1.msra.mxu0 0.0
    %3628 = vmatprep.mubr.f32.mxu0 0.0
    %3629 = vmatmul.mubr.f32.gmra.mrb[0].mxu0 %v3418
    %v3630 = vpop.f32.mrb[0].mxu0
    %v3631 = vadd.f32 0.0, %v3630
    %v3632 = vpop.f32.mrb[0].mxu0
    %3633 = vdwg.mxu0
    %3634 = vmatprep.subr.mxu0 0.0
    %3635 = vmatpush1.msra.mxu0 %v335
    %3636 = vmatprep.subr.mxu0 0.0
    %3637 = vmatpush1.msra.mxu0 %v336
    %3638 = vmatprep.subr.mxu0 0.0
    %3639 = vmatpush1.msra.mxu0 %v337
    %3640 = vmatprep.subr.mxu0 0.0
    %3641 = vmatpush1.msra.mxu0 %v338
    %3642 = vmatprep.subr.mxu0 0.0
    %3643 = vmatpush1.msra.mxu0 0.0
    %3644 = vmatprep.subr.mxu0 0.0
    %3645 = vmatpush1.msra.mxu0 0.0
    %3646 = vmatprep.subr.mxu0 0.0
    %3647 = vmatpush1.msra.mxu0 0.0
    %3648 = vmatprep.subr.mxu0 0.0
    %3649 = vmatpush1.msra.mxu0 0.0
    %3650 = vmatprep.subr.mxu0 0.0
    %3651 = vmatpush1.msra.mxu0 0.0
    %3652 = vmatprep.subr.mxu0 0.0
    %3653 = vmatpush1.msra.mxu0 0.0
    %3654 = vmatprep.subr.mxu0 0.0
    %3655 = vmatpush1.msra.mxu0 0.0
    %3656 = vmatprep.subr.mxu0 0.0
    %3657 = vmatpush1.msra.mxu0 0.0
    %3658 = vmatprep.subr.mxu0 0.0
    %3659 = vmatpush1.msra.mxu0 0.0
    %3660 = vmatprep.subr.mxu0 0.0
    %3661 = vmatpush1.msra.mxu0 0.0
    %3662 = vmatprep.subr.mxu0 0.0
    %3663 = vmatpush1.msra.mxu0 0.0
    %3664 = vmatprep.subr.mxu0 0.0
    %3665 = vmatpush1.msra.mxu0 0.0
    %3666 = vmatprep.subr.mxu0 0.0
    %3667 = vmatpush1.msra.mxu0 0.0
    %3668 = vmatprep.subr.mxu0 0.0
    %3669 = vmatpush1.msra.mxu0 0.0
    %3670 = vmatprep.subr.mxu0 0.0
    %3671 = vmatpush1.msra.mxu0 0.0
    %3672 = vmatprep.subr.mxu0 0.0
    %3673 = vmatpush1.msra.mxu0 0.0
    %3674 = vmatprep.subr.mxu0 0.0
    %3675 = vmatpush1.msra.mxu0 0.0
    %3676 = vmatprep.subr.mxu0 0.0
    %3677 = vmatpush1.msra.mxu0 0.0
    %3678 = vmatprep.subr.mxu0 0.0
    %3679 = vmatpush1.msra.mxu0 0.0
    %3680 = vmatprep.subr.mxu0 0.0
    %3681 = vmatpush1.msra.mxu0 0.0
    %3682 = vmatprep.subr.mxu0 0.0
    %3683 = vmatpush1.msra.mxu0 0.0
    %3684 = vmatprep.subr.mxu0 0.0
    %3685 = vmatpush1.msra.mxu0 0.0
    %3686 = vmatprep.subr.mxu0 0.0
    %3687 = vmatpush1.msra.mxu0 0.0
    %3688 = vmatprep.subr.mxu0 0.0
    %3689 = vmatpush1.msra.mxu0 0.0
    %3690 = vmatprep.subr.mxu0 0.0
    %3691 = vmatpush1.msra.mxu0 0.0
    %3692 = vmatprep.subr.mxu0 0.0
    %3693 = vmatpush1.msra.mxu0 0.0
    %3694 = vmatprep.subr.mxu0 0.0
    %3695 = vmatpush1.msra.mxu0 0.0
    %3696 = vmatprep.subr.mxu0 0.0
    %3697 = vmatpush1.msra.mxu0 0.0
    %3698 = vmatprep.mubr.f32.mxu0 0.0
    %3699 = vmatmul.mubr.f32.gmra.mrb[0].mxu0 %v3491
    %v3700 = vpop.f32.mrb[0].mxu0
    %v3701 = vadd.f32 %v3631, %v3700
    %v3702 = vpop.f32.mrb[0].mxu0
    %3703 = vdwg.mxu0
    %v3704 = vadd.f32 %v3701, %v419
    %3705 = vmatprep.subr.mxu0 0.0
    %3706 = vmatpush1.msra.mxu0 %v371
    %3707 = vmatprep.subr.mxu0 0.0
    %3708 = vmatpush1.msra.mxu0 %v372
    %3709 = vmatprep.subr.mxu0 0.0
    %3710 = vmatpush1.msra.mxu0 %v373
    %3711 = vmatprep.subr.mxu0 0.0
    %3712 = vmatpush1.msra.mxu0 %v374
    %3713 = vmatprep.subr.mxu0 0.0
    %3714 = vmatpush1.msra.mxu0 0.0
    %3715 = vmatprep.subr.mxu0 0.0
    %3716 = vmatpush1.msra.mxu0 0.0
    %3717 = vmatprep.subr.mxu0 0.0
    %3718 = vmatpush1.msra.mxu0 0.0
    %3719 = vmatprep.subr.mxu0 0.0
    %3720 = vmatpush1.msra.mxu0 0.0
    %3721 = vmatprep.subr.mxu0 0.0
    %3722 = vmatpush1.msra.mxu0 0.0
    %3723 = vmatprep.subr.mxu0 0.0
    %3724 = vmatpush1.msra.mxu0 0.0
    %3725 = vmatprep.subr.mxu0 0.0
    %3726 = vmatpush1.msra.mxu0 0.0
    %3727 = vmatprep.subr.mxu0 0.0
    %3728 = vmatpush1.msra.mxu0 0.0
    %3729 = vmatprep.subr.mxu0 0.0
    %3730 = vmatpush1.msra.mxu0 0.0
    %3731 = vmatprep.subr.mxu0 0.0
    %3732 = vmatpush1.msra.mxu0 0.0
    %3733 = vmatprep.subr.mxu0 0.0
    %3734 = vmatpush1.msra.mxu0 0.0
    %3735 = vmatprep.subr.mxu0 0.0
    %3736 = vmatpush1.msra.mxu0 0.0
    %3737 = vmatprep.subr.mxu0 0.0
    %3738 = vmatpush1.msra.mxu0 0.0
    %3739 = vmatprep.subr.mxu0 0.0
    %3740 = vmatpush1.msra.mxu0 0.0
    %3741 = vmatprep.subr.mxu0 0.0
    %3742 = vmatpush1.msra.mxu0 0.0
    %3743 = vmatprep.subr.mxu0 0.0
    %3744 = vmatpush1.msra.mxu0 0.0
    %3745 = vmatprep.subr.mxu0 0.0
    %3746 = vmatpush1.msra.mxu0 0.0
    %3747 = vmatprep.subr.mxu0 0.0
    %3748 = vmatpush1.msra.mxu0 0.0
    %3749 = vmatprep.subr.mxu0 0.0
    %3750 = vmatpush1.msra.mxu0 0.0
    %3751 = vmatprep.subr.mxu0 0.0
    %3752 = vmatpush1.msra.mxu0 0.0
    %3753 = vmatprep.subr.mxu0 0.0
    %3754 = vmatpush1.msra.mxu0 0.0
    %3755 = vmatprep.subr.mxu0 0.0
    %3756 = vmatpush1.msra.mxu0 0.0
    %3757 = vmatprep.subr.mxu0 0.0
    %3758 = vmatpush1.msra.mxu0 0.0
    %3759 = vmatprep.subr.mxu0 0.0
    %3760 = vmatpush1.msra.mxu0 0.0
    %3761 = vmatprep.subr.mxu0 0.0
    %3762 = vmatpush1.msra.mxu0 0.0
    %3763 = vmatprep.subr.mxu0 0.0
    %3764 = vmatpush1.msra.mxu0 0.0
    %3765 = vmatprep.subr.mxu0 0.0
    %3766 = vmatpush1.msra.mxu0 0.0
    %3767 = vmatprep.subr.mxu0 0.0
    %3768 = vmatpush1.msra.mxu0 0.0
    %3769 = vmatprep.mubr.f32.mxu0 0.0
    %3770 = vmatmul.mubr.f32.gmra.mrb[0].mxu0 %v3418
    %v3771 = vpop.f32.mrb[0].mxu0
    %v3772 = vadd.f32 0.0, %v3771
    %v3773 = vpop.f32.mrb[0].mxu0
    %3774 = vdwg.mxu0
    %3775 = vmatprep.subr.mxu0 0.0
    %3776 = vmatpush1.msra.mxu0 %v339
    %3777 = vmatprep.subr.mxu0 0.0
    %3778 = vmatpush1.msra.mxu0 %v340
    %3779 = vmatprep.subr.mxu0 0.0
    %3780 = vmatpush1.msra.mxu0 %v341
    %3781 = vmatprep.subr.mxu0 0.0
    %3782 = vmatpush1.msra.mxu0 %v342
    %3783 = vmatprep.subr.mxu0 0.0
    %3784 = vmatpush1.msra.mxu0 0.0
    %3785 = vmatprep.subr.mxu0 0.0
    %3786 = vmatpush1.msra.mxu0 0.0
    %3787 = vmatprep.subr.mxu0 0.0
    %3788 = vmatpush1.msra.mxu0 0.0
    %3789 = vmatprep.subr.mxu0 0.0
    %3790 = vmatpush1.msra.mxu0 0.0
    %3791 = vmatprep.subr.mxu0 0.0
    %3792 = vmatpush1.msra.mxu0 0.0
    %3793 = vmatprep.subr.mxu0 0.0
    %3794 = vmatpush1.msra.mxu0 0.0
    %3795 = vmatprep.subr.mxu0 0.0
    %3796 = vmatpush1.msra.mxu0 0.0
    %3797 = vmatprep.subr.mxu0 0.0
    %3798 = vmatpush1.msra.mxu0 0.0
    %3799 = vmatprep.subr.mxu0 0.0
    %3800 = vmatpush1.msra.mxu0 0.0
    %3801 = vmatprep.subr.mxu0 0.0
    %3802 = vmatpush1.msra.mxu0 0.0
    %3803 = vmatprep.subr.mxu0 0.0
    %3804 = vmatpush1.msra.mxu0 0.0
    %3805 = vmatprep.subr.mxu0 0.0
    %3806 = vmatpush1.msra.mxu0 0.0
    %3807 = vmatprep.subr.mxu0 0.0
    %3808 = vmatpush1.msra.mxu0 0.0
    %3809 = vmatprep.subr.mxu0 0.0
    %3810 = vmatpush1.msra.mxu0 0.0
    %3811 = vmatprep.subr.mxu0 0.0
    %3812 = vmatpush1.msra.mxu0 0.0
    %3813 = vmatprep.subr.mxu0 0.0
    %3814 = vmatpush1.msra.mxu0 0.0
    %3815 = vmatprep.subr.mxu0 0.0
    %3816 = vmatpush1.msra.mxu0 0.0
    %3817 = vmatprep.subr.mxu0 0.0
    %3818 = vmatpush1.msra.mxu0 0.0
    %3819 = vmatprep.subr.mxu0 0.0
    %3820 = vmatpush1.msra.mxu0 0.0
    %3821 = vmatprep.subr.mxu0 0.0
    %3822 = vmatpush1.msra.mxu0 0.0
    %3823 = vmatprep.subr.mxu0 0.0
    %3824 = vmatpush1.msra.mxu0 0.0
    %3825 = vmatprep.subr.mxu0 0.0
    %3826 = vmatpush1.msra.mxu0 0.0
    %3827 = vmatprep.subr.mxu0 0.0
    %3828 = vmatpush1.msra.mxu0 0.0
    %3829 = vmatprep.subr.mxu0 0.0
    %3830 = vmatpush1.msra.mxu0 0.0
    %3831 = vmatprep.subr.mxu0 0.0
    %3832 = vmatpush1.msra.mxu0 0.0
    %3833 = vmatprep.subr.mxu0 0.0
    %3834 = vmatpush1.msra.mxu0 0.0
    %3835 = vmatprep.subr.mxu0 0.0
    %3836 = vmatpush1.msra.mxu0 0.0
    %3837 = vmatprep.subr.mxu0 0.0
    %3838 = vmatpush1.msra.mxu0 0.0
    %3839 = vmatprep.mubr.f32.mxu0 0.0
    %3840 = vmatmul.mubr.f32.gmra.mrb[0].mxu0 %v3491
    %v3841 = vpop.f32.mrb[0].mxu0
    %v3842 = vadd.f32 %v3772, %v3841
    %v3843 = vpop.f32.mrb[0].mxu0
    %3844 = vdwg.mxu0
    %v3845 = vadd.f32 %v3842, %v426
    %3846 = vmatprep.subr.mxu0 0.0
    %3847 = vmatpush1.msra.mxu0 %v375
    %3848 = vmatprep.subr.mxu0 0.0
    %3849 = vmatpush1.msra.mxu0 %v376
    %3850 = vmatprep.subr.mxu0 0.0
    %3851 = vmatpush1.msra.mxu0 %v377
    %3852 = vmatprep.subr.mxu0 0.0
    %3853 = vmatpush1.msra.mxu0 %v378
    %3854 = vmatprep.subr.mxu0 0.0
    %3855 = vmatpush1.msra.mxu0 0.0
    %3856 = vmatprep.subr.mxu0 0.0
    %3857 = vmatpush1.msra.mxu0 0.0
    %3858 = vmatprep.subr.mxu0 0.0
    %3859 = vmatpush1.msra.mxu0 0.0
    %3860 = vmatprep.subr.mxu0 0.0
    %3861 = vmatpush1.msra.mxu0 0.0
    %3862 = vmatprep.subr.mxu0 0.0
    %3863 = vmatpush1.msra.mxu0 0.0
    %3864 = vmatprep.subr.mxu0 0.0
    %3865 = vmatpush1.msra.mxu0 0.0
    %3866 = vmatprep.subr.mxu0 0.0
    %3867 = vmatpush1.msra.mxu0 0.0
    %3868 = vmatprep.subr.mxu0 0.0
    %3869 = vmatpush1.msra.mxu0 0.0
    %3870 = vmatprep.subr.mxu0 0.0
    %3871 = vmatpush1.msra.mxu0 0.0
    %3872 = vmatprep.subr.mxu0 0.0
    %3873 = vmatpush1.msra.mxu0 0.0
    %3874 = vmatprep.subr.mxu0 0.0
    %3875 = vmatpush1.msra.mxu0 0.0
    %3876 = vmatprep.subr.mxu0 0.0
    %3877 = vmatpush1.msra.mxu0 0.0
    %3878 = vmatprep.subr.mxu0 0.0
    %3879 = vmatpush1.msra.mxu0 0.0
    %3880 = vmatprep.subr.mxu0 0.0
    %3881 = vmatpush1.msra.mxu0 0.0
    %3882 = vmatprep.subr.mxu0 0.0
    %3883 = vmatpush1.msra.mxu0 0.0
    %3884 = vmatprep.subr.mxu0 0.0
    %3885 = vmatpush1.msra.mxu0 0.0
    %3886 = vmatprep.subr.mxu0 0.0
    %3887 = vmatpush1.msra.mxu0 0.0
    %3888 = vmatprep.subr.mxu0 0.0
    %3889 = vmatpush1.msra.mxu0 0.0
    %3890 = vmatprep.subr.mxu0 0.0
    %3891 = vmatpush1.msra.mxu0 0.0
    %3892 = vmatprep.subr.mxu0 0.0
    %3893 = vmatpush1.msra.mxu0 0.0
    %3894 = vmatprep.subr.mxu0 0.0
    %3895 = vmatpush1.msra.mxu0 0.0
    %3896 = vmatprep.subr.mxu0 0.0
    %3897 = vmatpush1.msra.mxu0 0.0
    %3898 = vmatprep.subr.mxu0 0.0
    %3899 = vmatpush1.msra.mxu0 0.0
    %3900 = vmatprep.subr.mxu0 0.0
    %3901 = vmatpush1.msra.mxu0 0.0
    %3902 = vmatprep.subr.mxu0 0.0
    %3903 = vmatpush1.msra.mxu0 0.0
    %3904 = vmatprep.subr.mxu0 0.0
    %3905 = vmatpush1.msra.mxu0 0.0
    %3906 = vmatprep.subr.mxu0 0.0
    %3907 = vmatpush1.msra.mxu0 0.0
    %3908 = vmatprep.subr.mxu0 0.0
    %3909 = vmatpush1.msra.mxu0 0.0
    %3910 = vmatprep.mubr.f32.mxu0 0.0
    %3911 = vmatmul.mubr.f32.gmra.mrb[0].mxu0 %v3418
    %v3912 = vpop.f32.mrb[0].mxu0
    %v3913 = vadd.f32 0.0, %v3912
    %v3914 = vpop.f32.mrb[0].mxu0
    %3915 = vdwg.mxu0
    %3916 = vmatprep.subr.mxu0 0.0
    %3917 = vmatpush1.msra.mxu0 %v343
    %3918 = vmatprep.subr.mxu0 0.0
    %3919 = vmatpush1.msra.mxu0 %v344
    %3920 = vmatprep.subr.mxu0 0.0
    %3921 = vmatpush1.msra.mxu0 %v345
    %3922 = vmatprep.subr.mxu0 0.0
    %3923 = vmatpush1.msra.mxu0 %v346
    %3924 = vmatprep.subr.mxu0 0.0
    %3925 = vmatpush1.msra.mxu0 0.0
    %3926 = vmatprep.subr.mxu0 0.0
    %3927 = vmatpush1.msra.mxu0 0.0
    %3928 = vmatprep.subr.mxu0 0.0
    %3929 = vmatpush1.msra.mxu0 0.0
    %3930 = vmatprep.subr.mxu0 0.0
    %3931 = vmatpush1.msra.mxu0 0.0
    %3932 = vmatprep.subr.mxu0 0.0
    %3933 = vmatpush1.msra.mxu0 0.0
    %3934 = vmatprep.subr.mxu0 0.0
    %3935 = vmatpush1.msra.mxu0 0.0
    %3936 = vmatprep.subr.mxu0 0.0
    %3937 = vmatpush1.msra.mxu0 0.0
    %3938 = vmatprep.subr.mxu0 0.0
    %3939 = vmatpush1.msra.mxu0 0.0
    %3940 = vmatprep.subr.mxu0 0.0
    %3941 = vmatpush1.msra.mxu0 0.0
    %3942 = vmatprep.subr.mxu0 0.0
    %3943 = vmatpush1.msra.mxu0 0.0
    %3944 = vmatprep.subr.mxu0 0.0
    %3945 = vmatpush1.msra.mxu0 0.0
    %3946 = vmatprep.subr.mxu0 0.0
    %3947 = vmatpush1.msra.mxu0 0.0
    %3948 = vmatprep.subr.mxu0 0.0
    %3949 = vmatpush1.msra.mxu0 0.0
    %3950 = vmatprep.subr.mxu0 0.0
    %3951 = vmatpush1.msra.mxu0 0.0
    %3952 = vmatprep.subr.mxu0 0.0
    %3953 = vmatpush1.msra.mxu0 0.0
    %3954 = vmatprep.subr.mxu0 0.0
    %3955 = vmatpush1.msra.mxu0 0.0
    %3956 = vmatprep.subr.mxu0 0.0
    %3957 = vmatpush1.msra.mxu0 0.0
    %3958 = vmatprep.subr.mxu0 0.0
    %3959 = vmatpush1.msra.mxu0 0.0
    %3960 = vmatprep.subr.mxu0 0.0
    %3961 = vmatpush1.msra.mxu0 0.0
    %3962 = vmatprep.subr.mxu0 0.0
    %3963 = vmatpush1.msra.mxu0 0.0
    %3964 = vmatprep.subr.mxu0 0.0
    %3965 = vmatpush1.msra.mxu0 0.0
    %3966 = vmatprep.subr.mxu0 0.0
    %3967 = vmatpush1.msra.mxu0 0.0
    %3968 = vmatprep.subr.mxu0 0.0
    %3969 = vmatpush1.msra.mxu0 0.0
    %3970 = vmatprep.subr.mxu0 0.0
    %3971 = vmatpush1.msra.mxu0 0.0
    %3972 = vmatprep.subr.mxu0 0.0
    %3973 = vmatpush1.msra.mxu0 0.0
    %3974 = vmatprep.subr.mxu0 0.0
    %3975 = vmatpush1.msra.mxu0 0.0
    %3976 = vmatprep.subr.mxu0 0.0
    %3977 = vmatpush1.msra.mxu0 0.0
    %3978 = vmatprep.subr.mxu0 0.0
    %3979 = vmatpush1.msra.mxu0 0.0
    %3980 = vmatprep.mubr.f32.mxu0 0.0
    %3981 = vmatmul.mubr.f32.gmra.mrb[0].mxu0 %v3491
    %v3982 = vpop.f32.mrb[0].mxu0
    %v3983 = vadd.f32 %v3913, %v3982
    %v3984 = vpop.f32.mrb[0].mxu0
    %3985 = vdwg.mxu0
    %v3986 = vadd.f32 %v3983, %v433
    %v3987 = vxor.u32 %v3563, 2147483648
    %v3988 = vmul.f32 %v3987, 1.442695
    %v3989 = vpow.pop %v3988
    %v3990 = vadd.f32 %v3989, 1.0
    %v3991 = vrcp.pop %v3990
    %v3992 = vmul.f32 1.0, %v3991
    %v3993 = vxor.u32 %v3704, 2147483648
    %v3994 = vmul.f32 %v3993, 1.442695
    %v3995 = vpow.pop %v3994
    %v3996 = vadd.f32 %v3995, 1.0
    %v3997 = vrcp.pop %v3996
    %v3998 = vmul.f32 1.0, %v3997
    %v3999 = vtanh.pop %v3845
    %v4000 = vxor.u32 %v3986, 2147483648
    %v4001 = vmul.f32 %v4000, 1.442695
    %v4002 = vpow.pop %v4001
    %v4003 = vadd.f32 %v4002, 1.0
    %v4004 = vrcp.pop %v4003
    %v4005 = vmul.f32 1.0, %v4004
    %v4006 = vmul.f32 %v3998, %v2814
    %v4007 = vmul.f32 %v3992, %v3999
    %v4008 = vadd.f32 %v4006, %v4007
    %v4009 = vtanh.pop %v4008
    %v4010 = vmul.f32 %v4005, %v4009
    %vm4011 = vcmp.eq.s32.totalorder %v322, 2
    %v4012 = vsel %vm4011, 1, 0
    %4013 = vset.pattern.permute.xlu0 0
    %4014 = vperm.xlu0 %4013, %v4012
    %v4015 = vpop.permute.xlu0 %4014
    %vm4016 = vcmp.eq.s32.totalorder %v4015, 1
    %v4017 = vsel %vm4016, %v4010, %v2823
    %s4018 = scalar_lea.vmem [#allocation2], 24
    %v4019 = vld [vmem:[%s4018] sm:$0xff]
    %4020 = vmatprep.subr.mxu0 0.0
    %4021 = vmatpush1.msra.mxu0 %v347
    %4022 = vmatprep.subr.mxu0 0.0
    %4023 = vmatpush1.msra.mxu0 %v348
    %4024 = vmatprep.subr.mxu0 0.0
    %4025 = vmatpush1.msra.mxu0 %v349
    %4026 = vmatprep.subr.mxu0 0.0
    %4027 = vmatpush1.msra.mxu0 %v350
    %4028 = vmatprep.subr.mxu0 0.0
    %4029 = vmatpush1.msra.mxu0 0.0
    %4030 = vmatprep.subr.mxu0 0.0
    %4031 = vmatpush1.msra.mxu0 0.0
    %4032 = vmatprep.subr.mxu0 0.0
    %4033 = vmatpush1.msra.mxu0 0.0
    %4034 = vmatprep.subr.mxu0 0.0
    %4035 = vmatpush1.msra.mxu0 0.0
    %4036 = vmatprep.subr.mxu0 0.0
    %4037 = vmatpush1.msra.mxu0 0.0
    %4038 = vmatprep.subr.mxu0 0.0
    %4039 = vmatpush1.msra.mxu0 0.0
    %4040 = vmatprep.subr.mxu0 0.0
    %4041 = vmatpush1.msra.mxu0 0.0
    %4042 = vmatprep.subr.mxu0 0.0
    %4043 = vmatpush1.msra.mxu0 0.0
    %4044 = vmatprep.subr.mxu0 0.0
    %4045 = vmatpush1.msra.mxu0 0.0
    %4046 = vmatprep.subr.mxu0 0.0
    %4047 = vmatpush1.msra.mxu0 0.0
    %4048 = vmatprep.subr.mxu0 0.0
    %4049 = vmatpush1.msra.mxu0 0.0
    %4050 = vmatprep.subr.mxu0 0.0
    %4051 = vmatpush1.msra.mxu0 0.0
    %4052 = vmatprep.subr.mxu0 0.0
    %4053 = vmatpush1.msra.mxu0 0.0
    %4054 = vmatprep.subr.mxu0 0.0
    %4055 = vmatpush1.msra.mxu0 0.0
    %4056 = vmatprep.subr.mxu0 0.0
    %4057 = vmatpush1.msra.mxu0 0.0
    %4058 = vmatprep.subr.mxu0 0.0
    %4059 = vmatpush1.msra.mxu0 0.0
    %4060 = vmatprep.subr.mxu0 0.0
    %4061 = vmatpush1.msra.mxu0 0.0
    %4062 = vmatprep.subr.mxu0 0.0
    %4063 = vmatpush1.msra.mxu0 0.0
    %4064 = vmatprep.subr.mxu0 0.0
    %4065 = vmatpush1.msra.mxu0 0.0
    %4066 = vmatprep.subr.mxu0 0.0
    %4067 = vmatpush1.msra.mxu0 0.0
    %4068 = vmatprep.subr.mxu0 0.0
    %4069 = vmatpush1.msra.mxu0 0.0
    %4070 = vmatprep.subr.mxu0 0.0
    %4071 = vmatpush1.msra.mxu0 0.0
    %4072 = vmatprep.subr.mxu0 0.0
    %4073 = vmatpush1.msra.mxu0 0.0
    %4074 = vmatprep.subr.mxu0 0.0
    %4075 = vmatpush1.msra.mxu0 0.0
    %4076 = vmatprep.subr.mxu0 0.0
    %4077 = vmatpush1.msra.mxu0 0.0
    %4078 = vmatprep.subr.mxu0 0.0
    %4079 = vmatpush1.msra.mxu0 0.0
    %4080 = vmatprep.subr.mxu0 0.0
    %4081 = vmatpush1.msra.mxu0 0.0
    %4082 = vmatprep.subr.mxu0 0.0
    %4083 = vmatpush1.msra.mxu0 0.0
    %4084 = vmatprep.mubr.f32.mxu0 0.0
    %4085 = vmatmul.mubr.f32.gmra.mrb[0].mxu0 %v3491
    %v4086 = vpop.f32.mrb[0].mxu0
    %v4087 = vadd.f32 0.0, %v4086
    %v4088 = vpop.f32.mrb[0].mxu0
    %4089 = vdwg.mxu0
    %v4091 = vsel %vm510, %v4019, 0
    %4093 = vmatprep.subr.mxu0 0.0
    %4094 = vmatpush1.msra.mxu0 %v323
    %4095 = vmatprep.subr.mxu0 0.0
    %4096 = vmatpush1.msra.mxu0 %v324
    %4097 = vmatprep.subr.mxu0 0.0
    %4098 = vmatpush1.msra.mxu0 0.0
    %4099 = vmatprep.subr.mxu0 0.0
    %4100 = vmatpush1.msra.mxu0 0.0
    %4101 = vmatprep.subr.mxu0 0.0
    %4102 = vmatpush1.msra.mxu0 0.0
    %4103 = vmatprep.subr.mxu0 0.0
    %4104 = vmatpush1.msra.mxu0 0.0
    %4105 = vmatprep.subr.mxu0 0.0
    %4106 = vmatpush1.msra.mxu0 0.0
    %4107 = vmatprep.subr.mxu0 0.0
    %4108 = vmatpush1.msra.mxu0 0.0
    %4109 = vmatprep.subr.mxu0 0.0
    %4110 = vmatpush1.msra.mxu0 0.0
    %4111 = vmatprep.subr.mxu0 0.0
    %4112 = vmatpush1.msra.mxu0 0.0
    %4113 = vmatprep.subr.mxu0 0.0
    %4114 = vmatpush1.msra.mxu0 0.0
    %4115 = vmatprep.subr.mxu0 0.0
    %4116 = vmatpush1.msra.mxu0 0.0
    %4117 = vmatprep.subr.mxu0 0.0
    %4118 = vmatpush1.msra.mxu0 0.0
    %4119 = vmatprep.subr.mxu0 0.0
    %4120 = vmatpush1.msra.mxu0 0.0
    %4121 = vmatprep.subr.mxu0 0.0
    %4122 = vmatpush1.msra.mxu0 0.0
    %4123 = vmatprep.subr.mxu0 0.0
    %4124 = vmatpush1.msra.mxu0 0.0
    %4125 = vmatprep.subr.mxu0 0.0
    %4126 = vmatpush1.msra.mxu0 0.0
    %4127 = vmatprep.subr.mxu0 0.0
    %4128 = vmatpush1.msra.mxu0 0.0
    %4129 = vmatprep.subr.mxu0 0.0
    %4130 = vmatpush1.msra.mxu0 0.0
    %4131 = vmatprep.subr.mxu0 0.0
    %4132 = vmatpush1.msra.mxu0 0.0
    %4133 = vmatprep.subr.mxu0 0.0
    %4134 = vmatpush1.msra.mxu0 0.0
    %4135 = vmatprep.subr.mxu0 0.0
    %4136 = vmatpush1.msra.mxu0 0.0
    %4137 = vmatprep.subr.mxu0 0.0
    %4138 = vmatpush1.msra.mxu0 0.0
    %4139 = vmatprep.subr.mxu0 0.0
    %4140 = vmatpush1.msra.mxu0 0.0
    %4141 = vmatprep.subr.mxu0 0.0
    %4142 = vmatpush1.msra.mxu0 0.0
    %4143 = vmatprep.subr.mxu0 0.0
    %4144 = vmatpush1.msra.mxu0 0.0
    %4145 = vmatprep.subr.mxu0 0.0
    %4146 = vmatpush1.msra.mxu0 0.0
    %4147 = vmatprep.subr.mxu0 0.0
    %4148 = vmatpush1.msra.mxu0 0.0
    %4149 = vmatprep.subr.mxu0 0.0
    %4150 = vmatpush1.msra.mxu0 0.0
    %4151 = vmatprep.subr.mxu0 0.0
    %4152 = vmatpush1.msra.mxu0 0.0
    %4153 = vmatprep.subr.mxu0 0.0
    %4154 = vmatpush1.msra.mxu0 0.0
    %4155 = vmatprep.subr.mxu0 0.0
    %4156 = vmatpush1.msra.mxu0 0.0
    %4157 = vmatprep.mubr.f32.mxu0 0.0
    %4158 = vmatmul.mubr.f32.gmra.mrb[0].mxu0 %v4091
    %v4159 = vpop.f32.mrb[0].mxu0
    %v4160 = vadd.f32 %v4087, %v4159
    %v4161 = vpop.f32.mrb[0].mxu0
    %4162 = vdwg.mxu0
    %v4163 = vadd.f32 %v4160, %v384
    %4164 = vmatprep.subr.mxu0 0.0
    %4165 = vmatpush1.msra.mxu0 %v351
    %4166 = vmatprep.subr.mxu0 0.0
    %4167 = vmatpush1.msra.mxu0 %v352
    %4168 = vmatprep.subr.mxu0 0.0
    %4169 = vmatpush1.msra.mxu0 %v353
    %4170 = vmatprep.subr.mxu0 0.0
    %4171 = vmatpush1.msra.mxu0 %v354
    %4172 = vmatprep.subr.mxu0 0.0
    %4173 = vmatpush1.msra.mxu0 0.0
    %4174 = vmatprep.subr.mxu0 0.0
    %4175 = vmatpush1.msra.mxu0 0.0
    %4176 = vmatprep.subr.mxu0 0.0
    %4177 = vmatpush1.msra.mxu0 0.0
    %4178 = vmatprep.subr.mxu0 0.0
    %4179 = vmatpush1.msra.mxu0 0.0
    %4180 = vmatprep.subr.mxu0 0.0
    %4181 = vmatpush1.msra.mxu0 0.0
    %4182 = vmatprep.subr.mxu0 0.0
    %4183 = vmatpush1.msra.mxu0 0.0
    %4184 = vmatprep.subr.mxu0 0.0
    %4185 = vmatpush1.msra.mxu0 0.0
    %4186 = vmatprep.subr.mxu0 0.0
    %4187 = vmatpush1.msra.mxu0 0.0
    %4188 = vmatprep.subr.mxu0 0.0
    %4189 = vmatpush1.msra.mxu0 0.0
    %4190 = vmatprep.subr.mxu0 0.0
    %4191 = vmatpush1.msra.mxu0 0.0
    %4192 = vmatprep.subr.mxu0 0.0
    %4193 = vmatpush1.msra.mxu0 0.0
    %4194 = vmatprep.subr.mxu0 0.0
    %4195 = vmatpush1.msra.mxu0 0.0
    %4196 = vmatprep.subr.mxu0 0.0
    %4197 = vmatpush1.msra.mxu0 0.0
    %4198 = vmatprep.subr.mxu0 0.0
    %4199 = vmatpush1.msra.mxu0 0.0
    %4200 = vmatprep.subr.mxu0 0.0
    %4201 = vmatpush1.msra.mxu0 0.0
    %4202 = vmatprep.subr.mxu0 0.0
    %4203 = vmatpush1.msra.mxu0 0.0
    %4204 = vmatprep.subr.mxu0 0.0
    %4205 = vmatpush1.msra.mxu0 0.0
    %4206 = vmatprep.subr.mxu0 0.0
    %4207 = vmatpush1.msra.mxu0 0.0
    %4208 = vmatprep.subr.mxu0 0.0
    %4209 = vmatpush1.msra.mxu0 0.0
    %4210 = vmatprep.subr.mxu0 0.0
    %4211 = vmatpush1.msra.mxu0 0.0
    %4212 = vmatprep.subr.mxu0 0.0
    %4213 = vmatpush1.msra.mxu0 0.0
    %4214 = vmatprep.subr.mxu0 0.0
    %4215 = vmatpush1.msra.mxu0 0.0
    %4216 = vmatprep.subr.mxu0 0.0
    %4217 = vmatpush1.msra.mxu0 0.0
    %4218 = vmatprep.subr.mxu0 0.0
    %4219 = vmatpush1.msra.mxu0 0.0
    %4220 = vmatprep.subr.mxu0 0.0
    %4221 = vmatpush1.msra.mxu0 0.0
    %4222 = vmatprep.subr.mxu0 0.0
    %4223 = vmatpush1.msra.mxu0 0.0
    %4224 = vmatprep.subr.mxu0 0.0
    %4225 = vmatpush1.msra.mxu0 0.0
    %4226 = vmatprep.subr.mxu0 0.0
    %4227 = vmatpush1.msra.mxu0 0.0
    %4228 = vmatprep.mubr.f32.mxu0 0.0
    %4229 = vmatmul.mubr.f32.gmra.mrb[0].mxu0 %v3491
    %v4230 = vpop.f32.mrb[0].mxu0
    %v4231 = vadd.f32 0.0, %v4230
    %v4232 = vpop.f32.mrb[0].mxu0
    %4233 = vdwg.mxu0
    %4234 = vmatprep.subr.mxu0 0.0
    %4235 = vmatpush1.msra.mxu0 %v325
    %4236 = vmatprep.subr.mxu0 0.0
    %4237 = vmatpush1.msra.mxu0 %v326
    %4238 = vmatprep.subr.mxu0 0.0
    %4239 = vmatpush1.msra.mxu0 0.0
    %4240 = vmatprep.subr.mxu0 0.0
    %4241 = vmatpush1.msra.mxu0 0.0
    %4242 = vmatprep.subr.mxu0 0.0
    %4243 = vmatpush1.msra.mxu0 0.0
    %4244 = vmatprep.subr.mxu0 0.0
    %4245 = vmatpush1.msra.mxu0 0.0
    %4246 = vmatprep.subr.mxu0 0.0
    %4247 = vmatpush1.msra.mxu0 0.0
    %4248 = vmatprep.subr.mxu0 0.0
    %4249 = vmatpush1.msra.mxu0 0.0
    %4250 = vmatprep.subr.mxu0 0.0
    %4251 = vmatpush1.msra.mxu0 0.0
    %4252 = vmatprep.subr.mxu0 0.0
    %4253 = vmatpush1.msra.mxu0 0.0
    %4254 = vmatprep.subr.mxu0 0.0
    %4255 = vmatpush1.msra.mxu0 0.0
    %4256 = vmatprep.subr.mxu0 0.0
    %4257 = vmatpush1.msra.mxu0 0.0
    %4258 = vmatprep.subr.mxu0 0.0
    %4259 = vmatpush1.msra.mxu0 0.0
    %4260 = vmatprep.subr.mxu0 0.0
    %4261 = vmatpush1.msra.mxu0 0.0
    %4262 = vmatprep.subr.mxu0 0.0
    %4263 = vmatpush1.msra.mxu0 0.0
    %4264 = vmatprep.subr.mxu0 0.0
    %4265 = vmatpush1.msra.mxu0 0.0
    %4266 = vmatprep.subr.mxu0 0.0
    %4267 = vmatpush1.msra.mxu0 0.0
    %4268 = vmatprep.subr.mxu0 0.0
    %4269 = vmatpush1.msra.mxu0 0.0
    %4270 = vmatprep.subr.mxu0 0.0
    %4271 = vmatpush1.msra.mxu0 0.0
    %4272 = vmatprep.subr.mxu0 0.0
    %4273 = vmatpush1.msra.mxu0 0.0
    %4274 = vmatprep.subr.mxu0 0.0
    %4275 = vmatpush1.msra.mxu0 0.0
    %4276 = vmatprep.subr.mxu0 0.0
    %4277 = vmatpush1.msra.mxu0 0.0
    %4278 = vmatprep.subr.mxu0 0.0
    %4279 = vmatpush1.msra.mxu0 0.0
    %4280 = vmatprep.subr.mxu0 0.0
    %4281 = vmatpush1.msra.mxu0 0.0
    %4282 = vmatprep.subr.mxu0 0.0
    %4283 = vmatpush1.msra.mxu0 0.0
    %4284 = vmatprep.subr.mxu0 0.0
    %4285 = vmatpush1.msra.mxu0 0.0
    %4286 = vmatprep.subr.mxu0 0.0
    %4287 = vmatpush1.msra.mxu0 0.0
    %4288 = vmatprep.subr.mxu0 0.0
    %4289 = vmatpush1.msra.mxu0 0.0
    %4290 = vmatprep.subr.mxu0 0.0
    %4291 = vmatpush1.msra.mxu0 0.0
    %4292 = vmatprep.subr.mxu0 0.0
    %4293 = vmatpush1.msra.mxu0 0.0
    %4294 = vmatprep.subr.mxu0 0.0
    %4295 = vmatpush1.msra.mxu0 0.0
    %4296 = vmatprep.subr.mxu0 0.0
    %4297 = vmatpush1.msra.mxu0 0.0
    %4298 = vmatprep.mubr.f32.mxu0 0.0
    %4299 = vmatmul.mubr.f32.gmra.mrb[0].mxu0 %v4091
    %v4300 = vpop.f32.mrb[0].mxu0
    %v4301 = vadd.f32 %v4231, %v4300
    %v4302 = vpop.f32.mrb[0].mxu0
    %4303 = vdwg.mxu0
    %v4304 = vadd.f32 %v4301, %v391
    %4305 = vmatprep.subr.mxu0 0.0
    %4306 = vmatpush1.msra.mxu0 %v355
    %4307 = vmatprep.subr.mxu0 0.0
    %4308 = vmatpush1.msra.mxu0 %v356
    %4309 = vmatprep.subr.mxu0 0.0
    %4310 = vmatpush1.msra.mxu0 %v357
    %4311 = vmatprep.subr.mxu0 0.0
    %4312 = vmatpush1.msra.mxu0 %v358
    %4313 = vmatprep.subr.mxu0 0.0
    %4314 = vmatpush1.msra.mxu0 0.0
    %4315 = vmatprep.subr.mxu0 0.0
    %4316 = vmatpush1.msra.mxu0 0.0
    %4317 = vmatprep.subr.mxu0 0.0
    %4318 = vmatpush1.msra.mxu0 0.0
    %4319 = vmatprep.subr.mxu0 0.0
    %4320 = vmatpush1.msra.mxu0 0.0
    %4321 = vmatprep.subr.mxu0 0.0
    %4322 = vmatpush1.msra.mxu0 0.0
    %4323 = vmatprep.subr.mxu0 0.0
    %4324 = vmatpush1.msra.mxu0 0.0
    %4325 = vmatprep.subr.mxu0 0.0
    %4326 = vmatpush1.msra.mxu0 0.0
    %4327 = vmatprep.subr.mxu0 0.0
    %4328 = vmatpush1.msra.mxu0 0.0
    %4329 = vmatprep.subr.mxu0 0.0
    %4330 = vmatpush1.msra.mxu0 0.0
    %4331 = vmatprep.subr.mxu0 0.0
    %4332 = vmatpush1.msra.mxu0 0.0
    %4333 = vmatprep.subr.mxu0 0.0
    %4334 = vmatpush1.msra.mxu0 0.0
    %4335 = vmatprep.subr.mxu0 0.0
    %4336 = vmatpush1.msra.mxu0 0.0
    %4337 = vmatprep.subr.mxu0 0.0
    %4338 = vmatpush1.msra.mxu0 0.0
    %4339 = vmatprep.subr.mxu0 0.0
    %4340 = vmatpush1.msra.mxu0 0.0
    %4341 = vmatprep.subr.mxu0 0.0
    %4342 = vmatpush1.msra.mxu0 0.0
    %4343 = vmatprep.subr.mxu0 0.0
    %4344 = vmatpush1.msra.mxu0 0.0
    %4345 = vmatprep.subr.mxu0 0.0
    %4346 = vmatpush1.msra.mxu0 0.0
    %4347 = vmatprep.subr.mxu0 0.0
    %4348 = vmatpush1.msra.mxu0 0.0
    %4349 = vmatprep.subr.mxu0 0.0
    %4350 = vmatpush1.msra.mxu0 0.0
    %4351 = vmatprep.subr.mxu0 0.0
    %4352 = vmatpush1.msra.mxu0 0.0
    %4353 = vmatprep.subr.mxu0 0.0
    %4354 = vmatpush1.msra.mxu0 0.0
    %4355 = vmatprep.subr.mxu0 0.0
    %4356 = vmatpush1.msra.mxu0 0.0
    %4357 = vmatprep.subr.mxu0 0.0
    %4358 = vmatpush1.msra.mxu0 0.0
    %4359 = vmatprep.subr.mxu0 0.0
    %4360 = vmatpush1.msra.mxu0 0.0
    %4361 = vmatprep.subr.mxu0 0.0
    %4362 = vmatpush1.msra.mxu0 0.0
    %4363 = vmatprep.subr.mxu0 0.0
    %4364 = vmatpush1.msra.mxu0 0.0
    %4365 = vmatprep.subr.mxu0 0.0
    %4366 = vmatpush1.msra.mxu0 0.0
    %4367 = vmatprep.subr.mxu0 0.0
    %4368 = vmatpush1.msra.mxu0 0.0
    %4369 = vmatprep.mubr.f32.mxu0 0.0
    %4370 = vmatmul.mubr.f32.gmra.mrb[0].mxu0 %v3491
    %v4371 = vpop.f32.mrb[0].mxu0
    %v4372 = vadd.f32 0.0, %v4371
    %v4373 = vpop.f32.mrb[0].mxu0
    %4374 = vdwg.mxu0
    %4375 = vmatprep.subr.mxu0 0.0
    %4376 = vmatpush1.msra.mxu0 %v327
    %4377 = vmatprep.subr.mxu0 0.0
    %4378 = vmatpush1.msra.mxu0 %v328
    %4379 = vmatprep.subr.mxu0 0.0
    %4380 = vmatpush1.msra.mxu0 0.0
    %4381 = vmatprep.subr.mxu0 0.0
    %4382 = vmatpush1.msra.mxu0 0.0
    %4383 = vmatprep.subr.mxu0 0.0
    %4384 = vmatpush1.msra.mxu0 0.0
    %4385 = vmatprep.subr.mxu0 0.0
    %4386 = vmatpush1.msra.mxu0 0.0
    %4387 = vmatprep.subr.mxu0 0.0
    %4388 = vmatpush1.msra.mxu0 0.0
    %4389 = vmatprep.subr.mxu0 0.0
    %4390 = vmatpush1.msra.mxu0 0.0
    %4391 = vmatprep.subr.mxu0 0.0
    %4392 = vmatpush1.msra.mxu0 0.0
    %4393 = vmatprep.subr.mxu0 0.0
    %4394 = vmatpush1.msra.mxu0 0.0
    %4395 = vmatprep.subr.mxu0 0.0
    %4396 = vmatpush1.msra.mxu0 0.0
    %4397 = vmatprep.subr.mxu0 0.0
    %4398 = vmatpush1.msra.mxu0 0.0
    %4399 = vmatprep.subr.mxu0 0.0
    %4400 = vmatpush1.msra.mxu0 0.0
    %4401 = vmatprep.subr.mxu0 0.0
    %4402 = vmatpush1.msra.mxu0 0.0
    %4403 = vmatprep.subr.mxu0 0.0
    %4404 = vmatpush1.msra.mxu0 0.0
    %4405 = vmatprep.subr.mxu0 0.0
    %4406 = vmatpush1.msra.mxu0 0.0
    %4407 = vmatprep.subr.mxu0 0.0
    %4408 = vmatpush1.msra.mxu0 0.0
    %4409 = vmatprep.subr.mxu0 0.0
    %4410 = vmatpush1.msra.mxu0 0.0
    %4411 = vmatprep.subr.mxu0 0.0
    %4412 = vmatpush1.msra.mxu0 0.0
    %4413 = vmatprep.subr.mxu0 0.0
    %4414 = vmatpush1.msra.mxu0 0.0
    %4415 = vmatprep.subr.mxu0 0.0
    %4416 = vmatpush1.msra.mxu0 0.0
    %4417 = vmatprep.subr.mxu0 0.0
    %4418 = vmatpush1.msra.mxu0 0.0
    %4419 = vmatprep.subr.mxu0 0.0
    %4420 = vmatpush1.msra.mxu0 0.0
    %4421 = vmatprep.subr.mxu0 0.0
    %4422 = vmatpush1.msra.mxu0 0.0
    %4423 = vmatprep.subr.mxu0 0.0
    %4424 = vmatpush1.msra.mxu0 0.0
    %4425 = vmatprep.subr.mxu0 0.0
    %4426 = vmatpush1.msra.mxu0 0.0
    %4427 = vmatprep.subr.mxu0 0.0
    %4428 = vmatpush1.msra.mxu0 0.0
    %4429 = vmatprep.subr.mxu0 0.0
    %4430 = vmatpush1.msra.mxu0 0.0
    %4431 = vmatprep.subr.mxu0 0.0
    %4432 = vmatpush1.msra.mxu0 0.0
    %4433 = vmatprep.subr.mxu0 0.0
    %4434 = vmatpush1.msra.mxu0 0.0
    %4435 = vmatprep.subr.mxu0 0.0
    %4436 = vmatpush1.msra.mxu0 0.0
    %4437 = vmatprep.subr.mxu0 0.0
    %4438 = vmatpush1.msra.mxu0 0.0
    %4439 = vmatprep.mubr.f32.mxu0 0.0
    %4440 = vmatmul.mubr.f32.gmra.mrb[0].mxu0 %v4091
    %v4441 = vpop.f32.mrb[0].mxu0
    %v4442 = vadd.f32 %v4372, %v4441
    %v4443 = vpop.f32.mrb[0].mxu0
    %4444 = vdwg.mxu0
    %v4445 = vadd.f32 %v4442, %v398
    %4446 = vmatprep.subr.mxu0 0.0
    %4447 = vmatpush1.msra.mxu0 %v359
    %4448 = vmatprep.subr.mxu0 0.0
    %4449 = vmatpush1.msra.mxu0 %v360
    %4450 = vmatprep.subr.mxu0 0.0
    %4451 = vmatpush1.msra.mxu0 %v361
    %4452 = vmatprep.subr.mxu0 0.0
    %4453 = vmatpush1.msra.mxu0 %v362
    %4454 = vmatprep.subr.mxu0 0.0
    %4455 = vmatpush1.msra.mxu0 0.0
    %4456 = vmatprep.subr.mxu0 0.0
    %4457 = vmatpush1.msra.mxu0 0.0
    %4458 = vmatprep.subr.mxu0 0.0
    %4459 = vmatpush1.msra.mxu0 0.0
    %4460 = vmatprep.subr.mxu0 0.0
    %4461 = vmatpush1.msra.mxu0 0.0
    %4462 = vmatprep.subr.mxu0 0.0
    %4463 = vmatpush1.msra.mxu0 0.0
    %4464 = vmatprep.subr.mxu0 0.0
    %4465 = vmatpush1.msra.mxu0 0.0
    %4466 = vmatprep.subr.mxu0 0.0
    %4467 = vmatpush1.msra.mxu0 0.0
    %4468 = vmatprep.subr.mxu0 0.0
    %4469 = vmatpush1.msra.mxu0 0.0
    %4470 = vmatprep.subr.mxu0 0.0
    %4471 = vmatpush1.msra.mxu0 0.0
    %4472 = vmatprep.subr.mxu0 0.0
    %4473 = vmatpush1.msra.mxu0 0.0
    %4474 = vmatprep.subr.mxu0 0.0
    %4475 = vmatpush1.msra.mxu0 0.0
    %4476 = vmatprep.subr.mxu0 0.0
    %4477 = vmatpush1.msra.mxu0 0.0
    %4478 = vmatprep.subr.mxu0 0.0
    %4479 = vmatpush1.msra.mxu0 0.0
    %4480 = vmatprep.subr.mxu0 0.0
    %4481 = vmatpush1.msra.mxu0 0.0
    %4482 = vmatprep.subr.mxu0 0.0
    %4483 = vmatpush1.msra.mxu0 0.0
    %4484 = vmatprep.subr.mxu0 0.0
    %4485 = vmatpush1.msra.mxu0 0.0
    %4486 = vmatprep.subr.mxu0 0.0
    %4487 = vmatpush1.msra.mxu0 0.0
    %4488 = vmatprep.subr.mxu0 0.0
    %4489 = vmatpush1.msra.mxu0 0.0
    %4490 = vmatprep.subr.mxu0 0.0
    %4491 = vmatpush1.msra.mxu0 0.0
    %4492 = vmatprep.subr.mxu0 0.0
    %4493 = vmatpush1.msra.mxu0 0.0
    %4494 = vmatprep.subr.mxu0 0.0
    %4495 = vmatpush1.msra.mxu0 0.0
    %4496 = vmatprep.subr.mxu0 0.0
    %4497 = vmatpush1.msra.mxu0 0.0
    %4498 = vmatprep.subr.mxu0 0.0
    %4499 = vmatpush1.msra.mxu0 0.0
    %4500 = vmatprep.subr.mxu0 0.0
    %4501 = vmatpush1.msra.mxu0 0.0
    %4502 = vmatprep.subr.mxu0 0.0
    %4503 = vmatpush1.msra.mxu0 0.0
    %4504 = vmatprep.subr.mxu0 0.0
    %4505 = vmatpush1.msra.mxu0 0.0
    %4506 = vmatprep.subr.mxu0 0.0
    %4507 = vmatpush1.msra.mxu0 0.0
    %4508 = vmatprep.subr.mxu0 0.0
    %4509 = vmatpush1.msra.mxu0 0.0
    %4510 = vmatprep.mubr.f32.mxu0 0.0
    %4511 = vmatmul.mubr.f32.gmra.mrb[0].mxu0 %v3491
    %v4512 = vpop.f32.mrb[0].mxu0
    %v4513 = vadd.f32 0.0, %v4512
    %v4514 = vpop.f32.mrb[0].mxu0
    %4515 = vdwg.mxu0
    %4516 = vmatprep.subr.mxu0 0.0
    %4517 = vmatpush1.msra.mxu0 %v329
    %4518 = vmatprep.subr.mxu0 0.0
    %4519 = vmatpush1.msra.mxu0 %v330
    %4520 = vmatprep.subr.mxu0 0.0
    %4521 = vmatpush1.msra.mxu0 0.0
    %4522 = vmatprep.subr.mxu0 0.0
    %4523 = vmatpush1.msra.mxu0 0.0
    %4524 = vmatprep.subr.mxu0 0.0
    %4525 = vmatpush1.msra.mxu0 0.0
    %4526 = vmatprep.subr.mxu0 0.0
    %4527 = vmatpush1.msra.mxu0 0.0
    %4528 = vmatprep.subr.mxu0 0.0
    %4529 = vmatpush1.msra.mxu0 0.0
    %4530 = vmatprep.subr.mxu0 0.0
    %4531 = vmatpush1.msra.mxu0 0.0
    %4532 = vmatprep.subr.mxu0 0.0
    %4533 = vmatpush1.msra.mxu0 0.0
    %4534 = vmatprep.subr.mxu0 0.0
    %4535 = vmatpush1.msra.mxu0 0.0
    %4536 = vmatprep.subr.mxu0 0.0
    %4537 = vmatpush1.msra.mxu0 0.0
    %4538 = vmatprep.subr.mxu0 0.0
    %4539 = vmatpush1.msra.mxu0 0.0
    %4540 = vmatprep.subr.mxu0 0.0
    %4541 = vmatpush1.msra.mxu0 0.0
    %4542 = vmatprep.subr.mxu0 0.0
    %4543 = vmatpush1.msra.mxu0 0.0
    %4544 = vmatprep.subr.mxu0 0.0
    %4545 = vmatpush1.msra.mxu0 0.0
    %4546 = vmatprep.subr.mxu0 0.0
    %4547 = vmatpush1.msra.mxu0 0.0
    %4548 = vmatprep.subr.mxu0 0.0
    %4549 = vmatpush1.msra.mxu0 0.0
    %4550 = vmatprep.subr.mxu0 0.0
    %4551 = vmatpush1.msra.mxu0 0.0
    %4552 = vmatprep.subr.mxu0 0.0
    %4553 = vmatpush1.msra.mxu0 0.0
    %4554 = vmatprep.subr.mxu0 0.0
    %4555 = vmatpush1.msra.mxu0 0.0
    %4556 = vmatprep.subr.mxu0 0.0
    %4557 = vmatpush1.msra.mxu0 0.0
    %4558 = vmatprep.subr.mxu0 0.0
    %4559 = vmatpush1.msra.mxu0 0.0
    %4560 = vmatprep.subr.mxu0 0.0
    %4561 = vmatpush1.msra.mxu0 0.0
    %4562 = vmatprep.subr.mxu0 0.0
    %4563 = vmatpush1.msra.mxu0 0.0
    %4564 = vmatprep.subr.mxu0 0.0
    %4565 = vmatpush1.msra.mxu0 0.0
    %4566 = vmatprep.subr.mxu0 0.0
    %4567 = vmatpush1.msra.mxu0 0.0
    %4568 = vmatprep.subr.mxu0 0.0
    %4569 = vmatpush1.msra.mxu0 0.0
    %4570 = vmatprep.subr.mxu0 0.0
    %4571 = vmatpush1.msra.mxu0 0.0
    %4572 = vmatprep.subr.mxu0 0.0
    %4573 = vmatpush1.msra.mxu0 0.0
    %4574 = vmatprep.subr.mxu0 0.0
    %4575 = vmatpush1.msra.mxu0 0.0
    %4576 = vmatprep.subr.mxu0 0.0
    %4577 = vmatpush1.msra.mxu0 0.0
    %4578 = vmatprep.subr.mxu0 0.0
    %4579 = vmatpush1.msra.mxu0 0.0
    %4580 = vmatprep.mubr.f32.mxu0 0.0
    %4581 = vmatmul.mubr.f32.gmra.mrb[0].mxu0 %v4091
    %v4582 = vpop.f32.mrb[0].mxu0
    %v4583 = vadd.f32 %v4513, %v4582
    %v4584 = vpop.f32.mrb[0].mxu0
    %4585 = vdwg.mxu0
    %v4586 = vadd.f32 %v4583, %v405
    %v4587 = vxor.u32 %v4163, 2147483648
    %v4588 = vmul.f32 %v4587, 1.442695
    %v4589 = vpow.pop %v4588
    %v4590 = vadd.f32 %v4589, 1.0
    %v4591 = vrcp.pop %v4590
    %v4592 = vmul.f32 1.0, %v4591
    %v4593 = vxor.u32 %v4304, 2147483648
    %v4594 = vmul.f32 %v4593, 1.442695
    %v4595 = vpow.pop %v4594
    %v4596 = vadd.f32 %v4595, 1.0
    %v4597 = vrcp.pop %v4596
    %v4598 = vmul.f32 1.0, %v4597
    %v4599 = vtanh.pop %v4445
    %v4600 = vxor.u32 %v4586, 2147483648
    %v4601 = vmul.f32 %v4600, 1.442695
    %v4602 = vpow.pop %v4601
    %v4603 = vadd.f32 %v4602, 1.0
    %v4604 = vrcp.pop %v4603
    %v4605 = vmul.f32 1.0, %v4604
    %v4606 = vmul.f32 %v4598, %v3414
    %v4607 = vmul.f32 %v4592, %v4599
    %v4608 = vadd.f32 %v4606, %v4607
    %v4609 = vtanh.pop %v4608
    %v4610 = vmul.f32 %v4605, %v4609
    %v4612 = vsel %vm436, %v4010, 0
    %4614 = vmatprep.subr.mxu0 0.0
    %4615 = vmatpush1.msra.mxu0 %v363
    %4616 = vmatprep.subr.mxu0 0.0
    %4617 = vmatpush1.msra.mxu0 %v364
    %4618 = vmatprep.subr.mxu0 0.0
    %4619 = vmatpush1.msra.mxu0 %v365
    %4620 = vmatprep.subr.mxu0 0.0
    %4621 = vmatpush1.msra.mxu0 %v366
    %4622 = vmatprep.subr.mxu0 0.0
    %4623 = vmatpush1.msra.mxu0 0.0
    %4624 = vmatprep.subr.mxu0 0.0
    %4625 = vmatpush1.msra.mxu0 0.0
    %4626 = vmatprep.subr.mxu0 0.0
    %4627 = vmatpush1.msra.mxu0 0.0
    %4628 = vmatprep.subr.mxu0 0.0
    %4629 = vmatpush1.msra.mxu0 0.0
    %4630 = vmatprep.subr.mxu0 0.0
    %4631 = vmatpush1.msra.mxu0 0.0
    %4632 = vmatprep.subr.mxu0 0.0
    %4633 = vmatpush1.msra.mxu0 0.0
    %4634 = vmatprep.subr.mxu0 0.0
    %4635 = vmatpush1.msra.mxu0 0.0
    %4636 = vmatprep.subr.mxu0 0.0
    %4637 = vmatpush1.msra.mxu0 0.0
    %4638 = vmatprep.subr.mxu0 0.0
    %4639 = vmatpush1.msra.mxu0 0.0
    %4640 = vmatprep.subr.mxu0 0.0
    %4641 = vmatpush1.msra.mxu0 0.0
    %4642 = vmatprep.subr.mxu0 0.0
    %4643 = vmatpush1.msra.mxu0 0.0
    %4644 = vmatprep.subr.mxu0 0.0
    %4645 = vmatpush1.msra.mxu0 0.0
    %4646 = vmatprep.subr.mxu0 0.0
    %4647 = vmatpush1.msra.mxu0 0.0
    %4648 = vmatprep.subr.mxu0 0.0
    %4649 = vmatpush1.msra.mxu0 0.0
    %4650 = vmatprep.subr.mxu0 0.0
    %4651 = vmatpush1.msra.mxu0 0.0
    %4652 = vmatprep.subr.mxu0 0.0
    %4653 = vmatpush1.msra.mxu0 0.0
    %4654 = vmatprep.subr.mxu0 0.0
    %4655 = vmatpush1.msra.mxu0 0.0
    %4656 = vmatprep.subr.mxu0 0.0
    %4657 = vmatpush1.msra.mxu0 0.0
    %4658 = vmatprep.subr.mxu0 0.0
    %4659 = vmatpush1.msra.mxu0 0.0
    %4660 = vmatprep.subr.mxu0 0.0
    %4661 = vmatpush1.msra.mxu0 0.0
    %4662 = vmatprep.subr.mxu0 0.0
    %4663 = vmatpush1.msra.mxu0 0.0
    %4664 = vmatprep.subr.mxu0 0.0
    %4665 = vmatpush1.msra.mxu0 0.0
    %4666 = vmatprep.subr.mxu0 0.0
    %4667 = vmatpush1.msra.mxu0 0.0
    %4668 = vmatprep.subr.mxu0 0.0
    %4669 = vmatpush1.msra.mxu0 0.0
    %4670 = vmatprep.subr.mxu0 0.0
    %4671 = vmatpush1.msra.mxu0 0.0
    %4672 = vmatprep.subr.mxu0 0.0
    %4673 = vmatpush1.msra.mxu0 0.0
    %4674 = vmatprep.subr.mxu0 0.0
    %4675 = vmatpush1.msra.mxu0 0.0
    %4676 = vmatprep.subr.mxu0 0.0
    %4677 = vmatpush1.msra.mxu0 0.0
    %4678 = vmatprep.mubr.f32.mxu0 0.0
    %4679 = vmatmul.mubr.f32.gmra.mrb[0].mxu0 %v4612
    %v4680 = vpop.f32.mrb[0].mxu0
    %v4681 = vadd.f32 0.0, %v4680
    %v4682 = vpop.f32.mrb[0].mxu0
    %4683 = vdwg.mxu0
    %v4685 = vsel %vm436, %v4610, 0
    %4687 = vmatprep.subr.mxu0 0.0
    %4688 = vmatpush1.msra.mxu0 %v331
    %4689 = vmatprep.subr.mxu0 0.0
    %4690 = vmatpush1.msra.mxu0 %v332
    %4691 = vmatprep.subr.mxu0 0.0
    %4692 = vmatpush1.msra.mxu0 %v333
    %4693 = vmatprep.subr.mxu0 0.0
    %4694 = vmatpush1.msra.mxu0 %v334
    %4695 = vmatprep.subr.mxu0 0.0
    %4696 = vmatpush1.msra.mxu0 0.0
    %4697 = vmatprep.subr.mxu0 0.0
    %4698 = vmatpush1.msra.mxu0 0.0
    %4699 = vmatprep.subr.mxu0 0.0
    %4700 = vmatpush1.msra.mxu0 0.0
    %4701 = vmatprep.subr.mxu0 0.0
    %4702 = vmatpush1.msra.mxu0 0.0
    %4703 = vmatprep.subr.mxu0 0.0
    %4704 = vmatpush1.msra.mxu0 0.0
    %4705 = vmatprep.subr.mxu0 0.0
    %4706 = vmatpush1.msra.mxu0 0.0
    %4707 = vmatprep.subr.mxu0 0.0
    %4708 = vmatpush1.msra.mxu0 0.0
    %4709 = vmatprep.subr.mxu0 0.0
    %4710 = vmatpush1.msra.mxu0 0.0
    %4711 = vmatprep.subr.mxu0 0.0
    %4712 = vmatpush1.msra.mxu0 0.0
    %4713 = vmatprep.subr.mxu0 0.0
    %4714 = vmatpush1.msra.mxu0 0.0
    %4715 = vmatprep.subr.mxu0 0.0
    %4716 = vmatpush1.msra.mxu0 0.0
    %4717 = vmatprep.subr.mxu0 0.0
    %4718 = vmatpush1.msra.mxu0 0.0
    %4719 = vmatprep.subr.mxu0 0.0
    %4720 = vmatpush1.msra.mxu0 0.0
    %4721 = vmatprep.subr.mxu0 0.0
    %4722 = vmatpush1.msra.mxu0 0.0
    %4723 = vmatprep.subr.mxu0 0.0
    %4724 = vmatpush1.msra.mxu0 0.0
    %4725 = vmatprep.subr.mxu0 0.0
    %4726 = vmatpush1.msra.mxu0 0.0
    %4727 = vmatprep.subr.mxu0 0.0
    %4728 = vmatpush1.msra.mxu0 0.0
    %4729 = vmatprep.subr.mxu0 0.0
    %4730 = vmatpush1.msra.mxu0 0.0
    %4731 = vmatprep.subr.mxu0 0.0
    %4732 = vmatpush1.msra.mxu0 0.0
    %4733 = vmatprep.subr.mxu0 0.0
    %4734 = vmatpush1.msra.mxu0 0.0
    %4735 = vmatprep.subr.mxu0 0.0
    %4736 = vmatpush1.msra.mxu0 0.0
    %4737 = vmatprep.subr.mxu0 0.0
    %4738 = vmatpush1.msra.mxu0 0.0
    %4739 = vmatprep.subr.mxu0 0.0
    %4740 = vmatpush1.msra.mxu0 0.0
    %4741 = vmatprep.subr.mxu0 0.0
    %4742 = vmatpush1.msra.mxu0 0.0
    %4743 = vmatprep.subr.mxu0 0.0
    %4744 = vmatpush1.msra.mxu0 0.0
    %4745 = vmatprep.subr.mxu0 0.0
    %4746 = vmatpush1.msra.mxu0 0.0
    %4747 = vmatprep.subr.mxu0 0.0
    %4748 = vmatpush1.msra.mxu0 0.0
    %4749 = vmatprep.subr.mxu0 0.0
    %4750 = vmatpush1.msra.mxu0 0.0
    %4751 = vmatprep.mubr.f32.mxu0 0.0
    %4752 = vmatmul.mubr.f32.gmra.mrb[0].mxu0 %v4685
    %v4753 = vpop.f32.mrb[0].mxu0
    %v4754 = vadd.f32 %v4681, %v4753
    %v4755 = vpop.f32.mrb[0].mxu0
    %4756 = vdwg.mxu0
    %v4757 = vadd.f32 %v4754, %v412
    %4758 = vmatprep.subr.mxu0 0.0
    %4759 = vmatpush1.msra.mxu0 %v367
    %4760 = vmatprep.subr.mxu0 0.0
    %4761 = vmatpush1.msra.mxu0 %v368
    %4762 = vmatprep.subr.mxu0 0.0
    %4763 = vmatpush1.msra.mxu0 %v369
    %4764 = vmatprep.subr.mxu0 0.0
    %4765 = vmatpush1.msra.mxu0 %v370
    %4766 = vmatprep.subr.mxu0 0.0
    %4767 = vmatpush1.msra.mxu0 0.0
    %4768 = vmatprep.subr.mxu0 0.0
    %4769 = vmatpush1.msra.mxu0 0.0
    %4770 = vmatprep.subr.mxu0 0.0
    %4771 = vmatpush1.msra.mxu0 0.0
    %4772 = vmatprep.subr.mxu0 0.0
    %4773 = vmatpush1.msra.mxu0 0.0
    %4774 = vmatprep.subr.mxu0 0.0
    %4775 = vmatpush1.msra.mxu0 0.0
    %4776 = vmatprep.subr.mxu0 0.0
    %4777 = vmatpush1.msra.mxu0 0.0
    %4778 = vmatprep.subr.mxu0 0.0
    %4779 = vmatpush1.msra.mxu0 0.0
    %4780 = vmatprep.subr.mxu0 0.0
    %4781 = vmatpush1.msra.mxu0 0.0
    %4782 = vmatprep.subr.mxu0 0.0
    %4783 = vmatpush1.msra.mxu0 0.0
    %4784 = vmatprep.subr.mxu0 0.0
    %4785 = vmatpush1.msra.mxu0 0.0
    %4786 = vmatprep.subr.mxu0 0.0
    %4787 = vmatpush1.msra.mxu0 0.0
    %4788 = vmatprep.subr.mxu0 0.0
    %4789 = vmatpush1.msra.mxu0 0.0
    %4790 = vmatprep.subr.mxu0 0.0
    %4791 = vmatpush1.msra.mxu0 0.0
    %4792 = vmatprep.subr.mxu0 0.0
    %4793 = vmatpush1.msra.mxu0 0.0
    %4794 = vmatprep.subr.mxu0 0.0
    %4795 = vmatpush1.msra.mxu0 0.0
    %4796 = vmatprep.subr.mxu0 0.0
    %4797 = vmatpush1.msra.mxu0 0.0
    %4798 = vmatprep.subr.mxu0 0.0
    %4799 = vmatpush1.msra.mxu0 0.0
    %4800 = vmatprep.subr.mxu0 0.0
    %4801 = vmatpush1.msra.mxu0 0.0
    %4802 = vmatprep.subr.mxu0 0.0
    %4803 = vmatpush1.msra.mxu0 0.0
    %4804 = vmatprep.subr.mxu0 0.0
    %4805 = vmatpush1.msra.mxu0 0.0
    %4806 = vmatprep.subr.mxu0 0.0
    %4807 = vmatpush1.msra.mxu0 0.0
    %4808 = vmatprep.subr.mxu0 0.0
    %4809 = vmatpush1.msra.mxu0 0.0
    %4810 = vmatprep.subr.mxu0 0.0
    %4811 = vmatpush1.msra.mxu0 0.0
    %4812 = vmatprep.subr.mxu0 0.0
    %4813 = vmatpush1.msra.mxu0 0.0
    %4814 = vmatprep.subr.mxu0 0.0
    %4815 = vmatpush1.msra.mxu0 0.0
    %4816 = vmatprep.subr.mxu0 0.0
    %4817 = vmatpush1.msra.mxu0 0.0
    %4818 = vmatprep.subr.mxu0 0.0
    %4819 = vmatpush1.msra.mxu0 0.0
    %4820 = vmatprep.subr.mxu0 0.0
    %4821 = vmatpush1.msra.mxu0 0.0
    %4822 = vmatprep.mubr.f32.mxu0 0.0
    %4823 = vmatmul.mubr.f32.gmra.mrb[0].mxu0 %v4612
    %v4824 = vpop.f32.mrb[0].mxu0
    %v4825 = vadd.f32 0.0, %v4824
    %v4826 = vpop.f32.mrb[0].mxu0
    %4827 = vdwg.mxu0
    %4828 = vmatprep.subr.mxu0 0.0
    %4829 = vmatpush1.msra.mxu0 %v335
    %4830 = vmatprep.subr.mxu0 0.0
    %4831 = vmatpush1.msra.mxu0 %v336
    %4832 = vmatprep.subr.mxu0 0.0
    %4833 = vmatpush1.msra.mxu0 %v337
    %4834 = vmatprep.subr.mxu0 0.0
    %4835 = vmatpush1.msra.mxu0 %v338
    %4836 = vmatprep.subr.mxu0 0.0
    %4837 = vmatpush1.msra.mxu0 0.0
    %4838 = vmatprep.subr.mxu0 0.0
    %4839 = vmatpush1.msra.mxu0 0.0
    %4840 = vmatprep.subr.mxu0 0.0
    %4841 = vmatpush1.msra.mxu0 0.0
    %4842 = vmatprep.subr.mxu0 0.0
    %4843 = vmatpush1.msra.mxu0 0.0
    %4844 = vmatprep.subr.mxu0 0.0
    %4845 = vmatpush1.msra.mxu0 0.0
    %4846 = vmatprep.subr.mxu0 0.0
    %4847 = vmatpush1.msra.mxu0 0.0
    %4848 = vmatprep.subr.mxu0 0.0
    %4849 = vmatpush1.msra.mxu0 0.0
    %4850 = vmatprep.subr.mxu0 0.0
    %4851 = vmatpush1.msra.mxu0 0.0
    %4852 = vmatprep.subr.mxu0 0.0
    %4853 = vmatpush1.msra.mxu0 0.0
    %4854 = vmatprep.subr.mxu0 0.0
    %4855 = vmatpush1.msra.mxu0 0.0
    %4856 = vmatprep.subr.mxu0 0.0
    %4857 = vmatpush1.msra.mxu0 0.0
    %4858 = vmatprep.subr.mxu0 0.0
    %4859 = vmatpush1.msra.mxu0 0.0
    %4860 = vmatprep.subr.mxu0 0.0
    %4861 = vmatpush1.msra.mxu0 0.0
    %4862 = vmatprep.subr.mxu0 0.0
    %4863 = vmatpush1.msra.mxu0 0.0
    %4864 = vmatprep.subr.mxu0 0.0
    %4865 = vmatpush1.msra.mxu0 0.0
    %4866 = vmatprep.subr.mxu0 0.0
    %4867 = vmatpush1.msra.mxu0 0.0
    %4868 = vmatprep.subr.mxu0 0.0
    %4869 = vmatpush1.msra.mxu0 0.0
    %4870 = vmatprep.subr.mxu0 0.0
    %4871 = vmatpush1.msra.mxu0 0.0
    %4872 = vmatprep.subr.mxu0 0.0
    %4873 = vmatpush1.msra.mxu0 0.0
    %4874 = vmatprep.subr.mxu0 0.0
    %4875 = vmatpush1.msra.mxu0 0.0
    %4876 = vmatprep.subr.mxu0 0.0
    %4877 = vmatpush1.msra.mxu0 0.0
    %4878 = vmatprep.subr.mxu0 0.0
    %4879 = vmatpush1.msra.mxu0 0.0
    %4880 = vmatprep.subr.mxu0 0.0
    %4881 = vmatpush1.msra.mxu0 0.0
    %4882 = vmatprep.subr.mxu0 0.0
    %4883 = vmatpush1.msra.mxu0 0.0
    %4884 = vmatprep.subr.mxu0 0.0
    %4885 = vmatpush1.msra.mxu0 0.0
    %4886 = vmatprep.subr.mxu0 0.0
    %4887 = vmatpush1.msra.mxu0 0.0
    %4888 = vmatprep.subr.mxu0 0.0
    %4889 = vmatpush1.msra.mxu0 0.0
    %4890 = vmatprep.subr.mxu0 0.0
    %4891 = vmatpush1.msra.mxu0 0.0
    %4892 = vmatprep.mubr.f32.mxu0 0.0
    %4893 = vmatmul.mubr.f32.gmra.mrb[0].mxu0 %v4685
    %v4894 = vpop.f32.mrb[0].mxu0
    %v4895 = vadd.f32 %v4825, %v4894
    %v4896 = vpop.f32.mrb[0].mxu0
    %4897 = vdwg.mxu0
    %v4898 = vadd.f32 %v4895, %v419
    %4899 = vmatprep.subr.mxu0 0.0
    %4900 = vmatpush1.msra.mxu0 %v371
    %4901 = vmatprep.subr.mxu0 0.0
    %4902 = vmatpush1.msra.mxu0 %v372
    %4903 = vmatprep.subr.mxu0 0.0
    %4904 = vmatpush1.msra.mxu0 %v373
    %4905 = vmatprep.subr.mxu0 0.0
    %4906 = vmatpush1.msra.mxu0 %v374
    %4907 = vmatprep.subr.mxu0 0.0
    %4908 = vmatpush1.msra.mxu0 0.0
    %4909 = vmatprep.subr.mxu0 0.0
    %4910 = vmatpush1.msra.mxu0 0.0
    %4911 = vmatprep.subr.mxu0 0.0
    %4912 = vmatpush1.msra.mxu0 0.0
    %4913 = vmatprep.subr.mxu0 0.0
    %4914 = vmatpush1.msra.mxu0 0.0
    %4915 = vmatprep.subr.mxu0 0.0
    %4916 = vmatpush1.msra.mxu0 0.0
    %4917 = vmatprep.subr.mxu0 0.0
    %4918 = vmatpush1.msra.mxu0 0.0
    %4919 = vmatprep.subr.mxu0 0.0
    %4920 = vmatpush1.msra.mxu0 0.0
    %4921 = vmatprep.subr.mxu0 0.0
    %4922 = vmatpush1.msra.mxu0 0.0
    %4923 = vmatprep.subr.mxu0 0.0
    %4924 = vmatpush1.msra.mxu0 0.0
    %4925 = vmatprep.subr.mxu0 0.0
    %4926 = vmatpush1.msra.mxu0 0.0
    %4927 = vmatprep.subr.mxu0 0.0
    %4928 = vmatpush1.msra.mxu0 0.0
    %4929 = vmatprep.subr.mxu0 0.0
    %4930 = vmatpush1.msra.mxu0 0.0
    %4931 = vmatprep.subr.mxu0 0.0
    %4932 = vmatpush1.msra.mxu0 0.0
    %4933 = vmatprep.subr.mxu0 0.0
    %4934 = vmatpush1.msra.mxu0 0.0
    %4935 = vmatprep.subr.mxu0 0.0
    %4936 = vmatpush1.msra.mxu0 0.0
    %4937 = vmatprep.subr.mxu0 0.0
    %4938 = vmatpush1.msra.mxu0 0.0
    %4939 = vmatprep.subr.mxu0 0.0
    %4940 = vmatpush1.msra.mxu0 0.0
    %4941 = vmatprep.subr.mxu0 0.0
    %4942 = vmatpush1.msra.mxu0 0.0
    %4943 = vmatprep.subr.mxu0 0.0
    %4944 = vmatpush1.msra.mxu0 0.0
    %4945 = vmatprep.subr.mxu0 0.0
    %4946 = vmatpush1.msra.mxu0 0.0
    %4947 = vmatprep.subr.mxu0 0.0
    %4948 = vmatpush1.msra.mxu0 0.0
    %4949 = vmatprep.subr.mxu0 0.0
    %4950 = vmatpush1.msra.mxu0 0.0
    %4951 = vmatprep.subr.mxu0 0.0
    %4952 = vmatpush1.msra.mxu0 0.0
    %4953 = vmatprep.subr.mxu0 0.0
    %4954 = vmatpush1.msra.mxu0 0.0
    %4955 = vmatprep.subr.mxu0 0.0
    %4956 = vmatpush1.msra.mxu0 0.0
    %4957 = vmatprep.subr.mxu0 0.0
    %4958 = vmatpush1.msra.mxu0 0.0
    %4959 = vmatprep.subr.mxu0 0.0
    %4960 = vmatpush1.msra.mxu0 0.0
    %4961 = vmatprep.subr.mxu0 0.0
    %4962 = vmatpush1.msra.mxu0 0.0
    %4963 = vmatprep.mubr.f32.mxu0 0.0
    %4964 = vmatmul.mubr.f32.gmra.mrb[0].mxu0 %v4612
    %v4965 = vpop.f32.mrb[0].mxu0
    %v4966 = vadd.f32 0.0, %v4965
    %v4967 = vpop.f32.mrb[0].mxu0
    %4968 = vdwg.mxu0
    %4969 = vmatprep.subr.mxu0 0.0
    %4970 = vmatpush1.msra.mxu0 %v339
    %4971 = vmatprep.subr.mxu0 0.0
    %4972 = vmatpush1.msra.mxu0 %v340
    %4973 = vmatprep.subr.mxu0 0.0
    %4974 = vmatpush1.msra.mxu0 %v341
    %4975 = vmatprep.subr.mxu0 0.0
    %4976 = vmatpush1.msra.mxu0 %v342
    %4977 = vmatprep.subr.mxu0 0.0
    %4978 = vmatpush1.msra.mxu0 0.0
    %4979 = vmatprep.subr.mxu0 0.0
    %4980 = vmatpush1.msra.mxu0 0.0
    %4981 = vmatprep.subr.mxu0 0.0
    %4982 = vmatpush1.msra.mxu0 0.0
    %4983 = vmatprep.subr.mxu0 0.0
    %4984 = vmatpush1.msra.mxu0 0.0
    %4985 = vmatprep.subr.mxu0 0.0
    %4986 = vmatpush1.msra.mxu0 0.0
    %4987 = vmatprep.subr.mxu0 0.0
    %4988 = vmatpush1.msra.mxu0 0.0
    %4989 = vmatprep.subr.mxu0 0.0
    %4990 = vmatpush1.msra.mxu0 0.0
    %4991 = vmatprep.subr.mxu0 0.0
    %4992 = vmatpush1.msra.mxu0 0.0
    %4993 = vmatprep.subr.mxu0 0.0
    %4994 = vmatpush1.msra.mxu0 0.0
    %4995 = vmatprep.subr.mxu0 0.0
    %4996 = vmatpush1.msra.mxu0 0.0
    %4997 = vmatprep.subr.mxu0 0.0
    %4998 = vmatpush1.msra.mxu0 0.0
    %4999 = vmatprep.subr.mxu0 0.0
    %5000 = vmatpush1.msra.mxu0 0.0
    %5001 = vmatprep.subr.mxu0 0.0
    %5002 = vmatpush1.msra.mxu0 0.0
    %5003 = vmatprep.subr.mxu0 0.0
    %5004 = vmatpush1.msra.mxu0 0.0
    %5005 = vmatprep.subr.mxu0 0.0
    %5006 = vmatpush1.msra.mxu0 0.0
    %5007 = vmatprep.subr.mxu0 0.0
    %5008 = vmatpush1.msra.mxu0 0.0
    %5009 = vmatprep.subr.mxu0 0.0
    %5010 = vmatpush1.msra.mxu0 0.0
    %5011 = vmatprep.subr.mxu0 0.0
    %5012 = vmatpush1.msra.mxu0 0.0
    %5013 = vmatprep.subr.mxu0 0.0
    %5014 = vmatpush1.msra.mxu0 0.0
    %5015 = vmatprep.subr.mxu0 0.0
    %5016 = vmatpush1.msra.mxu0 0.0
    %5017 = vmatprep.subr.mxu0 0.0
    %5018 = vmatpush1.msra.mxu0 0.0
    %5019 = vmatprep.subr.mxu0 0.0
    %5020 = vmatpush1.msra.mxu0 0.0
    %5021 = vmatprep.subr.mxu0 0.0
    %5022 = vmatpush1.msra.mxu0 0.0
    %5023 = vmatprep.subr.mxu0 0.0
    %5024 = vmatpush1.msra.mxu0 0.0
    %5025 = vmatprep.subr.mxu0 0.0
    %5026 = vmatpush1.msra.mxu0 0.0
    %5027 = vmatprep.subr.mxu0 0.0
    %5028 = vmatpush1.msra.mxu0 0.0
    %5029 = vmatprep.subr.mxu0 0.0
    %5030 = vmatpush1.msra.mxu0 0.0
    %5031 = vmatprep.subr.mxu0 0.0
    %5032 = vmatpush1.msra.mxu0 0.0
    %5033 = vmatprep.mubr.f32.mxu0 0.0
    %5034 = vmatmul.mubr.f32.gmra.mrb[0].mxu0 %v4685
    %v5035 = vpop.f32.mrb[0].mxu0
    %v5036 = vadd.f32 %v4966, %v5035
    %v5037 = vpop.f32.mrb[0].mxu0
    %5038 = vdwg.mxu0
    %v5039 = vadd.f32 %v5036, %v426
    %5040 = vmatprep.subr.mxu0 0.0
    %5041 = vmatpush1.msra.mxu0 %v375
    %5042 = vmatprep.subr.mxu0 0.0
    %5043 = vmatpush1.msra.mxu0 %v376
    %5044 = vmatprep.subr.mxu0 0.0
    %5045 = vmatpush1.msra.mxu0 %v377
    %5046 = vmatprep.subr.mxu0 0.0
    %5047 = vmatpush1.msra.mxu0 %v378
    %5048 = vmatprep.subr.mxu0 0.0
    %5049 = vmatpush1.msra.mxu0 0.0
    %5050 = vmatprep.subr.mxu0 0.0
    %5051 = vmatpush1.msra.mxu0 0.0
    %5052 = vmatprep.subr.mxu0 0.0
    %5053 = vmatpush1.msra.mxu0 0.0
    %5054 = vmatprep.subr.mxu0 0.0
    %5055 = vmatpush1.msra.mxu0 0.0
    %5056 = vmatprep.subr.mxu0 0.0
    %5057 = vmatpush1.msra.mxu0 0.0
    %5058 = vmatprep.subr.mxu0 0.0
    %5059 = vmatpush1.msra.mxu0 0.0
    %5060 = vmatprep.subr.mxu0 0.0
    %5061 = vmatpush1.msra.mxu0 0.0
    %5062 = vmatprep.subr.mxu0 0.0
    %5063 = vmatpush1.msra.mxu0 0.0
    %5064 = vmatprep.subr.mxu0 0.0
    %5065 = vmatpush1.msra.mxu0 0.0
    %5066 = vmatprep.subr.mxu0 0.0
    %5067 = vmatpush1.msra.mxu0 0.0
    %5068 = vmatprep.subr.mxu0 0.0
    %5069 = vmatpush1.msra.mxu0 0.0
    %5070 = vmatprep.subr.mxu0 0.0
    %5071 = vmatpush1.msra.mxu0 0.0
    %5072 = vmatprep.subr.mxu0 0.0
    %5073 = vmatpush1.msra.mxu0 0.0
    %5074 = vmatprep.subr.mxu0 0.0
    %5075 = vmatpush1.msra.mxu0 0.0
    %5076 = vmatprep.subr.mxu0 0.0
    %5077 = vmatpush1.msra.mxu0 0.0
    %5078 = vmatprep.subr.mxu0 0.0
    %5079 = vmatpush1.msra.mxu0 0.0
    %5080 = vmatprep.subr.mxu0 0.0
    %5081 = vmatpush1.msra.mxu0 0.0
    %5082 = vmatprep.subr.mxu0 0.0
    %5083 = vmatpush1.msra.mxu0 0.0
    %5084 = vmatprep.subr.mxu0 0.0
    %5085 = vmatpush1.msra.mxu0 0.0
    %5086 = vmatprep.subr.mxu0 0.0
    %5087 = vmatpush1.msra.mxu0 0.0
    %5088 = vmatprep.subr.mxu0 0.0
    %5089 = vmatpush1.msra.mxu0 0.0
    %5090 = vmatprep.subr.mxu0 0.0
    %5091 = vmatpush1.msra.mxu0 0.0
    %5092 = vmatprep.subr.mxu0 0.0
    %5093 = vmatpush1.msra.mxu0 0.0
    %5094 = vmatprep.subr.mxu0 0.0
    %5095 = vmatpush1.msra.mxu0 0.0
    %5096 = vmatprep.subr.mxu0 0.0
    %5097 = vmatpush1.msra.mxu0 0.0
    %5098 = vmatprep.subr.mxu0 0.0
    %5099 = vmatpush1.msra.mxu0 0.0
    %5100 = vmatprep.subr.mxu0 0.0
    %5101 = vmatpush1.msra.mxu0 0.0
    %5102 = vmatprep.subr.mxu0 0.0
    %5103 = vmatpush1.msra.mxu0 0.0
    %5104 = vmatprep.mubr.f32.mxu0 0.0
    %5105 = vmatmul.mubr.f32.gmra.mrb[0].mxu0 %v4612
    %v5106 = vpop.f32.mrb[0].mxu0
    %v5107 = vadd.f32 0.0, %v5106
    %v5108 = vpop.f32.mrb[0].mxu0
    %5109 = vdwg.mxu0
    %5110 = vmatprep.subr.mxu0 0.0
    %5111 = vmatpush1.msra.mxu0 %v343
    %5112 = vmatprep.subr.mxu0 0.0
    %5113 = vmatpush1.msra.mxu0 %v344
    %5114 = vmatprep.subr.mxu0 0.0
    %5115 = vmatpush1.msra.mxu0 %v345
    %5116 = vmatprep.subr.mxu0 0.0
    %5117 = vmatpush1.msra.mxu0 %v346
    %5118 = vmatprep.subr.mxu0 0.0
    %5119 = vmatpush1.msra.mxu0 0.0
    %5120 = vmatprep.subr.mxu0 0.0
    %5121 = vmatpush1.msra.mxu0 0.0
    %5122 = vmatprep.subr.mxu0 0.0
    %5123 = vmatpush1.msra.mxu0 0.0
    %5124 = vmatprep.subr.mxu0 0.0
    %5125 = vmatpush1.msra.mxu0 0.0
    %5126 = vmatprep.subr.mxu0 0.0
    %5127 = vmatpush1.msra.mxu0 0.0
    %5128 = vmatprep.subr.mxu0 0.0
    %5129 = vmatpush1.msra.mxu0 0.0
    %5130 = vmatprep.subr.mxu0 0.0
    %5131 = vmatpush1.msra.mxu0 0.0
    %5132 = vmatprep.subr.mxu0 0.0
    %5133 = vmatpush1.msra.mxu0 0.0
    %5134 = vmatprep.subr.mxu0 0.0
    %5135 = vmatpush1.msra.mxu0 0.0
    %5136 = vmatprep.subr.mxu0 0.0
    %5137 = vmatpush1.msra.mxu0 0.0
    %5138 = vmatprep.subr.mxu0 0.0
    %5139 = vmatpush1.msra.mxu0 0.0
    %5140 = vmatprep.subr.mxu0 0.0
    %5141 = vmatpush1.msra.mxu0 0.0
    %5142 = vmatprep.subr.mxu0 0.0
    %5143 = vmatpush1.msra.mxu0 0.0
    %5144 = vmatprep.subr.mxu0 0.0
    %5145 = vmatpush1.msra.mxu0 0.0
    %5146 = vmatprep.subr.mxu0 0.0
    %5147 = vmatpush1.msra.mxu0 0.0
    %5148 = vmatprep.subr.mxu0 0.0
    %5149 = vmatpush1.msra.mxu0 0.0
    %5150 = vmatprep.subr.mxu0 0.0
    %5151 = vmatpush1.msra.mxu0 0.0
    %5152 = vmatprep.subr.mxu0 0.0
    %5153 = vmatpush1.msra.mxu0 0.0
    %5154 = vmatprep.subr.mxu0 0.0
    %5155 = vmatpush1.msra.mxu0 0.0
    %5156 = vmatprep.subr.mxu0 0.0
    %5157 = vmatpush1.msra.mxu0 0.0
    %5158 = vmatprep.subr.mxu0 0.0
    %5159 = vmatpush1.msra.mxu0 0.0
    %5160 = vmatprep.subr.mxu0 0.0
    %5161 = vmatpush1.msra.mxu0 0.0
    %5162 = vmatprep.subr.mxu0 0.0
    %5163 = vmatpush1.msra.mxu0 0.0
    %5164 = vmatprep.subr.mxu0 0.0
    %5165 = vmatpush1.msra.mxu0 0.0
    %5166 = vmatprep.subr.mxu0 0.0
    %5167 = vmatpush1.msra.mxu0 0.0
    %5168 = vmatprep.subr.mxu0 0.0
    %5169 = vmatpush1.msra.mxu0 0.0
    %5170 = vmatprep.subr.mxu0 0.0
    %5171 = vmatpush1.msra.mxu0 0.0
    %5172 = vmatprep.subr.mxu0 0.0
    %5173 = vmatpush1.msra.mxu0 0.0
    %5174 = vmatprep.mubr.f32.mxu0 0.0
    %5175 = vmatmul.mubr.f32.gmra.mrb[0].mxu0 %v4685
    %v5176 = vpop.f32.mrb[0].mxu0
    %v5177 = vadd.f32 %v5107, %v5176
    %v5178 = vpop.f32.mrb[0].mxu0
    %5179 = vdwg.mxu0
    %v5180 = vadd.f32 %v5177, %v433
    %v5181 = vxor.u32 %v4757, 2147483648
    %v5182 = vmul.f32 %v5181, 1.442695
    %v5183 = vpow.pop %v5182
    %v5184 = vadd.f32 %v5183, 1.0
    %v5185 = vrcp.pop %v5184
    %v5186 = vmul.f32 1.0, %v5185
    %v5187 = vxor.u32 %v4898, 2147483648
    %v5188 = vmul.f32 %v5187, 1.442695
    %v5189 = vpow.pop %v5188
    %v5190 = vadd.f32 %v5189, 1.0
    %v5191 = vrcp.pop %v5190
    %v5192 = vmul.f32 1.0, %v5191
    %v5193 = vtanh.pop %v5039
    %v5194 = vxor.u32 %v5180, 2147483648
    %v5195 = vmul.f32 %v5194, 1.442695
    %v5196 = vpow.pop %v5195
    %v5197 = vadd.f32 %v5196, 1.0
    %v5198 = vrcp.pop %v5197
    %v5199 = vmul.f32 1.0, %v5198
    %v5200 = vmul.f32 %v5192, %v4008
    %v5201 = vmul.f32 %v5186, %v5193
    %v5202 = vadd.f32 %v5200, %v5201
    %v5203 = vtanh.pop %v5202
    %v5204 = vmul.f32 %v5199, %v5203
    %vm5205 = vcmp.eq.s32.totalorder %v322, 3
    %v5206 = vsel %vm5205, 1, 0
    %5207 = vset.pattern.permute.xlu0 0
    %5208 = vperm.xlu0 %5207, %v5206
    %v5209 = vpop.permute.xlu0 %5208
    %vm5210 = vcmp.eq.s32.totalorder %v5209, 1
    %v5211 = vsel %vm5210, %v5204, %v4017
    %s5212 = scalar_lea.vmem [#allocation2], 32
    %v5213 = vld [vmem:[%s5212] sm:$0xff]
    %5214 = vmatprep.subr.mxu0 0.0
    %5215 = vmatpush1.msra.mxu0 %v347
    %5216 = vmatprep.subr.mxu0 0.0
    %5217 = vmatpush1.msra.mxu0 %v348
    %5218 = vmatprep.subr.mxu0 0.0
    %5219 = vmatpush1.msra.mxu0 %v349
    %5220 = vmatprep.subr.mxu0 0.0
    %5221 = vmatpush1.msra.mxu0 %v350
    %5222 = vmatprep.subr.mxu0 0.0
    %5223 = vmatpush1.msra.mxu0 0.0
    %5224 = vmatprep.subr.mxu0 0.0
    %5225 = vmatpush1.msra.mxu0 0.0
    %5226 = vmatprep.subr.mxu0 0.0
    %5227 = vmatpush1.msra.mxu0 0.0
    %5228 = vmatprep.subr.mxu0 0.0
    %5229 = vmatpush1.msra.mxu0 0.0
    %5230 = vmatprep.subr.mxu0 0.0
    %5231 = vmatpush1.msra.mxu0 0.0
    %5232 = vmatprep.subr.mxu0 0.0
    %5233 = vmatpush1.msra.mxu0 0.0
    %5234 = vmatprep.subr.mxu0 0.0
    %5235 = vmatpush1.msra.mxu0 0.0
    %5236 = vmatprep.subr.mxu0 0.0
    %5237 = vmatpush1.msra.mxu0 0.0
    %5238 = vmatprep.subr.mxu0 0.0
    %5239 = vmatpush1.msra.mxu0 0.0
    %5240 = vmatprep.subr.mxu0 0.0
    %5241 = vmatpush1.msra.mxu0 0.0
    %5242 = vmatprep.subr.mxu0 0.0
    %5243 = vmatpush1.msra.mxu0 0.0
    %5244 = vmatprep.subr.mxu0 0.0
    %5245 = vmatpush1.msra.mxu0 0.0
    %5246 = vmatprep.subr.mxu0 0.0
    %5247 = vmatpush1.msra.mxu0 0.0
    %5248 = vmatprep.subr.mxu0 0.0
    %5249 = vmatpush1.msra.mxu0 0.0
    %5250 = vmatprep.subr.mxu0 0.0
    %5251 = vmatpush1.msra.mxu0 0.0
    %5252 = vmatprep.subr.mxu0 0.0
    %5253 = vmatpush1.msra.mxu0 0.0
    %5254 = vmatprep.subr.mxu0 0.0
    %5255 = vmatpush1.msra.mxu0 0.0
    %5256 = vmatprep.subr.mxu0 0.0
    %5257 = vmatpush1.msra.mxu0 0.0
    %5258 = vmatprep.subr.mxu0 0.0
    %5259 = vmatpush1.msra.mxu0 0.0
    %5260 = vmatprep.subr.mxu0 0.0
    %5261 = vmatpush1.msra.mxu0 0.0
    %5262 = vmatprep.subr.mxu0 0.0
    %5263 = vmatpush1.msra.mxu0 0.0
    %5264 = vmatprep.subr.mxu0 0.0
    %5265 = vmatpush1.msra.mxu0 0.0
    %5266 = vmatprep.subr.mxu0 0.0
    %5267 = vmatpush1.msra.mxu0 0.0
    %5268 = vmatprep.subr.mxu0 0.0
    %5269 = vmatpush1.msra.mxu0 0.0
    %5270 = vmatprep.subr.mxu0 0.0
    %5271 = vmatpush1.msra.mxu0 0.0
    %5272 = vmatprep.subr.mxu0 0.0
    %5273 = vmatpush1.msra.mxu0 0.0
    %5274 = vmatprep.subr.mxu0 0.0
    %5275 = vmatpush1.msra.mxu0 0.0
    %5276 = vmatprep.subr.mxu0 0.0
    %5277 = vmatpush1.msra.mxu0 0.0
    %5278 = vmatprep.mubr.f32.mxu0 0.0
    %5279 = vmatmul.mubr.f32.gmra.mrb[0].mxu0 %v4685
    %v5280 = vpop.f32.mrb[0].mxu0
    %v5281 = vadd.f32 0.0, %v5280
    %v5282 = vpop.f32.mrb[0].mxu0
    %5283 = vdwg.mxu0
    %v5285 = vsel %vm510, %v5213, 0
    %5287 = vmatprep.subr.mxu0 0.0
    %5288 = vmatpush1.msra.mxu0 %v323
    %5289 = vmatprep.subr.mxu0 0.0
    %5290 = vmatpush1.msra.mxu0 %v324
    %5291 = vmatprep.subr.mxu0 0.0
    %5292 = vmatpush1.msra.mxu0 0.0
    %5293 = vmatprep.subr.mxu0 0.0
    %5294 = vmatpush1.msra.mxu0 0.0
    %5295 = vmatprep.subr.mxu0 0.0
    %5296 = vmatpush1.msra.mxu0 0.0
    %5297 = vmatprep.subr.mxu0 0.0
    %5298 = vmatpush1.msra.mxu0 0.0
    %5299 = vmatprep.subr.mxu0 0.0
    %5300 = vmatpush1.msra.mxu0 0.0
    %5301 = vmatprep.subr.mxu0 0.0
    %5302 = vmatpush1.msra.mxu0 0.0
    %5303 = vmatprep.subr.mxu0 0.0
    %5304 = vmatpush1.msra.mxu0 0.0
    %5305 = vmatprep.subr.mxu0 0.0
    %5306 = vmatpush1.msra.mxu0 0.0
    %5307 = vmatprep.subr.mxu0 0.0
    %5308 = vmatpush1.msra.mxu0 0.0
    %5309 = vmatprep.subr.mxu0 0.0
    %5310 = vmatpush1.msra.mxu0 0.0
    %5311 = vmatprep.subr.mxu0 0.0
    %5312 = vmatpush1.msra.mxu0 0.0
    %5313 = vmatprep.subr.mxu0 0.0
    %5314 = vmatpush1.msra.mxu0 0.0
    %5315 = vmatprep.subr.mxu0 0.0
    %5316 = vmatpush1.msra.mxu0 0.0
    %5317 = vmatprep.subr.mxu0 0.0
    %5318 = vmatpush1.msra.mxu0 0.0
    %5319 = vmatprep.subr.mxu0 0.0
    %5320 = vmatpush1.msra.mxu0 0.0
    %5321 = vmatprep.subr.mxu0 0.0
    %5322 = vmatpush1.msra.mxu0 0.0
    %5323 = vmatprep.subr.mxu0 0.0
    %5324 = vmatpush1.msra.mxu0 0.0
    %5325 = vmatprep.subr.mxu0 0.0
    %5326 = vmatpush1.msra.mxu0 0.0
    %5327 = vmatprep.subr.mxu0 0.0
    %5328 = vmatpush1.msra.mxu0 0.0
    %5329 = vmatprep.subr.mxu0 0.0
    %5330 = vmatpush1.msra.mxu0 0.0
    %5331 = vmatprep.subr.mxu0 0.0
    %5332 = vmatpush1.msra.mxu0 0.0
    %5333 = vmatprep.subr.mxu0 0.0
    %5334 = vmatpush1.msra.mxu0 0.0
    %5335 = vmatprep.subr.mxu0 0.0
    %5336 = vmatpush1.msra.mxu0 0.0
    %5337 = vmatprep.subr.mxu0 0.0
    %5338 = vmatpush1.msra.mxu0 0.0
    %5339 = vmatprep.subr.mxu0 0.0
    %5340 = vmatpush1.msra.mxu0 0.0
    %5341 = vmatprep.subr.mxu0 0.0
    %5342 = vmatpush1.msra.mxu0 0.0
    %5343 = vmatprep.subr.mxu0 0.0
    %5344 = vmatpush1.msra.mxu0 0.0
    %5345 = vmatprep.subr.mxu0 0.0
    %5346 = vmatpush1.msra.mxu0 0.0
    %5347 = vmatprep.subr.mxu0 0.0
    %5348 = vmatpush1.msra.mxu0 0.0
    %5349 = vmatprep.subr.mxu0 0.0
    %5350 = vmatpush1.msra.mxu0 0.0
    %5351 = vmatprep.mubr.f32.mxu0 0.0
    %5352 = vmatmul.mubr.f32.gmra.mrb[0].mxu0 %v5285
    %v5353 = vpop.f32.mrb[0].mxu0
    %v5354 = vadd.f32 %v5281, %v5353
    %v5355 = vpop.f32.mrb[0].mxu0
    %5356 = vdwg.mxu0
    %v5357 = vadd.f32 %v5354, %v384
    %5358 = vmatprep.subr.mxu0 0.0
    %5359 = vmatpush1.msra.mxu0 %v351
    %5360 = vmatprep.subr.mxu0 0.0
    %5361 = vmatpush1.msra.mxu0 %v352
    %5362 = vmatprep.subr.mxu0 0.0
    %5363 = vmatpush1.msra.mxu0 %v353
    %5364 = vmatprep.subr.mxu0 0.0
    %5365 = vmatpush1.msra.mxu0 %v354
    %5366 = vmatprep.subr.mxu0 0.0
    %5367 = vmatpush1.msra.mxu0 0.0
    %5368 = vmatprep.subr.mxu0 0.0
    %5369 = vmatpush1.msra.mxu0 0.0
    %5370 = vmatprep.subr.mxu0 0.0
    %5371 = vmatpush1.msra.mxu0 0.0
    %5372 = vmatprep.subr.mxu0 0.0
    %5373 = vmatpush1.msra.mxu0 0.0
    %5374 = vmatprep.subr.mxu0 0.0
    %5375 = vmatpush1.msra.mxu0 0.0
    %5376 = vmatprep.subr.mxu0 0.0
    %5377 = vmatpush1.msra.mxu0 0.0
    %5378 = vmatprep.subr.mxu0 0.0
    %5379 = vmatpush1.msra.mxu0 0.0
    %5380 = vmatprep.subr.mxu0 0.0
    %5381 = vmatpush1.msra.mxu0 0.0
    %5382 = vmatprep.subr.mxu0 0.0
    %5383 = vmatpush1.msra.mxu0 0.0
    %5384 = vmatprep.subr.mxu0 0.0
    %5385 = vmatpush1.msra.mxu0 0.0
    %5386 = vmatprep.subr.mxu0 0.0
    %5387 = vmatpush1.msra.mxu0 0.0
    %5388 = vmatprep.subr.mxu0 0.0
    %5389 = vmatpush1.msra.mxu0 0.0
    %5390 = vmatprep.subr.mxu0 0.0
    %5391 = vmatpush1.msra.mxu0 0.0
    %5392 = vmatprep.subr.mxu0 0.0
    %5393 = vmatpush1.msra.mxu0 0.0
    %5394 = vmatprep.subr.mxu0 0.0
    %5395 = vmatpush1.msra.mxu0 0.0
    %5396 = vmatprep.subr.mxu0 0.0
    %5397 = vmatpush1.msra.mxu0 0.0
    %5398 = vmatprep.subr.mxu0 0.0
    %5399 = vmatpush1.msra.mxu0 0.0
    %5400 = vmatprep.subr.mxu0 0.0
    %5401 = vmatpush1.msra.mxu0 0.0
    %5402 = vmatprep.subr.mxu0 0.0
    %5403 = vmatpush1.msra.mxu0 0.0
    %5404 = vmatprep.subr.mxu0 0.0
    %5405 = vmatpush1.msra.mxu0 0.0
    %5406 = vmatprep.subr.mxu0 0.0
    %5407 = vmatpush1.msra.mxu0 0.0
    %5408 = vmatprep.subr.mxu0 0.0
    %5409 = vmatpush1.msra.mxu0 0.0
    %5410 = vmatprep.subr.mxu0 0.0
    %5411 = vmatpush1.msra.mxu0 0.0
    %5412 = vmatprep.subr.mxu0 0.0
    %5413 = vmatpush1.msra.mxu0 0.0
    %5414 = vmatprep.subr.mxu0 0.0
    %5415 = vmatpush1.msra.mxu0 0.0
    %5416 = vmatprep.subr.mxu0 0.0
    %5417 = vmatpush1.msra.mxu0 0.0
    %5418 = vmatprep.subr.mxu0 0.0
    %5419 = vmatpush1.msra.mxu0 0.0
    %5420 = vmatprep.subr.mxu0 0.0
    %5421 = vmatpush1.msra.mxu0 0.0
    %5422 = vmatprep.mubr.f32.mxu0 0.0
    %5423 = vmatmul.mubr.f32.gmra.mrb[0].mxu0 %v4685
    %v5424 = vpop.f32.mrb[0].mxu0
    %v5425 = vadd.f32 0.0, %v5424
    %v5426 = vpop.f32.mrb[0].mxu0
    %5427 = vdwg.mxu0
    %5428 = vmatprep.subr.mxu0 0.0
    %5429 = vmatpush1.msra.mxu0 %v325
    %5430 = vmatprep.subr.mxu0 0.0
    %5431 = vmatpush1.msra.mxu0 %v326
    %5432 = vmatprep.subr.mxu0 0.0
    %5433 = vmatpush1.msra.mxu0 0.0
    %5434 = vmatprep.subr.mxu0 0.0
    %5435 = vmatpush1.msra.mxu0 0.0
    %5436 = vmatprep.subr.mxu0 0.0
    %5437 = vmatpush1.msra.mxu0 0.0
    %5438 = vmatprep.subr.mxu0 0.0
    %5439 = vmatpush1.msra.mxu0 0.0
    %5440 = vmatprep.subr.mxu0 0.0
    %5441 = vmatpush1.msra.mxu0 0.0
    %5442 = vmatprep.subr.mxu0 0.0
    %5443 = vmatpush1.msra.mxu0 0.0
    %5444 = vmatprep.subr.mxu0 0.0
    %5445 = vmatpush1.msra.mxu0 0.0
    %5446 = vmatprep.subr.mxu0 0.0
    %5447 = vmatpush1.msra.mxu0 0.0
    %5448 = vmatprep.subr.mxu0 0.0
    %5449 = vmatpush1.msra.mxu0 0.0
    %5450 = vmatprep.subr.mxu0 0.0
    %5451 = vmatpush1.msra.mxu0 0.0
    %5452 = vmatprep.subr.mxu0 0.0
    %5453 = vmatpush1.msra.mxu0 0.0
    %5454 = vmatprep.subr.mxu0 0.0
    %5455 = vmatpush1.msra.mxu0 0.0
    %5456 = vmatprep.subr.mxu0 0.0
    %5457 = vmatpush1.msra.mxu0 0.0
    %5458 = vmatprep.subr.mxu0 0.0
    %5459 = vmatpush1.msra.mxu0 0.0
    %5460 = vmatprep.subr.mxu0 0.0
    %5461 = vmatpush1.msra.mxu0 0.0
    %5462 = vmatprep.subr.mxu0 0.0
    %5463 = vmatpush1.msra.mxu0 0.0
    %5464 = vmatprep.subr.mxu0 0.0
    %5465 = vmatpush1.msra.mxu0 0.0
    %5466 = vmatprep.subr.mxu0 0.0
    %5467 = vmatpush1.msra.mxu0 0.0
    %5468 = vmatprep.subr.mxu0 0.0
    %5469 = vmatpush1.msra.mxu0 0.0
    %5470 = vmatprep.subr.mxu0 0.0
    %5471 = vmatpush1.msra.mxu0 0.0
    %5472 = vmatprep.subr.mxu0 0.0
    %5473 = vmatpush1.msra.mxu0 0.0
    %5474 = vmatprep.subr.mxu0 0.0
    %5475 = vmatpush1.msra.mxu0 0.0
    %5476 = vmatprep.subr.mxu0 0.0
    %5477 = vmatpush1.msra.mxu0 0.0
    %5478 = vmatprep.subr.mxu0 0.0
    %5479 = vmatpush1.msra.mxu0 0.0
    %5480 = vmatprep.subr.mxu0 0.0
    %5481 = vmatpush1.msra.mxu0 0.0
    %5482 = vmatprep.subr.mxu0 0.0
    %5483 = vmatpush1.msra.mxu0 0.0
    %5484 = vmatprep.subr.mxu0 0.0
    %5485 = vmatpush1.msra.mxu0 0.0
    %5486 = vmatprep.subr.mxu0 0.0
    %5487 = vmatpush1.msra.mxu0 0.0
    %5488 = vmatprep.subr.mxu0 0.0
    %5489 = vmatpush1.msra.mxu0 0.0
    %5490 = vmatprep.subr.mxu0 0.0
    %5491 = vmatpush1.msra.mxu0 0.0
    %5492 = vmatprep.mubr.f32.mxu0 0.0
    %5493 = vmatmul.mubr.f32.gmra.mrb[0].mxu0 %v5285
    %v5494 = vpop.f32.mrb[0].mxu0
    %v5495 = vadd.f32 %v5425, %v5494
    %v5496 = vpop.f32.mrb[0].mxu0
    %5497 = vdwg.mxu0
    %v5498 = vadd.f32 %v5495, %v391
    %5499 = vmatprep.subr.mxu0 0.0
    %5500 = vmatpush1.msra.mxu0 %v355
    %5501 = vmatprep.subr.mxu0 0.0
    %5502 = vmatpush1.msra.mxu0 %v356
    %5503 = vmatprep.subr.mxu0 0.0
    %5504 = vmatpush1.msra.mxu0 %v357
    %5505 = vmatprep.subr.mxu0 0.0
    %5506 = vmatpush1.msra.mxu0 %v358
    %5507 = vmatprep.subr.mxu0 0.0
    %5508 = vmatpush1.msra.mxu0 0.0
    %5509 = vmatprep.subr.mxu0 0.0
    %5510 = vmatpush1.msra.mxu0 0.0
    %5511 = vmatprep.subr.mxu0 0.0
    %5512 = vmatpush1.msra.mxu0 0.0
    %5513 = vmatprep.subr.mxu0 0.0
    %5514 = vmatpush1.msra.mxu0 0.0
    %5515 = vmatprep.subr.mxu0 0.0
    %5516 = vmatpush1.msra.mxu0 0.0
    %5517 = vmatprep.subr.mxu0 0.0
    %5518 = vmatpush1.msra.mxu0 0.0
    %5519 = vmatprep.subr.mxu0 0.0
    %5520 = vmatpush1.msra.mxu0 0.0
    %5521 = vmatprep.subr.mxu0 0.0
    %5522 = vmatpush1.msra.mxu0 0.0
    %5523 = vmatprep.subr.mxu0 0.0
    %5524 = vmatpush1.msra.mxu0 0.0
    %5525 = vmatprep.subr.mxu0 0.0
    %5526 = vmatpush1.msra.mxu0 0.0
    %5527 = vmatprep.subr.mxu0 0.0
    %5528 = vmatpush1.msra.mxu0 0.0
    %5529 = vmatprep.subr.mxu0 0.0
    %5530 = vmatpush1.msra.mxu0 0.0
    %5531 = vmatprep.subr.mxu0 0.0
    %5532 = vmatpush1.msra.mxu0 0.0
    %5533 = vmatprep.subr.mxu0 0.0
    %5534 = vmatpush1.msra.mxu0 0.0
    %5535 = vmatprep.subr.mxu0 0.0
    %5536 = vmatpush1.msra.mxu0 0.0
    %5537 = vmatprep.subr.mxu0 0.0
    %5538 = vmatpush1.msra.mxu0 0.0
    %5539 = vmatprep.subr.mxu0 0.0
    %5540 = vmatpush1.msra.mxu0 0.0
    %5541 = vmatprep.subr.mxu0 0.0
    %5542 = vmatpush1.msra.mxu0 0.0
    %5543 = vmatprep.subr.mxu0 0.0
    %5544 = vmatpush1.msra.mxu0 0.0
    %5545 = vmatprep.subr.mxu0 0.0
    %5546 = vmatpush1.msra.mxu0 0.0
    %5547 = vmatprep.subr.mxu0 0.0
    %5548 = vmatpush1.msra.mxu0 0.0
    %5549 = vmatprep.subr.mxu0 0.0
    %5550 = vmatpush1.msra.mxu0 0.0
    %5551 = vmatprep.subr.mxu0 0.0
    %5552 = vmatpush1.msra.mxu0 0.0
    %5553 = vmatprep.subr.mxu0 0.0
    %5554 = vmatpush1.msra.mxu0 0.0
    %5555 = vmatprep.subr.mxu0 0.0
    %5556 = vmatpush1.msra.mxu0 0.0
    %5557 = vmatprep.subr.mxu0 0.0
    %5558 = vmatpush1.msra.mxu0 0.0
    %5559 = vmatprep.subr.mxu0 0.0
    %5560 = vmatpush1.msra.mxu0 0.0
    %5561 = vmatprep.subr.mxu0 0.0
    %5562 = vmatpush1.msra.mxu0 0.0
    %5563 = vmatprep.mubr.f32.mxu0 0.0
    %5564 = vmatmul.mubr.f32.gmra.mrb[0].mxu0 %v4685
    %v5565 = vpop.f32.mrb[0].mxu0
    %v5566 = vadd.f32 0.0, %v5565
    %v5567 = vpop.f32.mrb[0].mxu0
    %5568 = vdwg.mxu0
    %5569 = vmatprep.subr.mxu0 0.0
    %5570 = vmatpush1.msra.mxu0 %v327
    %5571 = vmatprep.subr.mxu0 0.0
    %5572 = vmatpush1.msra.mxu0 %v328
    %5573 = vmatprep.subr.mxu0 0.0
    %5574 = vmatpush1.msra.mxu0 0.0
    %5575 = vmatprep.subr.mxu0 0.0
    %5576 = vmatpush1.msra.mxu0 0.0
    %5577 = vmatprep.subr.mxu0 0.0
    %5578 = vmatpush1.msra.mxu0 0.0
    %5579 = vmatprep.subr.mxu0 0.0
    %5580 = vmatpush1.msra.mxu0 0.0
    %5581 = vmatprep.subr.mxu0 0.0
    %5582 = vmatpush1.msra.mxu0 0.0
    %5583 = vmatprep.subr.mxu0 0.0
    %5584 = vmatpush1.msra.mxu0 0.0
    %5585 = vmatprep.subr.mxu0 0.0
    %5586 = vmatpush1.msra.mxu0 0.0
    %5587 = vmatprep.subr.mxu0 0.0
    %5588 = vmatpush1.msra.mxu0 0.0
    %5589 = vmatprep.subr.mxu0 0.0
    %5590 = vmatpush1.msra.mxu0 0.0
    %5591 = vmatprep.subr.mxu0 0.0
    %5592 = vmatpush1.msra.mxu0 0.0
    %5593 = vmatprep.subr.mxu0 0.0
    %5594 = vmatpush1.msra.mxu0 0.0
    %5595 = vmatprep.subr.mxu0 0.0
    %5596 = vmatpush1.msra.mxu0 0.0
    %5597 = vmatprep.subr.mxu0 0.0
    %5598 = vmatpush1.msra.mxu0 0.0
    %5599 = vmatprep.subr.mxu0 0.0
    %5600 = vmatpush1.msra.mxu0 0.0
    %5601 = vmatprep.subr.mxu0 0.0
    %5602 = vmatpush1.msra.mxu0 0.0
    %5603 = vmatprep.subr.mxu0 0.0
    %5604 = vmatpush1.msra.mxu0 0.0
    %5605 = vmatprep.subr.mxu0 0.0
    %5606 = vmatpush1.msra.mxu0 0.0
    %5607 = vmatprep.subr.mxu0 0.0
    %5608 = vmatpush1.msra.mxu0 0.0
    %5609 = vmatprep.subr.mxu0 0.0
    %5610 = vmatpush1.msra.mxu0 0.0
    %5611 = vmatprep.subr.mxu0 0.0
    %5612 = vmatpush1.msra.mxu0 0.0
    %5613 = vmatprep.subr.mxu0 0.0
    %5614 = vmatpush1.msra.mxu0 0.0
    %5615 = vmatprep.subr.mxu0 0.0
    %5616 = vmatpush1.msra.mxu0 0.0
    %5617 = vmatprep.subr.mxu0 0.0
    %5618 = vmatpush1.msra.mxu0 0.0
    %5619 = vmatprep.subr.mxu0 0.0
    %5620 = vmatpush1.msra.mxu0 0.0
    %5621 = vmatprep.subr.mxu0 0.0
    %5622 = vmatpush1.msra.mxu0 0.0
    %5623 = vmatprep.subr.mxu0 0.0
    %5624 = vmatpush1.msra.mxu0 0.0
    %5625 = vmatprep.subr.mxu0 0.0
    %5626 = vmatpush1.msra.mxu0 0.0
    %5627 = vmatprep.subr.mxu0 0.0
    %5628 = vmatpush1.msra.mxu0 0.0
    %5629 = vmatprep.subr.mxu0 0.0
    %5630 = vmatpush1.msra.mxu0 0.0
    %5631 = vmatprep.subr.mxu0 0.0
    %5632 = vmatpush1.msra.mxu0 0.0
    %5633 = vmatprep.mubr.f32.mxu0 0.0
    %5634 = vmatmul.mubr.f32.gmra.mrb[0].mxu0 %v5285
    %v5635 = vpop.f32.mrb[0].mxu0
    %v5636 = vadd.f32 %v5566, %v5635
    %v5637 = vpop.f32.mrb[0].mxu0
    %5638 = vdwg.mxu0
    %v5639 = vadd.f32 %v5636, %v398
    %5640 = vmatprep.subr.mxu0 0.0
    %5641 = vmatpush1.msra.mxu0 %v359
    %5642 = vmatprep.subr.mxu0 0.0
    %5643 = vmatpush1.msra.mxu0 %v360
    %5644 = vmatprep.subr.mxu0 0.0
    %5645 = vmatpush1.msra.mxu0 %v361
    %5646 = vmatprep.subr.mxu0 0.0
    %5647 = vmatpush1.msra.mxu0 %v362
    %5648 = vmatprep.subr.mxu0 0.0
    %5649 = vmatpush1.msra.mxu0 0.0
    %5650 = vmatprep.subr.mxu0 0.0
    %5651 = vmatpush1.msra.mxu0 0.0
    %5652 = vmatprep.subr.mxu0 0.0
    %5653 = vmatpush1.msra.mxu0 0.0
    %5654 = vmatprep.subr.mxu0 0.0
    %5655 = vmatpush1.msra.mxu0 0.0
    %5656 = vmatprep.subr.mxu0 0.0
    %5657 = vmatpush1.msra.mxu0 0.0
    %5658 = vmatprep.subr.mxu0 0.0
    %5659 = vmatpush1.msra.mxu0 0.0
    %5660 = vmatprep.subr.mxu0 0.0
    %5661 = vmatpush1.msra.mxu0 0.0
    %5662 = vmatprep.subr.mxu0 0.0
    %5663 = vmatpush1.msra.mxu0 0.0
    %5664 = vmatprep.subr.mxu0 0.0
    %5665 = vmatpush1.msra.mxu0 0.0
    %5666 = vmatprep.subr.mxu0 0.0
    %5667 = vmatpush1.msra.mxu0 0.0
    %5668 = vmatprep.subr.mxu0 0.0
    %5669 = vmatpush1.msra.mxu0 0.0
    %5670 = vmatprep.subr.mxu0 0.0
    %5671 = vmatpush1.msra.mxu0 0.0
    %5672 = vmatprep.subr.mxu0 0.0
    %5673 = vmatpush1.msra.mxu0 0.0
    %5674 = vmatprep.subr.mxu0 0.0
    %5675 = vmatpush1.msra.mxu0 0.0
    %5676 = vmatprep.subr.mxu0 0.0
    %5677 = vmatpush1.msra.mxu0 0.0
    %5678 = vmatprep.subr.mxu0 0.0
    %5679 = vmatpush1.msra.mxu0 0.0
    %5680 = vmatprep.subr.mxu0 0.0
    %5681 = vmatpush1.msra.mxu0 0.0
    %5682 = vmatprep.subr.mxu0 0.0
    %5683 = vmatpush1.msra.mxu0 0.0
    %5684 = vmatprep.subr.mxu0 0.0
    %5685 = vmatpush1.msra.mxu0 0.0
    %5686 = vmatprep.subr.mxu0 0.0
    %5687 = vmatpush1.msra.mxu0 0.0
    %5688 = vmatprep.subr.mxu0 0.0
    %5689 = vmatpush1.msra.mxu0 0.0
    %5690 = vmatprep.subr.mxu0 0.0
    %5691 = vmatpush1.msra.mxu0 0.0
    %5692 = vmatprep.subr.mxu0 0.0
    %5693 = vmatpush1.msra.mxu0 0.0
    %5694 = vmatprep.subr.mxu0 0.0
    %5695 = vmatpush1.msra.mxu0 0.0
    %5696 = vmatprep.subr.mxu0 0.0
    %5697 = vmatpush1.msra.mxu0 0.0
    %5698 = vmatprep.subr.mxu0 0.0
    %5699 = vmatpush1.msra.mxu0 0.0
    %5700 = vmatprep.subr.mxu0 0.0
    %5701 = vmatpush1.msra.mxu0 0.0
    %5702 = vmatprep.subr.mxu0 0.0
    %5703 = vmatpush1.msra.mxu0 0.0
    %5704 = vmatprep.mubr.f32.mxu0 0.0
    %5705 = vmatmul.mubr.f32.gmra.mrb[0].mxu0 %v4685
    %v5706 = vpop.f32.mrb[0].mxu0
    %v5707 = vadd.f32 0.0, %v5706
    %v5708 = vpop.f32.mrb[0].mxu0
    %5709 = vdwg.mxu0
    %5710 = vmatprep.subr.mxu0 0.0
    %5711 = vmatpush1.msra.mxu0 %v329
    %5712 = vmatprep.subr.mxu0 0.0
    %5713 = vmatpush1.msra.mxu0 %v330
    %5714 = vmatprep.subr.mxu0 0.0
    %5715 = vmatpush1.msra.mxu0 0.0
    %5716 = vmatprep.subr.mxu0 0.0
    %5717 = vmatpush1.msra.mxu0 0.0
    %5718 = vmatprep.subr.mxu0 0.0
    %5719 = vmatpush1.msra.mxu0 0.0
    %5720 = vmatprep.subr.mxu0 0.0
    %5721 = vmatpush1.msra.mxu0 0.0
    %5722 = vmatprep.subr.mxu0 0.0
    %5723 = vmatpush1.msra.mxu0 0.0
    %5724 = vmatprep.subr.mxu0 0.0
    %5725 = vmatpush1.msra.mxu0 0.0
    %5726 = vmatprep.subr.mxu0 0.0
    %5727 = vmatpush1.msra.mxu0 0.0
    %5728 = vmatprep.subr.mxu0 0.0
    %5729 = vmatpush1.msra.mxu0 0.0
    %5730 = vmatprep.subr.mxu0 0.0
    %5731 = vmatpush1.msra.mxu0 0.0
    %5732 = vmatprep.subr.mxu0 0.0
    %5733 = vmatpush1.msra.mxu0 0.0
    %5734 = vmatprep.subr.mxu0 0.0
    %5735 = vmatpush1.msra.mxu0 0.0
    %5736 = vmatprep.subr.mxu0 0.0
    %5737 = vmatpush1.msra.mxu0 0.0
    %5738 = vmatprep.subr.mxu0 0.0
    %5739 = vmatpush1.msra.mxu0 0.0
    %5740 = vmatprep.subr.mxu0 0.0
    %5741 = vmatpush1.msra.mxu0 0.0
    %5742 = vmatprep.subr.mxu0 0.0
    %5743 = vmatpush1.msra.mxu0 0.0
    %5744 = vmatprep.subr.mxu0 0.0
    %5745 = vmatpush1.msra.mxu0 0.0
    %5746 = vmatprep.subr.mxu0 0.0
    %5747 = vmatpush1.msra.mxu0 0.0
    %5748 = vmatprep.subr.mxu0 0.0
    %5749 = vmatpush1.msra.mxu0 0.0
    %5750 = vmatprep.subr.mxu0 0.0
    %5751 = vmatpush1.msra.mxu0 0.0
    %5752 = vmatprep.subr.mxu0 0.0
    %5753 = vmatpush1.msra.mxu0 0.0
    %5754 = vmatprep.subr.mxu0 0.0
    %5755 = vmatpush1.msra.mxu0 0.0
    %5756 = vmatprep.subr.mxu0 0.0
    %5757 = vmatpush1.msra.mxu0 0.0
    %5758 = vmatprep.subr.mxu0 0.0
    %5759 = vmatpush1.msra.mxu0 0.0
    %5760 = vmatprep.subr.mxu0 0.0
    %5761 = vmatpush1.msra.mxu0 0.0
    %5762 = vmatprep.subr.mxu0 0.0
    %5763 = vmatpush1.msra.mxu0 0.0
    %5764 = vmatprep.subr.mxu0 0.0
    %5765 = vmatpush1.msra.mxu0 0.0
    %5766 = vmatprep.subr.mxu0 0.0
    %5767 = vmatpush1.msra.mxu0 0.0
    %5768 = vmatprep.subr.mxu0 0.0
    %5769 = vmatpush1.msra.mxu0 0.0
    %5770 = vmatprep.subr.mxu0 0.0
    %5771 = vmatpush1.msra.mxu0 0.0
    %5772 = vmatprep.subr.mxu0 0.0
    %5773 = vmatpush1.msra.mxu0 0.0
    %5774 = vmatprep.mubr.f32.mxu0 0.0
    %5775 = vmatmul.mubr.f32.gmra.mrb[0].mxu0 %v5285
    %v5776 = vpop.f32.mrb[0].mxu0
    %v5777 = vadd.f32 %v5707, %v5776
    %v5778 = vpop.f32.mrb[0].mxu0
    %5779 = vdwg.mxu0
    %v5780 = vadd.f32 %v5777, %v405
    %v5781 = vxor.u32 %v5357, 2147483648
    %v5782 = vmul.f32 %v5781, 1.442695
    %v5783 = vpow.pop %v5782
    %v5784 = vadd.f32 %v5783, 1.0
    %v5785 = vrcp.pop %v5784
    %v5786 = vmul.f32 1.0, %v5785
    %v5787 = vxor.u32 %v5498, 2147483648
    %v5788 = vmul.f32 %v5787, 1.442695
    %v5789 = vpow.pop %v5788
    %v5790 = vadd.f32 %v5789, 1.0
    %v5791 = vrcp.pop %v5790
    %v5792 = vmul.f32 1.0, %v5791
    %v5793 = vtanh.pop %v5639
    %v5794 = vxor.u32 %v5780, 2147483648
    %v5795 = vmul.f32 %v5794, 1.442695
    %v5796 = vpow.pop %v5795
    %v5797 = vadd.f32 %v5796, 1.0
    %v5798 = vrcp.pop %v5797
    %v5799 = vmul.f32 1.0, %v5798
    %v5800 = vmul.f32 %v5792, %v4608
    %v5801 = vmul.f32 %v5786, %v5793
    %v5802 = vadd.f32 %v5800, %v5801
    %v5803 = vtanh.pop %v5802
    %v5804 = vmul.f32 %v5799, %v5803
    %v5806 = vsel %vm436, %v5204, 0
    %5808 = vmatprep.subr.mxu0 0.0
    %5809 = vmatpush1.msra.mxu0 %v363
    %5810 = vmatprep.subr.mxu0 0.0
    %5811 = vmatpush1.msra.mxu0 %v364
    %5812 = vmatprep.subr.mxu0 0.0
    %5813 = vmatpush1.msra.mxu0 %v365
    %5814 = vmatprep.subr.mxu0 0.0
    %5815 = vmatpush1.msra.mxu0 %v366
    %5816 = vmatprep.subr.mxu0 0.0
    %5817 = vmatpush1.msra.mxu0 0.0
    %5818 = vmatprep.subr.mxu0 0.0
    %5819 = vmatpush1.msra.mxu0 0.0
    %5820 = vmatprep.subr.mxu0 0.0
    %5821 = vmatpush1.msra.mxu0 0.0
    %5822 = vmatprep.subr.mxu0 0.0
    %5823 = vmatpush1.msra.mxu0 0.0
    %5824 = vmatprep.subr.mxu0 0.0
    %5825 = vmatpush1.msra.mxu0 0.0
    %5826 = vmatprep.subr.mxu0 0.0
    %5827 = vmatpush1.msra.mxu0 0.0
    %5828 = vmatprep.subr.mxu0 0.0
    %5829 = vmatpush1.msra.mxu0 0.0
    %5830 = vmatprep.subr.mxu0 0.0
    %5831 = vmatpush1.msra.mxu0 0.0
    %5832 = vmatprep.subr.mxu0 0.0
    %5833 = vmatpush1.msra.mxu0 0.0
    %5834 = vmatprep.subr.mxu0 0.0
    %5835 = vmatpush1.msra.mxu0 0.0
    %5836 = vmatprep.subr.mxu0 0.0
    %5837 = vmatpush1.msra.mxu0 0.0
    %5838 = vmatprep.subr.mxu0 0.0
    %5839 = vmatpush1.msra.mxu0 0.0
    %5840 = vmatprep.subr.mxu0 0.0
    %5841 = vmatpush1.msra.mxu0 0.0
    %5842 = vmatprep.subr.mxu0 0.0
    %5843 = vmatpush1.msra.mxu0 0.0
    %5844 = vmatprep.subr.mxu0 0.0
    %5845 = vmatpush1.msra.mxu0 0.0
    %5846 = vmatprep.subr.mxu0 0.0
    %5847 = vmatpush1.msra.mxu0 0.0
    %5848 = vmatprep.subr.mxu0 0.0
    %5849 = vmatpush1.msra.mxu0 0.0
    %5850 = vmatprep.subr.mxu0 0.0
    %5851 = vmatpush1.msra.mxu0 0.0
    %5852 = vmatprep.subr.mxu0 0.0
    %5853 = vmatpush1.msra.mxu0 0.0
    %5854 = vmatprep.subr.mxu0 0.0
    %5855 = vmatpush1.msra.mxu0 0.0
    %5856 = vmatprep.subr.mxu0 0.0
    %5857 = vmatpush1.msra.mxu0 0.0
    %5858 = vmatprep.subr.mxu0 0.0
    %5859 = vmatpush1.msra.mxu0 0.0
    %5860 = vmatprep.subr.mxu0 0.0
    %5861 = vmatpush1.msra.mxu0 0.0
    %5862 = vmatprep.subr.mxu0 0.0
    %5863 = vmatpush1.msra.mxu0 0.0
    %5864 = vmatprep.subr.mxu0 0.0
    %5865 = vmatpush1.msra.mxu0 0.0
    %5866 = vmatprep.subr.mxu0 0.0
    %5867 = vmatpush1.msra.mxu0 0.0
    %5868 = vmatprep.subr.mxu0 0.0
    %5869 = vmatpush1.msra.mxu0 0.0
    %5870 = vmatprep.subr.mxu0 0.0
    %5871 = vmatpush1.msra.mxu0 0.0
    %5872 = vmatprep.mubr.f32.mxu0 0.0
    %5873 = vmatmul.mubr.f32.gmra.mrb[0].mxu0 %v5806
    %v5874 = vpop.f32.mrb[0].mxu0
    %v5875 = vadd.f32 0.0, %v5874
    %v5876 = vpop.f32.mrb[0].mxu0
    %5877 = vdwg.mxu0
    %v5879 = vsel %vm436, %v5804, 0
    %5881 = vmatprep.subr.mxu0 0.0
    %5882 = vmatpush1.msra.mxu0 %v331
    %5883 = vmatprep.subr.mxu0 0.0
    %5884 = vmatpush1.msra.mxu0 %v332
    %5885 = vmatprep.subr.mxu0 0.0
    %5886 = vmatpush1.msra.mxu0 %v333
    %5887 = vmatprep.subr.mxu0 0.0
    %5888 = vmatpush1.msra.mxu0 %v334
    %5889 = vmatprep.subr.mxu0 0.0
    %5890 = vmatpush1.msra.mxu0 0.0
    %5891 = vmatprep.subr.mxu0 0.0
    %5892 = vmatpush1.msra.mxu0 0.0
    %5893 = vmatprep.subr.mxu0 0.0
    %5894 = vmatpush1.msra.mxu0 0.0
    %5895 = vmatprep.subr.mxu0 0.0
    %5896 = vmatpush1.msra.mxu0 0.0
    %5897 = vmatprep.subr.mxu0 0.0
    %5898 = vmatpush1.msra.mxu0 0.0
    %5899 = vmatprep.subr.mxu0 0.0
    %5900 = vmatpush1.msra.mxu0 0.0
    %5901 = vmatprep.subr.mxu0 0.0
    %5902 = vmatpush1.msra.mxu0 0.0
    %5903 = vmatprep.subr.mxu0 0.0
    %5904 = vmatpush1.msra.mxu0 0.0
    %5905 = vmatprep.subr.mxu0 0.0
    %5906 = vmatpush1.msra.mxu0 0.0
    %5907 = vmatprep.subr.mxu0 0.0
    %5908 = vmatpush1.msra.mxu0 0.0
    %5909 = vmatprep.subr.mxu0 0.0
    %5910 = vmatpush1.msra.mxu0 0.0
    %5911 = vmatprep.subr.mxu0 0.0
    %5912 = vmatpush1.msra.mxu0 0.0
    %5913 = vmatprep.subr.mxu0 0.0
    %5914 = vmatpush1.msra.mxu0 0.0
    %5915 = vmatprep.subr.mxu0 0.0
    %5916 = vmatpush1.msra.mxu0 0.0
    %5917 = vmatprep.subr.mxu0 0.0
    %5918 = vmatpush1.msra.mxu0 0.0
    %5919 = vmatprep.subr.mxu0 0.0
    %5920 = vmatpush1.msra.mxu0 0.0
    %5921 = vmatprep.subr.mxu0 0.0
    %5922 = vmatpush1.msra.mxu0 0.0
    %5923 = vmatprep.subr.mxu0 0.0
    %5924 = vmatpush1.msra.mxu0 0.0
    %5925 = vmatprep.subr.mxu0 0.0
    %5926 = vmatpush1.msra.mxu0 0.0
    %5927 = vmatprep.subr.mxu0 0.0
    %5928 = vmatpush1.msra.mxu0 0.0
    %5929 = vmatprep.subr.mxu0 0.0
    %5930 = vmatpush1.msra.mxu0 0.0
    %5931 = vmatprep.subr.mxu0 0.0
    %5932 = vmatpush1.msra.mxu0 0.0
    %5933 = vmatprep.subr.mxu0 0.0
    %5934 = vmatpush1.msra.mxu0 0.0
    %5935 = vmatprep.subr.mxu0 0.0
    %5936 = vmatpush1.msra.mxu0 0.0
    %5937 = vmatprep.subr.mxu0 0.0
    %5938 = vmatpush1.msra.mxu0 0.0
    %5939 = vmatprep.subr.mxu0 0.0
    %5940 = vmatpush1.msra.mxu0 0.0
    %5941 = vmatprep.subr.mxu0 0.0
    %5942 = vmatpush1.msra.mxu0 0.0
    %5943 = vmatprep.subr.mxu0 0.0
    %5944 = vmatpush1.msra.mxu0 0.0
    %5945 = vmatprep.mubr.f32.mxu0 0.0
    %5946 = vmatmul.mubr.f32.gmra.mrb[0].mxu0 %v5879
    %v5947 = vpop.f32.mrb[0].mxu0
    %v5948 = vadd.f32 %v5875, %v5947
    %v5949 = vpop.f32.mrb[0].mxu0
    %5950 = vdwg.mxu0
    %v5951 = vadd.f32 %v5948, %v412
    %5952 = vmatprep.subr.mxu0 0.0
    %5953 = vmatpush1.msra.mxu0 %v367
    %5954 = vmatprep.subr.mxu0 0.0
    %5955 = vmatpush1.msra.mxu0 %v368
    %5956 = vmatprep.subr.mxu0 0.0
    %5957 = vmatpush1.msra.mxu0 %v369
    %5958 = vmatprep.subr.mxu0 0.0
    %5959 = vmatpush1.msra.mxu0 %v370
    %5960 = vmatprep.subr.mxu0 0.0
    %5961 = vmatpush1.msra.mxu0 0.0
    %5962 = vmatprep.subr.mxu0 0.0
    %5963 = vmatpush1.msra.mxu0 0.0
    %5964 = vmatprep.subr.mxu0 0.0
    %5965 = vmatpush1.msra.mxu0 0.0
    %5966 = vmatprep.subr.mxu0 0.0
    %5967 = vmatpush1.msra.mxu0 0.0
    %5968 = vmatprep.subr.mxu0 0.0
    %5969 = vmatpush1.msra.mxu0 0.0
    %5970 = vmatprep.subr.mxu0 0.0
    %5971 = vmatpush1.msra.mxu0 0.0
    %5972 = vmatprep.subr.mxu0 0.0
    %5973 = vmatpush1.msra.mxu0 0.0
    %5974 = vmatprep.subr.mxu0 0.0
    %5975 = vmatpush1.msra.mxu0 0.0
    %5976 = vmatprep.subr.mxu0 0.0
    %5977 = vmatpush1.msra.mxu0 0.0
    %5978 = vmatprep.subr.mxu0 0.0
    %5979 = vmatpush1.msra.mxu0 0.0
    %5980 = vmatprep.subr.mxu0 0.0
    %5981 = vmatpush1.msra.mxu0 0.0
    %5982 = vmatprep.subr.mxu0 0.0
    %5983 = vmatpush1.msra.mxu0 0.0
    %5984 = vmatprep.subr.mxu0 0.0
    %5985 = vmatpush1.msra.mxu0 0.0
    %5986 = vmatprep.subr.mxu0 0.0
    %5987 = vmatpush1.msra.mxu0 0.0
    %5988 = vmatprep.subr.mxu0 0.0
    %5989 = vmatpush1.msra.mxu0 0.0
    %5990 = vmatprep.subr.mxu0 0.0
    %5991 = vmatpush1.msra.mxu0 0.0
    %5992 = vmatprep.subr.mxu0 0.0
    %5993 = vmatpush1.msra.mxu0 0.0
    %5994 = vmatprep.subr.mxu0 0.0
    %5995 = vmatpush1.msra.mxu0 0.0
    %5996 = vmatprep.subr.mxu0 0.0
    %5997 = vmatpush1.msra.mxu0 0.0
    %5998 = vmatprep.subr.mxu0 0.0
    %5999 = vmatpush1.msra.mxu0 0.0
    %6000 = vmatprep.subr.mxu0 0.0
    %6001 = vmatpush1.msra.mxu0 0.0
    %6002 = vmatprep.subr.mxu0 0.0
    %6003 = vmatpush1.msra.mxu0 0.0
    %6004 = vmatprep.subr.mxu0 0.0
    %6005 = vmatpush1.msra.mxu0 0.0
    %6006 = vmatprep.subr.mxu0 0.0
    %6007 = vmatpush1.msra.mxu0 0.0
    %6008 = vmatprep.subr.mxu0 0.0
    %6009 = vmatpush1.msra.mxu0 0.0
    %6010 = vmatprep.subr.mxu0 0.0
    %6011 = vmatpush1.msra.mxu0 0.0
    %6012 = vmatprep.subr.mxu0 0.0
    %6013 = vmatpush1.msra.mxu0 0.0
    %6014 = vmatprep.subr.mxu0 0.0
    %6015 = vmatpush1.msra.mxu0 0.0
    %6016 = vmatprep.mubr.f32.mxu0 0.0
    %6017 = vmatmul.mubr.f32.gmra.mrb[0].mxu0 %v5806
    %v6018 = vpop.f32.mrb[0].mxu0
    %v6019 = vadd.f32 0.0, %v6018
    %v6020 = vpop.f32.mrb[0].mxu0
    %6021 = vdwg.mxu0
    %6022 = vmatprep.subr.mxu0 0.0
    %6023 = vmatpush1.msra.mxu0 %v335
    %6024 = vmatprep.subr.mxu0 0.0
    %6025 = vmatpush1.msra.mxu0 %v336
    %6026 = vmatprep.subr.mxu0 0.0
    %6027 = vmatpush1.msra.mxu0 %v337
    %6028 = vmatprep.subr.mxu0 0.0
    %6029 = vmatpush1.msra.mxu0 %v338
    %6030 = vmatprep.subr.mxu0 0.0
    %6031 = vmatpush1.msra.mxu0 0.0
    %6032 = vmatprep.subr.mxu0 0.0
    %6033 = vmatpush1.msra.mxu0 0.0
    %6034 = vmatprep.subr.mxu0 0.0
    %6035 = vmatpush1.msra.mxu0 0.0
    %6036 = vmatprep.subr.mxu0 0.0
    %6037 = vmatpush1.msra.mxu0 0.0
    %6038 = vmatprep.subr.mxu0 0.0
    %6039 = vmatpush1.msra.mxu0 0.0
    %6040 = vmatprep.subr.mxu0 0.0
    %6041 = vmatpush1.msra.mxu0 0.0
    %6042 = vmatprep.subr.mxu0 0.0
    %6043 = vmatpush1.msra.mxu0 0.0
    %6044 = vmatprep.subr.mxu0 0.0
    %6045 = vmatpush1.msra.mxu0 0.0
    %6046 = vmatprep.subr.mxu0 0.0
    %6047 = vmatpush1.msra.mxu0 0.0
    %6048 = vmatprep.subr.mxu0 0.0
    %6049 = vmatpush1.msra.mxu0 0.0
    %6050 = vmatprep.subr.mxu0 0.0
    %6051 = vmatpush1.msra.mxu0 0.0
    %6052 = vmatprep.subr.mxu0 0.0
    %6053 = vmatpush1.msra.mxu0 0.0
    %6054 = vmatprep.subr.mxu0 0.0
    %6055 = vmatpush1.msra.mxu0 0.0
    %6056 = vmatprep.subr.mxu0 0.0
    %6057 = vmatpush1.msra.mxu0 0.0
    %6058 = vmatprep.subr.mxu0 0.0
    %6059 = vmatpush1.msra.mxu0 0.0
    %6060 = vmatprep.subr.mxu0 0.0
    %6061 = vmatpush1.msra.mxu0 0.0
    %6062 = vmatprep.subr.mxu0 0.0
    %6063 = vmatpush1.msra.mxu0 0.0
    %6064 = vmatprep.subr.mxu0 0.0
    %6065 = vmatpush1.msra.mxu0 0.0
    %6066 = vmatprep.subr.mxu0 0.0
    %6067 = vmatpush1.msra.mxu0 0.0
    %6068 = vmatprep.subr.mxu0 0.0
    %6069 = vmatpush1.msra.mxu0 0.0
    %6070 = vmatprep.subr.mxu0 0.0
    %6071 = vmatpush1.msra.mxu0 0.0
    %6072 = vmatprep.subr.mxu0 0.0
    %6073 = vmatpush1.msra.mxu0 0.0
    %6074 = vmatprep.subr.mxu0 0.0
    %6075 = vmatpush1.msra.mxu0 0.0
    %6076 = vmatprep.subr.mxu0 0.0
    %6077 = vmatpush1.msra.mxu0 0.0
    %6078 = vmatprep.subr.mxu0 0.0
    %6079 = vmatpush1.msra.mxu0 0.0
    %6080 = vmatprep.subr.mxu0 0.0
    %6081 = vmatpush1.msra.mxu0 0.0
    %6082 = vmatprep.subr.mxu0 0.0
    %6083 = vmatpush1.msra.mxu0 0.0
    %6084 = vmatprep.subr.mxu0 0.0
    %6085 = vmatpush1.msra.mxu0 0.0
    %6086 = vmatprep.mubr.f32.mxu0 0.0
    %6087 = vmatmul.mubr.f32.gmra.mrb[0].mxu0 %v5879
    %v6088 = vpop.f32.mrb[0].mxu0
    %v6089 = vadd.f32 %v6019, %v6088
    %v6090 = vpop.f32.mrb[0].mxu0
    %6091 = vdwg.mxu0
    %v6092 = vadd.f32 %v6089, %v419
    %6093 = vmatprep.subr.mxu0 0.0
    %6094 = vmatpush1.msra.mxu0 %v371
    %6095 = vmatprep.subr.mxu0 0.0
    %6096 = vmatpush1.msra.mxu0 %v372
    %6097 = vmatprep.subr.mxu0 0.0
    %6098 = vmatpush1.msra.mxu0 %v373
    %6099 = vmatprep.subr.mxu0 0.0
    %6100 = vmatpush1.msra.mxu0 %v374
    %6101 = vmatprep.subr.mxu0 0.0
    %6102 = vmatpush1.msra.mxu0 0.0
    %6103 = vmatprep.subr.mxu0 0.0
    %6104 = vmatpush1.msra.mxu0 0.0
    %6105 = vmatprep.subr.mxu0 0.0
    %6106 = vmatpush1.msra.mxu0 0.0
    %6107 = vmatprep.subr.mxu0 0.0
    %6108 = vmatpush1.msra.mxu0 0.0
    %6109 = vmatprep.subr.mxu0 0.0
    %6110 = vmatpush1.msra.mxu0 0.0
    %6111 = vmatprep.subr.mxu0 0.0
    %6112 = vmatpush1.msra.mxu0 0.0
    %6113 = vmatprep.subr.mxu0 0.0
    %6114 = vmatpush1.msra.mxu0 0.0
    %6115 = vmatprep.subr.mxu0 0.0
    %6116 = vmatpush1.msra.mxu0 0.0
    %6117 = vmatprep.subr.mxu0 0.0
    %6118 = vmatpush1.msra.mxu0 0.0
    %6119 = vmatprep.subr.mxu0 0.0
    %6120 = vmatpush1.msra.mxu0 0.0
    %6121 = vmatprep.subr.mxu0 0.0
    %6122 = vmatpush1.msra.mxu0 0.0
    %6123 = vmatprep.subr.mxu0 0.0
    %6124 = vmatpush1.msra.mxu0 0.0
    %6125 = vmatprep.subr.mxu0 0.0
    %6126 = vmatpush1.msra.mxu0 0.0
    %6127 = vmatprep.subr.mxu0 0.0
    %6128 = vmatpush1.msra.mxu0 0.0
    %6129 = vmatprep.subr.mxu0 0.0
    %6130 = vmatpush1.msra.mxu0 0.0
    %6131 = vmatprep.subr.mxu0 0.0
    %6132 = vmatpush1.msra.mxu0 0.0
    %6133 = vmatprep.subr.mxu0 0.0
    %6134 = vmatpush1.msra.mxu0 0.0
    %6135 = vmatprep.subr.mxu0 0.0
    %6136 = vmatpush1.msra.mxu0 0.0
    %6137 = vmatprep.subr.mxu0 0.0
    %6138 = vmatpush1.msra.mxu0 0.0
    %6139 = vmatprep.subr.mxu0 0.0
    %6140 = vmatpush1.msra.mxu0 0.0
    %6141 = vmatprep.subr.mxu0 0.0
    %6142 = vmatpush1.msra.mxu0 0.0
    %6143 = vmatprep.subr.mxu0 0.0
    %6144 = vmatpush1.msra.mxu0 0.0
    %6145 = vmatprep.subr.mxu0 0.0
    %6146 = vmatpush1.msra.mxu0 0.0
    %6147 = vmatprep.subr.mxu0 0.0
    %6148 = vmatpush1.msra.mxu0 0.0
    %6149 = vmatprep.subr.mxu0 0.0
    %6150 = vmatpush1.msra.mxu0 0.0
    %6151 = vmatprep.subr.mxu0 0.0
    %6152 = vmatpush1.msra.mxu0 0.0
    %6153 = vmatprep.subr.mxu0 0.0
    %6154 = vmatpush1.msra.mxu0 0.0
    %6155 = vmatprep.subr.mxu0 0.0
    %6156 = vmatpush1.msra.mxu0 0.0
    %6157 = vmatprep.mubr.f32.mxu0 0.0
    %6158 = vmatmul.mubr.f32.gmra.mrb[0].mxu0 %v5806
    %v6159 = vpop.f32.mrb[0].mxu0
    %v6160 = vadd.f32 0.0, %v6159
    %v6161 = vpop.f32.mrb[0].mxu0
    %6162 = vdwg.mxu0
    %6163 = vmatprep.subr.mxu0 0.0
    %6164 = vmatpush1.msra.mxu0 %v339
    %6165 = vmatprep.subr.mxu0 0.0
    %6166 = vmatpush1.msra.mxu0 %v340
    %6167 = vmatprep.subr.mxu0 0.0
    %6168 = vmatpush1.msra.mxu0 %v341
    %6169 = vmatprep.subr.mxu0 0.0
    %6170 = vmatpush1.msra.mxu0 %v342
    %6171 = vmatprep.subr.mxu0 0.0
    %6172 = vmatpush1.msra.mxu0 0.0
    %6173 = vmatprep.subr.mxu0 0.0
    %6174 = vmatpush1.msra.mxu0 0.0
    %6175 = vmatprep.subr.mxu0 0.0
    %6176 = vmatpush1.msra.mxu0 0.0
    %6177 = vmatprep.subr.mxu0 0.0
    %6178 = vmatpush1.msra.mxu0 0.0
    %6179 = vmatprep.subr.mxu0 0.0
    %6180 = vmatpush1.msra.mxu0 0.0
    %6181 = vmatprep.subr.mxu0 0.0
    %6182 = vmatpush1.msra.mxu0 0.0
    %6183 = vmatprep.subr.mxu0 0.0
    %6184 = vmatpush1.msra.mxu0 0.0
    %6185 = vmatprep.subr.mxu0 0.0
    %6186 = vmatpush1.msra.mxu0 0.0
    %6187 = vmatprep.subr.mxu0 0.0
    %6188 = vmatpush1.msra.mxu0 0.0
    %6189 = vmatprep.subr.mxu0 0.0
    %6190 = vmatpush1.msra.mxu0 0.0
    %6191 = vmatprep.subr.mxu0 0.0
    %6192 = vmatpush1.msra.mxu0 0.0
    %6193 = vmatprep.subr.mxu0 0.0
    %6194 = vmatpush1.msra.mxu0 0.0
    %6195 = vmatprep.subr.mxu0 0.0
    %6196 = vmatpush1.msra.mxu0 0.0
    %6197 = vmatprep.subr.mxu0 0.0
    %6198 = vmatpush1.msra.mxu0 0.0
    %6199 = vmatprep.subr.mxu0 0.0
    %6200 = vmatpush1.msra.mxu0 0.0
    %6201 = vmatprep.subr.mxu0 0.0
    %6202 = vmatpush1.msra.mxu0 0.0
    %6203 = vmatprep.subr.mxu0 0.0
    %6204 = vmatpush1.msra.mxu0 0.0
    %6205 = vmatprep.subr.mxu0 0.0
    %6206 = vmatpush1.msra.mxu0 0.0
    %6207 = vmatprep.subr.mxu0 0.0
    %6208 = vmatpush1.msra.mxu0 0.0
    %6209 = vmatprep.subr.mxu0 0.0
    %6210 = vmatpush1.msra.mxu0 0.0
    %6211 = vmatprep.subr.mxu0 0.0
    %6212 = vmatpush1.msra.mxu0 0.0
    %6213 = vmatprep.subr.mxu0 0.0
    %6214 = vmatpush1.msra.mxu0 0.0
    %6215 = vmatprep.subr.mxu0 0.0
    %6216 = vmatpush1.msra.mxu0 0.0
    %6217 = vmatprep.subr.mxu0 0.0
    %6218 = vmatpush1.msra.mxu0 0.0
    %6219 = vmatprep.subr.mxu0 0.0
    %6220 = vmatpush1.msra.mxu0 0.0
    %6221 = vmatprep.subr.mxu0 0.0
    %6222 = vmatpush1.msra.mxu0 0.0
    %6223 = vmatprep.subr.mxu0 0.0
    %6224 = vmatpush1.msra.mxu0 0.0
    %6225 = vmatprep.subr.mxu0 0.0
    %6226 = vmatpush1.msra.mxu0 0.0
    %6227 = vmatprep.mubr.f32.mxu0 0.0
    %6228 = vmatmul.mubr.f32.gmra.mrb[0].mxu0 %v5879
    %v6229 = vpop.f32.mrb[0].mxu0
    %v6230 = vadd.f32 %v6160, %v6229
    %v6231 = vpop.f32.mrb[0].mxu0
    %6232 = vdwg.mxu0
    %v6233 = vadd.f32 %v6230, %v426
    %6234 = vmatprep.subr.mxu0 0.0
    %6235 = vmatpush1.msra.mxu0 %v375
    %6236 = vmatprep.subr.mxu0 0.0
    %6237 = vmatpush1.msra.mxu0 %v376
    %6238 = vmatprep.subr.mxu0 0.0
    %6239 = vmatpush1.msra.mxu0 %v377
    %6240 = vmatprep.subr.mxu0 0.0
    %6241 = vmatpush1.msra.mxu0 %v378
    %6242 = vmatprep.subr.mxu0 0.0
    %6243 = vmatpush1.msra.mxu0 0.0
    %6244 = vmatprep.subr.mxu0 0.0
    %6245 = vmatpush1.msra.mxu0 0.0
    %6246 = vmatprep.subr.mxu0 0.0
    %6247 = vmatpush1.msra.mxu0 0.0
    %6248 = vmatprep.subr.mxu0 0.0
    %6249 = vmatpush1.msra.mxu0 0.0
    %6250 = vmatprep.subr.mxu0 0.0
    %6251 = vmatpush1.msra.mxu0 0.0
    %6252 = vmatprep.subr.mxu0 0.0
    %6253 = vmatpush1.msra.mxu0 0.0
    %6254 = vmatprep.subr.mxu0 0.0
    %6255 = vmatpush1.msra.mxu0 0.0
    %6256 = vmatprep.subr.mxu0 0.0
    %6257 = vmatpush1.msra.mxu0 0.0
    %6258 = vmatprep.subr.mxu0 0.0
    %6259 = vmatpush1.msra.mxu0 0.0
    %6260 = vmatprep.subr.mxu0 0.0
    %6261 = vmatpush1.msra.mxu0 0.0
    %6262 = vmatprep.subr.mxu0 0.0
    %6263 = vmatpush1.msra.mxu0 0.0
    %6264 = vmatprep.subr.mxu0 0.0
    %6265 = vmatpush1.msra.mxu0 0.0
    %6266 = vmatprep.subr.mxu0 0.0
    %6267 = vmatpush1.msra.mxu0 0.0
    %6268 = vmatprep.subr.mxu0 0.0
    %6269 = vmatpush1.msra.mxu0 0.0
    %6270 = vmatprep.subr.mxu0 0.0
    %6271 = vmatpush1.msra.mxu0 0.0
    %6272 = vmatprep.subr.mxu0 0.0
    %6273 = vmatpush1.msra.mxu0 0.0
    %6274 = vmatprep.subr.mxu0 0.0
    %6275 = vmatpush1.msra.mxu0 0.0
    %6276 = vmatprep.subr.mxu0 0.0
    %6277 = vmatpush1.msra.mxu0 0.0
    %6278 = vmatprep.subr.mxu0 0.0
    %6279 = vmatpush1.msra.mxu0 0.0
    %6280 = vmatprep.subr.mxu0 0.0
    %6281 = vmatpush1.msra.mxu0 0.0
    %6282 = vmatprep.subr.mxu0 0.0
    %6283 = vmatpush1.msra.mxu0 0.0
    %6284 = vmatprep.subr.mxu0 0.0
    %6285 = vmatpush1.msra.mxu0 0.0
    %6286 = vmatprep.subr.mxu0 0.0
    %6287 = vmatpush1.msra.mxu0 0.0
    %6288 = vmatprep.subr.mxu0 0.0
    %6289 = vmatpush1.msra.mxu0 0.0
    %6290 = vmatprep.subr.mxu0 0.0
    %6291 = vmatpush1.msra.mxu0 0.0
    %6292 = vmatprep.subr.mxu0 0.0
    %6293 = vmatpush1.msra.mxu0 0.0
    %6294 = vmatprep.subr.mxu0 0.0
    %6295 = vmatpush1.msra.mxu0 0.0
    %6296 = vmatprep.subr.mxu0 0.0
    %6297 = vmatpush1.msra.mxu0 0.0
    %6298 = vmatprep.mubr.f32.mxu0 0.0
    %6299 = vmatmul.mubr.f32.gmra.mrb[0].mxu0 %v5806
    %v6300 = vpop.f32.mrb[0].mxu0
    %v6301 = vadd.f32 0.0, %v6300
    %v6302 = vpop.f32.mrb[0].mxu0
    %6303 = vdwg.mxu0
    %6304 = vmatprep.subr.mxu0 0.0
    %6305 = vmatpush1.msra.mxu0 %v343
    %6306 = vmatprep.subr.mxu0 0.0
    %6307 = vmatpush1.msra.mxu0 %v344
    %6308 = vmatprep.subr.mxu0 0.0
    %6309 = vmatpush1.msra.mxu0 %v345
    %6310 = vmatprep.subr.mxu0 0.0
    %6311 = vmatpush1.msra.mxu0 %v346
    %6312 = vmatprep.subr.mxu0 0.0
    %6313 = vmatpush1.msra.mxu0 0.0
    %6314 = vmatprep.subr.mxu0 0.0
    %6315 = vmatpush1.msra.mxu0 0.0
    %6316 = vmatprep.subr.mxu0 0.0
    %6317 = vmatpush1.msra.mxu0 0.0
    %6318 = vmatprep.subr.mxu0 0.0
    %6319 = vmatpush1.msra.mxu0 0.0
    %6320 = vmatprep.subr.mxu0 0.0
    %6321 = vmatpush1.msra.mxu0 0.0
    %6322 = vmatprep.subr.mxu0 0.0
    %6323 = vmatpush1.msra.mxu0 0.0
    %6324 = vmatprep.subr.mxu0 0.0
    %6325 = vmatpush1.msra.mxu0 0.0
    %6326 = vmatprep.subr.mxu0 0.0
    %6327 = vmatpush1.msra.mxu0 0.0
    %6328 = vmatprep.subr.mxu0 0.0
    %6329 = vmatpush1.msra.mxu0 0.0
    %6330 = vmatprep.subr.mxu0 0.0
    %6331 = vmatpush1.msra.mxu0 0.0
    %6332 = vmatprep.subr.mxu0 0.0
    %6333 = vmatpush1.msra.mxu0 0.0
    %6334 = vmatprep.subr.mxu0 0.0
    %6335 = vmatpush1.msra.mxu0 0.0
    %6336 = vmatprep.subr.mxu0 0.0
    %6337 = vmatpush1.msra.mxu0 0.0
    %6338 = vmatprep.subr.mxu0 0.0
    %6339 = vmatpush1.msra.mxu0 0.0
    %6340 = vmatprep.subr.mxu0 0.0
    %6341 = vmatpush1.msra.mxu0 0.0
    %6342 = vmatprep.subr.mxu0 0.0
    %6343 = vmatpush1.msra.mxu0 0.0
    %6344 = vmatprep.subr.mxu0 0.0
    %6345 = vmatpush1.msra.mxu0 0.0
    %6346 = vmatprep.subr.mxu0 0.0
    %6347 = vmatpush1.msra.mxu0 0.0
    %6348 = vmatprep.subr.mxu0 0.0
    %6349 = vmatpush1.msra.mxu0 0.0
    %6350 = vmatprep.subr.mxu0 0.0
    %6351 = vmatpush1.msra.mxu0 0.0
    %6352 = vmatprep.subr.mxu0 0.0
    %6353 = vmatpush1.msra.mxu0 0.0
    %6354 = vmatprep.subr.mxu0 0.0
    %6355 = vmatpush1.msra.mxu0 0.0
    %6356 = vmatprep.subr.mxu0 0.0
    %6357 = vmatpush1.msra.mxu0 0.0
    %6358 = vmatprep.subr.mxu0 0.0
    %6359 = vmatpush1.msra.mxu0 0.0
    %6360 = vmatprep.subr.mxu0 0.0
    %6361 = vmatpush1.msra.mxu0 0.0
    %6362 = vmatprep.subr.mxu0 0.0
    %6363 = vmatpush1.msra.mxu0 0.0
    %6364 = vmatprep.subr.mxu0 0.0
    %6365 = vmatpush1.msra.mxu0 0.0
    %6366 = vmatprep.subr.mxu0 0.0
    %6367 = vmatpush1.msra.mxu0 0.0
    %6368 = vmatprep.mubr.f32.mxu0 0.0
    %6369 = vmatmul.mubr.f32.gmra.mrb[0].mxu0 %v5879
    %v6370 = vpop.f32.mrb[0].mxu0
    %v6371 = vadd.f32 %v6301, %v6370
    %v6372 = vpop.f32.mrb[0].mxu0
    %6373 = vdwg.mxu0
    %v6374 = vadd.f32 %v6371, %v433
    %v6375 = vxor.u32 %v5951, 2147483648
    %v6376 = vmul.f32 %v6375, 1.442695
    %v6377 = vpow.pop %v6376
    %v6378 = vadd.f32 %v6377, 1.0
    %v6379 = vrcp.pop %v6378
    %v6380 = vmul.f32 1.0, %v6379
    %v6381 = vxor.u32 %v6092, 2147483648
    %v6382 = vmul.f32 %v6381, 1.442695
    %v6383 = vpow.pop %v6382
    %v6384 = vadd.f32 %v6383, 1.0
    %v6385 = vrcp.pop %v6384
    %v6386 = vmul.f32 1.0, %v6385
    %v6387 = vtanh.pop %v6233
    %v6388 = vxor.u32 %v6374, 2147483648
    %v6389 = vmul.f32 %v6388, 1.442695
    %v6390 = vpow.pop %v6389
    %v6391 = vadd.f32 %v6390, 1.0
    %v6392 = vrcp.pop %v6391
    %v6393 = vmul.f32 1.0, %v6392
    %v6394 = vmul.f32 %v6386, %v5202
    %v6395 = vmul.f32 %v6380, %v6387
    %v6396 = vadd.f32 %v6394, %v6395
    %v6397 = vtanh.pop %v6396
    %v6398 = vmul.f32 %v6393, %v6397
    %vm6399 = vcmp.eq.s32.totalorder %v322, 4
    %v6400 = vsel %vm6399, 1, 0
    %6401 = vset.pattern.permute.xlu0 0
    %6402 = vperm.xlu0 %6401, %v6400
    %v6403 = vpop.permute.xlu0 %6402
    %vm6404 = vcmp.eq.s32.totalorder %v6403, 1
    %v6405 = vsel %vm6404, %v6398, %v5211
    %s6406 = scalar_lea.vmem [#allocation2], 40
    %v6407 = vld [vmem:[%s6406] sm:$0xff]
    %6408 = vmatprep.subr.mxu0 0.0
    %6409 = vmatpush1.msra.mxu0 %v347
    %6410 = vmatprep.subr.mxu0 0.0
    %6411 = vmatpush1.msra.mxu0 %v348
    %6412 = vmatprep.subr.mxu0 0.0
    %6413 = vmatpush1.msra.mxu0 %v349
    %6414 = vmatprep.subr.mxu0 0.0
    %6415 = vmatpush1.msra.mxu0 %v350
    %6416 = vmatprep.subr.mxu0 0.0
    %6417 = vmatpush1.msra.mxu0 0.0
    %6418 = vmatprep.subr.mxu0 0.0
    %6419 = vmatpush1.msra.mxu0 0.0
    %6420 = vmatprep.subr.mxu0 0.0
    %6421 = vmatpush1.msra.mxu0 0.0
    %6422 = vmatprep.subr.mxu0 0.0
    %6423 = vmatpush1.msra.mxu0 0.0
    %6424 = vmatprep.subr.mxu0 0.0
    %6425 = vmatpush1.msra.mxu0 0.0
    %6426 = vmatprep.subr.mxu0 0.0
    %6427 = vmatpush1.msra.mxu0 0.0
    %6428 = vmatprep.subr.mxu0 0.0
    %6429 = vmatpush1.msra.mxu0 0.0
    %6430 = vmatprep.subr.mxu0 0.0
    %6431 = vmatpush1.msra.mxu0 0.0
    %6432 = vmatprep.subr.mxu0 0.0
    %6433 = vmatpush1.msra.mxu0 0.0
    %6434 = vmatprep.subr.mxu0 0.0
    %6435 = vmatpush1.msra.mxu0 0.0
    %6436 = vmatprep.subr.mxu0 0.0
    %6437 = vmatpush1.msra.mxu0 0.0
    %6438 = vmatprep.subr.mxu0 0.0
    %6439 = vmatpush1.msra.mxu0 0.0
    %6440 = vmatprep.subr.mxu0 0.0
    %6441 = vmatpush1.msra.mxu0 0.0
    %6442 = vmatprep.subr.mxu0 0.0
    %6443 = vmatpush1.msra.mxu0 0.0
    %6444 = vmatprep.subr.mxu0 0.0
    %6445 = vmatpush1.msra.mxu0 0.0
    %6446 = vmatprep.subr.mxu0 0.0
    %6447 = vmatpush1.msra.mxu0 0.0
    %6448 = vmatprep.subr.mxu0 0.0
    %6449 = vmatpush1.msra.mxu0 0.0
    %6450 = vmatprep.subr.mxu0 0.0
    %6451 = vmatpush1.msra.mxu0 0.0
    %6452 = vmatprep.subr.mxu0 0.0
    %6453 = vmatpush1.msra.mxu0 0.0
    %6454 = vmatprep.subr.mxu0 0.0
    %6455 = vmatpush1.msra.mxu0 0.0
    %6456 = vmatprep.subr.mxu0 0.0
    %6457 = vmatpush1.msra.mxu0 0.0
    %6458 = vmatprep.subr.mxu0 0.0
    %6459 = vmatpush1.msra.mxu0 0.0
    %6460 = vmatprep.subr.mxu0 0.0
    %6461 = vmatpush1.msra.mxu0 0.0
    %6462 = vmatprep.subr.mxu0 0.0
    %6463 = vmatpush1.msra.mxu0 0.0
    %6464 = vmatprep.subr.mxu0 0.0
    %6465 = vmatpush1.msra.mxu0 0.0
    %6466 = vmatprep.subr.mxu0 0.0
    %6467 = vmatpush1.msra.mxu0 0.0
    %6468 = vmatprep.subr.mxu0 0.0
    %6469 = vmatpush1.msra.mxu0 0.0
    %6470 = vmatprep.subr.mxu0 0.0
    %6471 = vmatpush1.msra.mxu0 0.0
    %6472 = vmatprep.mubr.f32.mxu0 0.0
    %6473 = vmatmul.mubr.f32.gmra.mrb[0].mxu0 %v5879
    %v6474 = vpop.f32.mrb[0].mxu0
    %v6475 = vadd.f32 0.0, %v6474
    %v6476 = vpop.f32.mrb[0].mxu0
    %6477 = vdwg.mxu0
    %v6479 = vsel %vm510, %v6407, 0
    %6481 = vmatprep.subr.mxu0 0.0
    %6482 = vmatpush1.msra.mxu0 %v323
    %6483 = vmatprep.subr.mxu0 0.0
    %6484 = vmatpush1.msra.mxu0 %v324
    %6485 = vmatprep.subr.mxu0 0.0
    %6486 = vmatpush1.msra.mxu0 0.0
    %6487 = vmatprep.subr.mxu0 0.0
    %6488 = vmatpush1.msra.mxu0 0.0
    %6489 = vmatprep.subr.mxu0 0.0
    %6490 = vmatpush1.msra.mxu0 0.0
    %6491 = vmatprep.subr.mxu0 0.0
    %6492 = vmatpush1.msra.mxu0 0.0
    %6493 = vmatprep.subr.mxu0 0.0
    %6494 = vmatpush1.msra.mxu0 0.0
    %6495 = vmatprep.subr.mxu0 0.0
    %6496 = vmatpush1.msra.mxu0 0.0
    %6497 = vmatprep.subr.mxu0 0.0
    %6498 = vmatpush1.msra.mxu0 0.0
    %6499 = vmatprep.subr.mxu0 0.0
    %6500 = vmatpush1.msra.mxu0 0.0
    %6501 = vmatprep.subr.mxu0 0.0
    %6502 = vmatpush1.msra.mxu0 0.0
    %6503 = vmatprep.subr.mxu0 0.0
    %6504 = vmatpush1.msra.mxu0 0.0
    %6505 = vmatprep.subr.mxu0 0.0
    %6506 = vmatpush1.msra.mxu0 0.0
    %6507 = vmatprep.subr.mxu0 0.0
    %6508 = vmatpush1.msra.mxu0 0.0
    %6509 = vmatprep.subr.mxu0 0.0
    %6510 = vmatpush1.msra.mxu0 0.0
    %6511 = vmatprep.subr.mxu0 0.0
    %6512 = vmatpush1.msra.mxu0 0.0
    %6513 = vmatprep.subr.mxu0 0.0
    %6514 = vmatpush1.msra.mxu0 0.0
    %6515 = vmatprep.subr.mxu0 0.0
    %6516 = vmatpush1.msra.mxu0 0.0
    %6517 = vmatprep.subr.mxu0 0.0
    %6518 = vmatpush1.msra.mxu0 0.0
    %6519 = vmatprep.subr.mxu0 0.0
    %6520 = vmatpush1.msra.mxu0 0.0
    %6521 = vmatprep.subr.mxu0 0.0
    %6522 = vmatpush1.msra.mxu0 0.0
    %6523 = vmatprep.subr.mxu0 0.0
    %6524 = vmatpush1.msra.mxu0 0.0
    %6525 = vmatprep.subr.mxu0 0.0
    %6526 = vmatpush1.msra.mxu0 0.0
    %6527 = vmatprep.subr.mxu0 0.0
    %6528 = vmatpush1.msra.mxu0 0.0
    %6529 = vmatprep.subr.mxu0 0.0
    %6530 = vmatpush1.msra.mxu0 0.0
    %6531 = vmatprep.subr.mxu0 0.0
    %6532 = vmatpush1.msra.mxu0 0.0
    %6533 = vmatprep.subr.mxu0 0.0
    %6534 = vmatpush1.msra.mxu0 0.0
    %6535 = vmatprep.subr.mxu0 0.0
    %6536 = vmatpush1.msra.mxu0 0.0
    %6537 = vmatprep.subr.mxu0 0.0
    %6538 = vmatpush1.msra.mxu0 0.0
    %6539 = vmatprep.subr.mxu0 0.0
    %6540 = vmatpush1.msra.mxu0 0.0
    %6541 = vmatprep.subr.mxu0 0.0
    %6542 = vmatpush1.msra.mxu0 0.0
    %6543 = vmatprep.subr.mxu0 0.0
    %6544 = vmatpush1.msra.mxu0 0.0
    %6545 = vmatprep.mubr.f32.mxu0 0.0
    %6546 = vmatmul.mubr.f32.gmra.mrb[0].mxu0 %v6479
    %v6547 = vpop.f32.mrb[0].mxu0
    %v6548 = vadd.f32 %v6475, %v6547
    %v6549 = vpop.f32.mrb[0].mxu0
    %6550 = vdwg.mxu0
    %v6551 = vadd.f32 %v6548, %v384
    %6552 = vmatprep.subr.mxu0 0.0
    %6553 = vmatpush1.msra.mxu0 %v351
    %6554 = vmatprep.subr.mxu0 0.0
    %6555 = vmatpush1.msra.mxu0 %v352
    %6556 = vmatprep.subr.mxu0 0.0
    %6557 = vmatpush1.msra.mxu0 %v353
    %6558 = vmatprep.subr.mxu0 0.0
    %6559 = vmatpush1.msra.mxu0 %v354
    %6560 = vmatprep.subr.mxu0 0.0
    %6561 = vmatpush1.msra.mxu0 0.0
    %6562 = vmatprep.subr.mxu0 0.0
    %6563 = vmatpush1.msra.mxu0 0.0
    %6564 = vmatprep.subr.mxu0 0.0
    %6565 = vmatpush1.msra.mxu0 0.0
    %6566 = vmatprep.subr.mxu0 0.0
    %6567 = vmatpush1.msra.mxu0 0.0
    %6568 = vmatprep.subr.mxu0 0.0
    %6569 = vmatpush1.msra.mxu0 0.0
    %6570 = vmatprep.subr.mxu0 0.0
    %6571 = vmatpush1.msra.mxu0 0.0
    %6572 = vmatprep.subr.mxu0 0.0
    %6573 = vmatpush1.msra.mxu0 0.0
    %6574 = vmatprep.subr.mxu0 0.0
    %6575 = vmatpush1.msra.mxu0 0.0
    %6576 = vmatprep.subr.mxu0 0.0
    %6577 = vmatpush1.msra.mxu0 0.0
    %6578 = vmatprep.subr.mxu0 0.0
    %6579 = vmatpush1.msra.mxu0 0.0
    %6580 = vmatprep.subr.mxu0 0.0
    %6581 = vmatpush1.msra.mxu0 0.0
    %6582 = vmatprep.subr.mxu0 0.0
    %6583 = vmatpush1.msra.mxu0 0.0
    %6584 = vmatprep.subr.mxu0 0.0
    %6585 = vmatpush1.msra.mxu0 0.0
    %6586 = vmatprep.subr.mxu0 0.0
    %6587 = vmatpush1.msra.mxu0 0.0
    %6588 = vmatprep.subr.mxu0 0.0
    %6589 = vmatpush1.msra.mxu0 0.0
    %6590 = vmatprep.subr.mxu0 0.0
    %6591 = vmatpush1.msra.mxu0 0.0
    %6592 = vmatprep.subr.mxu0 0.0
    %6593 = vmatpush1.msra.mxu0 0.0
    %6594 = vmatprep.subr.mxu0 0.0
    %6595 = vmatpush1.msra.mxu0 0.0
    %6596 = vmatprep.subr.mxu0 0.0
    %6597 = vmatpush1.msra.mxu0 0.0
    %6598 = vmatprep.subr.mxu0 0.0
    %6599 = vmatpush1.msra.mxu0 0.0
    %6600 = vmatprep.subr.mxu0 0.0
    %6601 = vmatpush1.msra.mxu0 0.0
    %6602 = vmatprep.subr.mxu0 0.0
    %6603 = vmatpush1.msra.mxu0 0.0
    %6604 = vmatprep.subr.mxu0 0.0
    %6605 = vmatpush1.msra.mxu0 0.0
    %6606 = vmatprep.subr.mxu0 0.0
    %6607 = vmatpush1.msra.mxu0 0.0
    %6608 = vmatprep.subr.mxu0 0.0
    %6609 = vmatpush1.msra.mxu0 0.0
    %6610 = vmatprep.subr.mxu0 0.0
    %6611 = vmatpush1.msra.mxu0 0.0
    %6612 = vmatprep.subr.mxu0 0.0
    %6613 = vmatpush1.msra.mxu0 0.0
    %6614 = vmatprep.subr.mxu0 0.0
    %6615 = vmatpush1.msra.mxu0 0.0
    %6616 = vmatprep.mubr.f32.mxu0 0.0
    %6617 = vmatmul.mubr.f32.gmra.mrb[0].mxu0 %v5879
    %v6618 = vpop.f32.mrb[0].mxu0
    %v6619 = vadd.f32 0.0, %v6618
    %v6620 = vpop.f32.mrb[0].mxu0
    %6621 = vdwg.mxu0
    %6622 = vmatprep.subr.mxu0 0.0
    %6623 = vmatpush1.msra.mxu0 %v325
    %6624 = vmatprep.subr.mxu0 0.0
    %6625 = vmatpush1.msra.mxu0 %v326
    %6626 = vmatprep.subr.mxu0 0.0
    %6627 = vmatpush1.msra.mxu0 0.0
    %6628 = vmatprep.subr.mxu0 0.0
    %6629 = vmatpush1.msra.mxu0 0.0
    %6630 = vmatprep.subr.mxu0 0.0
    %6631 = vmatpush1.msra.mxu0 0.0
    %6632 = vmatprep.subr.mxu0 0.0
    %6633 = vmatpush1.msra.mxu0 0.0
    %6634 = vmatprep.subr.mxu0 0.0
    %6635 = vmatpush1.msra.mxu0 0.0
    %6636 = vmatprep.subr.mxu0 0.0
    %6637 = vmatpush1.msra.mxu0 0.0
    %6638 = vmatprep.subr.mxu0 0.0
    %6639 = vmatpush1.msra.mxu0 0.0
    %6640 = vmatprep.subr.mxu0 0.0
    %6641 = vmatpush1.msra.mxu0 0.0
    %6642 = vmatprep.subr.mxu0 0.0
    %6643 = vmatpush1.msra.mxu0 0.0
    %6644 = vmatprep.subr.mxu0 0.0
    %6645 = vmatpush1.msra.mxu0 0.0
    %6646 = vmatprep.subr.mxu0 0.0
    %6647 = vmatpush1.msra.mxu0 0.0
    %6648 = vmatprep.subr.mxu0 0.0
    %6649 = vmatpush1.msra.mxu0 0.0
    %6650 = vmatprep.subr.mxu0 0.0
    %6651 = vmatpush1.msra.mxu0 0.0
    %6652 = vmatprep.subr.mxu0 0.0
    %6653 = vmatpush1.msra.mxu0 0.0
    %6654 = vmatprep.subr.mxu0 0.0
    %6655 = vmatpush1.msra.mxu0 0.0
    %6656 = vmatprep.subr.mxu0 0.0
    %6657 = vmatpush1.msra.mxu0 0.0
    %6658 = vmatprep.subr.mxu0 0.0
    %6659 = vmatpush1.msra.mxu0 0.0
    %6660 = vmatprep.subr.mxu0 0.0
    %6661 = vmatpush1.msra.mxu0 0.0
    %6662 = vmatprep.subr.mxu0 0.0
    %6663 = vmatpush1.msra.mxu0 0.0
    %6664 = vmatprep.subr.mxu0 0.0
    %6665 = vmatpush1.msra.mxu0 0.0
    %6666 = vmatprep.subr.mxu0 0.0
    %6667 = vmatpush1.msra.mxu0 0.0
    %6668 = vmatprep.subr.mxu0 0.0
    %6669 = vmatpush1.msra.mxu0 0.0
    %6670 = vmatprep.subr.mxu0 0.0
    %6671 = vmatpush1.msra.mxu0 0.0
    %6672 = vmatprep.subr.mxu0 0.0
    %6673 = vmatpush1.msra.mxu0 0.0
    %6674 = vmatprep.subr.mxu0 0.0
    %6675 = vmatpush1.msra.mxu0 0.0
    %6676 = vmatprep.subr.mxu0 0.0
    %6677 = vmatpush1.msra.mxu0 0.0
    %6678 = vmatprep.subr.mxu0 0.0
    %6679 = vmatpush1.msra.mxu0 0.0
    %6680 = vmatprep.subr.mxu0 0.0
    %6681 = vmatpush1.msra.mxu0 0.0
    %6682 = vmatprep.subr.mxu0 0.0
    %6683 = vmatpush1.msra.mxu0 0.0
    %6684 = vmatprep.subr.mxu0 0.0
    %6685 = vmatpush1.msra.mxu0 0.0
    %6686 = vmatprep.mubr.f32.mxu0 0.0
    %6687 = vmatmul.mubr.f32.gmra.mrb[0].mxu0 %v6479
    %v6688 = vpop.f32.mrb[0].mxu0
    %v6689 = vadd.f32 %v6619, %v6688
    %v6690 = vpop.f32.mrb[0].mxu0
    %6691 = vdwg.mxu0
    %v6692 = vadd.f32 %v6689, %v391
    %6693 = vmatprep.subr.mxu0 0.0
    %6694 = vmatpush1.msra.mxu0 %v355
    %6695 = vmatprep.subr.mxu0 0.0
    %6696 = vmatpush1.msra.mxu0 %v356
    %6697 = vmatprep.subr.mxu0 0.0
    %6698 = vmatpush1.msra.mxu0 %v357
    %6699 = vmatprep.subr.mxu0 0.0
    %6700 = vmatpush1.msra.mxu0 %v358
    %6701 = vmatprep.subr.mxu0 0.0
    %6702 = vmatpush1.msra.mxu0 0.0
    %6703 = vmatprep.subr.mxu0 0.0
    %6704 = vmatpush1.msra.mxu0 0.0
    %6705 = vmatprep.subr.mxu0 0.0
    %6706 = vmatpush1.msra.mxu0 0.0
    %6707 = vmatprep.subr.mxu0 0.0
    %6708 = vmatpush1.msra.mxu0 0.0
    %6709 = vmatprep.subr.mxu0 0.0
    %6710 = vmatpush1.msra.mxu0 0.0
    %6711 = vmatprep.subr.mxu0 0.0
    %6712 = vmatpush1.msra.mxu0 0.0
    %6713 = vmatprep.subr.mxu0 0.0
    %6714 = vmatpush1.msra.mxu0 0.0
    %6715 = vmatprep.subr.mxu0 0.0
    %6716 = vmatpush1.msra.mxu0 0.0
    %6717 = vmatprep.subr.mxu0 0.0
    %6718 = vmatpush1.msra.mxu0 0.0
    %6719 = vmatprep.subr.mxu0 0.0
    %6720 = vmatpush1.msra.mxu0 0.0
    %6721 = vmatprep.subr.mxu0 0.0
    %6722 = vmatpush1.msra.mxu0 0.0
    %6723 = vmatprep.subr.mxu0 0.0
    %6724 = vmatpush1.msra.mxu0 0.0
    %6725 = vmatprep.subr.mxu0 0.0
    %6726 = vmatpush1.msra.mxu0 0.0
    %6727 = vmatprep.subr.mxu0 0.0
    %6728 = vmatpush1.msra.mxu0 0.0
    %6729 = vmatprep.subr.mxu0 0.0
    %6730 = vmatpush1.msra.mxu0 0.0
    %6731 = vmatprep.subr.mxu0 0.0
    %6732 = vmatpush1.msra.mxu0 0.0
    %6733 = vmatprep.subr.mxu0 0.0
    %6734 = vmatpush1.msra.mxu0 0.0
    %6735 = vmatprep.subr.mxu0 0.0
    %6736 = vmatpush1.msra.mxu0 0.0
    %6737 = vmatprep.subr.mxu0 0.0
    %6738 = vmatpush1.msra.mxu0 0.0
    %6739 = vmatprep.subr.mxu0 0.0
    %6740 = vmatpush1.msra.mxu0 0.0
    %6741 = vmatprep.subr.mxu0 0.0
    %6742 = vmatpush1.msra.mxu0 0.0
    %6743 = vmatprep.subr.mxu0 0.0
    %6744 = vmatpush1.msra.mxu0 0.0
    %6745 = vmatprep.subr.mxu0 0.0
    %6746 = vmatpush1.msra.mxu0 0.0
    %6747 = vmatprep.subr.mxu0 0.0
    %6748 = vmatpush1.msra.mxu0 0.0
    %6749 = vmatprep.subr.mxu0 0.0
    %6750 = vmatpush1.msra.mxu0 0.0
    %6751 = vmatprep.subr.mxu0 0.0
    %6752 = vmatpush1.msra.mxu0 0.0
    %6753 = vmatprep.subr.mxu0 0.0
    %6754 = vmatpush1.msra.mxu0 0.0
    %6755 = vmatprep.subr.mxu0 0.0
    %6756 = vmatpush1.msra.mxu0 0.0
    %6757 = vmatprep.mubr.f32.mxu0 0.0
    %6758 = vmatmul.mubr.f32.gmra.mrb[0].mxu0 %v5879
    %v6759 = vpop.f32.mrb[0].mxu0
    %v6760 = vadd.f32 0.0, %v6759
    %v6761 = vpop.f32.mrb[0].mxu0
    %6762 = vdwg.mxu0
    %6763 = vmatprep.subr.mxu0 0.0
    %6764 = vmatpush1.msra.mxu0 %v327
    %6765 = vmatprep.subr.mxu0 0.0
    %6766 = vmatpush1.msra.mxu0 %v328
    %6767 = vmatprep.subr.mxu0 0.0
    %6768 = vmatpush1.msra.mxu0 0.0
    %6769 = vmatprep.subr.mxu0 0.0
    %6770 = vmatpush1.msra.mxu0 0.0
    %6771 = vmatprep.subr.mxu0 0.0
    %6772 = vmatpush1.msra.mxu0 0.0
    %6773 = vmatprep.subr.mxu0 0.0
    %6774 = vmatpush1.msra.mxu0 0.0
    %6775 = vmatprep.subr.mxu0 0.0
    %6776 = vmatpush1.msra.mxu0 0.0
    %6777 = vmatprep.subr.mxu0 0.0
    %6778 = vmatpush1.msra.mxu0 0.0
    %6779 = vmatprep.subr.mxu0 0.0
    %6780 = vmatpush1.msra.mxu0 0.0
    %6781 = vmatprep.subr.mxu0 0.0
    %6782 = vmatpush1.msra.mxu0 0.0
    %6783 = vmatprep.subr.mxu0 0.0
    %6784 = vmatpush1.msra.mxu0 0.0
    %6785 = vmatprep.subr.mxu0 0.0
    %6786 = vmatpush1.msra.mxu0 0.0
    %6787 = vmatprep.subr.mxu0 0.0
    %6788 = vmatpush1.msra.mxu0 0.0
    %6789 = vmatprep.subr.mxu0 0.0
    %6790 = vmatpush1.msra.mxu0 0.0
    %6791 = vmatprep.subr.mxu0 0.0
    %6792 = vmatpush1.msra.mxu0 0.0
    %6793 = vmatprep.subr.mxu0 0.0
    %6794 = vmatpush1.msra.mxu0 0.0
    %6795 = vmatprep.subr.mxu0 0.0
    %6796 = vmatpush1.msra.mxu0 0.0
    %6797 = vmatprep.subr.mxu0 0.0
    %6798 = vmatpush1.msra.mxu0 0.0
    %6799 = vmatprep.subr.mxu0 0.0
    %6800 = vmatpush1.msra.mxu0 0.0
    %6801 = vmatprep.subr.mxu0 0.0
    %6802 = vmatpush1.msra.mxu0 0.0
    %6803 = vmatprep.subr.mxu0 0.0
    %6804 = vmatpush1.msra.mxu0 0.0
    %6805 = vmatprep.subr.mxu0 0.0
    %6806 = vmatpush1.msra.mxu0 0.0
    %6807 = vmatprep.subr.mxu0 0.0
    %6808 = vmatpush1.msra.mxu0 0.0
    %6809 = vmatprep.subr.mxu0 0.0
    %6810 = vmatpush1.msra.mxu0 0.0
    %6811 = vmatprep.subr.mxu0 0.0
    %6812 = vmatpush1.msra.mxu0 0.0
    %6813 = vmatprep.subr.mxu0 0.0
    %6814 = vmatpush1.msra.mxu0 0.0
    %6815 = vmatprep.subr.mxu0 0.0
    %6816 = vmatpush1.msra.mxu0 0.0
    %6817 = vmatprep.subr.mxu0 0.0
    %6818 = vmatpush1.msra.mxu0 0.0
    %6819 = vmatprep.subr.mxu0 0.0
    %6820 = vmatpush1.msra.mxu0 0.0
    %6821 = vmatprep.subr.mxu0 0.0
    %6822 = vmatpush1.msra.mxu0 0.0
    %6823 = vmatprep.subr.mxu0 0.0
    %6824 = vmatpush1.msra.mxu0 0.0
    %6825 = vmatprep.subr.mxu0 0.0
    %6826 = vmatpush1.msra.mxu0 0.0
    %6827 = vmatprep.mubr.f32.mxu0 0.0
    %6828 = vmatmul.mubr.f32.gmra.mrb[0].mxu0 %v6479
    %v6829 = vpop.f32.mrb[0].mxu0
    %v6830 = vadd.f32 %v6760, %v6829
    %v6831 = vpop.f32.mrb[0].mxu0
    %6832 = vdwg.mxu0
    %v6833 = vadd.f32 %v6830, %v398
    %6834 = vmatprep.subr.mxu0 0.0
    %6835 = vmatpush1.msra.mxu0 %v359
    %6836 = vmatprep.subr.mxu0 0.0
    %6837 = vmatpush1.msra.mxu0 %v360
    %6838 = vmatprep.subr.mxu0 0.0
    %6839 = vmatpush1.msra.mxu0 %v361
    %6840 = vmatprep.subr.mxu0 0.0
    %6841 = vmatpush1.msra.mxu0 %v362
    %6842 = vmatprep.subr.mxu0 0.0
    %6843 = vmatpush1.msra.mxu0 0.0
    %6844 = vmatprep.subr.mxu0 0.0
    %6845 = vmatpush1.msra.mxu0 0.0
    %6846 = vmatprep.subr.mxu0 0.0
    %6847 = vmatpush1.msra.mxu0 0.0
    %6848 = vmatprep.subr.mxu0 0.0
    %6849 = vmatpush1.msra.mxu0 0.0
    %6850 = vmatprep.subr.mxu0 0.0
    %6851 = vmatpush1.msra.mxu0 0.0
    %6852 = vmatprep.subr.mxu0 0.0
    %6853 = vmatpush1.msra.mxu0 0.0
    %6854 = vmatprep.subr.mxu0 0.0
    %6855 = vmatpush1.msra.mxu0 0.0
    %6856 = vmatprep.subr.mxu0 0.0
    %6857 = vmatpush1.msra.mxu0 0.0
    %6858 = vmatprep.subr.mxu0 0.0
    %6859 = vmatpush1.msra.mxu0 0.0
    %6860 = vmatprep.subr.mxu0 0.0
    %6861 = vmatpush1.msra.mxu0 0.0
    %6862 = vmatprep.subr.mxu0 0.0
    %6863 = vmatpush1.msra.mxu0 0.0
    %6864 = vmatprep.subr.mxu0 0.0
    %6865 = vmatpush1.msra.mxu0 0.0
    %6866 = vmatprep.subr.mxu0 0.0
    %6867 = vmatpush1.msra.mxu0 0.0
    %6868 = vmatprep.subr.mxu0 0.0
    %6869 = vmatpush1.msra.mxu0 0.0
    %6870 = vmatprep.subr.mxu0 0.0
    %6871 = vmatpush1.msra.mxu0 0.0
    %6872 = vmatprep.subr.mxu0 0.0
    %6873 = vmatpush1.msra.mxu0 0.0
    %6874 = vmatprep.subr.mxu0 0.0
    %6875 = vmatpush1.msra.mxu0 0.0
    %6876 = vmatprep.subr.mxu0 0.0
    %6877 = vmatpush1.msra.mxu0 0.0
    %6878 = vmatprep.subr.mxu0 0.0
    %6879 = vmatpush1.msra.mxu0 0.0
    %6880 = vmatprep.subr.mxu0 0.0
    %6881 = vmatpush1.msra.mxu0 0.0
    %6882 = vmatprep.subr.mxu0 0.0
    %6883 = vmatpush1.msra.mxu0 0.0
    %6884 = vmatprep.subr.mxu0 0.0
    %6885 = vmatpush1.msra.mxu0 0.0
    %6886 = vmatprep.subr.mxu0 0.0
    %6887 = vmatpush1.msra.mxu0 0.0
    %6888 = vmatprep.subr.mxu0 0.0
    %6889 = vmatpush1.msra.mxu0 0.0
    %6890 = vmatprep.subr.mxu0 0.0
    %6891 = vmatpush1.msra.mxu0 0.0
    %6892 = vmatprep.subr.mxu0 0.0
    %6893 = vmatpush1.msra.mxu0 0.0
    %6894 = vmatprep.subr.mxu0 0.0
    %6895 = vmatpush1.msra.mxu0 0.0
    %6896 = vmatprep.subr.mxu0 0.0
    %6897 = vmatpush1.msra.mxu0 0.0
    %6898 = vmatprep.mubr.f32.mxu0 0.0
    %6899 = vmatmul.mubr.f32.gmra.mrb[0].mxu0 %v5879
    %v6900 = vpop.f32.mrb[0].mxu0
    %v6901 = vadd.f32 0.0, %v6900
    %v6902 = vpop.f32.mrb[0].mxu0
    %6903 = vdwg.mxu0
    %6904 = vmatprep.subr.mxu0 0.0
    %6905 = vmatpush1.msra.mxu0 %v329
    %6906 = vmatprep.subr.mxu0 0.0
    %6907 = vmatpush1.msra.mxu0 %v330
    %6908 = vmatprep.subr.mxu0 0.0
    %6909 = vmatpush1.msra.mxu0 0.0
    %6910 = vmatprep.subr.mxu0 0.0
    %6911 = vmatpush1.msra.mxu0 0.0
    %6912 = vmatprep.subr.mxu0 0.0
    %6913 = vmatpush1.msra.mxu0 0.0
    %6914 = vmatprep.subr.mxu0 0.0
    %6915 = vmatpush1.msra.mxu0 0.0
    %6916 = vmatprep.subr.mxu0 0.0
    %6917 = vmatpush1.msra.mxu0 0.0
    %6918 = vmatprep.subr.mxu0 0.0
    %6919 = vmatpush1.msra.mxu0 0.0
    %6920 = vmatprep.subr.mxu0 0.0
    %6921 = vmatpush1.msra.mxu0 0.0
    %6922 = vmatprep.subr.mxu0 0.0
    %6923 = vmatpush1.msra.mxu0 0.0
    %6924 = vmatprep.subr.mxu0 0.0
    %6925 = vmatpush1.msra.mxu0 0.0
    %6926 = vmatprep.subr.mxu0 0.0
    %6927 = vmatpush1.msra.mxu0 0.0
    %6928 = vmatprep.subr.mxu0 0.0
    %6929 = vmatpush1.msra.mxu0 0.0
    %6930 = vmatprep.subr.mxu0 0.0
    %6931 = vmatpush1.msra.mxu0 0.0
    %6932 = vmatprep.subr.mxu0 0.0
    %6933 = vmatpush1.msra.mxu0 0.0
    %6934 = vmatprep.subr.mxu0 0.0
    %6935 = vmatpush1.msra.mxu0 0.0
    %6936 = vmatprep.subr.mxu0 0.0
    %6937 = vmatpush1.msra.mxu0 0.0
    %6938 = vmatprep.subr.mxu0 0.0
    %6939 = vmatpush1.msra.mxu0 0.0
    %6940 = vmatprep.subr.mxu0 0.0
    %6941 = vmatpush1.msra.mxu0 0.0
    %6942 = vmatprep.subr.mxu0 0.0
    %6943 = vmatpush1.msra.mxu0 0.0
    %6944 = vmatprep.subr.mxu0 0.0
    %6945 = vmatpush1.msra.mxu0 0.0
    %6946 = vmatprep.subr.mxu0 0.0
    %6947 = vmatpush1.msra.mxu0 0.0
    %6948 = vmatprep.subr.mxu0 0.0
    %6949 = vmatpush1.msra.mxu0 0.0
    %6950 = vmatprep.subr.mxu0 0.0
    %6951 = vmatpush1.msra.mxu0 0.0
    %6952 = vmatprep.subr.mxu0 0.0
    %6953 = vmatpush1.msra.mxu0 0.0
    %6954 = vmatprep.subr.mxu0 0.0
    %6955 = vmatpush1.msra.mxu0 0.0
    %6956 = vmatprep.subr.mxu0 0.0
    %6957 = vmatpush1.msra.mxu0 0.0
    %6958 = vmatprep.subr.mxu0 0.0
    %6959 = vmatpush1.msra.mxu0 0.0
    %6960 = vmatprep.subr.mxu0 0.0
    %6961 = vmatpush1.msra.mxu0 0.0
    %6962 = vmatprep.subr.mxu0 0.0
    %6963 = vmatpush1.msra.mxu0 0.0
    %6964 = vmatprep.subr.mxu0 0.0
    %6965 = vmatpush1.msra.mxu0 0.0
    %6966 = vmatprep.subr.mxu0 0.0
    %6967 = vmatpush1.msra.mxu0 0.0
    %6968 = vmatprep.mubr.f32.mxu0 0.0
    %6969 = vmatmul.mubr.f32.gmra.mrb[0].mxu0 %v6479
    %v6970 = vpop.f32.mrb[0].mxu0
    %v6971 = vadd.f32 %v6901, %v6970
    %v6972 = vpop.f32.mrb[0].mxu0
    %6973 = vdwg.mxu0
    %v6974 = vadd.f32 %v6971, %v405
    %v6975 = vxor.u32 %v6551, 2147483648
    %v6976 = vmul.f32 %v6975, 1.442695
    %v6977 = vpow.pop %v6976
    %v6978 = vadd.f32 %v6977, 1.0
    %v6979 = vrcp.pop %v6978
    %v6980 = vmul.f32 1.0, %v6979
    %v6981 = vxor.u32 %v6692, 2147483648
    %v6982 = vmul.f32 %v6981, 1.442695
    %v6983 = vpow.pop %v6982
    %v6984 = vadd.f32 %v6983, 1.0
    %v6985 = vrcp.pop %v6984
    %v6986 = vmul.f32 1.0, %v6985
    %v6987 = vtanh.pop %v6833
    %v6988 = vxor.u32 %v6974, 2147483648
    %v6989 = vmul.f32 %v6988, 1.442695
    %v6990 = vpow.pop %v6989
    %v6991 = vadd.f32 %v6990, 1.0
    %v6992 = vrcp.pop %v6991
    %v6993 = vmul.f32 1.0, %v6992
    %v6994 = vmul.f32 %v6986, %v5802
    %v6995 = vmul.f32 %v6980, %v6987
    %v6996 = vadd.f32 %v6994, %v6995
    %v6997 = vtanh.pop %v6996
    %v6998 = vmul.f32 %v6993, %v6997
    %v7000 = vsel %vm436, %v6398, 0
    %7002 = vmatprep.subr.mxu0 0.0
    %7003 = vmatpush1.msra.mxu0 %v363
    %7004 = vmatprep.subr.mxu0 0.0
    %7005 = vmatpush1.msra.mxu0 %v364
    %7006 = vmatprep.subr.mxu0 0.0
    %7007 = vmatpush1.msra.mxu0 %v365
    %7008 = vmatprep.subr.mxu0 0.0
    %7009 = vmatpush1.msra.mxu0 %v366
    %7010 = vmatprep.subr.mxu0 0.0
    %7011 = vmatpush1.msra.mxu0 0.0
    %7012 = vmatprep.subr.mxu0 0.0
    %7013 = vmatpush1.msra.mxu0 0.0
    %7014 = vmatprep.subr.mxu0 0.0
    %7015 = vmatpush1.msra.mxu0 0.0
    %7016 = vmatprep.subr.mxu0 0.0
    %7017 = vmatpush1.msra.mxu0 0.0
    %7018 = vmatprep.subr.mxu0 0.0
    %7019 = vmatpush1.msra.mxu0 0.0
    %7020 = vmatprep.subr.mxu0 0.0
    %7021 = vmatpush1.msra.mxu0 0.0
    %7022 = vmatprep.subr.mxu0 0.0
    %7023 = vmatpush1.msra.mxu0 0.0
    %7024 = vmatprep.subr.mxu0 0.0
    %7025 = vmatpush1.msra.mxu0 0.0
    %7026 = vmatprep.subr.mxu0 0.0
    %7027 = vmatpush1.msra.mxu0 0.0
    %7028 = vmatprep.subr.mxu0 0.0
    %7029 = vmatpush1.msra.mxu0 0.0
    %7030 = vmatprep.subr.mxu0 0.0
    %7031 = vmatpush1.msra.mxu0 0.0
    %7032 = vmatprep.subr.mxu0 0.0
    %7033 = vmatpush1.msra.mxu0 0.0
    %7034 = vmatprep.subr.mxu0 0.0
    %7035 = vmatpush1.msra.mxu0 0.0
    %7036 = vmatprep.subr.mxu0 0.0
    %7037 = vmatpush1.msra.mxu0 0.0
    %7038 = vmatprep.subr.mxu0 0.0
    %7039 = vmatpush1.msra.mxu0 0.0
    %7040 = vmatprep.subr.mxu0 0.0
    %7041 = vmatpush1.msra.mxu0 0.0
    %7042 = vmatprep.subr.mxu0 0.0
    %7043 = vmatpush1.msra.mxu0 0.0
    %7044 = vmatprep.subr.mxu0 0.0
    %7045 = vmatpush1.msra.mxu0 0.0
    %7046 = vmatprep.subr.mxu0 0.0
    %7047 = vmatpush1.msra.mxu0 0.0
    %7048 = vmatprep.subr.mxu0 0.0
    %7049 = vmatpush1.msra.mxu0 0.0
    %7050 = vmatprep.subr.mxu0 0.0
    %7051 = vmatpush1.msra.mxu0 0.0
    %7052 = vmatprep.subr.mxu0 0.0
    %7053 = vmatpush1.msra.mxu0 0.0
    %7054 = vmatprep.subr.mxu0 0.0
    %7055 = vmatpush1.msra.mxu0 0.0
    %7056 = vmatprep.subr.mxu0 0.0
    %7057 = vmatpush1.msra.mxu0 0.0
    %7058 = vmatprep.subr.mxu0 0.0
    %7059 = vmatpush1.msra.mxu0 0.0
    %7060 = vmatprep.subr.mxu0 0.0
    %7061 = vmatpush1.msra.mxu0 0.0
    %7062 = vmatprep.subr.mxu0 0.0
    %7063 = vmatpush1.msra.mxu0 0.0
    %7064 = vmatprep.subr.mxu0 0.0
    %7065 = vmatpush1.msra.mxu0 0.0
    %7066 = vmatprep.mubr.f32.mxu0 0.0
    %7067 = vmatmul.mubr.f32.gmra.mrb[0].mxu0 %v7000
    %v7068 = vpop.f32.mrb[0].mxu0
    %v7069 = vadd.f32 0.0, %v7068
    %v7070 = vpop.f32.mrb[0].mxu0
    %7071 = vdwg.mxu0
    %v7073 = vsel %vm436, %v6998, 0
    %7075 = vmatprep.subr.mxu0 0.0
    %7076 = vmatpush1.msra.mxu0 %v331
    %7077 = vmatprep.subr.mxu0 0.0
    %7078 = vmatpush1.msra.mxu0 %v332
    %7079 = vmatprep.subr.mxu0 0.0
    %7080 = vmatpush1.msra.mxu0 %v333
    %7081 = vmatprep.subr.mxu0 0.0
    %7082 = vmatpush1.msra.mxu0 %v334
    %7083 = vmatprep.subr.mxu0 0.0
    %7084 = vmatpush1.msra.mxu0 0.0
    %7085 = vmatprep.subr.mxu0 0.0
    %7086 = vmatpush1.msra.mxu0 0.0
    %7087 = vmatprep.subr.mxu0 0.0
    %7088 = vmatpush1.msra.mxu0 0.0
    %7089 = vmatprep.subr.mxu0 0.0
    %7090 = vmatpush1.msra.mxu0 0.0
    %7091 = vmatprep.subr.mxu0 0.0
    %7092 = vmatpush1.msra.mxu0 0.0
    %7093 = vmatprep.subr.mxu0 0.0
    %7094 = vmatpush1.msra.mxu0 0.0
    %7095 = vmatprep.subr.mxu0 0.0
    %7096 = vmatpush1.msra.mxu0 0.0
    %7097 = vmatprep.subr.mxu0 0.0
    %7098 = vmatpush1.msra.mxu0 0.0
    %7099 = vmatprep.subr.mxu0 0.0
    %7100 = vmatpush1.msra.mxu0 0.0
    %7101 = vmatprep.subr.mxu0 0.0
    %7102 = vmatpush1.msra.mxu0 0.0
    %7103 = vmatprep.subr.mxu0 0.0
    %7104 = vmatpush1.msra.mxu0 0.0
    %7105 = vmatprep.subr.mxu0 0.0
    %7106 = vmatpush1.msra.mxu0 0.0
    %7107 = vmatprep.subr.mxu0 0.0
    %7108 = vmatpush1.msra.mxu0 0.0
    %7109 = vmatprep.subr.mxu0 0.0
    %7110 = vmatpush1.msra.mxu0 0.0
    %7111 = vmatprep.subr.mxu0 0.0
    %7112 = vmatpush1.msra.mxu0 0.0
    %7113 = vmatprep.subr.mxu0 0.0
    %7114 = vmatpush1.msra.mxu0 0.0
    %7115 = vmatprep.subr.mxu0 0.0
    %7116 = vmatpush1.msra.mxu0 0.0
    %7117 = vmatprep.subr.mxu0 0.0
    %7118 = vmatpush1.msra.mxu0 0.0
    %7119 = vmatprep.subr.mxu0 0.0
    %7120 = vmatpush1.msra.mxu0 0.0
    %7121 = vmatprep.subr.mxu0 0.0
    %7122 = vmatpush1.msra.mxu0 0.0
    %7123 = vmatprep.subr.mxu0 0.0
    %7124 = vmatpush1.msra.mxu0 0.0
    %7125 = vmatprep.subr.mxu0 0.0
    %7126 = vmatpush1.msra.mxu0 0.0
    %7127 = vmatprep.subr.mxu0 0.0
    %7128 = vmatpush1.msra.mxu0 0.0
    %7129 = vmatprep.subr.mxu0 0.0
    %7130 = vmatpush1.msra.mxu0 0.0
    %7131 = vmatprep.subr.mxu0 0.0
    %7132 = vmatpush1.msra.mxu0 0.0
    %7133 = vmatprep.subr.mxu0 0.0
    %7134 = vmatpush1.msra.mxu0 0.0
    %7135 = vmatprep.subr.mxu0 0.0
    %7136 = vmatpush1.msra.mxu0 0.0
    %7137 = vmatprep.subr.mxu0 0.0
    %7138 = vmatpush1.msra.mxu0 0.0
    %7139 = vmatprep.mubr.f32.mxu0 0.0
    %7140 = vmatmul.mubr.f32.gmra.mrb[0].mxu0 %v7073
    %v7141 = vpop.f32.mrb[0].mxu0
    %v7142 = vadd.f32 %v7069, %v7141
    %v7143 = vpop.f32.mrb[0].mxu0
    %7144 = vdwg.mxu0
    %v7145 = vadd.f32 %v7142, %v412
    %7146 = vmatprep.subr.mxu0 0.0
    %7147 = vmatpush1.msra.mxu0 %v367
    %7148 = vmatprep.subr.mxu0 0.0
    %7149 = vmatpush1.msra.mxu0 %v368
    %7150 = vmatprep.subr.mxu0 0.0
    %7151 = vmatpush1.msra.mxu0 %v369
    %7152 = vmatprep.subr.mxu0 0.0
    %7153 = vmatpush1.msra.mxu0 %v370
    %7154 = vmatprep.subr.mxu0 0.0
    %7155 = vmatpush1.msra.mxu0 0.0
    %7156 = vmatprep.subr.mxu0 0.0
    %7157 = vmatpush1.msra.mxu0 0.0
    %7158 = vmatprep.subr.mxu0 0.0
    %7159 = vmatpush1.msra.mxu0 0.0
    %7160 = vmatprep.subr.mxu0 0.0
    %7161 = vmatpush1.msra.mxu0 0.0
    %7162 = vmatprep.subr.mxu0 0.0
    %7163 = vmatpush1.msra.mxu0 0.0
    %7164 = vmatprep.subr.mxu0 0.0
    %7165 = vmatpush1.msra.mxu0 0.0
    %7166 = vmatprep.subr.mxu0 0.0
    %7167 = vmatpush1.msra.mxu0 0.0
    %7168 = vmatprep.subr.mxu0 0.0
    %7169 = vmatpush1.msra.mxu0 0.0
    %7170 = vmatprep.subr.mxu0 0.0
    %7171 = vmatpush1.msra.mxu0 0.0
    %7172 = vmatprep.subr.mxu0 0.0
    %7173 = vmatpush1.msra.mxu0 0.0
    %7174 = vmatprep.subr.mxu0 0.0
    %7175 = vmatpush1.msra.mxu0 0.0
    %7176 = vmatprep.subr.mxu0 0.0
    %7177 = vmatpush1.msra.mxu0 0.0
    %7178 = vmatprep.subr.mxu0 0.0
    %7179 = vmatpush1.msra.mxu0 0.0
    %7180 = vmatprep.subr.mxu0 0.0
    %7181 = vmatpush1.msra.mxu0 0.0
    %7182 = vmatprep.subr.mxu0 0.0
    %7183 = vmatpush1.msra.mxu0 0.0
    %7184 = vmatprep.subr.mxu0 0.0
    %7185 = vmatpush1.msra.mxu0 0.0
    %7186 = vmatprep.subr.mxu0 0.0
    %7187 = vmatpush1.msra.mxu0 0.0
    %7188 = vmatprep.subr.mxu0 0.0
    %7189 = vmatpush1.msra.mxu0 0.0
    %7190 = vmatprep.subr.mxu0 0.0
    %7191 = vmatpush1.msra.mxu0 0.0
    %7192 = vmatprep.subr.mxu0 0.0
    %7193 = vmatpush1.msra.mxu0 0.0
    %7194 = vmatprep.subr.mxu0 0.0
    %7195 = vmatpush1.msra.mxu0 0.0
    %7196 = vmatprep.subr.mxu0 0.0
    %7197 = vmatpush1.msra.mxu0 0.0
    %7198 = vmatprep.subr.mxu0 0.0
    %7199 = vmatpush1.msra.mxu0 0.0
    %7200 = vmatprep.subr.mxu0 0.0
    %7201 = vmatpush1.msra.mxu0 0.0
    %7202 = vmatprep.subr.mxu0 0.0
    %7203 = vmatpush1.msra.mxu0 0.0
    %7204 = vmatprep.subr.mxu0 0.0
    %7205 = vmatpush1.msra.mxu0 0.0
    %7206 = vmatprep.subr.mxu0 0.0
    %7207 = vmatpush1.msra.mxu0 0.0
    %7208 = vmatprep.subr.mxu0 0.0
    %7209 = vmatpush1.msra.mxu0 0.0
    %7210 = vmatprep.mubr.f32.mxu0 0.0
    %7211 = vmatmul.mubr.f32.gmra.mrb[0].mxu0 %v7000
    %v7212 = vpop.f32.mrb[0].mxu0
    %v7213 = vadd.f32 0.0, %v7212
    %v7214 = vpop.f32.mrb[0].mxu0
    %7215 = vdwg.mxu0
    %7216 = vmatprep.subr.mxu0 0.0
    %7217 = vmatpush1.msra.mxu0 %v335
    %7218 = vmatprep.subr.mxu0 0.0
    %7219 = vmatpush1.msra.mxu0 %v336
    %7220 = vmatprep.subr.mxu0 0.0
    %7221 = vmatpush1.msra.mxu0 %v337
    %7222 = vmatprep.subr.mxu0 0.0
    %7223 = vmatpush1.msra.mxu0 %v338
    %7224 = vmatprep.subr.mxu0 0.0
    %7225 = vmatpush1.msra.mxu0 0.0
    %7226 = vmatprep.subr.mxu0 0.0
    %7227 = vmatpush1.msra.mxu0 0.0
    %7228 = vmatprep.subr.mxu0 0.0
    %7229 = vmatpush1.msra.mxu0 0.0
    %7230 = vmatprep.subr.mxu0 0.0
    %7231 = vmatpush1.msra.mxu0 0.0
    %7232 = vmatprep.subr.mxu0 0.0
    %7233 = vmatpush1.msra.mxu0 0.0
    %7234 = vmatprep.subr.mxu0 0.0
    %7235 = vmatpush1.msra.mxu0 0.0
    %7236 = vmatprep.subr.mxu0 0.0
    %7237 = vmatpush1.msra.mxu0 0.0
    %7238 = vmatprep.subr.mxu0 0.0
    %7239 = vmatpush1.msra.mxu0 0.0
    %7240 = vmatprep.subr.mxu0 0.0
    %7241 = vmatpush1.msra.mxu0 0.0
    %7242 = vmatprep.subr.mxu0 0.0
    %7243 = vmatpush1.msra.mxu0 0.0
    %7244 = vmatprep.subr.mxu0 0.0
    %7245 = vmatpush1.msra.mxu0 0.0
    %7246 = vmatprep.subr.mxu0 0.0
    %7247 = vmatpush1.msra.mxu0 0.0
    %7248 = vmatprep.subr.mxu0 0.0
    %7249 = vmatpush1.msra.mxu0 0.0
    %7250 = vmatprep.subr.mxu0 0.0
    %7251 = vmatpush1.msra.mxu0 0.0
    %7252 = vmatprep.subr.mxu0 0.0
    %7253 = vmatpush1.msra.mxu0 0.0
    %7254 = vmatprep.subr.mxu0 0.0
    %7255 = vmatpush1.msra.mxu0 0.0
    %7256 = vmatprep.subr.mxu0 0.0
    %7257 = vmatpush1.msra.mxu0 0.0
    %7258 = vmatprep.subr.mxu0 0.0
    %7259 = vmatpush1.msra.mxu0 0.0
    %7260 = vmatprep.subr.mxu0 0.0
    %7261 = vmatpush1.msra.mxu0 0.0
    %7262 = vmatprep.subr.mxu0 0.0
    %7263 = vmatpush1.msra.mxu0 0.0
    %7264 = vmatprep.subr.mxu0 0.0
    %7265 = vmatpush1.msra.mxu0 0.0
    %7266 = vmatprep.subr.mxu0 0.0
    %7267 = vmatpush1.msra.mxu0 0.0
    %7268 = vmatprep.subr.mxu0 0.0
    %7269 = vmatpush1.msra.mxu0 0.0
    %7270 = vmatprep.subr.mxu0 0.0
    %7271 = vmatpush1.msra.mxu0 0.0
    %7272 = vmatprep.subr.mxu0 0.0
    %7273 = vmatpush1.msra.mxu0 0.0
    %7274 = vmatprep.subr.mxu0 0.0
    %7275 = vmatpush1.msra.mxu0 0.0
    %7276 = vmatprep.subr.mxu0 0.0
    %7277 = vmatpush1.msra.mxu0 0.0
    %7278 = vmatprep.subr.mxu0 0.0
    %7279 = vmatpush1.msra.mxu0 0.0
    %7280 = vmatprep.mubr.f32.mxu0 0.0
    %7281 = vmatmul.mubr.f32.gmra.mrb[0].mxu0 %v7073
    %v7282 = vpop.f32.mrb[0].mxu0
    %v7283 = vadd.f32 %v7213, %v7282
    %v7284 = vpop.f32.mrb[0].mxu0
    %7285 = vdwg.mxu0
    %v7286 = vadd.f32 %v7283, %v419
    %7287 = vmatprep.subr.mxu0 0.0
    %7288 = vmatpush1.msra.mxu0 %v371
    %7289 = vmatprep.subr.mxu0 0.0
    %7290 = vmatpush1.msra.mxu0 %v372
    %7291 = vmatprep.subr.mxu0 0.0
    %7292 = vmatpush1.msra.mxu0 %v373
    %7293 = vmatprep.subr.mxu0 0.0
    %7294 = vmatpush1.msra.mxu0 %v374
    %7295 = vmatprep.subr.mxu0 0.0
    %7296 = vmatpush1.msra.mxu0 0.0
    %7297 = vmatprep.subr.mxu0 0.0
    %7298 = vmatpush1.msra.mxu0 0.0
    %7299 = vmatprep.subr.mxu0 0.0
    %7300 = vmatpush1.msra.mxu0 0.0
    %7301 = vmatprep.subr.mxu0 0.0
    %7302 = vmatpush1.msra.mxu0 0.0
    %7303 = vmatprep.subr.mxu0 0.0
    %7304 = vmatpush1.msra.mxu0 0.0
    %7305 = vmatprep.subr.mxu0 0.0
    %7306 = vmatpush1.msra.mxu0 0.0
    %7307 = vmatprep.subr.mxu0 0.0
    %7308 = vmatpush1.msra.mxu0 0.0
    %7309 = vmatprep.subr.mxu0 0.0
    %7310 = vmatpush1.msra.mxu0 0.0
    %7311 = vmatprep.subr.mxu0 0.0
    %7312 = vmatpush1.msra.mxu0 0.0
    %7313 = vmatprep.subr.mxu0 0.0
    %7314 = vmatpush1.msra.mxu0 0.0
    %7315 = vmatprep.subr.mxu0 0.0
    %7316 = vmatpush1.msra.mxu0 0.0
    %7317 = vmatprep.subr.mxu0 0.0
    %7318 = vmatpush1.msra.mxu0 0.0
    %7319 = vmatprep.subr.mxu0 0.0
    %7320 = vmatpush1.msra.mxu0 0.0
    %7321 = vmatprep.subr.mxu0 0.0
    %7322 = vmatpush1.msra.mxu0 0.0
    %7323 = vmatprep.subr.mxu0 0.0
    %7324 = vmatpush1.msra.mxu0 0.0
    %7325 = vmatprep.subr.mxu0 0.0
    %7326 = vmatpush1.msra.mxu0 0.0
    %7327 = vmatprep.subr.mxu0 0.0
    %7328 = vmatpush1.msra.mxu0 0.0
    %7329 = vmatprep.subr.mxu0 0.0
    %7330 = vmatpush1.msra.mxu0 0.0
    %7331 = vmatprep.subr.mxu0 0.0
    %7332 = vmatpush1.msra.mxu0 0.0
    %7333 = vmatprep.subr.mxu0 0.0
    %7334 = vmatpush1.msra.mxu0 0.0
    %7335 = vmatprep.subr.mxu0 0.0
    %7336 = vmatpush1.msra.mxu0 0.0
    %7337 = vmatprep.subr.mxu0 0.0
    %7338 = vmatpush1.msra.mxu0 0.0
    %7339 = vmatprep.subr.mxu0 0.0
    %7340 = vmatpush1.msra.mxu0 0.0
    %7341 = vmatprep.subr.mxu0 0.0
    %7342 = vmatpush1.msra.mxu0 0.0
    %7343 = vmatprep.subr.mxu0 0.0
    %7344 = vmatpush1.msra.mxu0 0.0
    %7345 = vmatprep.subr.mxu0 0.0
    %7346 = vmatpush1.msra.mxu0 0.0
    %7347 = vmatprep.subr.mxu0 0.0
    %7348 = vmatpush1.msra.mxu0 0.0
    %7349 = vmatprep.subr.mxu0 0.0
    %7350 = vmatpush1.msra.mxu0 0.0
    %7351 = vmatprep.mubr.f32.mxu0 0.0
    %7352 = vmatmul.mubr.f32.gmra.mrb[0].mxu0 %v7000
    %v7353 = vpop.f32.mrb[0].mxu0
    %v7354 = vadd.f32 0.0, %v7353
    %v7355 = vpop.f32.mrb[0].mxu0
    %7356 = vdwg.mxu0
    %7357 = vmatprep.subr.mxu0 0.0
    %7358 = vmatpush1.msra.mxu0 %v339
    %7359 = vmatprep.subr.mxu0 0.0
    %7360 = vmatpush1.msra.mxu0 %v340
    %7361 = vmatprep.subr.mxu0 0.0
    %7362 = vmatpush1.msra.mxu0 %v341
    %7363 = vmatprep.subr.mxu0 0.0
    %7364 = vmatpush1.msra.mxu0 %v342
    %7365 = vmatprep.subr.mxu0 0.0
    %7366 = vmatpush1.msra.mxu0 0.0
    %7367 = vmatprep.subr.mxu0 0.0
    %7368 = vmatpush1.msra.mxu0 0.0
    %7369 = vmatprep.subr.mxu0 0.0
    %7370 = vmatpush1.msra.mxu0 0.0
    %7371 = vmatprep.subr.mxu0 0.0
    %7372 = vmatpush1.msra.mxu0 0.0
    %7373 = vmatprep.subr.mxu0 0.0
    %7374 = vmatpush1.msra.mxu0 0.0
    %7375 = vmatprep.subr.mxu0 0.0
    %7376 = vmatpush1.msra.mxu0 0.0
    %7377 = vmatprep.subr.mxu0 0.0
    %7378 = vmatpush1.msra.mxu0 0.0
    %7379 = vmatprep.subr.mxu0 0.0
    %7380 = vmatpush1.msra.mxu0 0.0
    %7381 = vmatprep.subr.mxu0 0.0
    %7382 = vmatpush1.msra.mxu0 0.0
    %7383 = vmatprep.subr.mxu0 0.0
    %7384 = vmatpush1.msra.mxu0 0.0
    %7385 = vmatprep.subr.mxu0 0.0
    %7386 = vmatpush1.msra.mxu0 0.0
    %7387 = vmatprep.subr.mxu0 0.0
    %7388 = vmatpush1.msra.mxu0 0.0
    %7389 = vmatprep.subr.mxu0 0.0
    %7390 = vmatpush1.msra.mxu0 0.0
    %7391 = vmatprep.subr.mxu0 0.0
    %7392 = vmatpush1.msra.mxu0 0.0
    %7393 = vmatprep.subr.mxu0 0.0
    %7394 = vmatpush1.msra.mxu0 0.0
    %7395 = vmatprep.subr.mxu0 0.0
    %7396 = vmatpush1.msra.mxu0 0.0
    %7397 = vmatprep.subr.mxu0 0.0
    %7398 = vmatpush1.msra.mxu0 0.0
    %7399 = vmatprep.subr.mxu0 0.0
    %7400 = vmatpush1.msra.mxu0 0.0
    %7401 = vmatprep.subr.mxu0 0.0
    %7402 = vmatpush1.msra.mxu0 0.0
    %7403 = vmatprep.subr.mxu0 0.0
    %7404 = vmatpush1.msra.mxu0 0.0
    %7405 = vmatprep.subr.mxu0 0.0
    %7406 = vmatpush1.msra.mxu0 0.0
    %7407 = vmatprep.subr.mxu0 0.0
    %7408 = vmatpush1.msra.mxu0 0.0
    %7409 = vmatprep.subr.mxu0 0.0
    %7410 = vmatpush1.msra.mxu0 0.0
    %7411 = vmatprep.subr.mxu0 0.0
    %7412 = vmatpush1.msra.mxu0 0.0
    %7413 = vmatprep.subr.mxu0 0.0
    %7414 = vmatpush1.msra.mxu0 0.0
    %7415 = vmatprep.subr.mxu0 0.0
    %7416 = vmatpush1.msra.mxu0 0.0
    %7417 = vmatprep.subr.mxu0 0.0
    %7418 = vmatpush1.msra.mxu0 0.0
    %7419 = vmatprep.subr.mxu0 0.0
    %7420 = vmatpush1.msra.mxu0 0.0
    %7421 = vmatprep.mubr.f32.mxu0 0.0
    %7422 = vmatmul.mubr.f32.gmra.mrb[0].mxu0 %v7073
    %v7423 = vpop.f32.mrb[0].mxu0
    %v7424 = vadd.f32 %v7354, %v7423
    %v7425 = vpop.f32.mrb[0].mxu0
    %7426 = vdwg.mxu0
    %v7427 = vadd.f32 %v7424, %v426
    %7428 = vmatprep.subr.mxu0 0.0
    %7429 = vmatpush1.msra.mxu0 %v375
    %7430 = vmatprep.subr.mxu0 0.0
    %7431 = vmatpush1.msra.mxu0 %v376
    %7432 = vmatprep.subr.mxu0 0.0
    %7433 = vmatpush1.msra.mxu0 %v377
    %7434 = vmatprep.subr.mxu0 0.0
    %7435 = vmatpush1.msra.mxu0 %v378
    %7436 = vmatprep.subr.mxu0 0.0
    %7437 = vmatpush1.msra.mxu0 0.0
    %7438 = vmatprep.subr.mxu0 0.0
    %7439 = vmatpush1.msra.mxu0 0.0
    %7440 = vmatprep.subr.mxu0 0.0
    %7441 = vmatpush1.msra.mxu0 0.0
    %7442 = vmatprep.subr.mxu0 0.0
    %7443 = vmatpush1.msra.mxu0 0.0
    %7444 = vmatprep.subr.mxu0 0.0
    %7445 = vmatpush1.msra.mxu0 0.0
    %7446 = vmatprep.subr.mxu0 0.0
    %7447 = vmatpush1.msra.mxu0 0.0
    %7448 = vmatprep.subr.mxu0 0.0
    %7449 = vmatpush1.msra.mxu0 0.0
    %7450 = vmatprep.subr.mxu0 0.0
    %7451 = vmatpush1.msra.mxu0 0.0
    %7452 = vmatprep.subr.mxu0 0.0
    %7453 = vmatpush1.msra.mxu0 0.0
    %7454 = vmatprep.subr.mxu0 0.0
    %7455 = vmatpush1.msra.mxu0 0.0
    %7456 = vmatprep.subr.mxu0 0.0
    %7457 = vmatpush1.msra.mxu0 0.0
    %7458 = vmatprep.subr.mxu0 0.0
    %7459 = vmatpush1.msra.mxu0 0.0
    %7460 = vmatprep.subr.mxu0 0.0
    %7461 = vmatpush1.msra.mxu0 0.0
    %7462 = vmatprep.subr.mxu0 0.0
    %7463 = vmatpush1.msra.mxu0 0.0
    %7464 = vmatprep.subr.mxu0 0.0
    %7465 = vmatpush1.msra.mxu0 0.0
    %7466 = vmatprep.subr.mxu0 0.0
    %7467 = vmatpush1.msra.mxu0 0.0
    %7468 = vmatprep.subr.mxu0 0.0
    %7469 = vmatpush1.msra.mxu0 0.0
    %7470 = vmatprep.subr.mxu0 0.0
    %7471 = vmatpush1.msra.mxu0 0.0
    %7472 = vmatprep.subr.mxu0 0.0
    %7473 = vmatpush1.msra.mxu0 0.0
    %7474 = vmatprep.subr.mxu0 0.0
    %7475 = vmatpush1.msra.mxu0 0.0
    %7476 = vmatprep.subr.mxu0 0.0
    %7477 = vmatpush1.msra.mxu0 0.0
    %7478 = vmatprep.subr.mxu0 0.0
    %7479 = vmatpush1.msra.mxu0 0.0
    %7480 = vmatprep.subr.mxu0 0.0
    %7481 = vmatpush1.msra.mxu0 0.0
    %7482 = vmatprep.subr.mxu0 0.0
    %7483 = vmatpush1.msra.mxu0 0.0
    %7484 = vmatprep.subr.mxu0 0.0
    %7485 = vmatpush1.msra.mxu0 0.0
    %7486 = vmatprep.subr.mxu0 0.0
    %7487 = vmatpush1.msra.mxu0 0.0
    %7488 = vmatprep.subr.mxu0 0.0
    %7489 = vmatpush1.msra.mxu0 0.0
    %7490 = vmatprep.subr.mxu0 0.0
    %7491 = vmatpush1.msra.mxu0 0.0
    %7492 = vmatprep.mubr.f32.mxu0 0.0
    %7493 = vmatmul.mubr.f32.gmra.mrb[0].mxu0 %v7000
    %v7494 = vpop.f32.mrb[0].mxu0
    %v7495 = vadd.f32 0.0, %v7494
    %v7496 = vpop.f32.mrb[0].mxu0
    %7497 = vdwg.mxu0
    %7498 = vmatprep.subr.mxu0 0.0
    %7499 = vmatpush1.msra.mxu0 %v343
    %7500 = vmatprep.subr.mxu0 0.0
    %7501 = vmatpush1.msra.mxu0 %v344
    %7502 = vmatprep.subr.mxu0 0.0
    %7503 = vmatpush1.msra.mxu0 %v345
    %7504 = vmatprep.subr.mxu0 0.0
    %7505 = vmatpush1.msra.mxu0 %v346
    %7506 = vmatprep.subr.mxu0 0.0
    %7507 = vmatpush1.msra.mxu0 0.0
    %7508 = vmatprep.subr.mxu0 0.0
    %7509 = vmatpush1.msra.mxu0 0.0
    %7510 = vmatprep.subr.mxu0 0.0
    %7511 = vmatpush1.msra.mxu0 0.0
    %7512 = vmatprep.subr.mxu0 0.0
    %7513 = vmatpush1.msra.mxu0 0.0
    %7514 = vmatprep.subr.mxu0 0.0
    %7515 = vmatpush1.msra.mxu0 0.0
    %7516 = vmatprep.subr.mxu0 0.0
    %7517 = vmatpush1.msra.mxu0 0.0
    %7518 = vmatprep.subr.mxu0 0.0
    %7519 = vmatpush1.msra.mxu0 0.0
    %7520 = vmatprep.subr.mxu0 0.0
    %7521 = vmatpush1.msra.mxu0 0.0
    %7522 = vmatprep.subr.mxu0 0.0
    %7523 = vmatpush1.msra.mxu0 0.0
    %7524 = vmatprep.subr.mxu0 0.0
    %7525 = vmatpush1.msra.mxu0 0.0
    %7526 = vmatprep.subr.mxu0 0.0
    %7527 = vmatpush1.msra.mxu0 0.0
    %7528 = vmatprep.subr.mxu0 0.0
    %7529 = vmatpush1.msra.mxu0 0.0
    %7530 = vmatprep.subr.mxu0 0.0
    %7531 = vmatpush1.msra.mxu0 0.0
    %7532 = vmatprep.subr.mxu0 0.0
    %7533 = vmatpush1.msra.mxu0 0.0
    %7534 = vmatprep.subr.mxu0 0.0
    %7535 = vmatpush1.msra.mxu0 0.0
    %7536 = vmatprep.subr.mxu0 0.0
    %7537 = vmatpush1.msra.mxu0 0.0
    %7538 = vmatprep.subr.mxu0 0.0
    %7539 = vmatpush1.msra.mxu0 0.0
    %7540 = vmatprep.subr.mxu0 0.0
    %7541 = vmatpush1.msra.mxu0 0.0
    %7542 = vmatprep.subr.mxu0 0.0
    %7543 = vmatpush1.msra.mxu0 0.0
    %7544 = vmatprep.subr.mxu0 0.0
    %7545 = vmatpush1.msra.mxu0 0.0
    %7546 = vmatprep.subr.mxu0 0.0
    %7547 = vmatpush1.msra.mxu0 0.0
    %7548 = vmatprep.subr.mxu0 0.0
    %7549 = vmatpush1.msra.mxu0 0.0
    %7550 = vmatprep.subr.mxu0 0.0
    %7551 = vmatpush1.msra.mxu0 0.0
    %7552 = vmatprep.subr.mxu0 0.0
    %7553 = vmatpush1.msra.mxu0 0.0
    %7554 = vmatprep.subr.mxu0 0.0
    %7555 = vmatpush1.msra.mxu0 0.0
    %7556 = vmatprep.subr.mxu0 0.0
    %7557 = vmatpush1.msra.mxu0 0.0
    %7558 = vmatprep.subr.mxu0 0.0
    %7559 = vmatpush1.msra.mxu0 0.0
    %7560 = vmatprep.subr.mxu0 0.0
    %7561 = vmatpush1.msra.mxu0 0.0
    %7562 = vmatprep.mubr.f32.mxu0 0.0
    %7563 = vmatmul.mubr.f32.gmra.mrb[0].mxu0 %v7073
    %v7564 = vpop.f32.mrb[0].mxu0
    %v7565 = vadd.f32 %v7495, %v7564
    %v7566 = vpop.f32.mrb[0].mxu0
    %7567 = vdwg.mxu0
    %v7568 = vadd.f32 %v7565, %v433
    %v7569 = vxor.u32 %v7145, 2147483648
    %v7570 = vmul.f32 %v7569, 1.442695
    %v7571 = vpow.pop %v7570
    %v7572 = vadd.f32 %v7571, 1.0
    %v7573 = vrcp.pop %v7572
    %v7574 = vmul.f32 1.0, %v7573
    %v7575 = vxor.u32 %v7286, 2147483648
    %v7576 = vmul.f32 %v7575, 1.442695
    %v7577 = vpow.pop %v7576
    %v7578 = vadd.f32 %v7577, 1.0
    %v7579 = vrcp.pop %v7578
    %v7580 = vmul.f32 1.0, %v7579
    %v7581 = vtanh.pop %v7427
    %v7582 = vxor.u32 %v7568, 2147483648
    %v7583 = vmul.f32 %v7582, 1.442695
    %v7584 = vpow.pop %v7583
    %v7585 = vadd.f32 %v7584, 1.0
    %v7586 = vrcp.pop %v7585
    %v7587 = vmul.f32 1.0, %v7586
    %v7588 = vmul.f32 %v7580, %v6396
    %v7589 = vmul.f32 %v7574, %v7581
    %v7590 = vadd.f32 %v7588, %v7589
    %v7591 = vtanh.pop %v7590
    %v7592 = vmul.f32 %v7587, %v7591
    %vm7593 = vcmp.eq.s32.totalorder %v322, 5
    %v7594 = vsel %vm7593, 1, 0
    %7595 = vset.pattern.permute.xlu0 0
    %7596 = vperm.xlu0 %7595, %v7594
    %v7597 = vpop.permute.xlu0 %7596
    %vm7598 = vcmp.eq.s32.totalorder %v7597, 1
    %v7599 = vsel %vm7598, %v7592, %v6405
    %s7600 = scalar_lea.vmem [#allocation2], 48
    %v7601 = vld [vmem:[%s7600] sm:$0xff]
    %7602 = vmatprep.subr.mxu0 0.0
    %7603 = vmatpush1.msra.mxu0 %v347
    %7604 = vmatprep.subr.mxu0 0.0
    %7605 = vmatpush1.msra.mxu0 %v348
    %7606 = vmatprep.subr.mxu0 0.0
    %7607 = vmatpush1.msra.mxu0 %v349
    %7608 = vmatprep.subr.mxu0 0.0
    %7609 = vmatpush1.msra.mxu0 %v350
    %7610 = vmatprep.subr.mxu0 0.0
    %7611 = vmatpush1.msra.mxu0 0.0
    %7612 = vmatprep.subr.mxu0 0.0
    %7613 = vmatpush1.msra.mxu0 0.0
    %7614 = vmatprep.subr.mxu0 0.0
    %7615 = vmatpush1.msra.mxu0 0.0
    %7616 = vmatprep.subr.mxu0 0.0
    %7617 = vmatpush1.msra.mxu0 0.0
    %7618 = vmatprep.subr.mxu0 0.0
    %7619 = vmatpush1.msra.mxu0 0.0
    %7620 = vmatprep.subr.mxu0 0.0
    %7621 = vmatpush1.msra.mxu0 0.0
    %7622 = vmatprep.subr.mxu0 0.0
    %7623 = vmatpush1.msra.mxu0 0.0
    %7624 = vmatprep.subr.mxu0 0.0
    %7625 = vmatpush1.msra.mxu0 0.0
    %7626 = vmatprep.subr.mxu0 0.0
    %7627 = vmatpush1.msra.mxu0 0.0
    %7628 = vmatprep.subr.mxu0 0.0
    %7629 = vmatpush1.msra.mxu0 0.0
    %7630 = vmatprep.subr.mxu0 0.0
    %7631 = vmatpush1.msra.mxu0 0.0
    %7632 = vmatprep.subr.mxu0 0.0
    %7633 = vmatpush1.msra.mxu0 0.0
    %7634 = vmatprep.subr.mxu0 0.0
    %7635 = vmatpush1.msra.mxu0 0.0
    %7636 = vmatprep.subr.mxu0 0.0
    %7637 = vmatpush1.msra.mxu0 0.0
    %7638 = vmatprep.subr.mxu0 0.0
    %7639 = vmatpush1.msra.mxu0 0.0
    %7640 = vmatprep.subr.mxu0 0.0
    %7641 = vmatpush1.msra.mxu0 0.0
    %7642 = vmatprep.subr.mxu0 0.0
    %7643 = vmatpush1.msra.mxu0 0.0
    %7644 = vmatprep.subr.mxu0 0.0
    %7645 = vmatpush1.msra.mxu0 0.0
    %7646 = vmatprep.subr.mxu0 0.0
    %7647 = vmatpush1.msra.mxu0 0.0
    %7648 = vmatprep.subr.mxu0 0.0
    %7649 = vmatpush1.msra.mxu0 0.0
    %7650 = vmatprep.subr.mxu0 0.0
    %7651 = vmatpush1.msra.mxu0 0.0
    %7652 = vmatprep.subr.mxu0 0.0
    %7653 = vmatpush1.msra.mxu0 0.0
    %7654 = vmatprep.subr.mxu0 0.0
    %7655 = vmatpush1.msra.mxu0 0.0
    %7656 = vmatprep.subr.mxu0 0.0
    %7657 = vmatpush1.msra.mxu0 0.0
    %7658 = vmatprep.subr.mxu0 0.0
    %7659 = vmatpush1.msra.mxu0 0.0
    %7660 = vmatprep.subr.mxu0 0.0
    %7661 = vmatpush1.msra.mxu0 0.0
    %7662 = vmatprep.subr.mxu0 0.0
    %7663 = vmatpush1.msra.mxu0 0.0
    %7664 = vmatprep.subr.mxu0 0.0
    %7665 = vmatpush1.msra.mxu0 0.0
    %7666 = vmatprep.mubr.f32.mxu0 0.0
    %7667 = vmatmul.mubr.f32.gmra.mrb[0].mxu0 %v7073
    %v7668 = vpop.f32.mrb[0].mxu0
    %v7669 = vadd.f32 0.0, %v7668
    %v7670 = vpop.f32.mrb[0].mxu0
    %7671 = vdwg.mxu0
    %v7673 = vsel %vm510, %v7601, 0
    %7675 = vmatprep.subr.mxu0 0.0
    %7676 = vmatpush1.msra.mxu0 %v323
    %7677 = vmatprep.subr.mxu0 0.0
    %7678 = vmatpush1.msra.mxu0 %v324
    %7679 = vmatprep.subr.mxu0 0.0
    %7680 = vmatpush1.msra.mxu0 0.0
    %7681 = vmatprep.subr.mxu0 0.0
    %7682 = vmatpush1.msra.mxu0 0.0
    %7683 = vmatprep.subr.mxu0 0.0
    %7684 = vmatpush1.msra.mxu0 0.0
    %7685 = vmatprep.subr.mxu0 0.0
    %7686 = vmatpush1.msra.mxu0 0.0
    %7687 = vmatprep.subr.mxu0 0.0
    %7688 = vmatpush1.msra.mxu0 0.0
    %7689 = vmatprep.subr.mxu0 0.0
    %7690 = vmatpush1.msra.mxu0 0.0
    %7691 = vmatprep.subr.mxu0 0.0
    %7692 = vmatpush1.msra.mxu0 0.0
    %7693 = vmatprep.subr.mxu0 0.0
    %7694 = vmatpush1.msra.mxu0 0.0
    %7695 = vmatprep.subr.mxu0 0.0
    %7696 = vmatpush1.msra.mxu0 0.0
    %7697 = vmatprep.subr.mxu0 0.0
    %7698 = vmatpush1.msra.mxu0 0.0
    %7699 = vmatprep.subr.mxu0 0.0
    %7700 = vmatpush1.msra.mxu0 0.0
    %7701 = vmatprep.subr.mxu0 0.0
    %7702 = vmatpush1.msra.mxu0 0.0
    %7703 = vmatprep.subr.mxu0 0.0
    %7704 = vmatpush1.msra.mxu0 0.0
    %7705 = vmatprep.subr.mxu0 0.0
    %7706 = vmatpush1.msra.mxu0 0.0
    %7707 = vmatprep.subr.mxu0 0.0
    %7708 = vmatpush1.msra.mxu0 0.0
    %7709 = vmatprep.subr.mxu0 0.0
    %7710 = vmatpush1.msra.mxu0 0.0
    %7711 = vmatprep.subr.mxu0 0.0
    %7712 = vmatpush1.msra.mxu0 0.0
    %7713 = vmatprep.subr.mxu0 0.0
    %7714 = vmatpush1.msra.mxu0 0.0
    %7715 = vmatprep.subr.mxu0 0.0
    %7716 = vmatpush1.msra.mxu0 0.0
    %7717 = vmatprep.subr.mxu0 0.0
    %7718 = vmatpush1.msra.mxu0 0.0
    %7719 = vmatprep.subr.mxu0 0.0
    %7720 = vmatpush1.msra.mxu0 0.0
    %7721 = vmatprep.subr.mxu0 0.0
    %7722 = vmatpush1.msra.mxu0 0.0
    %7723 = vmatprep.subr.mxu0 0.0
    %7724 = vmatpush1.msra.mxu0 0.0
    %7725 = vmatprep.subr.mxu0 0.0
    %7726 = vmatpush1.msra.mxu0 0.0
    %7727 = vmatprep.subr.mxu0 0.0
    %7728 = vmatpush1.msra.mxu0 0.0
    %7729 = vmatprep.subr.mxu0 0.0
    %7730 = vmatpush1.msra.mxu0 0.0
    %7731 = vmatprep.subr.mxu0 0.0
    %7732 = vmatpush1.msra.mxu0 0.0
    %7733 = vmatprep.subr.mxu0 0.0
    %7734 = vmatpush1.msra.mxu0 0.0
    %7735 = vmatprep.subr.mxu0 0.0
    %7736 = vmatpush1.msra.mxu0 0.0
    %7737 = vmatprep.subr.mxu0 0.0
    %7738 = vmatpush1.msra.mxu0 0.0
    %7739 = vmatprep.mubr.f32.mxu0 0.0
    %7740 = vmatmul.mubr.f32.gmra.mrb[0].mxu0 %v7673
    %v7741 = vpop.f32.mrb[0].mxu0
    %v7742 = vadd.f32 %v7669, %v7741
    %v7743 = vpop.f32.mrb[0].mxu0
    %7744 = vdwg.mxu0
    %v7745 = vadd.f32 %v7742, %v384
    %7746 = vmatprep.subr.mxu0 0.0
    %7747 = vmatpush1.msra.mxu0 %v351
    %7748 = vmatprep.subr.mxu0 0.0
    %7749 = vmatpush1.msra.mxu0 %v352
    %7750 = vmatprep.subr.mxu0 0.0
    %7751 = vmatpush1.msra.mxu0 %v353
    %7752 = vmatprep.subr.mxu0 0.0
    %7753 = vmatpush1.msra.mxu0 %v354
    %7754 = vmatprep.subr.mxu0 0.0
    %7755 = vmatpush1.msra.mxu0 0.0
    %7756 = vmatprep.subr.mxu0 0.0
    %7757 = vmatpush1.msra.mxu0 0.0
    %7758 = vmatprep.subr.mxu0 0.0
    %7759 = vmatpush1.msra.mxu0 0.0
    %7760 = vmatprep.subr.mxu0 0.0
    %7761 = vmatpush1.msra.mxu0 0.0
    %7762 = vmatprep.subr.mxu0 0.0
    %7763 = vmatpush1.msra.mxu0 0.0
    %7764 = vmatprep.subr.mxu0 0.0
    %7765 = vmatpush1.msra.mxu0 0.0
    %7766 = vmatprep.subr.mxu0 0.0
    %7767 = vmatpush1.msra.mxu0 0.0
    %7768 = vmatprep.subr.mxu0 0.0
    %7769 = vmatpush1.msra.mxu0 0.0
    %7770 = vmatprep.subr.mxu0 0.0
    %7771 = vmatpush1.msra.mxu0 0.0
    %7772 = vmatprep.subr.mxu0 0.0
    %7773 = vmatpush1.msra.mxu0 0.0
    %7774 = vmatprep.subr.mxu0 0.0
    %7775 = vmatpush1.msra.mxu0 0.0
    %7776 = vmatprep.subr.mxu0 0.0
    %7777 = vmatpush1.msra.mxu0 0.0
    %7778 = vmatprep.subr.mxu0 0.0
    %7779 = vmatpush1.msra.mxu0 0.0
    %7780 = vmatprep.subr.mxu0 0.0
    %7781 = vmatpush1.msra.mxu0 0.0
    %7782 = vmatprep.subr.mxu0 0.0
    %7783 = vmatpush1.msra.mxu0 0.0
    %7784 = vmatprep.subr.mxu0 0.0
    %7785 = vmatpush1.msra.mxu0 0.0
    %7786 = vmatprep.subr.mxu0 0.0
    %7787 = vmatpush1.msra.mxu0 0.0
    %7788 = vmatprep.subr.mxu0 0.0
    %7789 = vmatpush1.msra.mxu0 0.0
    %7790 = vmatprep.subr.mxu0 0.0
    %7791 = vmatpush1.msra.mxu0 0.0
    %7792 = vmatprep.subr.mxu0 0.0
    %7793 = vmatpush1.msra.mxu0 0.0
    %7794 = vmatprep.subr.mxu0 0.0
    %7795 = vmatpush1.msra.mxu0 0.0
    %7796 = vmatprep.subr.mxu0 0.0
    %7797 = vmatpush1.msra.mxu0 0.0
    %7798 = vmatprep.subr.mxu0 0.0
    %7799 = vmatpush1.msra.mxu0 0.0
    %7800 = vmatprep.subr.mxu0 0.0
    %7801 = vmatpush1.msra.mxu0 0.0
    %7802 = vmatprep.subr.mxu0 0.0
    %7803 = vmatpush1.msra.mxu0 0.0
    %7804 = vmatprep.subr.mxu0 0.0
    %7805 = vmatpush1.msra.mxu0 0.0
    %7806 = vmatprep.subr.mxu0 0.0
    %7807 = vmatpush1.msra.mxu0 0.0
    %7808 = vmatprep.subr.mxu0 0.0
    %7809 = vmatpush1.msra.mxu0 0.0
    %7810 = vmatprep.mubr.f32.mxu0 0.0
    %7811 = vmatmul.mubr.f32.gmra.mrb[0].mxu0 %v7073
    %v7812 = vpop.f32.mrb[0].mxu0
    %v7813 = vadd.f32 0.0, %v7812
    %v7814 = vpop.f32.mrb[0].mxu0
    %7815 = vdwg.mxu0
    %7816 = vmatprep.subr.mxu0 0.0
    %7817 = vmatpush1.msra.mxu0 %v325
    %7818 = vmatprep.subr.mxu0 0.0
    %7819 = vmatpush1.msra.mxu0 %v326
    %7820 = vmatprep.subr.mxu0 0.0
    %7821 = vmatpush1.msra.mxu0 0.0
    %7822 = vmatprep.subr.mxu0 0.0
    %7823 = vmatpush1.msra.mxu0 0.0
    %7824 = vmatprep.subr.mxu0 0.0
    %7825 = vmatpush1.msra.mxu0 0.0
    %7826 = vmatprep.subr.mxu0 0.0
    %7827 = vmatpush1.msra.mxu0 0.0
    %7828 = vmatprep.subr.mxu0 0.0
    %7829 = vmatpush1.msra.mxu0 0.0
    %7830 = vmatprep.subr.mxu0 0.0
    %7831 = vmatpush1.msra.mxu0 0.0
    %7832 = vmatprep.subr.mxu0 0.0
    %7833 = vmatpush1.msra.mxu0 0.0
    %7834 = vmatprep.subr.mxu0 0.0
    %7835 = vmatpush1.msra.mxu0 0.0
    %7836 = vmatprep.subr.mxu0 0.0
    %7837 = vmatpush1.msra.mxu0 0.0
    %7838 = vmatprep.subr.mxu0 0.0
    %7839 = vmatpush1.msra.mxu0 0.0
    %7840 = vmatprep.subr.mxu0 0.0
    %7841 = vmatpush1.msra.mxu0 0.0
    %7842 = vmatprep.subr.mxu0 0.0
    %7843 = vmatpush1.msra.mxu0 0.0
    %7844 = vmatprep.subr.mxu0 0.0
    %7845 = vmatpush1.msra.mxu0 0.0
    %7846 = vmatprep.subr.mxu0 0.0
    %7847 = vmatpush1.msra.mxu0 0.0
    %7848 = vmatprep.subr.mxu0 0.0
    %7849 = vmatpush1.msra.mxu0 0.0
    %7850 = vmatprep.subr.mxu0 0.0
    %7851 = vmatpush1.msra.mxu0 0.0
    %7852 = vmatprep.subr.mxu0 0.0
    %7853 = vmatpush1.msra.mxu0 0.0
    %7854 = vmatprep.subr.mxu0 0.0
    %7855 = vmatpush1.msra.mxu0 0.0
    %7856 = vmatprep.subr.mxu0 0.0
    %7857 = vmatpush1.msra.mxu0 0.0
    %7858 = vmatprep.subr.mxu0 0.0
    %7859 = vmatpush1.msra.mxu0 0.0
    %7860 = vmatprep.subr.mxu0 0.0
    %7861 = vmatpush1.msra.mxu0 0.0
    %7862 = vmatprep.subr.mxu0 0.0
    %7863 = vmatpush1.msra.mxu0 0.0
    %7864 = vmatprep.subr.mxu0 0.0
    %7865 = vmatpush1.msra.mxu0 0.0
    %7866 = vmatprep.subr.mxu0 0.0
    %7867 = vmatpush1.msra.mxu0 0.0
    %7868 = vmatprep.subr.mxu0 0.0
    %7869 = vmatpush1.msra.mxu0 0.0
    %7870 = vmatprep.subr.mxu0 0.0
    %7871 = vmatpush1.msra.mxu0 0.0
    %7872 = vmatprep.subr.mxu0 0.0
    %7873 = vmatpush1.msra.mxu0 0.0
    %7874 = vmatprep.subr.mxu0 0.0
    %7875 = vmatpush1.msra.mxu0 0.0
    %7876 = vmatprep.subr.mxu0 0.0
    %7877 = vmatpush1.msra.mxu0 0.0
    %7878 = vmatprep.subr.mxu0 0.0
    %7879 = vmatpush1.msra.mxu0 0.0
    %7880 = vmatprep.mubr.f32.mxu0 0.0
    %7881 = vmatmul.mubr.f32.gmra.mrb[0].mxu0 %v7673
    %v7882 = vpop.f32.mrb[0].mxu0
    %v7883 = vadd.f32 %v7813, %v7882
    %v7884 = vpop.f32.mrb[0].mxu0
    %7885 = vdwg.mxu0
    %v7886 = vadd.f32 %v7883, %v391
    %7887 = vmatprep.subr.mxu0 0.0
    %7888 = vmatpush1.msra.mxu0 %v355
    %7889 = vmatprep.subr.mxu0 0.0
    %7890 = vmatpush1.msra.mxu0 %v356
    %7891 = vmatprep.subr.mxu0 0.0
    %7892 = vmatpush1.msra.mxu0 %v357
    %7893 = vmatprep.subr.mxu0 0.0
    %7894 = vmatpush1.msra.mxu0 %v358
    %7895 = vmatprep.subr.mxu0 0.0
    %7896 = vmatpush1.msra.mxu0 0.0
    %7897 = vmatprep.subr.mxu0 0.0
    %7898 = vmatpush1.msra.mxu0 0.0
    %7899 = vmatprep.subr.mxu0 0.0
    %7900 = vmatpush1.msra.mxu0 0.0
    %7901 = vmatprep.subr.mxu0 0.0
    %7902 = vmatpush1.msra.mxu0 0.0
    %7903 = vmatprep.subr.mxu0 0.0
    %7904 = vmatpush1.msra.mxu0 0.0
    %7905 = vmatprep.subr.mxu0 0.0
    %7906 = vmatpush1.msra.mxu0 0.0
    %7907 = vmatprep.subr.mxu0 0.0
    %7908 = vmatpush1.msra.mxu0 0.0
    %7909 = vmatprep.subr.mxu0 0.0
    %7910 = vmatpush1.msra.mxu0 0.0
    %7911 = vmatprep.subr.mxu0 0.0
    %7912 = vmatpush1.msra.mxu0 0.0
    %7913 = vmatprep.subr.mxu0 0.0
    %7914 = vmatpush1.msra.mxu0 0.0
    %7915 = vmatprep.subr.mxu0 0.0
    %7916 = vmatpush1.msra.mxu0 0.0
    %7917 = vmatprep.subr.mxu0 0.0
    %7918 = vmatpush1.msra.mxu0 0.0
    %7919 = vmatprep.subr.mxu0 0.0
    %7920 = vmatpush1.msra.mxu0 0.0
    %7921 = vmatprep.subr.mxu0 0.0
    %7922 = vmatpush1.msra.mxu0 0.0
    %7923 = vmatprep.subr.mxu0 0.0
    %7924 = vmatpush1.msra.mxu0 0.0
    %7925 = vmatprep.subr.mxu0 0.0
    %7926 = vmatpush1.msra.mxu0 0.0
    %7927 = vmatprep.subr.mxu0 0.0
    %7928 = vmatpush1.msra.mxu0 0.0
    %7929 = vmatprep.subr.mxu0 0.0
    %7930 = vmatpush1.msra.mxu0 0.0
    %7931 = vmatprep.subr.mxu0 0.0
    %7932 = vmatpush1.msra.mxu0 0.0
    %7933 = vmatprep.subr.mxu0 0.0
    %7934 = vmatpush1.msra.mxu0 0.0
    %7935 = vmatprep.subr.mxu0 0.0
    %7936 = vmatpush1.msra.mxu0 0.0
    %7937 = vmatprep.subr.mxu0 0.0
    %7938 = vmatpush1.msra.mxu0 0.0
    %7939 = vmatprep.subr.mxu0 0.0
    %7940 = vmatpush1.msra.mxu0 0.0
    %7941 = vmatprep.subr.mxu0 0.0
    %7942 = vmatpush1.msra.mxu0 0.0
    %7943 = vmatprep.subr.mxu0 0.0
    %7944 = vmatpush1.msra.mxu0 0.0
    %7945 = vmatprep.subr.mxu0 0.0
    %7946 = vmatpush1.msra.mxu0 0.0
    %7947 = vmatprep.subr.mxu0 0.0
    %7948 = vmatpush1.msra.mxu0 0.0
    %7949 = vmatprep.subr.mxu0 0.0
    %7950 = vmatpush1.msra.mxu0 0.0
    %7951 = vmatprep.mubr.f32.mxu0 0.0
    %7952 = vmatmul.mubr.f32.gmra.mrb[0].mxu0 %v7073
    %v7953 = vpop.f32.mrb[0].mxu0
    %v7954 = vadd.f32 0.0, %v7953
    %v7955 = vpop.f32.mrb[0].mxu0
    %7956 = vdwg.mxu0
    %7957 = vmatprep.subr.mxu0 0.0
    %7958 = vmatpush1.msra.mxu0 %v327
    %7959 = vmatprep.subr.mxu0 0.0
    %7960 = vmatpush1.msra.mxu0 %v328
    %7961 = vmatprep.subr.mxu0 0.0
    %7962 = vmatpush1.msra.mxu0 0.0
    %7963 = vmatprep.subr.mxu0 0.0
    %7964 = vmatpush1.msra.mxu0 0.0
    %7965 = vmatprep.subr.mxu0 0.0
    %7966 = vmatpush1.msra.mxu0 0.0
    %7967 = vmatprep.subr.mxu0 0.0
    %7968 = vmatpush1.msra.mxu0 0.0
    %7969 = vmatprep.subr.mxu0 0.0
    %7970 = vmatpush1.msra.mxu0 0.0
    %7971 = vmatprep.subr.mxu0 0.0
    %7972 = vmatpush1.msra.mxu0 0.0
    %7973 = vmatprep.subr.mxu0 0.0
    %7974 = vmatpush1.msra.mxu0 0.0
    %7975 = vmatprep.subr.mxu0 0.0
    %7976 = vmatpush1.msra.mxu0 0.0
    %7977 = vmatprep.subr.mxu0 0.0
    %7978 = vmatpush1.msra.mxu0 0.0
    %7979 = vmatprep.subr.mxu0 0.0
    %7980 = vmatpush1.msra.mxu0 0.0
    %7981 = vmatprep.subr.mxu0 0.0
    %7982 = vmatpush1.msra.mxu0 0.0
    %7983 = vmatprep.subr.mxu0 0.0
    %7984 = vmatpush1.msra.mxu0 0.0
    %7985 = vmatprep.subr.mxu0 0.0
    %7986 = vmatpush1.msra.mxu0 0.0
    %7987 = vmatprep.subr.mxu0 0.0
    %7988 = vmatpush1.msra.mxu0 0.0
    %7989 = vmatprep.subr.mxu0 0.0
    %7990 = vmatpush1.msra.mxu0 0.0
    %7991 = vmatprep.subr.mxu0 0.0
    %7992 = vmatpush1.msra.mxu0 0.0
    %7993 = vmatprep.subr.mxu0 0.0
    %7994 = vmatpush1.msra.mxu0 0.0
    %7995 = vmatprep.subr.mxu0 0.0
    %7996 = vmatpush1.msra.mxu0 0.0
    %7997 = vmatprep.subr.mxu0 0.0
    %7998 = vmatpush1.msra.mxu0 0.0
    %7999 = vmatprep.subr.mxu0 0.0
    %8000 = vmatpush1.msra.mxu0 0.0
    %8001 = vmatprep.subr.mxu0 0.0
    %8002 = vmatpush1.msra.mxu0 0.0
    %8003 = vmatprep.subr.mxu0 0.0
    %8004 = vmatpush1.msra.mxu0 0.0
    %8005 = vmatprep.subr.mxu0 0.0
    %8006 = vmatpush1.msra.mxu0 0.0
    %8007 = vmatprep.subr.mxu0 0.0
    %8008 = vmatpush1.msra.mxu0 0.0
    %8009 = vmatprep.subr.mxu0 0.0
    %8010 = vmatpush1.msra.mxu0 0.0
    %8011 = vmatprep.subr.mxu0 0.0
    %8012 = vmatpush1.msra.mxu0 0.0
    %8013 = vmatprep.subr.mxu0 0.0
    %8014 = vmatpush1.msra.mxu0 0.0
    %8015 = vmatprep.subr.mxu0 0.0
    %8016 = vmatpush1.msra.mxu0 0.0
    %8017 = vmatprep.subr.mxu0 0.0
    %8018 = vmatpush1.msra.mxu0 0.0
    %8019 = vmatprep.subr.mxu0 0.0
    %8020 = vmatpush1.msra.mxu0 0.0
    %8021 = vmatprep.mubr.f32.mxu0 0.0
    %8022 = vmatmul.mubr.f32.gmra.mrb[0].mxu0 %v7673
    %v8023 = vpop.f32.mrb[0].mxu0
    %v8024 = vadd.f32 %v7954, %v8023
    %v8025 = vpop.f32.mrb[0].mxu0
    %8026 = vdwg.mxu0
    %v8027 = vadd.f32 %v8024, %v398
    %8028 = vmatprep.subr.mxu0 0.0
    %8029 = vmatpush1.msra.mxu0 %v359
    %8030 = vmatprep.subr.mxu0 0.0
    %8031 = vmatpush1.msra.mxu0 %v360
    %8032 = vmatprep.subr.mxu0 0.0
    %8033 = vmatpush1.msra.mxu0 %v361
    %8034 = vmatprep.subr.mxu0 0.0
    %8035 = vmatpush1.msra.mxu0 %v362
    %8036 = vmatprep.subr.mxu0 0.0
    %8037 = vmatpush1.msra.mxu0 0.0
    %8038 = vmatprep.subr.mxu0 0.0
    %8039 = vmatpush1.msra.mxu0 0.0
    %8040 = vmatprep.subr.mxu0 0.0
    %8041 = vmatpush1.msra.mxu0 0.0
    %8042 = vmatprep.subr.mxu0 0.0
    %8043 = vmatpush1.msra.mxu0 0.0
    %8044 = vmatprep.subr.mxu0 0.0
    %8045 = vmatpush1.msra.mxu0 0.0
    %8046 = vmatprep.subr.mxu0 0.0
    %8047 = vmatpush1.msra.mxu0 0.0
    %8048 = vmatprep.subr.mxu0 0.0
    %8049 = vmatpush1.msra.mxu0 0.0
    %8050 = vmatprep.subr.mxu0 0.0
    %8051 = vmatpush1.msra.mxu0 0.0
    %8052 = vmatprep.subr.mxu0 0.0
    %8053 = vmatpush1.msra.mxu0 0.0
    %8054 = vmatprep.subr.mxu0 0.0
    %8055 = vmatpush1.msra.mxu0 0.0
    %8056 = vmatprep.subr.mxu0 0.0
    %8057 = vmatpush1.msra.mxu0 0.0
    %8058 = vmatprep.subr.mxu0 0.0
    %8059 = vmatpush1.msra.mxu0 0.0
    %8060 = vmatprep.subr.mxu0 0.0
    %8061 = vmatpush1.msra.mxu0 0.0
    %8062 = vmatprep.subr.mxu0 0.0
    %8063 = vmatpush1.msra.mxu0 0.0
    %8064 = vmatprep.subr.mxu0 0.0
    %8065 = vmatpush1.msra.mxu0 0.0
    %8066 = vmatprep.subr.mxu0 0.0
    %8067 = vmatpush1.msra.mxu0 0.0
    %8068 = vmatprep.subr.mxu0 0.0
    %8069 = vmatpush1.msra.mxu0 0.0
    %8070 = vmatprep.subr.mxu0 0.0
    %8071 = vmatpush1.msra.mxu0 0.0
    %8072 = vmatprep.subr.mxu0 0.0
    %8073 = vmatpush1.msra.mxu0 0.0
    %8074 = vmatprep.subr.mxu0 0.0
    %8075 = vmatpush1.msra.mxu0 0.0
    %8076 = vmatprep.subr.mxu0 0.0
    %8077 = vmatpush1.msra.mxu0 0.0
    %8078 = vmatprep.subr.mxu0 0.0
    %8079 = vmatpush1.msra.mxu0 0.0
    %8080 = vmatprep.subr.mxu0 0.0
    %8081 = vmatpush1.msra.mxu0 0.0
    %8082 = vmatprep.subr.mxu0 0.0
    %8083 = vmatpush1.msra.mxu0 0.0
    %8084 = vmatprep.subr.mxu0 0.0
    %8085 = vmatpush1.msra.mxu0 0.0
    %8086 = vmatprep.subr.mxu0 0.0
    %8087 = vmatpush1.msra.mxu0 0.0
    %8088 = vmatprep.subr.mxu0 0.0
    %8089 = vmatpush1.msra.mxu0 0.0
    %8090 = vmatprep.subr.mxu0 0.0
    %8091 = vmatpush1.msra.mxu0 0.0
    %8092 = vmatprep.mubr.f32.mxu0 0.0
    %8093 = vmatmul.mubr.f32.gmra.mrb[0].mxu0 %v7073
    %v8094 = vpop.f32.mrb[0].mxu0
    %v8095 = vadd.f32 0.0, %v8094
    %v8096 = vpop.f32.mrb[0].mxu0
    %8097 = vdwg.mxu0
    %8098 = vmatprep.subr.mxu0 0.0
    %8099 = vmatpush1.msra.mxu0 %v329
    %8100 = vmatprep.subr.mxu0 0.0
    %8101 = vmatpush1.msra.mxu0 %v330
    %8102 = vmatprep.subr.mxu0 0.0
    %8103 = vmatpush1.msra.mxu0 0.0
    %8104 = vmatprep.subr.mxu0 0.0
    %8105 = vmatpush1.msra.mxu0 0.0
    %8106 = vmatprep.subr.mxu0 0.0
    %8107 = vmatpush1.msra.mxu0 0.0
    %8108 = vmatprep.subr.mxu0 0.0
    %8109 = vmatpush1.msra.mxu0 0.0
    %8110 = vmatprep.subr.mxu0 0.0
    %8111 = vmatpush1.msra.mxu0 0.0
    %8112 = vmatprep.subr.mxu0 0.0
    %8113 = vmatpush1.msra.mxu0 0.0
    %8114 = vmatprep.subr.mxu0 0.0
    %8115 = vmatpush1.msra.mxu0 0.0
    %8116 = vmatprep.subr.mxu0 0.0
    %8117 = vmatpush1.msra.mxu0 0.0
    %8118 = vmatprep.subr.mxu0 0.0
    %8119 = vmatpush1.msra.mxu0 0.0
    %8120 = vmatprep.subr.mxu0 0.0
    %8121 = vmatpush1.msra.mxu0 0.0
    %8122 = vmatprep.subr.mxu0 0.0
    %8123 = vmatpush1.msra.mxu0 0.0
    %8124 = vmatprep.subr.mxu0 0.0
    %8125 = vmatpush1.msra.mxu0 0.0
    %8126 = vmatprep.subr.mxu0 0.0
    %8127 = vmatpush1.msra.mxu0 0.0
    %8128 = vmatprep.subr.mxu0 0.0
    %8129 = vmatpush1.msra.mxu0 0.0
    %8130 = vmatprep.subr.mxu0 0.0
    %8131 = vmatpush1.msra.mxu0 0.0
    %8132 = vmatprep.subr.mxu0 0.0
    %8133 = vmatpush1.msra.mxu0 0.0
    %8134 = vmatprep.subr.mxu0 0.0
    %8135 = vmatpush1.msra.mxu0 0.0
    %8136 = vmatprep.subr.mxu0 0.0
    %8137 = vmatpush1.msra.mxu0 0.0
    %8138 = vmatprep.subr.mxu0 0.0
    %8139 = vmatpush1.msra.mxu0 0.0
    %8140 = vmatprep.subr.mxu0 0.0
    %8141 = vmatpush1.msra.mxu0 0.0
    %8142 = vmatprep.subr.mxu0 0.0
    %8143 = vmatpush1.msra.mxu0 0.0
    %8144 = vmatprep.subr.mxu0 0.0
    %8145 = vmatpush1.msra.mxu0 0.0
    %8146 = vmatprep.subr.mxu0 0.0
    %8147 = vmatpush1.msra.mxu0 0.0
    %8148 = vmatprep.subr.mxu0 0.0
    %8149 = vmatpush1.msra.mxu0 0.0
    %8150 = vmatprep.subr.mxu0 0.0
    %8151 = vmatpush1.msra.mxu0 0.0
    %8152 = vmatprep.subr.mxu0 0.0
    %8153 = vmatpush1.msra.mxu0 0.0
    %8154 = vmatprep.subr.mxu0 0.0
    %8155 = vmatpush1.msra.mxu0 0.0
    %8156 = vmatprep.subr.mxu0 0.0
    %8157 = vmatpush1.msra.mxu0 0.0
    %8158 = vmatprep.subr.mxu0 0.0
    %8159 = vmatpush1.msra.mxu0 0.0
    %8160 = vmatprep.subr.mxu0 0.0
    %8161 = vmatpush1.msra.mxu0 0.0
    %8162 = vmatprep.mubr.f32.mxu0 0.0
    %8163 = vmatmul.mubr.f32.gmra.mrb[0].mxu0 %v7673
    %v8164 = vpop.f32.mrb[0].mxu0
    %v8165 = vadd.f32 %v8095, %v8164
    %v8166 = vpop.f32.mrb[0].mxu0
    %8167 = vdwg.mxu0
    %v8168 = vadd.f32 %v8165, %v405
    %v8169 = vxor.u32 %v7745, 2147483648
    %v8170 = vmul.f32 %v8169, 1.442695
    %v8171 = vpow.pop %v8170
    %v8172 = vadd.f32 %v8171, 1.0
    %v8173 = vrcp.pop %v8172
    %v8174 = vmul.f32 1.0, %v8173
    %v8175 = vxor.u32 %v7886, 2147483648
    %v8176 = vmul.f32 %v8175, 1.442695
    %v8177 = vpow.pop %v8176
    %v8178 = vadd.f32 %v8177, 1.0
    %v8179 = vrcp.pop %v8178
    %v8180 = vmul.f32 1.0, %v8179
    %v8181 = vtanh.pop %v8027
    %v8182 = vxor.u32 %v8168, 2147483648
    %v8183 = vmul.f32 %v8182, 1.442695
    %v8184 = vpow.pop %v8183
    %v8185 = vadd.f32 %v8184, 1.0
    %v8186 = vrcp.pop %v8185
    %v8187 = vmul.f32 1.0, %v8186
    %v8188 = vmul.f32 %v8180, %v6996
    %v8189 = vmul.f32 %v8174, %v8181
    %v8190 = vadd.f32 %v8188, %v8189
    %v8191 = vtanh.pop %v8190
    %v8192 = vmul.f32 %v8187, %v8191
    %v8194 = vsel %vm436, %v7592, 0
    %8196 = vmatprep.subr.mxu0 0.0
    %8197 = vmatpush1.msra.mxu0 %v363
    %8198 = vmatprep.subr.mxu0 0.0
    %8199 = vmatpush1.msra.mxu0 %v364
    %8200 = vmatprep.subr.mxu0 0.0
    %8201 = vmatpush1.msra.mxu0 %v365
    %8202 = vmatprep.subr.mxu0 0.0
    %8203 = vmatpush1.msra.mxu0 %v366
    %8204 = vmatprep.subr.mxu0 0.0
    %8205 = vmatpush1.msra.mxu0 0.0
    %8206 = vmatprep.subr.mxu0 0.0
    %8207 = vmatpush1.msra.mxu0 0.0
    %8208 = vmatprep.subr.mxu0 0.0
    %8209 = vmatpush1.msra.mxu0 0.0
    %8210 = vmatprep.subr.mxu0 0.0
    %8211 = vmatpush1.msra.mxu0 0.0
    %8212 = vmatprep.subr.mxu0 0.0
    %8213 = vmatpush1.msra.mxu0 0.0
    %8214 = vmatprep.subr.mxu0 0.0
    %8215 = vmatpush1.msra.mxu0 0.0
    %8216 = vmatprep.subr.mxu0 0.0
    %8217 = vmatpush1.msra.mxu0 0.0
    %8218 = vmatprep.subr.mxu0 0.0
    %8219 = vmatpush1.msra.mxu0 0.0
    %8220 = vmatprep.subr.mxu0 0.0
    %8221 = vmatpush1.msra.mxu0 0.0
    %8222 = vmatprep.subr.mxu0 0.0
    %8223 = vmatpush1.msra.mxu0 0.0
    %8224 = vmatprep.subr.mxu0 0.0
    %8225 = vmatpush1.msra.mxu0 0.0
    %8226 = vmatprep.subr.mxu0 0.0
    %8227 = vmatpush1.msra.mxu0 0.0
    %8228 = vmatprep.subr.mxu0 0.0
    %8229 = vmatpush1.msra.mxu0 0.0
    %8230 = vmatprep.subr.mxu0 0.0
    %8231 = vmatpush1.msra.mxu0 0.0
    %8232 = vmatprep.subr.mxu0 0.0
    %8233 = vmatpush1.msra.mxu0 0.0
    %8234 = vmatprep.subr.mxu0 0.0
    %8235 = vmatpush1.msra.mxu0 0.0
    %8236 = vmatprep.subr.mxu0 0.0
    %8237 = vmatpush1.msra.mxu0 0.0
    %8238 = vmatprep.subr.mxu0 0.0
    %8239 = vmatpush1.msra.mxu0 0.0
    %8240 = vmatprep.subr.mxu0 0.0
    %8241 = vmatpush1.msra.mxu0 0.0
    %8242 = vmatprep.subr.mxu0 0.0
    %8243 = vmatpush1.msra.mxu0 0.0
    %8244 = vmatprep.subr.mxu0 0.0
    %8245 = vmatpush1.msra.mxu0 0.0
    %8246 = vmatprep.subr.mxu0 0.0
    %8247 = vmatpush1.msra.mxu0 0.0
    %8248 = vmatprep.subr.mxu0 0.0
    %8249 = vmatpush1.msra.mxu0 0.0
    %8250 = vmatprep.subr.mxu0 0.0
    %8251 = vmatpush1.msra.mxu0 0.0
    %8252 = vmatprep.subr.mxu0 0.0
    %8253 = vmatpush1.msra.mxu0 0.0
    %8254 = vmatprep.subr.mxu0 0.0
    %8255 = vmatpush1.msra.mxu0 0.0
    %8256 = vmatprep.subr.mxu0 0.0
    %8257 = vmatpush1.msra.mxu0 0.0
    %8258 = vmatprep.subr.mxu0 0.0
    %8259 = vmatpush1.msra.mxu0 0.0
    %8260 = vmatprep.mubr.f32.mxu0 0.0
    %8261 = vmatmul.mubr.f32.gmra.mrb[0].mxu0 %v8194
    %v8262 = vpop.f32.mrb[0].mxu0
    %v8263 = vadd.f32 0.0, %v8262
    %v8264 = vpop.f32.mrb[0].mxu0
    %8265 = vdwg.mxu0
    %v8267 = vsel %vm436, %v8192, 0
    %8269 = vmatprep.subr.mxu0 0.0
    %8270 = vmatpush1.msra.mxu0 %v331
    %8271 = vmatprep.subr.mxu0 0.0
    %8272 = vmatpush1.msra.mxu0 %v332
    %8273 = vmatprep.subr.mxu0 0.0
    %8274 = vmatpush1.msra.mxu0 %v333
    %8275 = vmatprep.subr.mxu0 0.0
    %8276 = vmatpush1.msra.mxu0 %v334
    %8277 = vmatprep.subr.mxu0 0.0
    %8278 = vmatpush1.msra.mxu0 0.0
    %8279 = vmatprep.subr.mxu0 0.0
    %8280 = vmatpush1.msra.mxu0 0.0
    %8281 = vmatprep.subr.mxu0 0.0
    %8282 = vmatpush1.msra.mxu0 0.0
    %8283 = vmatprep.subr.mxu0 0.0
    %8284 = vmatpush1.msra.mxu0 0.0
    %8285 = vmatprep.subr.mxu0 0.0
    %8286 = vmatpush1.msra.mxu0 0.0
    %8287 = vmatprep.subr.mxu0 0.0
    %8288 = vmatpush1.msra.mxu0 0.0
    %8289 = vmatprep.subr.mxu0 0.0
    %8290 = vmatpush1.msra.mxu0 0.0
    %8291 = vmatprep.subr.mxu0 0.0
    %8292 = vmatpush1.msra.mxu0 0.0
    %8293 = vmatprep.subr.mxu0 0.0
    %8294 = vmatpush1.msra.mxu0 0.0
    %8295 = vmatprep.subr.mxu0 0.0
    %8296 = vmatpush1.msra.mxu0 0.0
    %8297 = vmatprep.subr.mxu0 0.0
    %8298 = vmatpush1.msra.mxu0 0.0
    %8299 = vmatprep.subr.mxu0 0.0
    %8300 = vmatpush1.msra.mxu0 0.0
    %8301 = vmatprep.subr.mxu0 0.0
    %8302 = vmatpush1.msra.mxu0 0.0
    %8303 = vmatprep.subr.mxu0 0.0
    %8304 = vmatpush1.msra.mxu0 0.0
    %8305 = vmatprep.subr.mxu0 0.0
    %8306 = vmatpush1.msra.mxu0 0.0
    %8307 = vmatprep.subr.mxu0 0.0
    %8308 = vmatpush1.msra.mxu0 0.0
    %8309 = vmatprep.subr.mxu0 0.0
    %8310 = vmatpush1.msra.mxu0 0.0
    %8311 = vmatprep.subr.mxu0 0.0
    %8312 = vmatpush1.msra.mxu0 0.0
    %8313 = vmatprep.subr.mxu0 0.0
    %8314 = vmatpush1.msra.mxu0 0.0
    %8315 = vmatprep.subr.mxu0 0.0
    %8316 = vmatpush1.msra.mxu0 0.0
    %8317 = vmatprep.subr.mxu0 0.0
    %8318 = vmatpush1.msra.mxu0 0.0
    %8319 = vmatprep.subr.mxu0 0.0
    %8320 = vmatpush1.msra.mxu0 0.0
    %8321 = vmatprep.subr.mxu0 0.0
    %8322 = vmatpush1.msra.mxu0 0.0
    %8323 = vmatprep.subr.mxu0 0.0
    %8324 = vmatpush1.msra.mxu0 0.0
    %8325 = vmatprep.subr.mxu0 0.0
    %8326 = vmatpush1.msra.mxu0 0.0
    %8327 = vmatprep.subr.mxu0 0.0
    %8328 = vmatpush1.msra.mxu0 0.0
    %8329 = vmatprep.subr.mxu0 0.0
    %8330 = vmatpush1.msra.mxu0 0.0
    %8331 = vmatprep.subr.mxu0 0.0
    %8332 = vmatpush1.msra.mxu0 0.0
    %8333 = vmatprep.mubr.f32.mxu0 0.0
    %8334 = vmatmul.mubr.f32.gmra.mrb[0].mxu0 %v8267
    %v8335 = vpop.f32.mrb[0].mxu0
    %v8336 = vadd.f32 %v8263, %v8335
    %v8337 = vpop.f32.mrb[0].mxu0
    %8338 = vdwg.mxu0
    %v8339 = vadd.f32 %v8336, %v412
    %8340 = vmatprep.subr.mxu0 0.0
    %8341 = vmatpush1.msra.mxu0 %v367
    %8342 = vmatprep.subr.mxu0 0.0
    %8343 = vmatpush1.msra.mxu0 %v368
    %8344 = vmatprep.subr.mxu0 0.0
    %8345 = vmatpush1.msra.mxu0 %v369
    %8346 = vmatprep.subr.mxu0 0.0
    %8347 = vmatpush1.msra.mxu0 %v370
    %8348 = vmatprep.subr.mxu0 0.0
    %8349 = vmatpush1.msra.mxu0 0.0
    %8350 = vmatprep.subr.mxu0 0.0
    %8351 = vmatpush1.msra.mxu0 0.0
    %8352 = vmatprep.subr.mxu0 0.0
    %8353 = vmatpush1.msra.mxu0 0.0
    %8354 = vmatprep.subr.mxu0 0.0
    %8355 = vmatpush1.msra.mxu0 0.0
    %8356 = vmatprep.subr.mxu0 0.0
    %8357 = vmatpush1.msra.mxu0 0.0
    %8358 = vmatprep.subr.mxu0 0.0
    %8359 = vmatpush1.msra.mxu0 0.0
    %8360 = vmatprep.subr.mxu0 0.0
    %8361 = vmatpush1.msra.mxu0 0.0
    %8362 = vmatprep.subr.mxu0 0.0
    %8363 = vmatpush1.msra.mxu0 0.0
    %8364 = vmatprep.subr.mxu0 0.0
    %8365 = vmatpush1.msra.mxu0 0.0
    %8366 = vmatprep.subr.mxu0 0.0
    %8367 = vmatpush1.msra.mxu0 0.0
    %8368 = vmatprep.subr.mxu0 0.0
    %8369 = vmatpush1.msra.mxu0 0.0
    %8370 = vmatprep.subr.mxu0 0.0
    %8371 = vmatpush1.msra.mxu0 0.0
    %8372 = vmatprep.subr.mxu0 0.0
    %8373 = vmatpush1.msra.mxu0 0.0
    %8374 = vmatprep.subr.mxu0 0.0
    %8375 = vmatpush1.msra.mxu0 0.0
    %8376 = vmatprep.subr.mxu0 0.0
    %8377 = vmatpush1.msra.mxu0 0.0
    %8378 = vmatprep.subr.mxu0 0.0
    %8379 = vmatpush1.msra.mxu0 0.0
    %8380 = vmatprep.subr.mxu0 0.0
    %8381 = vmatpush1.msra.mxu0 0.0
    %8382 = vmatprep.subr.mxu0 0.0
    %8383 = vmatpush1.msra.mxu0 0.0
    %8384 = vmatprep.subr.mxu0 0.0
    %8385 = vmatpush1.msra.mxu0 0.0
    %8386 = vmatprep.subr.mxu0 0.0
    %8387 = vmatpush1.msra.mxu0 0.0
    %8388 = vmatprep.subr.mxu0 0.0
    %8389 = vmatpush1.msra.mxu0 0.0
    %8390 = vmatprep.subr.mxu0 0.0
    %8391 = vmatpush1.msra.mxu0 0.0
    %8392 = vmatprep.subr.mxu0 0.0
    %8393 = vmatpush1.msra.mxu0 0.0
    %8394 = vmatprep.subr.mxu0 0.0
    %8395 = vmatpush1.msra.mxu0 0.0
    %8396 = vmatprep.subr.mxu0 0.0
    %8397 = vmatpush1.msra.mxu0 0.0
    %8398 = vmatprep.subr.mxu0 0.0
    %8399 = vmatpush1.msra.mxu0 0.0
    %8400 = vmatprep.subr.mxu0 0.0
    %8401 = vmatpush1.msra.mxu0 0.0
    %8402 = vmatprep.subr.mxu0 0.0
    %8403 = vmatpush1.msra.mxu0 0.0
    %8404 = vmatprep.mubr.f32.mxu0 0.0
    %8405 = vmatmul.mubr.f32.gmra.mrb[0].mxu0 %v8194
    %v8406 = vpop.f32.mrb[0].mxu0
    %v8407 = vadd.f32 0.0, %v8406
    %v8408 = vpop.f32.mrb[0].mxu0
    %8409 = vdwg.mxu0
    %8410 = vmatprep.subr.mxu0 0.0
    %8411 = vmatpush1.msra.mxu0 %v335
    %8412 = vmatprep.subr.mxu0 0.0
    %8413 = vmatpush1.msra.mxu0 %v336
    %8414 = vmatprep.subr.mxu0 0.0
    %8415 = vmatpush1.msra.mxu0 %v337
    %8416 = vmatprep.subr.mxu0 0.0
    %8417 = vmatpush1.msra.mxu0 %v338
    %8418 = vmatprep.subr.mxu0 0.0
    %8419 = vmatpush1.msra.mxu0 0.0
    %8420 = vmatprep.subr.mxu0 0.0
    %8421 = vmatpush1.msra.mxu0 0.0
    %8422 = vmatprep.subr.mxu0 0.0
    %8423 = vmatpush1.msra.mxu0 0.0
    %8424 = vmatprep.subr.mxu0 0.0
    %8425 = vmatpush1.msra.mxu0 0.0
    %8426 = vmatprep.subr.mxu0 0.0
    %8427 = vmatpush1.msra.mxu0 0.0
    %8428 = vmatprep.subr.mxu0 0.0
    %8429 = vmatpush1.msra.mxu0 0.0
    %8430 = vmatprep.subr.mxu0 0.0
    %8431 = vmatpush1.msra.mxu0 0.0
    %8432 = vmatprep.subr.mxu0 0.0
    %8433 = vmatpush1.msra.mxu0 0.0
    %8434 = vmatprep.subr.mxu0 0.0
    %8435 = vmatpush1.msra.mxu0 0.0
    %8436 = vmatprep.subr.mxu0 0.0
    %8437 = vmatpush1.msra.mxu0 0.0
    %8438 = vmatprep.subr.mxu0 0.0
    %8439 = vmatpush1.msra.mxu0 0.0
    %8440 = vmatprep.subr.mxu0 0.0
    %8441 = vmatpush1.msra.mxu0 0.0
    %8442 = vmatprep.subr.mxu0 0.0
    %8443 = vmatpush1.msra.mxu0 0.0
    %8444 = vmatprep.subr.mxu0 0.0
    %8445 = vmatpush1.msra.mxu0 0.0
    %8446 = vmatprep.subr.mxu0 0.0
    %8447 = vmatpush1.msra.mxu0 0.0
    %8448 = vmatprep.subr.mxu0 0.0
    %8449 = vmatpush1.msra.mxu0 0.0
    %8450 = vmatprep.subr.mxu0 0.0
    %8451 = vmatpush1.msra.mxu0 0.0
    %8452 = vmatprep.subr.mxu0 0.0
    %8453 = vmatpush1.msra.mxu0 0.0
    %8454 = vmatprep.subr.mxu0 0.0
    %8455 = vmatpush1.msra.mxu0 0.0
    %8456 = vmatprep.subr.mxu0 0.0
    %8457 = vmatpush1.msra.mxu0 0.0
    %8458 = vmatprep.subr.mxu0 0.0
    %8459 = vmatpush1.msra.mxu0 0.0
    %8460 = vmatprep.subr.mxu0 0.0
    %8461 = vmatpush1.msra.mxu0 0.0
    %8462 = vmatprep.subr.mxu0 0.0
    %8463 = vmatpush1.msra.mxu0 0.0
    %8464 = vmatprep.subr.mxu0 0.0
    %8465 = vmatpush1.msra.mxu0 0.0
    %8466 = vmatprep.subr.mxu0 0.0
    %8467 = vmatpush1.msra.mxu0 0.0
    %8468 = vmatprep.subr.mxu0 0.0
    %8469 = vmatpush1.msra.mxu0 0.0
    %8470 = vmatprep.subr.mxu0 0.0
    %8471 = vmatpush1.msra.mxu0 0.0
    %8472 = vmatprep.subr.mxu0 0.0
    %8473 = vmatpush1.msra.mxu0 0.0
    %8474 = vmatprep.mubr.f32.mxu0 0.0
    %8475 = vmatmul.mubr.f32.gmra.mrb[0].mxu0 %v8267
    %v8476 = vpop.f32.mrb[0].mxu0
    %v8477 = vadd.f32 %v8407, %v8476
    %v8478 = vpop.f32.mrb[0].mxu0
    %8479 = vdwg.mxu0
    %v8480 = vadd.f32 %v8477, %v419
    %8481 = vmatprep.subr.mxu0 0.0
    %8482 = vmatpush1.msra.mxu0 %v371
    %8483 = vmatprep.subr.mxu0 0.0
    %8484 = vmatpush1.msra.mxu0 %v372
    %8485 = vmatprep.subr.mxu0 0.0
    %8486 = vmatpush1.msra.mxu0 %v373
    %8487 = vmatprep.subr.mxu0 0.0
    %8488 = vmatpush1.msra.mxu0 %v374
    %8489 = vmatprep.subr.mxu0 0.0
    %8490 = vmatpush1.msra.mxu0 0.0
    %8491 = vmatprep.subr.mxu0 0.0
    %8492 = vmatpush1.msra.mxu0 0.0
    %8493 = vmatprep.subr.mxu0 0.0
    %8494 = vmatpush1.msra.mxu0 0.0
    %8495 = vmatprep.subr.mxu0 0.0
    %8496 = vmatpush1.msra.mxu0 0.0
    %8497 = vmatprep.subr.mxu0 0.0
    %8498 = vmatpush1.msra.mxu0 0.0
    %8499 = vmatprep.subr.mxu0 0.0
    %8500 = vmatpush1.msra.mxu0 0.0
    %8501 = vmatprep.subr.mxu0 0.0
    %8502 = vmatpush1.msra.mxu0 0.0
    %8503 = vmatprep.subr.mxu0 0.0
    %8504 = vmatpush1.msra.mxu0 0.0
    %8505 = vmatprep.subr.mxu0 0.0
    %8506 = vmatpush1.msra.mxu0 0.0
    %8507 = vmatprep.subr.mxu0 0.0
    %8508 = vmatpush1.msra.mxu0 0.0
    %8509 = vmatprep.subr.mxu0 0.0
    %8510 = vmatpush1.msra.mxu0 0.0
    %8511 = vmatprep.subr.mxu0 0.0
    %8512 = vmatpush1.msra.mxu0 0.0
    %8513 = vmatprep.subr.mxu0 0.0
    %8514 = vmatpush1.msra.mxu0 0.0
    %8515 = vmatprep.subr.mxu0 0.0
    %8516 = vmatpush1.msra.mxu0 0.0
    %8517 = vmatprep.subr.mxu0 0.0
    %8518 = vmatpush1.msra.mxu0 0.0
    %8519 = vmatprep.subr.mxu0 0.0
    %8520 = vmatpush1.msra.mxu0 0.0
    %8521 = vmatprep.subr.mxu0 0.0
    %8522 = vmatpush1.msra.mxu0 0.0
    %8523 = vmatprep.subr.mxu0 0.0
    %8524 = vmatpush1.msra.mxu0 0.0
    %8525 = vmatprep.subr.mxu0 0.0
    %8526 = vmatpush1.msra.mxu0 0.0
    %8527 = vmatprep.subr.mxu0 0.0
    %8528 = vmatpush1.msra.mxu0 0.0
    %8529 = vmatprep.subr.mxu0 0.0
    %8530 = vmatpush1.msra.mxu0 0.0
    %8531 = vmatprep.subr.mxu0 0.0
    %8532 = vmatpush1.msra.mxu0 0.0
    %8533 = vmatprep.subr.mxu0 0.0
    %8534 = vmatpush1.msra.mxu0 0.0
    %8535 = vmatprep.subr.mxu0 0.0
    %8536 = vmatpush1.msra.mxu0 0.0
    %8537 = vmatprep.subr.mxu0 0.0
    %8538 = vmatpush1.msra.mxu0 0.0
    %8539 = vmatprep.subr.mxu0 0.0
    %8540 = vmatpush1.msra.mxu0 0.0
    %8541 = vmatprep.subr.mxu0 0.0
    %8542 = vmatpush1.msra.mxu0 0.0
    %8543 = vmatprep.subr.mxu0 0.0
    %8544 = vmatpush1.msra.mxu0 0.0
    %8545 = vmatprep.mubr.f32.mxu0 0.0
    %8546 = vmatmul.mubr.f32.gmra.mrb[0].mxu0 %v8194
    %v8547 = vpop.f32.mrb[0].mxu0
    %v8548 = vadd.f32 0.0, %v8547
    %v8549 = vpop.f32.mrb[0].mxu0
    %8550 = vdwg.mxu0
    %8551 = vmatprep.subr.mxu0 0.0
    %8552 = vmatpush1.msra.mxu0 %v339
    %8553 = vmatprep.subr.mxu0 0.0
    %8554 = vmatpush1.msra.mxu0 %v340
    %8555 = vmatprep.subr.mxu0 0.0
    %8556 = vmatpush1.msra.mxu0 %v341
    %8557 = vmatprep.subr.mxu0 0.0
    %8558 = vmatpush1.msra.mxu0 %v342
    %8559 = vmatprep.subr.mxu0 0.0
    %8560 = vmatpush1.msra.mxu0 0.0
    %8561 = vmatprep.subr.mxu0 0.0
    %8562 = vmatpush1.msra.mxu0 0.0
    %8563 = vmatprep.subr.mxu0 0.0
    %8564 = vmatpush1.msra.mxu0 0.0
    %8565 = vmatprep.subr.mxu0 0.0
    %8566 = vmatpush1.msra.mxu0 0.0
    %8567 = vmatprep.subr.mxu0 0.0
    %8568 = vmatpush1.msra.mxu0 0.0
    %8569 = vmatprep.subr.mxu0 0.0
    %8570 = vmatpush1.msra.mxu0 0.0
    %8571 = vmatprep.subr.mxu0 0.0
    %8572 = vmatpush1.msra.mxu0 0.0
    %8573 = vmatprep.subr.mxu0 0.0
    %8574 = vmatpush1.msra.mxu0 0.0
    %8575 = vmatprep.subr.mxu0 0.0
    %8576 = vmatpush1.msra.mxu0 0.0
    %8577 = vmatprep.subr.mxu0 0.0
    %8578 = vmatpush1.msra.mxu0 0.0
    %8579 = vmatprep.subr.mxu0 0.0
    %8580 = vmatpush1.msra.mxu0 0.0
    %8581 = vmatprep.subr.mxu0 0.0
    %8582 = vmatpush1.msra.mxu0 0.0
    %8583 = vmatprep.subr.mxu0 0.0
    %8584 = vmatpush1.msra.mxu0 0.0
    %8585 = vmatprep.subr.mxu0 0.0
    %8586 = vmatpush1.msra.mxu0 0.0
    %8587 = vmatprep.subr.mxu0 0.0
    %8588 = vmatpush1.msra.mxu0 0.0
    %8589 = vmatprep.subr.mxu0 0.0
    %8590 = vmatpush1.msra.mxu0 0.0
    %8591 = vmatprep.subr.mxu0 0.0
    %8592 = vmatpush1.msra.mxu0 0.0
    %8593 = vmatprep.subr.mxu0 0.0
    %8594 = vmatpush1.msra.mxu0 0.0
    %8595 = vmatprep.subr.mxu0 0.0
    %8596 = vmatpush1.msra.mxu0 0.0
    %8597 = vmatprep.subr.mxu0 0.0
    %8598 = vmatpush1.msra.mxu0 0.0
    %8599 = vmatprep.subr.mxu0 0.0
    %8600 = vmatpush1.msra.mxu0 0.0
    %8601 = vmatprep.subr.mxu0 0.0
    %8602 = vmatpush1.msra.mxu0 0.0
    %8603 = vmatprep.subr.mxu0 0.0
    %8604 = vmatpush1.msra.mxu0 0.0
    %8605 = vmatprep.subr.mxu0 0.0
    %8606 = vmatpush1.msra.mxu0 0.0
    %8607 = vmatprep.subr.mxu0 0.0
    %8608 = vmatpush1.msra.mxu0 0.0
    %8609 = vmatprep.subr.mxu0 0.0
    %8610 = vmatpush1.msra.mxu0 0.0
    %8611 = vmatprep.subr.mxu0 0.0
    %8612 = vmatpush1.msra.mxu0 0.0
    %8613 = vmatprep.subr.mxu0 0.0
    %8614 = vmatpush1.msra.mxu0 0.0
    %8615 = vmatprep.mubr.f32.mxu0 0.0
    %8616 = vmatmul.mubr.f32.gmra.mrb[0].mxu0 %v8267
    %v8617 = vpop.f32.mrb[0].mxu0
    %v8618 = vadd.f32 %v8548, %v8617
    %v8619 = vpop.f32.mrb[0].mxu0
    %8620 = vdwg.mxu0
    %v8621 = vadd.f32 %v8618, %v426
    %8622 = vmatprep.subr.mxu0 0.0
    %8623 = vmatpush1.msra.mxu0 %v375
    %8624 = vmatprep.subr.mxu0 0.0
    %8625 = vmatpush1.msra.mxu0 %v376
    %8626 = vmatprep.subr.mxu0 0.0
    %8627 = vmatpush1.msra.mxu0 %v377
    %8628 = vmatprep.subr.mxu0 0.0
    %8629 = vmatpush1.msra.mxu0 %v378
    %8630 = vmatprep.subr.mxu0 0.0
    %8631 = vmatpush1.msra.mxu0 0.0
    %8632 = vmatprep.subr.mxu0 0.0
    %8633 = vmatpush1.msra.mxu0 0.0
    %8634 = vmatprep.subr.mxu0 0.0
    %8635 = vmatpush1.msra.mxu0 0.0
    %8636 = vmatprep.subr.mxu0 0.0
    %8637 = vmatpush1.msra.mxu0 0.0
    %8638 = vmatprep.subr.mxu0 0.0
    %8639 = vmatpush1.msra.mxu0 0.0
    %8640 = vmatprep.subr.mxu0 0.0
    %8641 = vmatpush1.msra.mxu0 0.0
    %8642 = vmatprep.subr.mxu0 0.0
    %8643 = vmatpush1.msra.mxu0 0.0
    %8644 = vmatprep.subr.mxu0 0.0
    %8645 = vmatpush1.msra.mxu0 0.0
    %8646 = vmatprep.subr.mxu0 0.0
    %8647 = vmatpush1.msra.mxu0 0.0
    %8648 = vmatprep.subr.mxu0 0.0
    %8649 = vmatpush1.msra.mxu0 0.0
    %8650 = vmatprep.subr.mxu0 0.0
    %8651 = vmatpush1.msra.mxu0 0.0
    %8652 = vmatprep.subr.mxu0 0.0
    %8653 = vmatpush1.msra.mxu0 0.0
    %8654 = vmatprep.subr.mxu0 0.0
    %8655 = vmatpush1.msra.mxu0 0.0
    %8656 = vmatprep.subr.mxu0 0.0
    %8657 = vmatpush1.msra.mxu0 0.0
    %8658 = vmatprep.subr.mxu0 0.0
    %8659 = vmatpush1.msra.mxu0 0.0
    %8660 = vmatprep.subr.mxu0 0.0
    %8661 = vmatpush1.msra.mxu0 0.0
    %8662 = vmatprep.subr.mxu0 0.0
    %8663 = vmatpush1.msra.mxu0 0.0
    %8664 = vmatprep.subr.mxu0 0.0
    %8665 = vmatpush1.msra.mxu0 0.0
    %8666 = vmatprep.subr.mxu0 0.0
    %8667 = vmatpush1.msra.mxu0 0.0
    %8668 = vmatprep.subr.mxu0 0.0
    %8669 = vmatpush1.msra.mxu0 0.0
    %8670 = vmatprep.subr.mxu0 0.0
    %8671 = vmatpush1.msra.mxu0 0.0
    %8672 = vmatprep.subr.mxu0 0.0
    %8673 = vmatpush1.msra.mxu0 0.0
    %8674 = vmatprep.subr.mxu0 0.0
    %8675 = vmatpush1.msra.mxu0 0.0
    %8676 = vmatprep.subr.mxu0 0.0
    %8677 = vmatpush1.msra.mxu0 0.0
    %8678 = vmatprep.subr.mxu0 0.0
    %8679 = vmatpush1.msra.mxu0 0.0
    %8680 = vmatprep.subr.mxu0 0.0
    %8681 = vmatpush1.msra.mxu0 0.0
    %8682 = vmatprep.subr.mxu0 0.0
    %8683 = vmatpush1.msra.mxu0 0.0
    %8684 = vmatprep.subr.mxu0 0.0
    %8685 = vmatpush1.msra.mxu0 0.0
    %8686 = vmatprep.mubr.f32.mxu0 0.0
    %8687 = vmatmul.mubr.f32.gmra.mrb[0].mxu0 %v8194
    %v8688 = vpop.f32.mrb[0].mxu0
    %v8689 = vadd.f32 0.0, %v8688
    %v8690 = vpop.f32.mrb[0].mxu0
    %8691 = vdwg.mxu0
    %8692 = vmatprep.subr.mxu0 0.0
    %8693 = vmatpush1.msra.mxu0 %v343
    %8694 = vmatprep.subr.mxu0 0.0
    %8695 = vmatpush1.msra.mxu0 %v344
    %8696 = vmatprep.subr.mxu0 0.0
    %8697 = vmatpush1.msra.mxu0 %v345
    %8698 = vmatprep.subr.mxu0 0.0
    %8699 = vmatpush1.msra.mxu0 %v346
    %8700 = vmatprep.subr.mxu0 0.0
    %8701 = vmatpush1.msra.mxu0 0.0
    %8702 = vmatprep.subr.mxu0 0.0
    %8703 = vmatpush1.msra.mxu0 0.0
    %8704 = vmatprep.subr.mxu0 0.0
    %8705 = vmatpush1.msra.mxu0 0.0
    %8706 = vmatprep.subr.mxu0 0.0
    %8707 = vmatpush1.msra.mxu0 0.0
    %8708 = vmatprep.subr.mxu0 0.0
    %8709 = vmatpush1.msra.mxu0 0.0
    %8710 = vmatprep.subr.mxu0 0.0
    %8711 = vmatpush1.msra.mxu0 0.0
    %8712 = vmatprep.subr.mxu0 0.0
    %8713 = vmatpush1.msra.mxu0 0.0
    %8714 = vmatprep.subr.mxu0 0.0
    %8715 = vmatpush1.msra.mxu0 0.0
    %8716 = vmatprep.subr.mxu0 0.0
    %8717 = vmatpush1.msra.mxu0 0.0
    %8718 = vmatprep.subr.mxu0 0.0
    %8719 = vmatpush1.msra.mxu0 0.0
    %8720 = vmatprep.subr.mxu0 0.0
    %8721 = vmatpush1.msra.mxu0 0.0
    %8722 = vmatprep.subr.mxu0 0.0
    %8723 = vmatpush1.msra.mxu0 0.0
    %8724 = vmatprep.subr.mxu0 0.0
    %8725 = vmatpush1.msra.mxu0 0.0
    %8726 = vmatprep.subr.mxu0 0.0
    %8727 = vmatpush1.msra.mxu0 0.0
    %8728 = vmatprep.subr.mxu0 0.0
    %8729 = vmatpush1.msra.mxu0 0.0
    %8730 = vmatprep.subr.mxu0 0.0
    %8731 = vmatpush1.msra.mxu0 0.0
    %8732 = vmatprep.subr.mxu0 0.0
    %8733 = vmatpush1.msra.mxu0 0.0
    %8734 = vmatprep.subr.mxu0 0.0
    %8735 = vmatpush1.msra.mxu0 0.0
    %8736 = vmatprep.subr.mxu0 0.0
    %8737 = vmatpush1.msra.mxu0 0.0
    %8738 = vmatprep.subr.mxu0 0.0
    %8739 = vmatpush1.msra.mxu0 0.0
    %8740 = vmatprep.subr.mxu0 0.0
    %8741 = vmatpush1.msra.mxu0 0.0
    %8742 = vmatprep.subr.mxu0 0.0
    %8743 = vmatpush1.msra.mxu0 0.0
    %8744 = vmatprep.subr.mxu0 0.0
    %8745 = vmatpush1.msra.mxu0 0.0
    %8746 = vmatprep.subr.mxu0 0.0
    %8747 = vmatpush1.msra.mxu0 0.0
    %8748 = vmatprep.subr.mxu0 0.0
    %8749 = vmatpush1.msra.mxu0 0.0
    %8750 = vmatprep.subr.mxu0 0.0
    %8751 = vmatpush1.msra.mxu0 0.0
    %8752 = vmatprep.subr.mxu0 0.0
    %8753 = vmatpush1.msra.mxu0 0.0
    %8754 = vmatprep.subr.mxu0 0.0
    %8755 = vmatpush1.msra.mxu0 0.0
    %8756 = vmatprep.mubr.f32.mxu0 0.0
    %8757 = vmatmul.mubr.f32.gmra.mrb[0].mxu0 %v8267
    %v8758 = vpop.f32.mrb[0].mxu0
    %v8759 = vadd.f32 %v8689, %v8758
    %v8760 = vpop.f32.mrb[0].mxu0
    %8761 = vdwg.mxu0
    %v8762 = vadd.f32 %v8759, %v433
    %v8763 = vxor.u32 %v8339, 2147483648
    %v8764 = vmul.f32 %v8763, 1.442695
    %v8765 = vpow.pop %v8764
    %v8766 = vadd.f32 %v8765, 1.0
    %v8767 = vrcp.pop %v8766
    %v8768 = vmul.f32 1.0, %v8767
    %v8769 = vxor.u32 %v8480, 2147483648
    %v8770 = vmul.f32 %v8769, 1.442695
    %v8771 = vpow.pop %v8770
    %v8772 = vadd.f32 %v8771, 1.0
    %v8773 = vrcp.pop %v8772
    %v8774 = vmul.f32 1.0, %v8773
    %v8775 = vtanh.pop %v8621
    %v8776 = vxor.u32 %v8762, 2147483648
    %v8777 = vmul.f32 %v8776, 1.442695
    %v8778 = vpow.pop %v8777
    %v8779 = vadd.f32 %v8778, 1.0
    %v8780 = vrcp.pop %v8779
    %v8781 = vmul.f32 1.0, %v8780
    %v8782 = vmul.f32 %v8774, %v7590
    %v8783 = vmul.f32 %v8768, %v8775
    %v8784 = vadd.f32 %v8782, %v8783
    %v8785 = vtanh.pop %v8784
    %v8786 = vmul.f32 %v8781, %v8785
    %vm8787 = vcmp.eq.s32.totalorder %v322, 6
    %v8788 = vsel %vm8787, 1, 0
    %8789 = vset.pattern.permute.xlu0 0
    %8790 = vperm.xlu0 %8789, %v8788
    %v8791 = vpop.permute.xlu0 %8790
    %vm8792 = vcmp.eq.s32.totalorder %v8791, 1
    %v8793 = vsel %vm8792, %v8786, %v7599
    %s8794 = scalar_lea.vmem [#allocation2], 56
    %v8795 = vld [vmem:[%s8794] sm:$0xff]
    %8796 = vmatprep.subr.mxu0 0.0
    %8797 = vmatpush1.msra.mxu0 %v347
    %8798 = vmatprep.subr.mxu0 0.0
    %8799 = vmatpush1.msra.mxu0 %v348
    %8800 = vmatprep.subr.mxu0 0.0
    %8801 = vmatpush1.msra.mxu0 %v349
    %8802 = vmatprep.subr.mxu0 0.0
    %8803 = vmatpush1.msra.mxu0 %v350
    %8804 = vmatprep.subr.mxu0 0.0
    %8805 = vmatpush1.msra.mxu0 0.0
    %8806 = vmatprep.subr.mxu0 0.0
    %8807 = vmatpush1.msra.mxu0 0.0
    %8808 = vmatprep.subr.mxu0 0.0
    %8809 = vmatpush1.msra.mxu0 0.0
    %8810 = vmatprep.subr.mxu0 0.0
    %8811 = vmatpush1.msra.mxu0 0.0
    %8812 = vmatprep.subr.mxu0 0.0
    %8813 = vmatpush1.msra.mxu0 0.0
    %8814 = vmatprep.subr.mxu0 0.0
    %8815 = vmatpush1.msra.mxu0 0.0
    %8816 = vmatprep.subr.mxu0 0.0
    %8817 = vmatpush1.msra.mxu0 0.0
    %8818 = vmatprep.subr.mxu0 0.0
    %8819 = vmatpush1.msra.mxu0 0.0
    %8820 = vmatprep.subr.mxu0 0.0
    %8821 = vmatpush1.msra.mxu0 0.0
    %8822 = vmatprep.subr.mxu0 0.0
    %8823 = vmatpush1.msra.mxu0 0.0
    %8824 = vmatprep.subr.mxu0 0.0
    %8825 = vmatpush1.msra.mxu0 0.0
    %8826 = vmatprep.subr.mxu0 0.0
    %8827 = vmatpush1.msra.mxu0 0.0
    %8828 = vmatprep.subr.mxu0 0.0
    %8829 = vmatpush1.msra.mxu0 0.0
    %8830 = vmatprep.subr.mxu0 0.0
    %8831 = vmatpush1.msra.mxu0 0.0
    %8832 = vmatprep.subr.mxu0 0.0
    %8833 = vmatpush1.msra.mxu0 0.0
    %8834 = vmatprep.subr.mxu0 0.0
    %8835 = vmatpush1.msra.mxu0 0.0
    %8836 = vmatprep.subr.mxu0 0.0
    %8837 = vmatpush1.msra.mxu0 0.0
    %8838 = vmatprep.subr.mxu0 0.0
    %8839 = vmatpush1.msra.mxu0 0.0
    %8840 = vmatprep.subr.mxu0 0.0
    %8841 = vmatpush1.msra.mxu0 0.0
    %8842 = vmatprep.subr.mxu0 0.0
    %8843 = vmatpush1.msra.mxu0 0.0
    %8844 = vmatprep.subr.mxu0 0.0
    %8845 = vmatpush1.msra.mxu0 0.0
    %8846 = vmatprep.subr.mxu0 0.0
    %8847 = vmatpush1.msra.mxu0 0.0
    %8848 = vmatprep.subr.mxu0 0.0
    %8849 = vmatpush1.msra.mxu0 0.0
    %8850 = vmatprep.subr.mxu0 0.0
    %8851 = vmatpush1.msra.mxu0 0.0
    %8852 = vmatprep.subr.mxu0 0.0
    %8853 = vmatpush1.msra.mxu0 0.0
    %8854 = vmatprep.subr.mxu0 0.0
    %8855 = vmatpush1.msra.mxu0 0.0
    %8856 = vmatprep.subr.mxu0 0.0
    %8857 = vmatpush1.msra.mxu0 0.0
    %8858 = vmatprep.subr.mxu0 0.0
    %8859 = vmatpush1.msra.mxu0 0.0
    %8860 = vmatprep.mubr.f32.mxu0 0.0
    %8861 = vmatmul.mubr.f32.gmra.mrb[0].mxu0 %v8267
    %v8862 = vpop.f32.mrb[0].mxu0
    %v8863 = vadd.f32 0.0, %v8862
    %v8864 = vpop.f32.mrb[0].mxu0
    %8865 = vdwg.mxu0
    %v8867 = vsel %vm510, %v8795, 0
    %8869 = vmatprep.subr.mxu0 0.0
    %8870 = vmatpush1.msra.mxu0 %v323
    %8871 = vmatprep.subr.mxu0 0.0
    %8872 = vmatpush1.msra.mxu0 %v324
    %8873 = vmatprep.subr.mxu0 0.0
    %8874 = vmatpush1.msra.mxu0 0.0
    %8875 = vmatprep.subr.mxu0 0.0
    %8876 = vmatpush1.msra.mxu0 0.0
    %8877 = vmatprep.subr.mxu0 0.0
    %8878 = vmatpush1.msra.mxu0 0.0
    %8879 = vmatprep.subr.mxu0 0.0
    %8880 = vmatpush1.msra.mxu0 0.0
    %8881 = vmatprep.subr.mxu0 0.0
    %8882 = vmatpush1.msra.mxu0 0.0
    %8883 = vmatprep.subr.mxu0 0.0
    %8884 = vmatpush1.msra.mxu0 0.0
    %8885 = vmatprep.subr.mxu0 0.0
    %8886 = vmatpush1.msra.mxu0 0.0
    %8887 = vmatprep.subr.mxu0 0.0
    %8888 = vmatpush1.msra.mxu0 0.0
    %8889 = vmatprep.subr.mxu0 0.0
    %8890 = vmatpush1.msra.mxu0 0.0
    %8891 = vmatprep.subr.mxu0 0.0
    %8892 = vmatpush1.msra.mxu0 0.0
    %8893 = vmatprep.subr.mxu0 0.0
    %8894 = vmatpush1.msra.mxu0 0.0
    %8895 = vmatprep.subr.mxu0 0.0
    %8896 = vmatpush1.msra.mxu0 0.0
    %8897 = vmatprep.subr.mxu0 0.0
    %8898 = vmatpush1.msra.mxu0 0.0
    %8899 = vmatprep.subr.mxu0 0.0
    %8900 = vmatpush1.msra.mxu0 0.0
    %8901 = vmatprep.subr.mxu0 0.0
    %8902 = vmatpush1.msra.mxu0 0.0
    %8903 = vmatprep.subr.mxu0 0.0
    %8904 = vmatpush1.msra.mxu0 0.0
    %8905 = vmatprep.subr.mxu0 0.0
    %8906 = vmatpush1.msra.mxu0 0.0
    %8907 = vmatprep.subr.mxu0 0.0
    %8908 = vmatpush1.msra.mxu0 0.0
    %8909 = vmatprep.subr.mxu0 0.0
    %8910 = vmatpush1.msra.mxu0 0.0
    %8911 = vmatprep.subr.mxu0 0.0
    %8912 = vmatpush1.msra.mxu0 0.0
    %8913 = vmatprep.subr.mxu0 0.0
    %8914 = vmatpush1.msra.mxu0 0.0
    %8915 = vmatprep.subr.mxu0 0.0
    %8916 = vmatpush1.msra.mxu0 0.0
    %8917 = vmatprep.subr.mxu0 0.0
    %8918 = vmatpush1.msra.mxu0 0.0
    %8919 = vmatprep.subr.mxu0 0.0
    %8920 = vmatpush1.msra.mxu0 0.0
    %8921 = vmatprep.subr.mxu0 0.0
    %8922 = vmatpush1.msra.mxu0 0.0
    %8923 = vmatprep.subr.mxu0 0.0
    %8924 = vmatpush1.msra.mxu0 0.0
    %8925 = vmatprep.subr.mxu0 0.0
    %8926 = vmatpush1.msra.mxu0 0.0
    %8927 = vmatprep.subr.mxu0 0.0
    %8928 = vmatpush1.msra.mxu0 0.0
    %8929 = vmatprep.subr.mxu0 0.0
    %8930 = vmatpush1.msra.mxu0 0.0
    %8931 = vmatprep.subr.mxu0 0.0
    %8932 = vmatpush1.msra.mxu0 0.0
    %8933 = vmatprep.mubr.f32.mxu0 0.0
    %8934 = vmatmul.mubr.f32.gmra.mrb[0].mxu0 %v8867
    %v8935 = vpop.f32.mrb[0].mxu0
    %v8936 = vadd.f32 %v8863, %v8935
    %v8937 = vpop.f32.mrb[0].mxu0
    %8938 = vdwg.mxu0
    %v8939 = vadd.f32 %v8936, %v384
    %8940 = vmatprep.subr.mxu0 0.0
    %8941 = vmatpush1.msra.mxu0 %v351
    %8942 = vmatprep.subr.mxu0 0.0
    %8943 = vmatpush1.msra.mxu0 %v352
    %8944 = vmatprep.subr.mxu0 0.0
    %8945 = vmatpush1.msra.mxu0 %v353
    %8946 = vmatprep.subr.mxu0 0.0
    %8947 = vmatpush1.msra.mxu0 %v354
    %8948 = vmatprep.subr.mxu0 0.0
    %8949 = vmatpush1.msra.mxu0 0.0
    %8950 = vmatprep.subr.mxu0 0.0
    %8951 = vmatpush1.msra.mxu0 0.0
    %8952 = vmatprep.subr.mxu0 0.0
    %8953 = vmatpush1.msra.mxu0 0.0
    %8954 = vmatprep.subr.mxu0 0.0
    %8955 = vmatpush1.msra.mxu0 0.0
    %8956 = vmatprep.subr.mxu0 0.0
    %8957 = vmatpush1.msra.mxu0 0.0
    %8958 = vmatprep.subr.mxu0 0.0
    %8959 = vmatpush1.msra.mxu0 0.0
    %8960 = vmatprep.subr.mxu0 0.0
    %8961 = vmatpush1.msra.mxu0 0.0
    %8962 = vmatprep.subr.mxu0 0.0
    %8963 = vmatpush1.msra.mxu0 0.0
    %8964 = vmatprep.subr.mxu0 0.0
    %8965 = vmatpush1.msra.mxu0 0.0
    %8966 = vmatprep.subr.mxu0 0.0
    %8967 = vmatpush1.msra.mxu0 0.0
    %8968 = vmatprep.subr.mxu0 0.0
    %8969 = vmatpush1.msra.mxu0 0.0
    %8970 = vmatprep.subr.mxu0 0.0
    %8971 = vmatpush1.msra.mxu0 0.0
    %8972 = vmatprep.subr.mxu0 0.0
    %8973 = vmatpush1.msra.mxu0 0.0
    %8974 = vmatprep.subr.mxu0 0.0
    %8975 = vmatpush1.msra.mxu0 0.0
    %8976 = vmatprep.subr.mxu0 0.0
    %8977 = vmatpush1.msra.mxu0 0.0
    %8978 = vmatprep.subr.mxu0 0.0
    %8979 = vmatpush1.msra.mxu0 0.0
    %8980 = vmatprep.subr.mxu0 0.0
    %8981 = vmatpush1.msra.mxu0 0.0
    %8982 = vmatprep.subr.mxu0 0.0
    %8983 = vmatpush1.msra.mxu0 0.0
    %8984 = vmatprep.subr.mxu0 0.0
    %8985 = vmatpush1.msra.mxu0 0.0
    %8986 = vmatprep.subr.mxu0 0.0
    %8987 = vmatpush1.msra.mxu0 0.0
    %8988 = vmatprep.subr.mxu0 0.0
    %8989 = vmatpush1.msra.mxu0 0.0
    %8990 = vmatprep.subr.mxu0 0.0
    %8991 = vmatpush1.msra.mxu0 0.0
    %8992 = vmatprep.subr.mxu0 0.0
    %8993 = vmatpush1.msra.mxu0 0.0
    %8994 = vmatprep.subr.mxu0 0.0
    %8995 = vmatpush1.msra.mxu0 0.0
    %8996 = vmatprep.subr.mxu0 0.0
    %8997 = vmatpush1.msra.mxu0 0.0
    %8998 = vmatprep.subr.mxu0 0.0
    %8999 = vmatpush1.msra.mxu0 0.0
    %9000 = vmatprep.subr.mxu0 0.0
    %9001 = vmatpush1.msra.mxu0 0.0
    %9002 = vmatprep.subr.mxu0 0.0
    %9003 = vmatpush1.msra.mxu0 0.0
    %9004 = vmatprep.mubr.f32.mxu0 0.0
    %9005 = vmatmul.mubr.f32.gmra.mrb[0].mxu0 %v8267
    %v9006 = vpop.f32.mrb[0].mxu0
    %v9007 = vadd.f32 0.0, %v9006
    %v9008 = vpop.f32.mrb[0].mxu0
    %9009 = vdwg.mxu0
    %9010 = vmatprep.subr.mxu0 0.0
    %9011 = vmatpush1.msra.mxu0 %v325
    %9012 = vmatprep.subr.mxu0 0.0
    %9013 = vmatpush1.msra.mxu0 %v326
    %9014 = vmatprep.subr.mxu0 0.0
    %9015 = vmatpush1.msra.mxu0 0.0
    %9016 = vmatprep.subr.mxu0 0.0
    %9017 = vmatpush1.msra.mxu0 0.0
    %9018 = vmatprep.subr.mxu0 0.0
    %9019 = vmatpush1.msra.mxu0 0.0
    %9020 = vmatprep.subr.mxu0 0.0
    %9021 = vmatpush1.msra.mxu0 0.0
    %9022 = vmatprep.subr.mxu0 0.0
    %9023 = vmatpush1.msra.mxu0 0.0
    %9024 = vmatprep.subr.mxu0 0.0
    %9025 = vmatpush1.msra.mxu0 0.0
    %9026 = vmatprep.subr.mxu0 0.0
    %9027 = vmatpush1.msra.mxu0 0.0
    %9028 = vmatprep.subr.mxu0 0.0
    %9029 = vmatpush1.msra.mxu0 0.0
    %9030 = vmatprep.subr.mxu0 0.0
    %9031 = vmatpush1.msra.mxu0 0.0
    %9032 = vmatprep.subr.mxu0 0.0
    %9033 = vmatpush1.msra.mxu0 0.0
    %9034 = vmatprep.subr.mxu0 0.0
    %9035 = vmatpush1.msra.mxu0 0.0
    %9036 = vmatprep.subr.mxu0 0.0
    %9037 = vmatpush1.msra.mxu0 0.0
    %9038 = vmatprep.subr.mxu0 0.0
    %9039 = vmatpush1.msra.mxu0 0.0
    %9040 = vmatprep.subr.mxu0 0.0
    %9041 = vmatpush1.msra.mxu0 0.0
    %9042 = vmatprep.subr.mxu0 0.0
    %9043 = vmatpush1.msra.mxu0 0.0
    %9044 = vmatprep.subr.mxu0 0.0
    %9045 = vmatpush1.msra.mxu0 0.0
    %9046 = vmatprep.subr.mxu0 0.0
    %9047 = vmatpush1.msra.mxu0 0.0
    %9048 = vmatprep.subr.mxu0 0.0
    %9049 = vmatpush1.msra.mxu0 0.0
    %9050 = vmatprep.subr.mxu0 0.0
    %9051 = vmatpush1.msra.mxu0 0.0
    %9052 = vmatprep.subr.mxu0 0.0
    %9053 = vmatpush1.msra.mxu0 0.0
    %9054 = vmatprep.subr.mxu0 0.0
    %9055 = vmatpush1.msra.mxu0 0.0
    %9056 = vmatprep.subr.mxu0 0.0
    %9057 = vmatpush1.msra.mxu0 0.0
    %9058 = vmatprep.subr.mxu0 0.0
    %9059 = vmatpush1.msra.mxu0 0.0
    %9060 = vmatprep.subr.mxu0 0.0
    %9061 = vmatpush1.msra.mxu0 0.0
    %9062 = vmatprep.subr.mxu0 0.0
    %9063 = vmatpush1.msra.mxu0 0.0
    %9064 = vmatprep.subr.mxu0 0.0
    %9065 = vmatpush1.msra.mxu0 0.0
    %9066 = vmatprep.subr.mxu0 0.0
    %9067 = vmatpush1.msra.mxu0 0.0
    %9068 = vmatprep.subr.mxu0 0.0
    %9069 = vmatpush1.msra.mxu0 0.0
    %9070 = vmatprep.subr.mxu0 0.0
    %9071 = vmatpush1.msra.mxu0 0.0
    %9072 = vmatprep.subr.mxu0 0.0
    %9073 = vmatpush1.msra.mxu0 0.0
    %9074 = vmatprep.mubr.f32.mxu0 0.0
    %9075 = vmatmul.mubr.f32.gmra.mrb[0].mxu0 %v8867
    %v9076 = vpop.f32.mrb[0].mxu0
    %v9077 = vadd.f32 %v9007, %v9076
    %v9078 = vpop.f32.mrb[0].mxu0
    %9079 = vdwg.mxu0
    %v9080 = vadd.f32 %v9077, %v391
    %9081 = vmatprep.subr.mxu0 0.0
    %9082 = vmatpush1.msra.mxu0 %v355
    %9083 = vmatprep.subr.mxu0 0.0
    %9084 = vmatpush1.msra.mxu0 %v356
    %9085 = vmatprep.subr.mxu0 0.0
    %9086 = vmatpush1.msra.mxu0 %v357
    %9087 = vmatprep.subr.mxu0 0.0
    %9088 = vmatpush1.msra.mxu0 %v358
    %9089 = vmatprep.subr.mxu0 0.0
    %9090 = vmatpush1.msra.mxu0 0.0
    %9091 = vmatprep.subr.mxu0 0.0
    %9092 = vmatpush1.msra.mxu0 0.0
    %9093 = vmatprep.subr.mxu0 0.0
    %9094 = vmatpush1.msra.mxu0 0.0
    %9095 = vmatprep.subr.mxu0 0.0
    %9096 = vmatpush1.msra.mxu0 0.0
    %9097 = vmatprep.subr.mxu0 0.0
    %9098 = vmatpush1.msra.mxu0 0.0
    %9099 = vmatprep.subr.mxu0 0.0
    %9100 = vmatpush1.msra.mxu0 0.0
    %9101 = vmatprep.subr.mxu0 0.0
    %9102 = vmatpush1.msra.mxu0 0.0
    %9103 = vmatprep.subr.mxu0 0.0
    %9104 = vmatpush1.msra.mxu0 0.0
    %9105 = vmatprep.subr.mxu0 0.0
    %9106 = vmatpush1.msra.mxu0 0.0
    %9107 = vmatprep.subr.mxu0 0.0
    %9108 = vmatpush1.msra.mxu0 0.0
    %9109 = vmatprep.subr.mxu0 0.0
    %9110 = vmatpush1.msra.mxu0 0.0
    %9111 = vmatprep.subr.mxu0 0.0
    %9112 = vmatpush1.msra.mxu0 0.0
    %9113 = vmatprep.subr.mxu0 0.0
    %9114 = vmatpush1.msra.mxu0 0.0
    %9115 = vmatprep.subr.mxu0 0.0
    %9116 = vmatpush1.msra.mxu0 0.0
    %9117 = vmatprep.subr.mxu0 0.0
    %9118 = vmatpush1.msra.mxu0 0.0
    %9119 = vmatprep.subr.mxu0 0.0
    %9120 = vmatpush1.msra.mxu0 0.0
    %9121 = vmatprep.subr.mxu0 0.0
    %9122 = vmatpush1.msra.mxu0 0.0
    %9123 = vmatprep.subr.mxu0 0.0
    %9124 = vmatpush1.msra.mxu0 0.0
    %9125 = vmatprep.subr.mxu0 0.0
    %9126 = vmatpush1.msra.mxu0 0.0
    %9127 = vmatprep.subr.mxu0 0.0
    %9128 = vmatpush1.msra.mxu0 0.0
    %9129 = vmatprep.subr.mxu0 0.0
    %9130 = vmatpush1.msra.mxu0 0.0
    %9131 = vmatprep.subr.mxu0 0.0
    %9132 = vmatpush1.msra.mxu0 0.0
    %9133 = vmatprep.subr.mxu0 0.0
    %9134 = vmatpush1.msra.mxu0 0.0
    %9135 = vmatprep.subr.mxu0 0.0
    %9136 = vmatpush1.msra.mxu0 0.0
    %9137 = vmatprep.subr.mxu0 0.0
    %9138 = vmatpush1.msra.mxu0 0.0
    %9139 = vmatprep.subr.mxu0 0.0
    %9140 = vmatpush1.msra.mxu0 0.0
    %9141 = vmatprep.subr.mxu0 0.0
    %9142 = vmatpush1.msra.mxu0 0.0
    %9143 = vmatprep.subr.mxu0 0.0
    %9144 = vmatpush1.msra.mxu0 0.0
    %9145 = vmatprep.mubr.f32.mxu0 0.0
    %9146 = vmatmul.mubr.f32.gmra.mrb[0].mxu0 %v8267
    %v9147 = vpop.f32.mrb[0].mxu0
    %v9148 = vadd.f32 0.0, %v9147
    %v9149 = vpop.f32.mrb[0].mxu0
    %9150 = vdwg.mxu0
    %9151 = vmatprep.subr.mxu0 0.0
    %9152 = vmatpush1.msra.mxu0 %v327
    %9153 = vmatprep.subr.mxu0 0.0
    %9154 = vmatpush1.msra.mxu0 %v328
    %9155 = vmatprep.subr.mxu0 0.0
    %9156 = vmatpush1.msra.mxu0 0.0
    %9157 = vmatprep.subr.mxu0 0.0
    %9158 = vmatpush1.msra.mxu0 0.0
    %9159 = vmatprep.subr.mxu0 0.0
    %9160 = vmatpush1.msra.mxu0 0.0
    %9161 = vmatprep.subr.mxu0 0.0
    %9162 = vmatpush1.msra.mxu0 0.0
    %9163 = vmatprep.subr.mxu0 0.0
    %9164 = vmatpush1.msra.mxu0 0.0
    %9165 = vmatprep.subr.mxu0 0.0
    %9166 = vmatpush1.msra.mxu0 0.0
    %9167 = vmatprep.subr.mxu0 0.0
    %9168 = vmatpush1.msra.mxu0 0.0
    %9169 = vmatprep.subr.mxu0 0.0
    %9170 = vmatpush1.msra.mxu0 0.0
    %9171 = vmatprep.subr.mxu0 0.0
    %9172 = vmatpush1.msra.mxu0 0.0
    %9173 = vmatprep.subr.mxu0 0.0
    %9174 = vmatpush1.msra.mxu0 0.0
    %9175 = vmatprep.subr.mxu0 0.0
    %9176 = vmatpush1.msra.mxu0 0.0
    %9177 = vmatprep.subr.mxu0 0.0
    %9178 = vmatpush1.msra.mxu0 0.0
    %9179 = vmatprep.subr.mxu0 0.0
    %9180 = vmatpush1.msra.mxu0 0.0
    %9181 = vmatprep.subr.mxu0 0.0
    %9182 = vmatpush1.msra.mxu0 0.0
    %9183 = vmatprep.subr.mxu0 0.0
    %9184 = vmatpush1.msra.mxu0 0.0
    %9185 = vmatprep.subr.mxu0 0.0
    %9186 = vmatpush1.msra.mxu0 0.0
    %9187 = vmatprep.subr.mxu0 0.0
    %9188 = vmatpush1.msra.mxu0 0.0
    %9189 = vmatprep.subr.mxu0 0.0
    %9190 = vmatpush1.msra.mxu0 0.0
    %9191 = vmatprep.subr.mxu0 0.0
    %9192 = vmatpush1.msra.mxu0 0.0
    %9193 = vmatprep.subr.mxu0 0.0
    %9194 = vmatpush1.msra.mxu0 0.0
    %9195 = vmatprep.subr.mxu0 0.0
    %9196 = vmatpush1.msra.mxu0 0.0
    %9197 = vmatprep.subr.mxu0 0.0
    %9198 = vmatpush1.msra.mxu0 0.0
    %9199 = vmatprep.subr.mxu0 0.0
    %9200 = vmatpush1.msra.mxu0 0.0
    %9201 = vmatprep.subr.mxu0 0.0
    %9202 = vmatpush1.msra.mxu0 0.0
    %9203 = vmatprep.subr.mxu0 0.0
    %9204 = vmatpush1.msra.mxu0 0.0
    %9205 = vmatprep.subr.mxu0 0.0
    %9206 = vmatpush1.msra.mxu0 0.0
    %9207 = vmatprep.subr.mxu0 0.0
    %9208 = vmatpush1.msra.mxu0 0.0
    %9209 = vmatprep.subr.mxu0 0.0
    %9210 = vmatpush1.msra.mxu0 0.0
    %9211 = vmatprep.subr.mxu0 0.0
    %9212 = vmatpush1.msra.mxu0 0.0
    %9213 = vmatprep.subr.mxu0 0.0
    %9214 = vmatpush1.msra.mxu0 0.0
    %9215 = vmatprep.mubr.f32.mxu0 0.0
    %9216 = vmatmul.mubr.f32.gmra.mrb[0].mxu0 %v8867
    %v9217 = vpop.f32.mrb[0].mxu0
    %v9218 = vadd.f32 %v9148, %v9217
    %v9219 = vpop.f32.mrb[0].mxu0
    %9220 = vdwg.mxu0
    %v9221 = vadd.f32 %v9218, %v398
    %9222 = vmatprep.subr.mxu0 0.0
    %9223 = vmatpush1.msra.mxu0 %v359
    %9224 = vmatprep.subr.mxu0 0.0
    %9225 = vmatpush1.msra.mxu0 %v360
    %9226 = vmatprep.subr.mxu0 0.0
    %9227 = vmatpush1.msra.mxu0 %v361
    %9228 = vmatprep.subr.mxu0 0.0
    %9229 = vmatpush1.msra.mxu0 %v362
    %9230 = vmatprep.subr.mxu0 0.0
    %9231 = vmatpush1.msra.mxu0 0.0
    %9232 = vmatprep.subr.mxu0 0.0
    %9233 = vmatpush1.msra.mxu0 0.0
    %9234 = vmatprep.subr.mxu0 0.0
    %9235 = vmatpush1.msra.mxu0 0.0
    %9236 = vmatprep.subr.mxu0 0.0
    %9237 = vmatpush1.msra.mxu0 0.0
    %9238 = vmatprep.subr.mxu0 0.0
    %9239 = vmatpush1.msra.mxu0 0.0
    %9240 = vmatprep.subr.mxu0 0.0
    %9241 = vmatpush1.msra.mxu0 0.0
    %9242 = vmatprep.subr.mxu0 0.0
    %9243 = vmatpush1.msra.mxu0 0.0
    %9244 = vmatprep.subr.mxu0 0.0
    %9245 = vmatpush1.msra.mxu0 0.0
    %9246 = vmatprep.subr.mxu0 0.0
    %9247 = vmatpush1.msra.mxu0 0.0
    %9248 = vmatprep.subr.mxu0 0.0
    %9249 = vmatpush1.msra.mxu0 0.0
    %9250 = vmatprep.subr.mxu0 0.0
    %9251 = vmatpush1.msra.mxu0 0.0
    %9252 = vmatprep.subr.mxu0 0.0
    %9253 = vmatpush1.msra.mxu0 0.0
    %9254 = vmatprep.subr.mxu0 0.0
    %9255 = vmatpush1.msra.mxu0 0.0
    %9256 = vmatprep.subr.mxu0 0.0
    %9257 = vmatpush1.msra.mxu0 0.0
    %9258 = vmatprep.subr.mxu0 0.0
    %9259 = vmatpush1.msra.mxu0 0.0
    %9260 = vmatprep.subr.mxu0 0.0
    %9261 = vmatpush1.msra.mxu0 0.0
    %9262 = vmatprep.subr.mxu0 0.0
    %9263 = vmatpush1.msra.mxu0 0.0
    %9264 = vmatprep.subr.mxu0 0.0
    %9265 = vmatpush1.msra.mxu0 0.0
    %9266 = vmatprep.subr.mxu0 0.0
    %9267 = vmatpush1.msra.mxu0 0.0
    %9268 = vmatprep.subr.mxu0 0.0
    %9269 = vmatpush1.msra.mxu0 0.0
    %9270 = vmatprep.subr.mxu0 0.0
    %9271 = vmatpush1.msra.mxu0 0.0
    %9272 = vmatprep.subr.mxu0 0.0
    %9273 = vmatpush1.msra.mxu0 0.0
    %9274 = vmatprep.subr.mxu0 0.0
    %9275 = vmatpush1.msra.mxu0 0.0
    %9276 = vmatprep.subr.mxu0 0.0
    %9277 = vmatpush1.msra.mxu0 0.0
    %9278 = vmatprep.subr.mxu0 0.0
    %9279 = vmatpush1.msra.mxu0 0.0
    %9280 = vmatprep.subr.mxu0 0.0
    %9281 = vmatpush1.msra.mxu0 0.0
    %9282 = vmatprep.subr.mxu0 0.0
    %9283 = vmatpush1.msra.mxu0 0.0
    %9284 = vmatprep.subr.mxu0 0.0
    %9285 = vmatpush1.msra.mxu0 0.0
    %9286 = vmatprep.mubr.f32.mxu0 0.0
    %9287 = vmatmul.mubr.f32.gmra.mrb[0].mxu0 %v8267
    %v9288 = vpop.f32.mrb[0].mxu0
    %v9289 = vadd.f32 0.0, %v9288
    %v9290 = vpop.f32.mrb[0].mxu0
    %9291 = vdwg.mxu0
    %9292 = vmatprep.subr.mxu0 0.0
    %9293 = vmatpush1.msra.mxu0 %v329
    %9294 = vmatprep.subr.mxu0 0.0
    %9295 = vmatpush1.msra.mxu0 %v330
    %9296 = vmatprep.subr.mxu0 0.0
    %9297 = vmatpush1.msra.mxu0 0.0
    %9298 = vmatprep.subr.mxu0 0.0
    %9299 = vmatpush1.msra.mxu0 0.0
    %9300 = vmatprep.subr.mxu0 0.0
    %9301 = vmatpush1.msra.mxu0 0.0
    %9302 = vmatprep.subr.mxu0 0.0
    %9303 = vmatpush1.msra.mxu0 0.0
    %9304 = vmatprep.subr.mxu0 0.0
    %9305 = vmatpush1.msra.mxu0 0.0
    %9306 = vmatprep.subr.mxu0 0.0
    %9307 = vmatpush1.msra.mxu0 0.0
    %9308 = vmatprep.subr.mxu0 0.0
    %9309 = vmatpush1.msra.mxu0 0.0
    %9310 = vmatprep.subr.mxu0 0.0
    %9311 = vmatpush1.msra.mxu0 0.0
    %9312 = vmatprep.subr.mxu0 0.0
    %9313 = vmatpush1.msra.mxu0 0.0
    %9314 = vmatprep.subr.mxu0 0.0
    %9315 = vmatpush1.msra.mxu0 0.0
    %9316 = vmatprep.subr.mxu0 0.0
    %9317 = vmatpush1.msra.mxu0 0.0
    %9318 = vmatprep.subr.mxu0 0.0
    %9319 = vmatpush1.msra.mxu0 0.0
    %9320 = vmatprep.subr.mxu0 0.0
    %9321 = vmatpush1.msra.mxu0 0.0
    %9322 = vmatprep.subr.mxu0 0.0
    %9323 = vmatpush1.msra.mxu0 0.0
    %9324 = vmatprep.subr.mxu0 0.0
    %9325 = vmatpush1.msra.mxu0 0.0
    %9326 = vmatprep.subr.mxu0 0.0
    %9327 = vmatpush1.msra.mxu0 0.0
    %9328 = vmatprep.subr.mxu0 0.0
    %9329 = vmatpush1.msra.mxu0 0.0
    %9330 = vmatprep.subr.mxu0 0.0
    %9331 = vmatpush1.msra.mxu0 0.0
    %9332 = vmatprep.subr.mxu0 0.0
    %9333 = vmatpush1.msra.mxu0 0.0
    %9334 = vmatprep.subr.mxu0 0.0
    %9335 = vmatpush1.msra.mxu0 0.0
    %9336 = vmatprep.subr.mxu0 0.0
    %9337 = vmatpush1.msra.mxu0 0.0
    %9338 = vmatprep.subr.mxu0 0.0
    %9339 = vmatpush1.msra.mxu0 0.0
    %9340 = vmatprep.subr.mxu0 0.0
    %9341 = vmatpush1.msra.mxu0 0.0
    %9342 = vmatprep.subr.mxu0 0.0
    %9343 = vmatpush1.msra.mxu0 0.0
    %9344 = vmatprep.subr.mxu0 0.0
    %9345 = vmatpush1.msra.mxu0 0.0
    %9346 = vmatprep.subr.mxu0 0.0
    %9347 = vmatpush1.msra.mxu0 0.0
    %9348 = vmatprep.subr.mxu0 0.0
    %9349 = vmatpush1.msra.mxu0 0.0
    %9350 = vmatprep.subr.mxu0 0.0
    %9351 = vmatpush1.msra.mxu0 0.0
    %9352 = vmatprep.subr.mxu0 0.0
    %9353 = vmatpush1.msra.mxu0 0.0
    %9354 = vmatprep.subr.mxu0 0.0
    %9355 = vmatpush1.msra.mxu0 0.0
    %9356 = vmatprep.mubr.f32.mxu0 0.0
    %9357 = vmatmul.mubr.f32.gmra.mrb[0].mxu0 %v8867
    %v9358 = vpop.f32.mrb[0].mxu0
    %v9359 = vadd.f32 %v9289, %v9358
    %v9360 = vpop.f32.mrb[0].mxu0
    %9361 = vdwg.mxu0
    %v9362 = vadd.f32 %v9359, %v405
    %v9363 = vxor.u32 %v8939, 2147483648
    %v9364 = vmul.f32 %v9363, 1.442695
    %v9365 = vpow.pop %v9364
    %v9366 = vadd.f32 %v9365, 1.0
    %v9367 = vrcp.pop %v9366
    %v9368 = vmul.f32 1.0, %v9367
    %v9369 = vxor.u32 %v9080, 2147483648
    %v9370 = vmul.f32 %v9369, 1.442695
    %v9371 = vpow.pop %v9370
    %v9372 = vadd.f32 %v9371, 1.0
    %v9373 = vrcp.pop %v9372
    %v9374 = vmul.f32 1.0, %v9373
    %v9375 = vtanh.pop %v9221
    %v9376 = vxor.u32 %v9362, 2147483648
    %v9377 = vmul.f32 %v9376, 1.442695
    %v9378 = vpow.pop %v9377
    %v9379 = vadd.f32 %v9378, 1.0
    %v9380 = vrcp.pop %v9379
    %v9381 = vmul.f32 1.0, %v9380
    %v9382 = vmul.f32 %v9374, %v8190
    %v9383 = vmul.f32 %v9368, %v9375
    %v9384 = vadd.f32 %v9382, %v9383
    %v9385 = vtanh.pop %v9384
    %v9386 = vmul.f32 %v9381, %v9385
    %v9388 = vsel %vm436, %v8786, 0
    %9390 = vmatprep.subr.mxu0 0.0
    %9391 = vmatpush1.msra.mxu0 %v363
    %9392 = vmatprep.subr.mxu0 0.0
    %9393 = vmatpush1.msra.mxu0 %v364
    %9394 = vmatprep.subr.mxu0 0.0
    %9395 = vmatpush1.msra.mxu0 %v365
    %9396 = vmatprep.subr.mxu0 0.0
    %9397 = vmatpush1.msra.mxu0 %v366
    %9398 = vmatprep.subr.mxu0 0.0
    %9399 = vmatpush1.msra.mxu0 0.0
    %9400 = vmatprep.subr.mxu0 0.0
    %9401 = vmatpush1.msra.mxu0 0.0
    %9402 = vmatprep.subr.mxu0 0.0
    %9403 = vmatpush1.msra.mxu0 0.0
    %9404 = vmatprep.subr.mxu0 0.0
    %9405 = vmatpush1.msra.mxu0 0.0
    %9406 = vmatprep.subr.mxu0 0.0
    %9407 = vmatpush1.msra.mxu0 0.0
    %9408 = vmatprep.subr.mxu0 0.0
    %9409 = vmatpush1.msra.mxu0 0.0
    %9410 = vmatprep.subr.mxu0 0.0
    %9411 = vmatpush1.msra.mxu0 0.0
    %9412 = vmatprep.subr.mxu0 0.0
    %9413 = vmatpush1.msra.mxu0 0.0
    %9414 = vmatprep.subr.mxu0 0.0
    %9415 = vmatpush1.msra.mxu0 0.0
    %9416 = vmatprep.subr.mxu0 0.0
    %9417 = vmatpush1.msra.mxu0 0.0
    %9418 = vmatprep.subr.mxu0 0.0
    %9419 = vmatpush1.msra.mxu0 0.0
    %9420 = vmatprep.subr.mxu0 0.0
    %9421 = vmatpush1.msra.mxu0 0.0
    %9422 = vmatprep.subr.mxu0 0.0
    %9423 = vmatpush1.msra.mxu0 0.0
    %9424 = vmatprep.subr.mxu0 0.0
    %9425 = vmatpush1.msra.mxu0 0.0
    %9426 = vmatprep.subr.mxu0 0.0
    %9427 = vmatpush1.msra.mxu0 0.0
    %9428 = vmatprep.subr.mxu0 0.0
    %9429 = vmatpush1.msra.mxu0 0.0
    %9430 = vmatprep.subr.mxu0 0.0
    %9431 = vmatpush1.msra.mxu0 0.0
    %9432 = vmatprep.subr.mxu0 0.0
    %9433 = vmatpush1.msra.mxu0 0.0
    %9434 = vmatprep.subr.mxu0 0.0
    %9435 = vmatpush1.msra.mxu0 0.0
    %9436 = vmatprep.subr.mxu0 0.0
    %9437 = vmatpush1.msra.mxu0 0.0
    %9438 = vmatprep.subr.mxu0 0.0
    %9439 = vmatpush1.msra.mxu0 0.0
    %9440 = vmatprep.subr.mxu0 0.0
    %9441 = vmatpush1.msra.mxu0 0.0
    %9442 = vmatprep.subr.mxu0 0.0
    %9443 = vmatpush1.msra.mxu0 0.0
    %9444 = vmatprep.subr.mxu0 0.0
    %9445 = vmatpush1.msra.mxu0 0.0
    %9446 = vmatprep.subr.mxu0 0.0
    %9447 = vmatpush1.msra.mxu0 0.0
    %9448 = vmatprep.subr.mxu0 0.0
    %9449 = vmatpush1.msra.mxu0 0.0
    %9450 = vmatprep.subr.mxu0 0.0
    %9451 = vmatpush1.msra.mxu0 0.0
    %9452 = vmatprep.subr.mxu0 0.0
    %9453 = vmatpush1.msra.mxu0 0.0
    %9454 = vmatprep.mubr.f32.mxu0 0.0
    %9455 = vmatmul.mubr.f32.gmra.mrb[0].mxu0 %v9388
    %v9456 = vpop.f32.mrb[0].mxu0
    %v9457 = vadd.f32 0.0, %v9456
    %v9458 = vpop.f32.mrb[0].mxu0
    %9459 = vdwg.mxu0
    %v9461 = vsel %vm436, %v9386, 0
    %9463 = vmatprep.subr.mxu0 0.0
    %9464 = vmatpush1.msra.mxu0 %v331
    %9465 = vmatprep.subr.mxu0 0.0
    %9466 = vmatpush1.msra.mxu0 %v332
    %9467 = vmatprep.subr.mxu0 0.0
    %9468 = vmatpush1.msra.mxu0 %v333
    %9469 = vmatprep.subr.mxu0 0.0
    %9470 = vmatpush1.msra.mxu0 %v334
    %9471 = vmatprep.subr.mxu0 0.0
    %9472 = vmatpush1.msra.mxu0 0.0
    %9473 = vmatprep.subr.mxu0 0.0
    %9474 = vmatpush1.msra.mxu0 0.0
    %9475 = vmatprep.subr.mxu0 0.0
    %9476 = vmatpush1.msra.mxu0 0.0
    %9477 = vmatprep.subr.mxu0 0.0
    %9478 = vmatpush1.msra.mxu0 0.0
    %9479 = vmatprep.subr.mxu0 0.0
    %9480 = vmatpush1.msra.mxu0 0.0
    %9481 = vmatprep.subr.mxu0 0.0
    %9482 = vmatpush1.msra.mxu0 0.0
    %9483 = vmatprep.subr.mxu0 0.0
    %9484 = vmatpush1.msra.mxu0 0.0
    %9485 = vmatprep.subr.mxu0 0.0
    %9486 = vmatpush1.msra.mxu0 0.0
    %9487 = vmatprep.subr.mxu0 0.0
    %9488 = vmatpush1.msra.mxu0 0.0
    %9489 = vmatprep.subr.mxu0 0.0
    %9490 = vmatpush1.msra.mxu0 0.0
    %9491 = vmatprep.subr.mxu0 0.0
    %9492 = vmatpush1.msra.mxu0 0.0
    %9493 = vmatprep.subr.mxu0 0.0
    %9494 = vmatpush1.msra.mxu0 0.0
    %9495 = vmatprep.subr.mxu0 0.0
    %9496 = vmatpush1.msra.mxu0 0.0
    %9497 = vmatprep.subr.mxu0 0.0
    %9498 = vmatpush1.msra.mxu0 0.0
    %9499 = vmatprep.subr.mxu0 0.0
    %9500 = vmatpush1.msra.mxu0 0.0
    %9501 = vmatprep.subr.mxu0 0.0
    %9502 = vmatpush1.msra.mxu0 0.0
    %9503 = vmatprep.subr.mxu0 0.0
    %9504 = vmatpush1.msra.mxu0 0.0
    %9505 = vmatprep.subr.mxu0 0.0
    %9506 = vmatpush1.msra.mxu0 0.0
    %9507 = vmatprep.subr.mxu0 0.0
    %9508 = vmatpush1.msra.mxu0 0.0
    %9509 = vmatprep.subr.mxu0 0.0
    %9510 = vmatpush1.msra.mxu0 0.0
    %9511 = vmatprep.subr.mxu0 0.0
    %9512 = vmatpush1.msra.mxu0 0.0
    %9513 = vmatprep.subr.mxu0 0.0
    %9514 = vmatpush1.msra.mxu0 0.0
    %9515 = vmatprep.subr.mxu0 0.0
    %9516 = vmatpush1.msra.mxu0 0.0
    %9517 = vmatprep.subr.mxu0 0.0
    %9518 = vmatpush1.msra.mxu0 0.0
    %9519 = vmatprep.subr.mxu0 0.0
    %9520 = vmatpush1.msra.mxu0 0.0
    %9521 = vmatprep.subr.mxu0 0.0
    %9522 = vmatpush1.msra.mxu0 0.0
    %9523 = vmatprep.subr.mxu0 0.0
    %9524 = vmatpush1.msra.mxu0 0.0
    %9525 = vmatprep.subr.mxu0 0.0
    %9526 = vmatpush1.msra.mxu0 0.0
    %9527 = vmatprep.mubr.f32.mxu0 0.0
    %9528 = vmatmul.mubr.f32.gmra.mrb[0].mxu0 %v9461
    %v9529 = vpop.f32.mrb[0].mxu0
    %v9530 = vadd.f32 %v9457, %v9529
    %v9531 = vpop.f32.mrb[0].mxu0
    %9532 = vdwg.mxu0
    %v9533 = vadd.f32 %v9530, %v412
    %9534 = vmatprep.subr.mxu0 0.0
    %9535 = vmatpush1.msra.mxu0 %v367
    %9536 = vmatprep.subr.mxu0 0.0
    %9537 = vmatpush1.msra.mxu0 %v368
    %9538 = vmatprep.subr.mxu0 0.0
    %9539 = vmatpush1.msra.mxu0 %v369
    %9540 = vmatprep.subr.mxu0 0.0
    %9541 = vmatpush1.msra.mxu0 %v370
    %9542 = vmatprep.subr.mxu0 0.0
    %9543 = vmatpush1.msra.mxu0 0.0
    %9544 = vmatprep.subr.mxu0 0.0
    %9545 = vmatpush1.msra.mxu0 0.0
    %9546 = vmatprep.subr.mxu0 0.0
    %9547 = vmatpush1.msra.mxu0 0.0
    %9548 = vmatprep.subr.mxu0 0.0
    %9549 = vmatpush1.msra.mxu0 0.0
    %9550 = vmatprep.subr.mxu0 0.0
    %9551 = vmatpush1.msra.mxu0 0.0
    %9552 = vmatprep.subr.mxu0 0.0
    %9553 = vmatpush1.msra.mxu0 0.0
    %9554 = vmatprep.subr.mxu0 0.0
    %9555 = vmatpush1.msra.mxu0 0.0
    %9556 = vmatprep.subr.mxu0 0.0
    %9557 = vmatpush1.msra.mxu0 0.0
    %9558 = vmatprep.subr.mxu0 0.0
    %9559 = vmatpush1.msra.mxu0 0.0
    %9560 = vmatprep.subr.mxu0 0.0
    %9561 = vmatpush1.msra.mxu0 0.0
    %9562 = vmatprep.subr.mxu0 0.0
    %9563 = vmatpush1.msra.mxu0 0.0
    %9564 = vmatprep.subr.mxu0 0.0
    %9565 = vmatpush1.msra.mxu0 0.0
    %9566 = vmatprep.subr.mxu0 0.0
    %9567 = vmatpush1.msra.mxu0 0.0
    %9568 = vmatprep.subr.mxu0 0.0
    %9569 = vmatpush1.msra.mxu0 0.0
    %9570 = vmatprep.subr.mxu0 0.0
    %9571 = vmatpush1.msra.mxu0 0.0
    %9572 = vmatprep.subr.mxu0 0.0
    %9573 = vmatpush1.msra.mxu0 0.0
    %9574 = vmatprep.subr.mxu0 0.0
    %9575 = vmatpush1.msra.mxu0 0.0
    %9576 = vmatprep.subr.mxu0 0.0
    %9577 = vmatpush1.msra.mxu0 0.0
    %9578 = vmatprep.subr.mxu0 0.0
    %9579 = vmatpush1.msra.mxu0 0.0
    %9580 = vmatprep.subr.mxu0 0.0
    %9581 = vmatpush1.msra.mxu0 0.0
    %9582 = vmatprep.subr.mxu0 0.0
    %9583 = vmatpush1.msra.mxu0 0.0
    %9584 = vmatprep.subr.mxu0 0.0
    %9585 = vmatpush1.msra.mxu0 0.0
    %9586 = vmatprep.subr.mxu0 0.0
    %9587 = vmatpush1.msra.mxu0 0.0
    %9588 = vmatprep.subr.mxu0 0.0
    %9589 = vmatpush1.msra.mxu0 0.0
    %9590 = vmatprep.subr.mxu0 0.0
    %9591 = vmatpush1.msra.mxu0 0.0
    %9592 = vmatprep.subr.mxu0 0.0
    %9593 = vmatpush1.msra.mxu0 0.0
    %9594 = vmatprep.subr.mxu0 0.0
    %9595 = vmatpush1.msra.mxu0 0.0
    %9596 = vmatprep.subr.mxu0 0.0
    %9597 = vmatpush1.msra.mxu0 0.0
    %9598 = vmatprep.mubr.f32.mxu0 0.0
    %9599 = vmatmul.mubr.f32.gmra.mrb[0].mxu0 %v9388
    %v9600 = vpop.f32.mrb[0].mxu0
    %v9601 = vadd.f32 0.0, %v9600
    %v9602 = vpop.f32.mrb[0].mxu0
    %9603 = vdwg.mxu0
    %9604 = vmatprep.subr.mxu0 0.0
    %9605 = vmatpush1.msra.mxu0 %v335
    %9606 = vmatprep.subr.mxu0 0.0
    %9607 = vmatpush1.msra.mxu0 %v336
    %9608 = vmatprep.subr.mxu0 0.0
    %9609 = vmatpush1.msra.mxu0 %v337
    %9610 = vmatprep.subr.mxu0 0.0
    %9611 = vmatpush1.msra.mxu0 %v338
    %9612 = vmatprep.subr.mxu0 0.0
    %9613 = vmatpush1.msra.mxu0 0.0
    %9614 = vmatprep.subr.mxu0 0.0
    %9615 = vmatpush1.msra.mxu0 0.0
    %9616 = vmatprep.subr.mxu0 0.0
    %9617 = vmatpush1.msra.mxu0 0.0
    %9618 = vmatprep.subr.mxu0 0.0
    %9619 = vmatpush1.msra.mxu0 0.0
    %9620 = vmatprep.subr.mxu0 0.0
    %9621 = vmatpush1.msra.mxu0 0.0
    %9622 = vmatprep.subr.mxu0 0.0
    %9623 = vmatpush1.msra.mxu0 0.0
    %9624 = vmatprep.subr.mxu0 0.0
    %9625 = vmatpush1.msra.mxu0 0.0
    %9626 = vmatprep.subr.mxu0 0.0
    %9627 = vmatpush1.msra.mxu0 0.0
    %9628 = vmatprep.subr.mxu0 0.0
    %9629 = vmatpush1.msra.mxu0 0.0
    %9630 = vmatprep.subr.mxu0 0.0
    %9631 = vmatpush1.msra.mxu0 0.0
    %9632 = vmatprep.subr.mxu0 0.0
    %9633 = vmatpush1.msra.mxu0 0.0
    %9634 = vmatprep.subr.mxu0 0.0
    %9635 = vmatpush1.msra.mxu0 0.0
    %9636 = vmatprep.subr.mxu0 0.0
    %9637 = vmatpush1.msra.mxu0 0.0
    %9638 = vmatprep.subr.mxu0 0.0
    %9639 = vmatpush1.msra.mxu0 0.0
    %9640 = vmatprep.subr.mxu0 0.0
    %9641 = vmatpush1.msra.mxu0 0.0
    %9642 = vmatprep.subr.mxu0 0.0
    %9643 = vmatpush1.msra.mxu0 0.0
    %9644 = vmatprep.subr.mxu0 0.0
    %9645 = vmatpush1.msra.mxu0 0.0
    %9646 = vmatprep.subr.mxu0 0.0
    %9647 = vmatpush1.msra.mxu0 0.0
    %9648 = vmatprep.subr.mxu0 0.0
    %9649 = vmatpush1.msra.mxu0 0.0
    %9650 = vmatprep.subr.mxu0 0.0
    %9651 = vmatpush1.msra.mxu0 0.0
    %9652 = vmatprep.subr.mxu0 0.0
    %9653 = vmatpush1.msra.mxu0 0.0
    %9654 = vmatprep.subr.mxu0 0.0
    %9655 = vmatpush1.msra.mxu0 0.0
    %9656 = vmatprep.subr.mxu0 0.0
    %9657 = vmatpush1.msra.mxu0 0.0
    %9658 = vmatprep.subr.mxu0 0.0
    %9659 = vmatpush1.msra.mxu0 0.0
    %9660 = vmatprep.subr.mxu0 0.0
    %9661 = vmatpush1.msra.mxu0 0.0
    %9662 = vmatprep.subr.mxu0 0.0
    %9663 = vmatpush1.msra.mxu0 0.0
    %9664 = vmatprep.subr.mxu0 0.0
    %9665 = vmatpush1.msra.mxu0 0.0
    %9666 = vmatprep.subr.mxu0 0.0
    %9667 = vmatpush1.msra.mxu0 0.0
    %9668 = vmatprep.mubr.f32.mxu0 0.0
    %9669 = vmatmul.mubr.f32.gmra.mrb[0].mxu0 %v9461
    %v9670 = vpop.f32.mrb[0].mxu0
    %v9671 = vadd.f32 %v9601, %v9670
    %v9672 = vpop.f32.mrb[0].mxu0
    %9673 = vdwg.mxu0
    %v9674 = vadd.f32 %v9671, %v419
    %9675 = vmatprep.subr.mxu0 0.0
    %9676 = vmatpush1.msra.mxu0 %v371
    %9677 = vmatprep.subr.mxu0 0.0
    %9678 = vmatpush1.msra.mxu0 %v372
    %9679 = vmatprep.subr.mxu0 0.0
    %9680 = vmatpush1.msra.mxu0 %v373
    %9681 = vmatprep.subr.mxu0 0.0
    %9682 = vmatpush1.msra.mxu0 %v374
    %9683 = vmatprep.subr.mxu0 0.0
    %9684 = vmatpush1.msra.mxu0 0.0
    %9685 = vmatprep.subr.mxu0 0.0
    %9686 = vmatpush1.msra.mxu0 0.0
    %9687 = vmatprep.subr.mxu0 0.0
    %9688 = vmatpush1.msra.mxu0 0.0
    %9689 = vmatprep.subr.mxu0 0.0
    %9690 = vmatpush1.msra.mxu0 0.0
    %9691 = vmatprep.subr.mxu0 0.0
    %9692 = vmatpush1.msra.mxu0 0.0
    %9693 = vmatprep.subr.mxu0 0.0
    %9694 = vmatpush1.msra.mxu0 0.0
    %9695 = vmatprep.subr.mxu0 0.0
    %9696 = vmatpush1.msra.mxu0 0.0
    %9697 = vmatprep.subr.mxu0 0.0
    %9698 = vmatpush1.msra.mxu0 0.0
    %9699 = vmatprep.subr.mxu0 0.0
    %9700 = vmatpush1.msra.mxu0 0.0
    %9701 = vmatprep.subr.mxu0 0.0
    %9702 = vmatpush1.msra.mxu0 0.0
    %9703 = vmatprep.subr.mxu0 0.0
    %9704 = vmatpush1.msra.mxu0 0.0
    %9705 = vmatprep.subr.mxu0 0.0
    %9706 = vmatpush1.msra.mxu0 0.0
    %9707 = vmatprep.subr.mxu0 0.0
    %9708 = vmatpush1.msra.mxu0 0.0
    %9709 = vmatprep.subr.mxu0 0.0
    %9710 = vmatpush1.msra.mxu0 0.0
    %9711 = vmatprep.subr.mxu0 0.0
    %9712 = vmatpush1.msra.mxu0 0.0
    %9713 = vmatprep.subr.mxu0 0.0
    %9714 = vmatpush1.msra.mxu0 0.0
    %9715 = vmatprep.subr.mxu0 0.0
    %9716 = vmatpush1.msra.mxu0 0.0
    %9717 = vmatprep.subr.mxu0 0.0
    %9718 = vmatpush1.msra.mxu0 0.0
    %9719 = vmatprep.subr.mxu0 0.0
    %9720 = vmatpush1.msra.mxu0 0.0
    %9721 = vmatprep.subr.mxu0 0.0
    %9722 = vmatpush1.msra.mxu0 0.0
    %9723 = vmatprep.subr.mxu0 0.0
    %9724 = vmatpush1.msra.mxu0 0.0
    %9725 = vmatprep.subr.mxu0 0.0
    %9726 = vmatpush1.msra.mxu0 0.0
    %9727 = vmatprep.subr.mxu0 0.0
    %9728 = vmatpush1.msra.mxu0 0.0
    %9729 = vmatprep.subr.mxu0 0.0
    %9730 = vmatpush1.msra.mxu0 0.0
    %9731 = vmatprep.subr.mxu0 0.0
    %9732 = vmatpush1.msra.mxu0 0.0
    %9733 = vmatprep.subr.mxu0 0.0
    %9734 = vmatpush1.msra.mxu0 0.0
    %9735 = vmatprep.subr.mxu0 0.0
    %9736 = vmatpush1.msra.mxu0 0.0
    %9737 = vmatprep.subr.mxu0 0.0
    %9738 = vmatpush1.msra.mxu0 0.0
    %9739 = vmatprep.mubr.f32.mxu0 0.0
    %9740 = vmatmul.mubr.f32.gmra.mrb[0].mxu0 %v9388
    %v9741 = vpop.f32.mrb[0].mxu0
    %v9742 = vadd.f32 0.0, %v9741
    %v9743 = vpop.f32.mrb[0].mxu0
    %9744 = vdwg.mxu0
    %9745 = vmatprep.subr.mxu0 0.0
    %9746 = vmatpush1.msra.mxu0 %v339
    %9747 = vmatprep.subr.mxu0 0.0
    %9748 = vmatpush1.msra.mxu0 %v340
    %9749 = vmatprep.subr.mxu0 0.0
    %9750 = vmatpush1.msra.mxu0 %v341
    %9751 = vmatprep.subr.mxu0 0.0
    %9752 = vmatpush1.msra.mxu0 %v342
    %9753 = vmatprep.subr.mxu0 0.0
    %9754 = vmatpush1.msra.mxu0 0.0
    %9755 = vmatprep.subr.mxu0 0.0
    %9756 = vmatpush1.msra.mxu0 0.0
    %9757 = vmatprep.subr.mxu0 0.0
    %9758 = vmatpush1.msra.mxu0 0.0
    %9759 = vmatprep.subr.mxu0 0.0
    %9760 = vmatpush1.msra.mxu0 0.0
    %9761 = vmatprep.subr.mxu0 0.0
    %9762 = vmatpush1.msra.mxu0 0.0
    %9763 = vmatprep.subr.mxu0 0.0
    %9764 = vmatpush1.msra.mxu0 0.0
    %9765 = vmatprep.subr.mxu0 0.0
    %9766 = vmatpush1.msra.mxu0 0.0
    %9767 = vmatprep.subr.mxu0 0.0
    %9768 = vmatpush1.msra.mxu0 0.0
    %9769 = vmatprep.subr.mxu0 0.0
    %9770 = vmatpush1.msra.mxu0 0.0
    %9771 = vmatprep.subr.mxu0 0.0
    %9772 = vmatpush1.msra.mxu0 0.0
    %9773 = vmatprep.subr.mxu0 0.0
    %9774 = vmatpush1.msra.mxu0 0.0
    %9775 = vmatprep.subr.mxu0 0.0
    %9776 = vmatpush1.msra.mxu0 0.0
    %9777 = vmatprep.subr.mxu0 0.0
    %9778 = vmatpush1.msra.mxu0 0.0
    %9779 = vmatprep.subr.mxu0 0.0
    %9780 = vmatpush1.msra.mxu0 0.0
    %9781 = vmatprep.subr.mxu0 0.0
    %9782 = vmatpush1.msra.mxu0 0.0
    %9783 = vmatprep.subr.mxu0 0.0
    %9784 = vmatpush1.msra.mxu0 0.0
    %9785 = vmatprep.subr.mxu0 0.0
    %9786 = vmatpush1.msra.mxu0 0.0
    %9787 = vmatprep.subr.mxu0 0.0
    %9788 = vmatpush1.msra.mxu0 0.0
    %9789 = vmatprep.subr.mxu0 0.0
    %9790 = vmatpush1.msra.mxu0 0.0
    %9791 = vmatprep.subr.mxu0 0.0
    %9792 = vmatpush1.msra.mxu0 0.0
    %9793 = vmatprep.subr.mxu0 0.0
    %9794 = vmatpush1.msra.mxu0 0.0
    %9795 = vmatprep.subr.mxu0 0.0
    %9796 = vmatpush1.msra.mxu0 0.0
    %9797 = vmatprep.subr.mxu0 0.0
    %9798 = vmatpush1.msra.mxu0 0.0
    %9799 = vmatprep.subr.mxu0 0.0
    %9800 = vmatpush1.msra.mxu0 0.0
    %9801 = vmatprep.subr.mxu0 0.0
    %9802 = vmatpush1.msra.mxu0 0.0
    %9803 = vmatprep.subr.mxu0 0.0
    %9804 = vmatpush1.msra.mxu0 0.0
    %9805 = vmatprep.subr.mxu0 0.0
    %9806 = vmatpush1.msra.mxu0 0.0
    %9807 = vmatprep.subr.mxu0 0.0
    %9808 = vmatpush1.msra.mxu0 0.0
    %9809 = vmatprep.mubr.f32.mxu0 0.0
    %9810 = vmatmul.mubr.f32.gmra.mrb[0].mxu0 %v9461
    %v9811 = vpop.f32.mrb[0].mxu0
    %v9812 = vadd.f32 %v9742, %v9811
    %v9813 = vpop.f32.mrb[0].mxu0
    %9814 = vdwg.mxu0
    %v9815 = vadd.f32 %v9812, %v426
    %9816 = vmatprep.subr.mxu0 0.0
    %9817 = vmatpush1.msra.mxu0 %v375
    %9818 = vmatprep.subr.mxu0 0.0
    %9819 = vmatpush1.msra.mxu0 %v376
    %9820 = vmatprep.subr.mxu0 0.0
    %9821 = vmatpush1.msra.mxu0 %v377
    %9822 = vmatprep.subr.mxu0 0.0
    %9823 = vmatpush1.msra.mxu0 %v378
    %9824 = vmatprep.subr.mxu0 0.0
    %9825 = vmatpush1.msra.mxu0 0.0
    %9826 = vmatprep.subr.mxu0 0.0
    %9827 = vmatpush1.msra.mxu0 0.0
    %9828 = vmatprep.subr.mxu0 0.0
    %9829 = vmatpush1.msra.mxu0 0.0
    %9830 = vmatprep.subr.mxu0 0.0
    %9831 = vmatpush1.msra.mxu0 0.0
    %9832 = vmatprep.subr.mxu0 0.0
    %9833 = vmatpush1.msra.mxu0 0.0
    %9834 = vmatprep.subr.mxu0 0.0
    %9835 = vmatpush1.msra.mxu0 0.0
    %9836 = vmatprep.subr.mxu0 0.0
    %9837 = vmatpush1.msra.mxu0 0.0
    %9838 = vmatprep.subr.mxu0 0.0
    %9839 = vmatpush1.msra.mxu0 0.0
    %9840 = vmatprep.subr.mxu0 0.0
    %9841 = vmatpush1.msra.mxu0 0.0
    %9842 = vmatprep.subr.mxu0 0.0
    %9843 = vmatpush1.msra.mxu0 0.0
    %9844 = vmatprep.subr.mxu0 0.0
    %9845 = vmatpush1.msra.mxu0 0.0
    %9846 = vmatprep.subr.mxu0 0.0
    %9847 = vmatpush1.msra.mxu0 0.0
    %9848 = vmatprep.subr.mxu0 0.0
    %9849 = vmatpush1.msra.mxu0 0.0
    %9850 = vmatprep.subr.mxu0 0.0
    %9851 = vmatpush1.msra.mxu0 0.0
    %9852 = vmatprep.subr.mxu0 0.0
    %9853 = vmatpush1.msra.mxu0 0.0
    %9854 = vmatprep.subr.mxu0 0.0
    %9855 = vmatpush1.msra.mxu0 0.0
    %9856 = vmatprep.subr.mxu0 0.0
    %9857 = vmatpush1.msra.mxu0 0.0
    %9858 = vmatprep.subr.mxu0 0.0
    %9859 = vmatpush1.msra.mxu0 0.0
    %9860 = vmatprep.subr.mxu0 0.0
    %9861 = vmatpush1.msra.mxu0 0.0
    %9862 = vmatprep.subr.mxu0 0.0
    %9863 = vmatpush1.msra.mxu0 0.0
    %9864 = vmatprep.subr.mxu0 0.0
    %9865 = vmatpush1.msra.mxu0 0.0
    %9866 = vmatprep.subr.mxu0 0.0
    %9867 = vmatpush1.msra.mxu0 0.0
    %9868 = vmatprep.subr.mxu0 0.0
    %9869 = vmatpush1.msra.mxu0 0.0
    %9870 = vmatprep.subr.mxu0 0.0
    %9871 = vmatpush1.msra.mxu0 0.0
    %9872 = vmatprep.subr.mxu0 0.0
    %9873 = vmatpush1.msra.mxu0 0.0
    %9874 = vmatprep.subr.mxu0 0.0
    %9875 = vmatpush1.msra.mxu0 0.0
    %9876 = vmatprep.subr.mxu0 0.0
    %9877 = vmatpush1.msra.mxu0 0.0
    %9878 = vmatprep.subr.mxu0 0.0
    %9879 = vmatpush1.msra.mxu0 0.0
    %9880 = vmatprep.mubr.f32.mxu0 0.0
    %9881 = vmatmul.mubr.f32.gmra.mrb[0].mxu0 %v9388
    %v9882 = vpop.f32.mrb[0].mxu0
    %v9883 = vadd.f32 0.0, %v9882
    %v9884 = vpop.f32.mrb[0].mxu0
    %9885 = vdwg.mxu0
    %9886 = vmatprep.subr.mxu0 0.0
    %9887 = vmatpush1.msra.mxu0 %v343
    %9888 = vmatprep.subr.mxu0 0.0
    %9889 = vmatpush1.msra.mxu0 %v344
    %9890 = vmatprep.subr.mxu0 0.0
    %9891 = vmatpush1.msra.mxu0 %v345
    %9892 = vmatprep.subr.mxu0 0.0
    %9893 = vmatpush1.msra.mxu0 %v346
    %9894 = vmatprep.subr.mxu0 0.0
    %9895 = vmatpush1.msra.mxu0 0.0
    %9896 = vmatprep.subr.mxu0 0.0
    %9897 = vmatpush1.msra.mxu0 0.0
    %9898 = vmatprep.subr.mxu0 0.0
    %9899 = vmatpush1.msra.mxu0 0.0
    %9900 = vmatprep.subr.mxu0 0.0
    %9901 = vmatpush1.msra.mxu0 0.0
    %9902 = vmatprep.subr.mxu0 0.0
    %9903 = vmatpush1.msra.mxu0 0.0
    %9904 = vmatprep.subr.mxu0 0.0
    %9905 = vmatpush1.msra.mxu0 0.0
    %9906 = vmatprep.subr.mxu0 0.0
    %9907 = vmatpush1.msra.mxu0 0.0
    %9908 = vmatprep.subr.mxu0 0.0
    %9909 = vmatpush1.msra.mxu0 0.0
    %9910 = vmatprep.subr.mxu0 0.0
    %9911 = vmatpush1.msra.mxu0 0.0
    %9912 = vmatprep.subr.mxu0 0.0
    %9913 = vmatpush1.msra.mxu0 0.0
    %9914 = vmatprep.subr.mxu0 0.0
    %9915 = vmatpush1.msra.mxu0 0.0
    %9916 = vmatprep.subr.mxu0 0.0
    %9917 = vmatpush1.msra.mxu0 0.0
    %9918 = vmatprep.subr.mxu0 0.0
    %9919 = vmatpush1.msra.mxu0 0.0
    %9920 = vmatprep.subr.mxu0 0.0
    %9921 = vmatpush1.msra.mxu0 0.0
    %9922 = vmatprep.subr.mxu0 0.0
    %9923 = vmatpush1.msra.mxu0 0.0
    %9924 = vmatprep.subr.mxu0 0.0
    %9925 = vmatpush1.msra.mxu0 0.0
    %9926 = vmatprep.subr.mxu0 0.0
    %9927 = vmatpush1.msra.mxu0 0.0
    %9928 = vmatprep.subr.mxu0 0.0
    %9929 = vmatpush1.msra.mxu0 0.0
    %9930 = vmatprep.subr.mxu0 0.0
    %9931 = vmatpush1.msra.mxu0 0.0
    %9932 = vmatprep.subr.mxu0 0.0
    %9933 = vmatpush1.msra.mxu0 0.0
    %9934 = vmatprep.subr.mxu0 0.0
    %9935 = vmatpush1.msra.mxu0 0.0
    %9936 = vmatprep.subr.mxu0 0.0
    %9937 = vmatpush1.msra.mxu0 0.0
    %9938 = vmatprep.subr.mxu0 0.0
    %9939 = vmatpush1.msra.mxu0 0.0
    %9940 = vmatprep.subr.mxu0 0.0
    %9941 = vmatpush1.msra.mxu0 0.0
    %9942 = vmatprep.subr.mxu0 0.0
    %9943 = vmatpush1.msra.mxu0 0.0
    %9944 = vmatprep.subr.mxu0 0.0
    %9945 = vmatpush1.msra.mxu0 0.0
    %9946 = vmatprep.subr.mxu0 0.0
    %9947 = vmatpush1.msra.mxu0 0.0
    %9948 = vmatprep.subr.mxu0 0.0
    %9949 = vmatpush1.msra.mxu0 0.0
    %9950 = vmatprep.mubr.f32.mxu0 0.0
    %9951 = vmatmul.mubr.f32.gmra.mrb[0].mxu0 %v9461
    %v9952 = vpop.f32.mrb[0].mxu0
    %v9953 = vadd.f32 %v9883, %v9952
    %v9954 = vpop.f32.mrb[0].mxu0
    %9955 = vdwg.mxu0
    %v9956 = vadd.f32 %v9953, %v433
    %v9957 = vxor.u32 %v9533, 2147483648
    %v9958 = vmul.f32 %v9957, 1.442695
    %v9959 = vpow.pop %v9958
    %v9960 = vadd.f32 %v9959, 1.0
    %v9961 = vrcp.pop %v9960
    %v9962 = vmul.f32 1.0, %v9961
    %v9963 = vxor.u32 %v9674, 2147483648
    %v9964 = vmul.f32 %v9963, 1.442695
    %v9965 = vpow.pop %v9964
    %v9966 = vadd.f32 %v9965, 1.0
    %v9967 = vrcp.pop %v9966
    %v9968 = vmul.f32 1.0, %v9967
    %v9969 = vtanh.pop %v9815
    %v9970 = vxor.u32 %v9956, 2147483648
    %v9971 = vmul.f32 %v9970, 1.442695
    %v9972 = vpow.pop %v9971
    %v9973 = vadd.f32 %v9972, 1.0
    %v9974 = vrcp.pop %v9973
    %v9975 = vmul.f32 1.0, %v9974
    %v9976 = vmul.f32 %v9968, %v8784
    %v9977 = vmul.f32 %v9962, %v9969
    %v9978 = vadd.f32 %v9976, %v9977
    %v9979 = vtanh.pop %v9978
    %v9980 = vmul.f32 %v9975, %v9979
    %vm9981 = vcmp.eq.s32.totalorder %v322, 7
    %v9982 = vsel %vm9981, 1, 0
    %9983 = vset.pattern.permute.xlu0 0
    %9984 = vperm.xlu0 %9983, %v9982
    %v9985 = vpop.permute.xlu0 %9984
    %vm9986 = vcmp.eq.s32.totalorder %v9985, 1
    %v9987 = vsel %vm9986, %v9980, %v8793
    %9988 = vst.msk [vmem:[#allocation31] sm:$0xff] %vm436, %v9987
    // Predicated region
    $region178: #{tpu_custom_call.1} parent=1 // pred_check
      _
    $region179: #{tpu_custom_call.1} parent=1 // pred_check_branch
      %9990 = sbr.rel (0) target = $region181
    $region180: #{tpu_custom_call.1} parent=1 // pred_region
      %s9992 = ssub.s32 128, 128
      %9993 = vsyncadd [#allocation4], %s9992
      %s9995 = sshll.u32 [#allocation31], 4
      %s9996 = int_to_ptr.vmem [resolvable:$true] %s9995
      %9998 = dma.vmem_to_hbm [thread:$0]  %s9996, 128, %s26, [#allocation4]
    $region181: #{tpu_custom_call.1} parent=1 // pred_fallthru
      _
    // Predicated region
    $region182: #{tpu_custom_call.1} parent=1 // pred_check
      _
    $region183: #{tpu_custom_call.1} parent=1 // pred_check_branch
      %10000 = sbr.rel (0) target = $region185
    $region184: #{tpu_custom_call.1} parent=1 // pred_region
      %10001 = dma.done [#allocation4], 128
    $region185: #{tpu_custom_call.1} parent=1 // pred_fallthru
      _
    %10002 = vsyncpa [#allocation3], 1
    %10003 = vsyncpa [#allocation6], 1
    %10004 = vsyncpa [#allocation9], 1
    %10005 = vsyncpa [#allocation12], 1
    %10006 = vsyncpa [#allocation15], 1
    %10007 = vsyncpa [#allocation18], 1
    %10008 = vsyncpa [#allocation21], 1
    %10009 = vsyncpa [#allocation24], 1
    %10010 = vsyncpa [#allocation27], 1
    %10011 = vsyncpa [#allocation30], 1
    %10012 = vsyncpa [#allocation4], 1

</llo_original>
